<compile_context>
chip_gen: v6e
topology: v6e:2x2x1
jax: 0.10.0
libtpu: 0.0.40
codegen_flags: <defaults>
</compile_context>

<pallas_src>
import math

import jax
import jax.numpy as jnp
from jax.experimental import pallas as pl
from jax.experimental.pallas import tpu as pltpu

# ----------------------------- small synthetic WavLM config -----------------
CONV_DIM = (32, 32, 32)          # feature-extractor conv channels
CONV_KERNEL = (10, 3, 3)
CONV_STRIDE = (5, 2, 2)
HIDDEN = 32                      # encoder hidden size
NUM_HEADS = 4
HEAD_DIM = HIDDEN // NUM_HEADS
FFN = 64                         # intermediate size
NUM_LAYERS = 2
POS_CONV_KERNEL = 3              # odd -> no trailing-pad removal needed
POS_CONV_GROUPS = 4
EPS = 1e-5


def _gelu(x):
    return jax.nn.gelu(x, approximate=True)


def _ln_rows(v, g, b):
    """LayerNorm over the last axis of a 2-D value (rsqrt -> EUP slot)."""
    mean = jnp.mean(v, axis=-1, keepdims=True)
    var = jnp.mean((v - mean) ** 2, axis=-1, keepdims=True)
    return (v - mean) * jax.lax.rsqrt(var + EPS) * g + b


# ----------------------------- fused Pallas kernels --------------------------
def conv_layer(xr, w_taps, gn_g=None, gn_b=None, *, t_out):
    """Fused strided conv (+ optional per-channel GroupNorm over time) + GELU.

    xr:     (B, Lr, F) space-to-depth input, F = stride * C_in (channel-last).
    w_taps: (A, F, C_out) bf16 tap weights, A = ceil(K / stride).
    Grid is over batch; everything for one batch element lives in VMEM.
    """
    B, Lr, F = xr.shape
    A, _, c_out = w_taps.shape
    use_gn = gn_g is not None

    def _conv(x_ref, w_ref):
        xv = x_ref[0]                                        # (Lr, F) f32
        acc = jnp.zeros((t_out, c_out), jnp.float32)
        for a in range(A):                                   # static, A == 2
            acc = acc + jnp.dot(
                xv[a:a + t_out, :].astype(jnp.bfloat16), w_ref[a],
                preferred_element_type=jnp.float32)
        return acc

    if use_gn:
        def body(x_ref, w_ref, g_ref, b_ref, o_ref):
            acc = _conv(x_ref, w_ref)
            # GroupNorm(groups=C, channels=C): per-channel over time, no transposes.
            mean = jnp.mean(acc, axis=0, keepdims=True)
            var = jnp.mean((acc - mean) ** 2, axis=0, keepdims=True)
            acc = (acc - mean) * jax.lax.rsqrt(var + EPS) * g_ref[...] + b_ref[...]
            o_ref[0] = _gelu(acc)
    else:
        def body(x_ref, w_ref, o_ref):
            o_ref[0] = _gelu(_conv(x_ref, w_ref))

    in_specs = [pl.BlockSpec((1, Lr, F), lambda b: (b, 0, 0)),
                pl.BlockSpec((A, F, c_out), lambda b: (0, 0, 0))]
    args = [xr, w_taps]
    if use_gn:
        in_specs += [pl.BlockSpec((1, c_out), lambda b: (0, 0)),
                     pl.BlockSpec((1, c_out), lambda b: (0, 0))]
        args += [gn_g, gn_b]

    return pl.pallas_call(
        body,
        grid=(B,),
        in_specs=in_specs,
        out_specs=pl.BlockSpec((1, t_out, c_out), lambda b: (b, 0, 0)),
        out_shape=jax.ShapeDtypeStruct((B, t_out, c_out), jnp.float32),
        compiler_params=pltpu.CompilerParams(dimension_semantics=("parallel",)),
    )(*args)


def feature_projection(prep, feats):
    """Fused LayerNorm + Linear projection: (B, T, C) -> (B, T, HIDDEN)."""
    B, T, C = feats.shape
    x2 = feats.reshape(B * T, C)

    def body(x_ref, g_ref, b_ref, w_ref, bias_ref, o_ref):
        xn = _ln_rows(x_ref[...], g_ref[...], b_ref[...])
        o_ref[...] = jnp.dot(xn.astype(jnp.bfloat16), w_ref[...],
                             preferred_element_type=jnp.float32) + bias_ref[...]

    y = pl.pallas_call(
        body,
        out_shape=jax.ShapeDtypeStruct((B * T, HIDDEN), jnp.float32),
    )(x2, prep["fp_ln_g"], prep["fp_ln_b"], prep["fp_w"], prep["fp_b"])
    return y.reshape(B, T, HIDDEN)


def encoder_front(prep, x):
    """Fused positional grouped conv + GELU + residual add + encoder LayerNorm."""
    B, T, H = x.shape
    K = POS_CONV_KERNEL
    pad = K // 2
    xp = jnp.pad(x, ((0, 0), (pad, pad), (0, 0)))
    Tp = T + 2 * pad

    def body(xp_ref, w_ref, pb_ref, g_ref, b_ref, o_ref):
        xpv = xp_ref[0]                                      # (Tp, H) f32
        xv = xpv[pad:pad + T, :]
        pos = jnp.zeros((T, H), jnp.float32)
        for j in range(K):                                   # static taps
            pos = pos + jnp.dot(
                xpv[j:j + T, :].astype(jnp.bfloat16), w_ref[j],
                preferred_element_type=jnp.float32)
        pos = _gelu(pos + pb_ref[...])
        o_ref[0] = _ln_rows(xv + pos, g_ref[...], b_ref[...])

    return pl.pallas_call(
        body,
        grid=(B,),
        in_specs=[pl.BlockSpec((1, Tp, H), lambda b: (b, 0, 0)),
                  pl.BlockSpec((K, H, H), lambda b: (0, 0, 0)),
                  pl.BlockSpec((1, H), lambda b: (0, 0)),
                  pl.BlockSpec((1, H), lambda b: (0, 0)),
                  pl.BlockSpec((1, H), lambda b: (0, 0))],
        out_specs=pl.BlockSpec((1, T, H), lambda b: (b, 0, 0)),
        out_shape=jax.ShapeDtypeStruct((B, T, H), jnp.float32),
        compiler_params=pltpu.CompilerParams(dimension_semantics=("parallel",)),
    )(xp, prep["pos_wt"], prep["pos_b"], prep["enc_ln_g"], prep["enc_ln_b"])


def encoder_layer(lp, x, *, final_relu):
    """One fully-fused transformer encoder layer (post-norm, as in WavLM).

    QKV packed matmul -> per-head attention (no explicit K transpose) ->
    output projection (summed per head, no concat) -> residual -> LN1 ->
    FFN (GELU) -> residual -> LN2 (+ optional fused final ReLU).
    """
    B, T, H = x.shape
    D = HEAD_DIM
    scale = 1.0 / math.sqrt(D)

    def body(x_ref, wqkv_ref, bqkv_ref, wo_ref, bo_ref, g1_ref, b1_ref,
             wf1_ref, bf1_ref, wf2_ref, bf2_ref, g2_ref, b2_ref, o_ref):
        xv = x_ref[0]                                        # (T, H) f32
        qkv = jnp.dot(xv.astype(jnp.bfloat16), wqkv_ref[...],
                      preferred_element_type=jnp.float32) + bqkv_ref[...]
        wov = wo_ref[...]                                    # (H, H) bf16
        attn = jnp.zeros((T, H), jnp.float32)
        # TODO(synk): gated relative position bias omitted (vanilla MHA).
        for hd in range(NUM_HEADS):                          # static unroll
            q = qkv[:, hd * D:(hd + 1) * D].astype(jnp.bfloat16)
            k = qkv[:, H + hd * D:H + (hd + 1) * D].astype(jnp.bfloat16)
            v = qkv[:, 2 * H + hd * D:2 * H + (hd + 1) * D].astype(jnp.bfloat16)
            # contract last axes of both -> no explicit kv.T / XLU transpose
            s = jax.lax.dot_general(q, k, (((1,), (1,)), ((), ())),
                                    preferred_element_type=jnp.float32) * scale
            s = s - jnp.max(s, axis=-1, keepdims=True)
            p = jnp.exp(s)
            p = p * pl.reciprocal(jnp.sum(p, axis=-1, keepdims=True), approx=True)
            oh = jnp.dot(p.astype(jnp.bfloat16), v,
                         preferred_element_type=jnp.float32)
            # fold output projection per head: avoids lane concat of heads
            attn = attn + jnp.dot(oh.astype(jnp.bfloat16),
                                  wov[hd * D:(hd + 1) * D, :],
                                  preferred_element_type=jnp.float32)
        attn = attn + bo_ref[...]
        h1 = xv + attn                                       # residual
        h2 = _ln_rows(h1, g1_ref[...], b1_ref[...])
        ff = _gelu(jnp.dot(h2.astype(jnp.bfloat16), wf1_ref[...],
                           preferred_element_type=jnp.float32) + bf1_ref[...])
        ff = jnp.dot(ff.astype(jnp.bfloat16), wf2_ref[...],
                     preferred_element_type=jnp.float32) + bf2_ref[...]
        out = _ln_rows(h2 + ff, g2_ref[...], b2_ref[...])
        if final_relu:                                       # fused final ReLU
            out = jnp.maximum(out, 0.0)
        o_ref[0] = out

    def full2(shp):
        return pl.BlockSpec(shp, lambda b: (0, 0))

    return pl.pallas_call(
        body,
        grid=(B,),
        in_specs=[pl.BlockSpec((1, T, H), lambda b: (b, 0, 0)),
                  full2((H, 3 * H)), full2((1, 3 * H)),
                  full2((H, H)), full2((1, H)),
                  full2((1, H)), full2((1, H)),
                  full2((H, FFN)), full2((1, FFN)),
                  full2((FFN, H)), full2((1, H)),
                  full2((1, H)), full2((1, H))],
        out_specs=pl.BlockSpec((1, T, H), lambda b: (b, 0, 0)),
        out_shape=jax.ShapeDtypeStruct((B, T, H), jnp.float32),
        compiler_params=pltpu.CompilerParams(dimension_semantics=("parallel",)),
    )(x, lp["wqkv"], lp["bqkv"], lp["wo"], lp["bo"], lp["ln1_g"], lp["ln1_b"],
      lp["w_ff1"], lp["b_ff1"], lp["w_ff2"], lp["b_ff2"], lp["ln2_g"], lp["ln2_b"])


# ----------------------------- wrapper glue (cheap XLA reshapes only) --------
def _space_to_depth(x, stride, min_rows):
    """(B, L, C) -> (B, rows, stride*C), a pure row-major reshape (no transpose)."""
    B, L, C = x.shape
    rows = max(-(-L // stride), min_rows)
    pad = rows * stride - L
    if pad:
        x = jnp.pad(x, ((0, 0), (0, pad), (0, 0)))
    return x.reshape(B, rows, stride * C)


def feature_extractor(prep, x):
    """WavLM conv feature extractor, channel-last throughout: (B, L) -> (B, T, C)."""
    h = x[:, :, None]                                        # (B, L, 1)
    for i, (c_out, k, s) in enumerate(zip(CONV_DIM, CONV_KERNEL, CONV_STRIDE)):
        L_cur = h.shape[1]
        t_out = (L_cur - k) // s + 1
        a_taps = -(-k // s)
        xr = _space_to_depth(h, s, t_out + a_taps - 1)
        if i == 0:
            h = conv_layer(xr, prep["conv0_wt"], prep["gn_g"], prep["gn_b"],
                           t_out=t_out)
        else:
            h = conv_layer(xr, prep[f"conv{i}_wt"], t_out=t_out)
    return h                                                 # (B, T, C) channel-last


def wavlm_wrapper_forward(prep, x):
    """WavLMWrapper.forward (inference, length=None):
    extractor -> projection -> encoder -> ReLU (ReLU fused into last layer)."""
    feats = feature_extractor(prep, x)                       # (B, T, conv_dim)
    h = feature_projection(prep, feats)                      # (B, T, hidden)
    h = encoder_front(prep, h)                               # pos conv + LN
    for i in range(NUM_LAYERS):
        h = encoder_layer(prep["layers"][i], h,
                          final_relu=(i == NUM_LAYERS - 1))
    return h


# ----------------------------- parameters ------------------------------------
def init_params(key):
    keys = iter(jax.random.split(key, 128))

    def rnd(shape, scale=0.05):
        return jax.random.normal(next(keys), shape, jnp.float32) * scale

    p = {}
    cin = 1
    for i, (cout, k, _s) in enumerate(zip(CONV_DIM, CONV_KERNEL, CONV_STRIDE)):
        p[f"conv{i}_w"] = rnd((cout, cin, k), 0.3)            # torch (Cout, Cin, K)
        cin = cout
    p["gn_g"] = jnp.ones((CONV_DIM[0],), jnp.float32)
    p["gn_b"] = jnp.zeros((CONV_DIM[0],), jnp.float32)

    C = CONV_DIM[-1]
    p["fp_ln_g"] = jnp.ones((C,), jnp.float32)
    p["fp_ln_b"] = jnp.zeros((C,), jnp.float32)
    p["fp_w"] = rnd((C, HIDDEN), 0.1)
    p["fp_b"] = rnd((HIDDEN,), 0.02)

    Cg = HIDDEN // POS_CONV_GROUPS
    p["pos_w"] = rnd((HIDDEN, Cg, POS_CONV_KERNEL), 0.1)      # torch (Cout, Cin/G, K)
    p["pos_b"] = rnd((HIDDEN,), 0.02)

    p["enc_ln_g"] = jnp.ones((HIDDEN,), jnp.float32)
    p["enc_ln_b"] = jnp.zeros((HIDDEN,), jnp.float32)

    layers = []
    for _ in range(NUM_LAYERS):
        layers.append({
            "wq": rnd((HIDDEN, HIDDEN), 0.1), "bq": rnd((HIDDEN,), 0.02),
            "wk": rnd((HIDDEN, HIDDEN), 0.1), "bk": rnd((HIDDEN,), 0.02),
            "wv": rnd((HIDDEN, HIDDEN), 0.1), "bv": rnd((HIDDEN,), 0.02),
            "wo": rnd((HIDDEN, HIDDEN), 0.1), "bo": rnd((HIDDEN,), 0.02),
            "ln1_g": jnp.ones((HIDDEN,), jnp.float32),
            "ln1_b": jnp.zeros((HIDDEN,), jnp.float32),
            "w_ff1": rnd((HIDDEN, FFN), 0.1), "b_ff1": rnd((FFN,), 0.02),
            "w_ff2": rnd((FFN, HIDDEN), 0.1), "b_ff2": rnd((HIDDEN,), 0.02),
            "ln2_g": jnp.ones((HIDDEN,), jnp.float32),
            "ln2_b": jnp.zeros((HIDDEN,), jnp.float32),
        })
    p["layers"] = layers
    return p


def prepare_params(p):
    """Rearrange torch-layout weights into kernel-ready fused/bf16 forms."""
    prep = {}

    # conv tap weights: Wa[r*Cin + c, o] = w[o, c, a*s + r]
    cin = 1
    for i, (cout, k, s) in enumerate(zip(CONV_DIM, CONV_KERNEL, CONV_STRIDE)):
        w = p[f"conv{i}_w"]
        a_taps = -(-k // s)
        wt = jnp.zeros((a_taps, s * cin, cout), jnp.float32)
        for a in range(a_taps):
            for r in range(s):
                j = a * s + r
                if j < k:
                    wt = wt.at[a, r * cin:(r + 1) * cin, :].set(
                        jnp.transpose(w[:, :, j]))
        prep[f"conv{i}_wt"] = wt.astype(jnp.bfloat16)
        cin = cout
    prep["gn_g"] = p["gn_g"].reshape(1, -1)
    prep["gn_b"] = p["gn_b"].reshape(1, -1)

    prep["fp_ln_g"] = p["fp_ln_g"].reshape(1, -1)
    prep["fp_ln_b"] = p["fp_ln_b"].reshape(1, -1)
    prep["fp_w"] = p["fp_w"].astype(jnp.bfloat16)
    prep["fp_b"] = p["fp_b"].reshape(1, -1)

    # grouped positional conv: per-tap (H, H) weights, block-diagonal per group
    K, G = POS_CONV_KERNEL, POS_CONV_GROUPS
    Cg = HIDDEN // G
    w = p["pos_w"]
    wt = jnp.zeros((K, HIDDEN, HIDDEN), jnp.float32)
    for j in range(K):
        for g in range(G):
            blk = jnp.transpose(w[g * Cg:(g + 1) * Cg, :, j])  # (Cg_in, Cg_out)
            wt = wt.at[j, g * Cg:(g + 1) * Cg, g * Cg:(g + 1) * Cg].set(blk)
    prep["pos_wt"] = wt.astype(jnp.bfloat16)
    prep["pos_b"] = p["pos_b"].reshape(1, -1)
    prep["enc_ln_g"] = p["enc_ln_g"].reshape(1, -1)
    prep["enc_ln_b"] = p["enc_ln_b"].reshape(1, -1)

    layers = []
    for lp in p["layers"]:
        layers.append({
            "wqkv": jnp.concatenate([lp["wq"], lp["wk"], lp["wv"]],
                                    axis=1).astype(jnp.bfloat16),
            "bqkv": jnp.concatenate([lp["bq"], lp["bk"], lp["bv"]]).reshape(1, -1),
            "wo": lp["wo"].astype(jnp.bfloat16), "bo": lp["bo"].reshape(1, -1),
            "ln1_g": lp["ln1_g"].reshape(1, -1), "ln1_b": lp["ln1_b"].reshape(1, -1),
            "w_ff1": lp["w_ff1"].astype(jnp.bfloat16),
            "b_ff1": lp["b_ff1"].reshape(1, -1),
            "w_ff2": lp["w_ff2"].astype(jnp.bfloat16),
            "b_ff2": lp["b_ff2"].reshape(1, -1),
            "ln2_g": lp["ln2_g"].reshape(1, -1), "ln2_b": lp["ln2_b"].reshape(1, -1),
        })
    prep["layers"] = layers
    return prep


# ----------------------------- main ------------------------------------------
if __name__ == "__main__":
    key = jax.random.PRNGKey(0)
    pkey, xkey = jax.random.split(key)
    prep = prepare_params(init_params(pkey))

    B, L = 2, 400                     # raw waveform input
    x = jax.random.normal(xkey, (B, L), jnp.float32)

    fwd = jax.jit(wavlm_wrapper_forward)
    out = jax.block_until_ready(fwd(prep, x))

    # expected seq length: (400-10)//5+1=79 -> (79-3)//2+1=39 -> (39-3)//2+1=19
    assert out.shape == (B, 19, HIDDEN), out.shape
    assert bool(jnp.all(jnp.isfinite(out)))
    assert bool(jnp.all(out >= 0.0))          # final ReLU (fused into last layer)
    print("KERNEL_OK")
</pallas_src>

<mosaic_0001>
module attributes {stable_mosaic.version = 11 : i64} {
  func.func @body(%arg0: i32, %arg1: memref<1x80x5xf32, #tpu.memory_space<vmem>>, %arg2: memref<2x5x32xbf16, #tpu.memory_space<vmem>>, %arg3: memref<1x32xf32, #tpu.memory_space<vmem>>, %arg4: memref<1x32xf32, #tpu.memory_space<vmem>>, %arg5: memref<1x79x32xf32, #tpu.memory_space<vmem>>) attributes {dimension_semantics = [#tpu.dimension_semantics<parallel>], iteration_bounds = array<i64: 2>, scalar_prefetch = 0 : i64, scratch_operands = 0 : i64, tpu.core_type = #tpu.core_type<tc>, window_params = [{transform_indices = @transform_0, window_bounds = array<i64: 1, 80, 5>}, {pipeline_mode = #tpu.pipeline_mode<synchronous>, transform_indices = @transform_1, window_bounds = array<i64: 2, 5, 32>}, {pipeline_mode = #tpu.pipeline_mode<synchronous>, transform_indices = @transform_2, window_bounds = array<i64: 1, 32>}, {pipeline_mode = #tpu.pipeline_mode<synchronous>, transform_indices = @transform_3, window_bounds = array<i64: 1, 32>}, {transform_indices = @transform_4, window_bounds = array<i64: 1, 79, 32>}]} {
    %c0 = arith.constant 0 : index
    %c0_0 = arith.constant 0 : index
    %c0_1 = arith.constant 0 : index
    %0 = vector.load %arg1[%c0, %c0_0, %c0_1] : memref<1x80x5xf32, #tpu.memory_space<vmem>>, vector<1x80x5xf32>
    %1 = vector.shape_cast %0 : vector<1x80x5xf32> to vector<80x5xf32>
    %cst = arith.constant 0.000000e+00 : f32
    %2 = vector.broadcast %cst : f32 to vector<79x32xf32>
    %3 = vector.extract_strided_slice %1 {offsets = [0, 0], sizes = [79, 5], strides = [1, 1]} : vector<80x5xf32> to vector<79x5xf32>
    %4 = arith.truncf %3 : vector<79x5xf32> to vector<79x5xbf16>
    %c0_2 = arith.constant 0 : index
    %c0_3 = arith.constant 0 : index
    %c0_4 = arith.constant 0 : index
    %5 = vector.load %arg2[%c0_2, %c0_3, %c0_4] : memref<2x5x32xbf16, #tpu.memory_space<vmem>>, vector<1x5x32xbf16>
    %6 = vector.shape_cast %5 : vector<1x5x32xbf16> to vector<5x32xbf16>
    %cst_5 = arith.constant dense<0.000000e+00> : vector<79x32xf32>
    %7 = tpu.matmul %4, %6, %cst_5 {dimension_numbers = #tpu.dot_dimension_numbers<[1], [0], [0], [1], [0, 0, 1, 1], [], []>} : vector<79x5xbf16>, vector<5x32xbf16>, vector<79x32xf32> -> vector<79x32xf32>
    %8 = arith.addf %2, %7 : vector<79x32xf32>
    %9 = vector.extract_strided_slice %1 {offsets = [1, 0], sizes = [79, 5], strides = [1, 1]} : vector<80x5xf32> to vector<79x5xf32>
    %10 = arith.truncf %9 : vector<79x5xf32> to vector<79x5xbf16>
    %c1 = arith.constant 1 : index
    %c0_6 = arith.constant 0 : index
    %c0_7 = arith.constant 0 : index
    %11 = vector.load %arg2[%c1, %c0_6, %c0_7] : memref<2x5x32xbf16, #tpu.memory_space<vmem>>, vector<1x5x32xbf16>
    %12 = vector.shape_cast %11 : vector<1x5x32xbf16> to vector<5x32xbf16>
    %cst_8 = arith.constant dense<0.000000e+00> : vector<79x32xf32>
    %13 = tpu.matmul %10, %12, %cst_8 {dimension_numbers = #tpu.dot_dimension_numbers<[1], [0], [0], [1], [0, 0, 1, 1], [], []>} : vector<79x5xbf16>, vector<5x32xbf16>, vector<79x32xf32> -> vector<79x32xf32>
    %14 = arith.addf %8, %13 : vector<79x32xf32>
    %cst_9 = arith.constant dense<0.000000e+00> : vector<32xf32>
    %15 = vector.multi_reduction <add>, %14, %cst_9 [0] : vector<79x32xf32> to vector<32xf32>
    %16 = vector.shape_cast %15 : vector<32xf32> to vector<1x32xf32>
    %cst_10 = arith.constant 7.900000e+01 : f32
    %17 = vector.broadcast %cst_10 : f32 to vector<1x32xf32>
    %18 = arith.divf %16, %17 : vector<1x32xf32>
    %19 = vector.broadcast %18 : vector<1x32xf32> to vector<79x32xf32>
    %20 = arith.subf %14, %19 : vector<79x32xf32>
    %21 = arith.mulf %20, %20 : vector<79x32xf32>
    %cst_11 = arith.constant dense<0.000000e+00> : vector<32xf32>
    %22 = vector.multi_reduction <add>, %21, %cst_11 [0] : vector<79x32xf32> to vector<32xf32>
    %23 = vector.shape_cast %22 : vector<32xf32> to vector<1x32xf32>
    %cst_12 = arith.constant 7.900000e+01 : f32
    %24 = vector.broadcast %cst_12 : f32 to vector<1x32xf32>
    %25 = arith.divf %23, %24 : vector<1x32xf32>
    %26 = vector.broadcast %18 : vector<1x32xf32> to vector<79x32xf32>
    %27 = arith.subf %14, %26 : vector<79x32xf32>
    %cst_13 = arith.constant 9.99999974E-6 : f32
    %28 = vector.broadcast %cst_13 : f32 to vector<1x32xf32>
    %29 = arith.addf %25, %28 : vector<1x32xf32>
    %30 = math.rsqrt %29 : vector<1x32xf32>
    %31 = vector.broadcast %30 : vector<1x32xf32> to vector<79x32xf32>
    %32 = arith.mulf %27, %31 : vector<79x32xf32>
    %c0_14 = arith.constant 0 : index
    %c0_15 = arith.constant 0 : index
    %33 = vector.load %arg3[%c0_14, %c0_15] : memref<1x32xf32, #tpu.memory_space<vmem>>, vector<1x32xf32>
    %34 = vector.broadcast %33 : vector<1x32xf32> to vector<79x32xf32>
    %35 = arith.mulf %32, %34 : vector<79x32xf32>
    %c0_16 = arith.constant 0 : index
    %c0_17 = arith.constant 0 : index
    %36 = vector.load %arg4[%c0_16, %c0_17] : memref<1x32xf32, #tpu.memory_space<vmem>>, vector<1x32xf32>
    %37 = vector.broadcast %36 : vector<1x32xf32> to vector<79x32xf32>
    %38 = arith.addf %35, %37 : vector<79x32xf32>
    %39 = arith.mulf %38, %38 : vector<79x32xf32>
    %40 = arith.mulf %38, %39 : vector<79x32xf32>
    %cst_18 = arith.constant 4.471500e-02 : f32
    %41 = vector.broadcast %cst_18 : f32 to vector<79x32xf32>
    %42 = arith.mulf %41, %40 : vector<79x32xf32>
    %43 = arith.addf %38, %42 : vector<79x32xf32>
    %cst_19 = arith.constant 0.797884583 : f32
    %44 = vector.broadcast %cst_19 : f32 to vector<79x32xf32>
    %45 = arith.mulf %44, %43 : vector<79x32xf32>
    %46 = math.tanh %45 : vector<79x32xf32>
    %cst_20 = arith.constant 1.000000e+00 : f32
    %47 = vector.broadcast %cst_20 : f32 to vector<79x32xf32>
    %48 = arith.addf %47, %46 : vector<79x32xf32>
    %cst_21 = arith.constant 5.000000e-01 : f32
    %49 = vector.broadcast %cst_21 : f32 to vector<79x32xf32>
    %50 = arith.mulf %49, %48 : vector<79x32xf32>
    %51 = arith.mulf %38, %50 : vector<79x32xf32>
    %c0_22 = arith.constant 0 : index
    %c0_23 = arith.constant 0 : index
    %c0_24 = arith.constant 0 : index
    %52 = vector.load %arg5[%c0_22, %c0_23, %c0_24] : memref<1x79x32xf32, #tpu.memory_space<vmem>>, vector<1x79x32xf32>
    %53 = vector.shape_cast %52 : vector<1x79x32xf32> to vector<79x32xf32>
    %54 = vector.shape_cast %51 : vector<79x32xf32> to vector<1x79x32xf32>
    tpu.vector_store %arg5[%c0_22, %c0_23, %c0_24], %54 {strides = array<i32>} : memref<1x79x32xf32, #tpu.memory_space<vmem>>, vector<1x79x32xf32>,
    return
  }
  func.func @transform_0(%arg0: i32) -> (i32, i32, i32) {
    %c0_i32 = arith.constant 0 : i32
    %c0_i32_0 = arith.constant 0 : i32
    %c0_i32_1 = arith.constant 0 : i32
    return %arg0, %c0_i32, %c0_i32_0 : i32, i32, i32
  }
  func.func @transform_1(%arg0: i32) -> (i32, i32, i32) {
    %c0_i32 = arith.constant 0 : i32
    %c0_i32_0 = arith.constant 0 : i32
    %c0_i32_1 = arith.constant 0 : i32
    %c0_i32_2 = arith.constant 0 : i32
    return %c0_i32, %c0_i32_0, %c0_i32_1 : i32, i32, i32
  }
  func.func @transform_2(%arg0: i32) -> (i32, i32) {
    %c0_i32 = arith.constant 0 : i32
    %c0_i32_0 = arith.constant 0 : i32
    %c0_i32_1 = arith.constant 0 : i32
    return %c0_i32, %c0_i32_0 : i32, i32
  }
  func.func @transform_3(%arg0: i32) -> (i32, i32) {
    %c0_i32 = arith.constant 0 : i32
    %c0_i32_0 = arith.constant 0 : i32
    %c0_i32_1 = arith.constant 0 : i32
    return %c0_i32, %c0_i32_0 : i32, i32
  }
  func.func @transform_4(%arg0: i32) -> (i32, i32, i32) {
    %c0_i32 = arith.constant 0 : i32
    %c0_i32_0 = arith.constant 0 : i32
    %c0_i32_1 = arith.constant 0 : i32
    return %arg0, %c0_i32, %c0_i32_0 : i32, i32, i32
  }
}

module attributes {stable_mosaic.version = 11 : i64} {
  func.func @body(%arg0: i32, %arg1: memref<1x40x64xf32, #tpu.memory_space<vmem>>, %arg2: memref<2x64x32xbf16, #tpu.memory_space<vmem>>, %arg3: memref<1x39x32xf32, #tpu.memory_space<vmem>>) attributes {dimension_semantics = [#tpu.dimension_semantics<parallel>], iteration_bounds = array<i64: 2>, scalar_prefetch = 0 : i64, scratch_operands = 0 : i64, tpu.core_type = #tpu.core_type<tc>, window_params = [{transform_indices = @transform_0, window_bounds = array<i64: 1, 40, 64>}, {pipeline_mode = #tpu.pipeline_mode<synchronous>, transform_indices = @transform_1, window_bounds = array<i64: 2, 64, 32>}, {transform_indices = @transform_2, window_bounds = array<i64: 1, 39, 32>}]} {
    %c0 = arith.constant 0 : index
    %c0_0 = arith.constant 0 : index
    %c0_1 = arith.constant 0 : index
    %0 = vector.load %arg1[%c0, %c0_0, %c0_1] : memref<1x40x64xf32, #tpu.memory_space<vmem>>, vector<1x40x64xf32>
    %1 = vector.shape_cast %0 : vector<1x40x64xf32> to vector<40x64xf32>
    %cst = arith.constant 0.000000e+00 : f32
    %2 = vector.broadcast %cst : f32 to vector<39x32xf32>
    %3 = vector.extract_strided_slice %1 {offsets = [0, 0], sizes = [39, 64], strides = [1, 1]} : vector<40x64xf32> to vector<39x64xf32>
    %4 = arith.truncf %3 : vector<39x64xf32> to vector<39x64xbf16>
    %c0_2 = arith.constant 0 : index
    %c0_3 = arith.constant 0 : index
    %c0_4 = arith.constant 0 : index
    %5 = vector.load %arg2[%c0_2, %c0_3, %c0_4] : memref<2x64x32xbf16, #tpu.memory_space<vmem>>, vector<1x64x32xbf16>
    %6 = vector.shape_cast %5 : vector<1x64x32xbf16> to vector<64x32xbf16>
    %cst_5 = arith.constant dense<0.000000e+00> : vector<39x32xf32>
    %7 = tpu.matmul %4, %6, %cst_5 {dimension_numbers = #tpu.dot_dimension_numbers<[1], [0], [0], [1], [0, 0, 1, 1], [], []>} : vector<39x64xbf16>, vector<64x32xbf16>, vector<39x32xf32> -> vector<39x32xf32>
    %8 = arith.addf %2, %7 : vector<39x32xf32>
    %9 = vector.extract_strided_slice %1 {offsets = [1, 0], sizes = [39, 64], strides = [1, 1]} : vector<40x64xf32> to vector<39x64xf32>
    %10 = arith.truncf %9 : vector<39x64xf32> to vector<39x64xbf16>
    %c1 = arith.constant 1 : index
    %c0_6 = arith.constant 0 : index
    %c0_7 = arith.constant 0 : index
    %11 = vector.load %arg2[%c1, %c0_6, %c0_7] : memref<2x64x32xbf16, #tpu.memory_space<vmem>>, vector<1x64x32xbf16>
    %12 = vector.shape_cast %11 : vector<1x64x32xbf16> to vector<64x32xbf16>
    %cst_8 = arith.constant dense<0.000000e+00> : vector<39x32xf32>
    %13 = tpu.matmul %10, %12, %cst_8 {dimension_numbers = #tpu.dot_dimension_numbers<[1], [0], [0], [1], [0, 0, 1, 1], [], []>} : vector<39x64xbf16>, vector<64x32xbf16>, vector<39x32xf32> -> vector<39x32xf32>
    %14 = arith.addf %8, %13 : vector<39x32xf32>
    %15 = arith.mulf %14, %14 : vector<39x32xf32>
    %16 = arith.mulf %14, %15 : vector<39x32xf32>
    %cst_9 = arith.constant 4.471500e-02 : f32
    %17 = vector.broadcast %cst_9 : f32 to vector<39x32xf32>
    %18 = arith.mulf %17, %16 : vector<39x32xf32>
    %19 = arith.addf %14, %18 : vector<39x32xf32>
    %cst_10 = arith.constant 0.797884583 : f32
    %20 = vector.broadcast %cst_10 : f32 to vector<39x32xf32>
    %21 = arith.mulf %20, %19 : vector<39x32xf32>
    %22 = math.tanh %21 : vector<39x32xf32>
    %cst_11 = arith.constant 1.000000e+00 : f32
    %23 = vector.broadcast %cst_11 : f32 to vector<39x32xf32>
    %24 = arith.addf %23, %22 : vector<39x32xf32>
    %cst_12 = arith.constant 5.000000e-01 : f32
    %25 = vector.broadcast %cst_12 : f32 to vector<39x32xf32>
    %26 = arith.mulf %25, %24 : vector<39x32xf32>
    %27 = arith.mulf %14, %26 : vector<39x32xf32>
    %c0_13 = arith.constant 0 : index
    %c0_14 = arith.constant 0 : index
    %c0_15 = arith.constant 0 : index
    %28 = vector.load %arg3[%c0_13, %c0_14, %c0_15] : memref<1x39x32xf32, #tpu.memory_space<vmem>>, vector<1x39x32xf32>
    %29 = vector.shape_cast %28 : vector<1x39x32xf32> to vector<39x32xf32>
    %30 = vector.shape_cast %27 : vector<39x32xf32> to vector<1x39x32xf32>
    tpu.vector_store %arg3[%c0_13, %c0_14, %c0_15], %30 {strides = array<i32>} : memref<1x39x32xf32, #tpu.memory_space<vmem>>, vector<1x39x32xf32>,
    return
  }
  func.func @transform_0(%arg0: i32) -> (i32, i32, i32) {
    %c0_i32 = arith.constant 0 : i32
    %c0_i32_0 = arith.constant 0 : i32
    %c0_i32_1 = arith.constant 0 : i32
    return %arg0, %c0_i32, %c0_i32_0 : i32, i32, i32
  }
  func.func @transform_1(%arg0: i32) -> (i32, i32, i32) {
    %c0_i32 = arith.constant 0 : i32
    %c0_i32_0 = arith.constant 0 : i32
    %c0_i32_1 = arith.constant 0 : i32
    %c0_i32_2 = arith.constant 0 : i32
    return %c0_i32, %c0_i32_0, %c0_i32_1 : i32, i32, i32
  }
  func.func @transform_2(%arg0: i32) -> (i32, i32, i32) {
    %c0_i32 = arith.constant 0 : i32
    %c0_i32_0 = arith.constant 0 : i32
    %c0_i32_1 = arith.constant 0 : i32
    return %arg0, %c0_i32, %c0_i32_0 : i32, i32, i32
  }
}

module attributes {stable_mosaic.version = 11 : i64} {
  func.func @body(%arg0: memref<38x32xf32, #tpu.memory_space<vmem>>, %arg1: memref<1x32xf32, #tpu.memory_space<vmem>>, %arg2: memref<1x32xf32, #tpu.memory_space<vmem>>, %arg3: memref<32x32xbf16, #tpu.memory_space<vmem>>, %arg4: memref<1x32xf32, #tpu.memory_space<vmem>>, %arg5: memref<38x32xf32, #tpu.memory_space<vmem>>) attributes {dimension_semantics = [], scalar_prefetch = 0 : i64, scratch_operands = 0 : i64, tpu.core_type = #tpu.core_type<tc>} {
    %c0 = arith.constant 0 : index
    %c0_0 = arith.constant 0 : index
    %0 = vector.load %arg0[%c0, %c0_0] : memref<38x32xf32, #tpu.memory_space<vmem>>, vector<38x32xf32>
    %c0_1 = arith.constant 0 : index
    %c0_2 = arith.constant 0 : index
    %1 = vector.load %arg1[%c0_1, %c0_2] : memref<1x32xf32, #tpu.memory_space<vmem>>, vector<1x32xf32>
    %c0_3 = arith.constant 0 : index
    %c0_4 = arith.constant 0 : index
    %2 = vector.load %arg2[%c0_3, %c0_4] : memref<1x32xf32, #tpu.memory_space<vmem>>, vector<1x32xf32>
    %cst = arith.constant dense<0.000000e+00> : vector<38xf32>
    %3 = vector.multi_reduction <add>, %0, %cst [1] : vector<38x32xf32> to vector<38xf32>
    %4 = vector.shape_cast %3 : vector<38xf32> to vector<38x1xf32>
    %cst_5 = arith.constant 3.200000e+01 : f32
    %5 = vector.broadcast %cst_5 : f32 to vector<38x1xf32>
    %6 = arith.divf %4, %5 : vector<38x1xf32>
    %7 = vector.broadcast %6 : vector<38x1xf32> to vector<38x32xf32>
    %8 = arith.subf %0, %7 : vector<38x32xf32>
    %9 = arith.mulf %8, %8 : vector<38x32xf32>
    %cst_6 = arith.constant dense<0.000000e+00> : vector<38xf32>
    %10 = vector.multi_reduction <add>, %9, %cst_6 [1] : vector<38x32xf32> to vector<38xf32>
    %11 = vector.shape_cast %10 : vector<38xf32> to vector<38x1xf32>
    %cst_7 = arith.constant 3.200000e+01 : f32
    %12 = vector.broadcast %cst_7 : f32 to vector<38x1xf32>
    %13 = arith.divf %11, %12 : vector<38x1xf32>
    %14 = vector.broadcast %6 : vector<38x1xf32> to vector<38x32xf32>
    %15 = arith.subf %0, %14 : vector<38x32xf32>
    %cst_8 = arith.constant 9.99999974E-6 : f32
    %16 = vector.broadcast %cst_8 : f32 to vector<38x1xf32>
    %17 = arith.addf %13, %16 : vector<38x1xf32>
    %18 = math.rsqrt %17 : vector<38x1xf32>
    %19 = vector.broadcast %18 : vector<38x1xf32> to vector<38x32xf32>
    %20 = arith.mulf %15, %19 : vector<38x32xf32>
    %21 = vector.broadcast %1 : vector<1x32xf32> to vector<38x32xf32>
    %22 = arith.mulf %20, %21 : vector<38x32xf32>
    %23 = vector.broadcast %2 : vector<1x32xf32> to vector<38x32xf32>
    %24 = arith.addf %22, %23 : vector<38x32xf32>
    %25 = arith.truncf %24 : vector<38x32xf32> to vector<38x32xbf16>
    %c0_9 = arith.constant 0 : index
    %c0_10 = arith.constant 0 : index
    %26 = vector.load %arg3[%c0_9, %c0_10] : memref<32x32xbf16, #tpu.memory_space<vmem>>, vector<32x32xbf16>
    %cst_11 = arith.constant dense<0.000000e+00> : vector<38x32xf32>
    %27 = tpu.matmul %25, %26, %cst_11 {dimension_numbers = #tpu.dot_dimension_numbers<[1], [0], [0], [1], [0, 0, 1, 1], [], []>} : vector<38x32xbf16>, vector<32x32xbf16>, vector<38x32xf32> -> vector<38x32xf32>
    %c0_12 = arith.constant 0 : index
    %c0_13 = arith.constant 0 : index
    %28 = vector.load %arg4[%c0_12, %c0_13] : memref<1x32xf32, #tpu.memory_space<vmem>>, vector<1x32xf32>
    %29 = vector.broadcast %28 : vector<1x32xf32> to vector<38x32xf32>
    %30 = arith.addf %27, %29 : vector<38x32xf32>
    %c0_14 = arith.constant 0 : index
    %c0_15 = arith.constant 0 : index
    %31 = vector.load %arg5[%c0_14, %c0_15] : memref<38x32xf32, #tpu.memory_space<vmem>>, vector<38x32xf32>
    tpu.vector_store %arg5[%c0_14, %c0_15], %30 {strides = array<i32>} : memref<38x32xf32, #tpu.memory_space<vmem>>, vector<38x32xf32>,
    return
  }
}

module attributes {stable_mosaic.version = 11 : i64} {
  func.func @body(%arg0: i32, %arg1: memref<1x20x64xf32, #tpu.memory_space<vmem>>, %arg2: memref<2x64x32xbf16, #tpu.memory_space<vmem>>, %arg3: memref<1x19x32xf32, #tpu.memory_space<vmem>>) attributes {dimension_semantics = [#tpu.dimension_semantics<parallel>], iteration_bounds = array<i64: 2>, scalar_prefetch = 0 : i64, scratch_operands = 0 : i64, tpu.core_type = #tpu.core_type<tc>, window_params = [{transform_indices = @transform_0, window_bounds = array<i64: 1, 20, 64>}, {pipeline_mode = #tpu.pipeline_mode<synchronous>, transform_indices = @transform_1, window_bounds = array<i64: 2, 64, 32>}, {transform_indices = @transform_2, window_bounds = array<i64: 1, 19, 32>}]} {
    %c0 = arith.constant 0 : index
    %c0_0 = arith.constant 0 : index
    %c0_1 = arith.constant 0 : index
    %0 = vector.load %arg1[%c0, %c0_0, %c0_1] : memref<1x20x64xf32, #tpu.memory_space<vmem>>, vector<1x20x64xf32>
    %1 = vector.shape_cast %0 : vector<1x20x64xf32> to vector<20x64xf32>
    %cst = arith.constant 0.000000e+00 : f32
    %2 = vector.broadcast %cst : f32 to vector<19x32xf32>
    %3 = vector.extract_strided_slice %1 {offsets = [0, 0], sizes = [19, 64], strides = [1, 1]} : vector<20x64xf32> to vector<19x64xf32>
    %4 = arith.truncf %3 : vector<19x64xf32> to vector<19x64xbf16>
    %c0_2 = arith.constant 0 : index
    %c0_3 = arith.constant 0 : index
    %c0_4 = arith.constant 0 : index
    %5 = vector.load %arg2[%c0_2, %c0_3, %c0_4] : memref<2x64x32xbf16, #tpu.memory_space<vmem>>, vector<1x64x32xbf16>
    %6 = vector.shape_cast %5 : vector<1x64x32xbf16> to vector<64x32xbf16>
    %cst_5 = arith.constant dense<0.000000e+00> : vector<19x32xf32>
    %7 = tpu.matmul %4, %6, %cst_5 {dimension_numbers = #tpu.dot_dimension_numbers<[1], [0], [0], [1], [0, 0, 1, 1], [], []>} : vector<19x64xbf16>, vector<64x32xbf16>, vector<19x32xf32> -> vector<19x32xf32>
    %8 = arith.addf %2, %7 : vector<19x32xf32>
    %9 = vector.extract_strided_slice %1 {offsets = [1, 0], sizes = [19, 64], strides = [1, 1]} : vector<20x64xf32> to vector<19x64xf32>
    %10 = arith.truncf %9 : vector<19x64xf32> to vector<19x64xbf16>
    %c1 = arith.constant 1 : index
    %c0_6 = arith.constant 0 : index
    %c0_7 = arith.constant 0 : index
    %11 = vector.load %arg2[%c1, %c0_6, %c0_7] : memref<2x64x32xbf16, #tpu.memory_space<vmem>>, vector<1x64x32xbf16>
    %12 = vector.shape_cast %11 : vector<1x64x32xbf16> to vector<64x32xbf16>
    %cst_8 = arith.constant dense<0.000000e+00> : vector<19x32xf32>
    %13 = tpu.matmul %10, %12, %cst_8 {dimension_numbers = #tpu.dot_dimension_numbers<[1], [0], [0], [1], [0, 0, 1, 1], [], []>} : vector<19x64xbf16>, vector<64x32xbf16>, vector<19x32xf32> -> vector<19x32xf32>
    %14 = arith.addf %8, %13 : vector<19x32xf32>
    %15 = arith.mulf %14, %14 : vector<19x32xf32>
    %16 = arith.mulf %14, %15 : vector<19x32xf32>
    %cst_9 = arith.constant 4.471500e-02 : f32
    %17 = vector.broadcast %cst_9 : f32 to vector<19x32xf32>
    %18 = arith.mulf %17, %16 : vector<19x32xf32>
    %19 = arith.addf %14, %18 : vector<19x32xf32>
    %cst_10 = arith.constant 0.797884583 : f32
    %20 = vector.broadcast %cst_10 : f32 to vector<19x32xf32>
    %21 = arith.mulf %20, %19 : vector<19x32xf32>
    %22 = math.tanh %21 : vector<19x32xf32>
    %cst_11 = arith.constant 1.000000e+00 : f32
    %23 = vector.broadcast %cst_11 : f32 to vector<19x32xf32>
    %24 = arith.addf %23, %22 : vector<19x32xf32>
    %cst_12 = arith.constant 5.000000e-01 : f32
    %25 = vector.broadcast %cst_12 : f32 to vector<19x32xf32>
    %26 = arith.mulf %25, %24 : vector<19x32xf32>
    %27 = arith.mulf %14, %26 : vector<19x32xf32>
    %c0_13 = arith.constant 0 : index
    %c0_14 = arith.constant 0 : index
    %c0_15 = arith.constant 0 : index
    %28 = vector.load %arg3[%c0_13, %c0_14, %c0_15] : memref<1x19x32xf32, #tpu.memory_space<vmem>>, vector<1x19x32xf32>
    %29 = vector.shape_cast %28 : vector<1x19x32xf32> to vector<19x32xf32>
    %30 = vector.shape_cast %27 : vector<19x32xf32> to vector<1x19x32xf32>
    tpu.vector_store %arg3[%c0_13, %c0_14, %c0_15], %30 {strides = array<i32>} : memref<1x19x32xf32, #tpu.memory_space<vmem>>, vector<1x19x32xf32>,
    return
  }
  func.func @transform_0(%arg0: i32) -> (i32, i32, i32) {
    %c0_i32 = arith.constant 0 : i32
    %c0_i32_0 = arith.constant 0 : i32
    %c0_i32_1 = arith.constant 0 : i32
    return %arg0, %c0_i32, %c0_i32_0 : i32, i32, i32
  }
  func.func @transform_1(%arg0: i32) -> (i32, i32, i32) {
    %c0_i32 = arith.constant 0 : i32
    %c0_i32_0 = arith.constant 0 : i32
    %c0_i32_1 = arith.constant 0 : i32
    %c0_i32_2 = arith.constant 0 : i32
    return %c0_i32, %c0_i32_0, %c0_i32_1 : i32, i32, i32
  }
  func.func @transform_2(%arg0: i32) -> (i32, i32, i32) {
    %c0_i32 = arith.constant 0 : i32
    %c0_i32_0 = arith.constant 0 : i32
    %c0_i32_1 = arith.constant 0 : i32
    return %arg0, %c0_i32, %c0_i32_0 : i32, i32, i32
  }
}

module attributes {stable_mosaic.version = 11 : i64} {
  func.func @body(%arg0: i32, %arg1: memref<1x21x32xf32, #tpu.memory_space<vmem>>, %arg2: memref<3x32x32xbf16, #tpu.memory_space<vmem>>, %arg3: memref<1x32xf32, #tpu.memory_space<vmem>>, %arg4: memref<1x32xf32, #tpu.memory_space<vmem>>, %arg5: memref<1x32xf32, #tpu.memory_space<vmem>>, %arg6: memref<1x19x32xf32, #tpu.memory_space<vmem>>) attributes {dimension_semantics = [#tpu.dimension_semantics<parallel>], iteration_bounds = array<i64: 2>, scalar_prefetch = 0 : i64, scratch_operands = 0 : i64, tpu.core_type = #tpu.core_type<tc>, window_params = [{transform_indices = @transform_0, window_bounds = array<i64: 1, 21, 32>}, {pipeline_mode = #tpu.pipeline_mode<synchronous>, transform_indices = @transform_1, window_bounds = array<i64: 3, 32, 32>}, {pipeline_mode = #tpu.pipeline_mode<synchronous>, transform_indices = @transform_2, window_bounds = array<i64: 1, 32>}, {pipeline_mode = #tpu.pipeline_mode<synchronous>, transform_indices = @transform_3, window_bounds = array<i64: 1, 32>}, {pipeline_mode = #tpu.pipeline_mode<synchronous>, transform_indices = @transform_4, window_bounds = array<i64: 1, 32>}, {transform_indices = @transform_5, window_bounds = array<i64: 1, 19, 32>}]} {
    %c0 = arith.constant 0 : index
    %c0_0 = arith.constant 0 : index
    %c0_1 = arith.constant 0 : index
    %0 = vector.load %arg1[%c0, %c0_0, %c0_1] : memref<1x21x32xf32, #tpu.memory_space<vmem>>, vector<1x21x32xf32>
    %1 = vector.shape_cast %0 : vector<1x21x32xf32> to vector<21x32xf32>
    %2 = vector.extract_strided_slice %1 {offsets = [1, 0], sizes = [19, 32], strides = [1, 1]} : vector<21x32xf32> to vector<19x32xf32>
    %cst = arith.constant 0.000000e+00 : f32
    %3 = vector.broadcast %cst : f32 to vector<19x32xf32>
    %4 = vector.extract_strided_slice %1 {offsets = [0, 0], sizes = [19, 32], strides = [1, 1]} : vector<21x32xf32> to vector<19x32xf32>
    %5 = arith.truncf %4 : vector<19x32xf32> to vector<19x32xbf16>
    %c0_2 = arith.constant 0 : index
    %c0_3 = arith.constant 0 : index
    %c0_4 = arith.constant 0 : index
    %6 = vector.load %arg2[%c0_2, %c0_3, %c0_4] : memref<3x32x32xbf16, #tpu.memory_space<vmem>>, vector<1x32x32xbf16>
    %7 = vector.shape_cast %6 : vector<1x32x32xbf16> to vector<32x32xbf16>
    %cst_5 = arith.constant dense<0.000000e+00> : vector<19x32xf32>
    %8 = tpu.matmul %5, %7, %cst_5 {dimension_numbers = #tpu.dot_dimension_numbers<[1], [0], [0], [1], [0, 0, 1, 1], [], []>} : vector<19x32xbf16>, vector<32x32xbf16>, vector<19x32xf32> -> vector<19x32xf32>
    %9 = arith.addf %3, %8 : vector<19x32xf32>
    %10 = vector.extract_strided_slice %1 {offsets = [1, 0], sizes = [19, 32], strides = [1, 1]} : vector<21x32xf32> to vector<19x32xf32>
    %11 = arith.truncf %10 : vector<19x32xf32> to vector<19x32xbf16>
    %c1 = arith.constant 1 : index
    %c0_6 = arith.constant 0 : index
    %c0_7 = arith.constant 0 : index
    %12 = vector.load %arg2[%c1, %c0_6, %c0_7] : memref<3x32x32xbf16, #tpu.memory_space<vmem>>, vector<1x32x32xbf16>
    %13 = vector.shape_cast %12 : vector<1x32x32xbf16> to vector<32x32xbf16>
    %cst_8 = arith.constant dense<0.000000e+00> : vector<19x32xf32>
    %14 = tpu.matmul %11, %13, %cst_8 {dimension_numbers = #tpu.dot_dimension_numbers<[1], [0], [0], [1], [0, 0, 1, 1], [], []>} : vector<19x32xbf16>, vector<32x32xbf16>, vector<19x32xf32> -> vector<19x32xf32>
    %15 = arith.addf %9, %14 : vector<19x32xf32>
    %16 = vector.extract_strided_slice %1 {offsets = [2, 0], sizes = [19, 32], strides = [1, 1]} : vector<21x32xf32> to vector<19x32xf32>
    %17 = arith.truncf %16 : vector<19x32xf32> to vector<19x32xbf16>
    %c2 = arith.constant 2 : index
    %c0_9 = arith.constant 0 : index
    %c0_10 = arith.constant 0 : index
    %18 = vector.load %arg2[%c2, %c0_9, %c0_10] : memref<3x32x32xbf16, #tpu.memory_space<vmem>>, vector<1x32x32xbf16>
    %19 = vector.shape_cast %18 : vector<1x32x32xbf16> to vector<32x32xbf16>
    %cst_11 = arith.constant dense<0.000000e+00> : vector<19x32xf32>
    %20 = tpu.matmul %17, %19, %cst_11 {dimension_numbers = #tpu.dot_dimension_numbers<[1], [0], [0], [1], [0, 0, 1, 1], [], []>} : vector<19x32xbf16>, vector<32x32xbf16>, vector<19x32xf32> -> vector<19x32xf32>
    %21 = arith.addf %15, %20 : vector<19x32xf32>
    %c0_12 = arith.constant 0 : index
    %c0_13 = arith.constant 0 : index
    %22 = vector.load %arg3[%c0_12, %c0_13] : memref<1x32xf32, #tpu.memory_space<vmem>>, vector<1x32xf32>
    %23 = vector.broadcast %22 : vector<1x32xf32> to vector<19x32xf32>
    %24 = arith.addf %21, %23 : vector<19x32xf32>
    %25 = arith.mulf %24, %24 : vector<19x32xf32>
    %26 = arith.mulf %24, %25 : vector<19x32xf32>
    %cst_14 = arith.constant 4.471500e-02 : f32
    %27 = vector.broadcast %cst_14 : f32 to vector<19x32xf32>
    %28 = arith.mulf %27, %26 : vector<19x32xf32>
    %29 = arith.addf %24, %28 : vector<19x32xf32>
    %cst_15 = arith.constant 0.797884583 : f32
    %30 = vector.broadcast %cst_15 : f32 to vector<19x32xf32>
    %31 = arith.mulf %30, %29 : vector<19x32xf32>
    %32 = math.tanh %31 : vector<19x32xf32>
    %cst_16 = arith.constant 1.000000e+00 : f32
    %33 = vector.broadcast %cst_16 : f32 to vector<19x32xf32>
    %34 = arith.addf %33, %32 : vector<19x32xf32>
    %cst_17 = arith.constant 5.000000e-01 : f32
    %35 = vector.broadcast %cst_17 : f32 to vector<19x32xf32>
    %36 = arith.mulf %35, %34 : vector<19x32xf32>
    %37 = arith.mulf %24, %36 : vector<19x32xf32>
    %38 = arith.addf %2, %37 : vector<19x32xf32>
    %c0_18 = arith.constant 0 : index
    %c0_19 = arith.constant 0 : index
    %39 = vector.load %arg4[%c0_18, %c0_19] : memref<1x32xf32, #tpu.memory_space<vmem>>, vector<1x32xf32>
    %c0_20 = arith.constant 0 : index
    %c0_21 = arith.constant 0 : index
    %40 = vector.load %arg5[%c0_20, %c0_21] : memref<1x32xf32, #tpu.memory_space<vmem>>, vector<1x32xf32>
    %cst_22 = arith.constant dense<0.000000e+00> : vector<19xf32>
    %41 = vector.multi_reduction <add>, %38, %cst_22 [1] : vector<19x32xf32> to vector<19xf32>
    %42 = vector.shape_cast %41 : vector<19xf32> to vector<19x1xf32>
    %cst_23 = arith.constant 3.200000e+01 : f32
    %43 = vector.broadcast %cst_23 : f32 to vector<19x1xf32>
    %44 = arith.divf %42, %43 : vector<19x1xf32>
    %45 = vector.broadcast %44 : vector<19x1xf32> to vector<19x32xf32>
    %46 = arith.subf %38, %45 : vector<19x32xf32>
    %47 = arith.mulf %46, %46 : vector<19x32xf32>
    %cst_24 = arith.constant dense<0.000000e+00> : vector<19xf32>
    %48 = vector.multi_reduction <add>, %47, %cst_24 [1] : vector<19x32xf32> to vector<19xf32>
    %49 = vector.shape_cast %48 : vector<19xf32> to vector<19x1xf32>
    %cst_25 = arith.constant 3.200000e+01 : f32
    %50 = vector.broadcast %cst_25 : f32 to vector<19x1xf32>
    %51 = arith.divf %49, %50 : vector<19x1xf32>
    %52 = vector.broadcast %44 : vector<19x1xf32> to vector<19x32xf32>
    %53 = arith.subf %38, %52 : vector<19x32xf32>
    %cst_26 = arith.constant 9.99999974E-6 : f32
    %54 = vector.broadcast %cst_26 : f32 to vector<19x1xf32>
    %55 = arith.addf %51, %54 : vector<19x1xf32>
    %56 = math.rsqrt %55 : vector<19x1xf32>
    %57 = vector.broadcast %56 : vector<19x1xf32> to vector<19x32xf32>
    %58 = arith.mulf %53, %57 : vector<19x32xf32>
    %59 = vector.broadcast %39 : vector<1x32xf32> to vector<19x32xf32>
    %60 = arith.mulf %58, %59 : vector<19x32xf32>
    %61 = vector.broadcast %40 : vector<1x32xf32> to vector<19x32xf32>
    %62 = arith.addf %60, %61 : vector<19x32xf32>
    %c0_27 = arith.constant 0 : index
    %c0_28 = arith.constant 0 : index
    %c0_29 = arith.constant 0 : index
    %63 = vector.load %arg6[%c0_27, %c0_28, %c0_29] : memref<1x19x32xf32, #tpu.memory_space<vmem>>, vector<1x19x32xf32>
    %64 = vector.shape_cast %63 : vector<1x19x32xf32> to vector<19x32xf32>
    %65 = vector.shape_cast %62 : vector<19x32xf32> to vector<1x19x32xf32>
    tpu.vector_store %arg6[%c0_27, %c0_28, %c0_29], %65 {strides = array<i32>} : memref<1x19x32xf32, #tpu.memory_space<vmem>>, vector<1x19x32xf32>,
    return
  }
  func.func @transform_0(%arg0: i32) -> (i32, i32, i32) {
    %c0_i32 = arith.constant 0 : i32
    %c0_i32_0 = arith.constant 0 : i32
    %c0_i32_1 = arith.constant 0 : i32
    return %arg0, %c0_i32, %c0_i32_0 : i32, i32, i32
  }
  func.func @transform_1(%arg0: i32) -> (i32, i32, i32) {
    %c0_i32 = arith.constant 0 : i32
    %c0_i32_0 = arith.constant 0 : i32
    %c0_i32_1 = arith.constant 0 : i32
    %c0_i32_2 = arith.constant 0 : i32
    return %c0_i32, %c0_i32_0, %c0_i32_1 : i32, i32, i32
  }
  func.func @transform_2(%arg0: i32) -> (i32, i32) {
    %c0_i32 = arith.constant 0 : i32
    %c0_i32_0 = arith.constant 0 : i32
    %c0_i32_1 = arith.constant 0 : i32
    return %c0_i32, %c0_i32_0 : i32, i32
  }
  func.func @transform_3(%arg0: i32) -> (i32, i32) {
    %c0_i32 = arith.constant 0 : i32
    %c0_i32_0 = arith.constant 0 : i32
    %c0_i32_1 = arith.constant 0 : i32
    return %c0_i32, %c0_i32_0 : i32, i32
  }
  func.func @transform_4(%arg0: i32) -> (i32, i32) {
    %c0_i32 = arith.constant 0 : i32
    %c0_i32_0 = arith.constant 0 : i32
    %c0_i32_1 = arith.constant 0 : i32
    return %c0_i32, %c0_i32_0 : i32, i32
  }
  func.func @transform_5(%arg0: i32) -> (i32, i32, i32) {
    %c0_i32 = arith.constant 0 : i32
    %c0_i32_0 = arith.constant 0 : i32
    %c0_i32_1 = arith.constant 0 : i32
    return %arg0, %c0_i32, %c0_i32_0 : i32, i32, i32
  }
}

module attributes {stable_mosaic.version = 11 : i64} {
  func.func @body(%arg0: i32, %arg1: memref<1x19x32xf32, #tpu.memory_space<vmem>>, %arg2: memref<32x96xbf16, #tpu.memory_space<vmem>>, %arg3: memref<1x96xf32, #tpu.memory_space<vmem>>, %arg4: memref<32x32xbf16, #tpu.memory_space<vmem>>, %arg5: memref<1x32xf32, #tpu.memory_space<vmem>>, %arg6: memref<1x32xf32, #tpu.memory_space<vmem>>, %arg7: memref<1x32xf32, #tpu.memory_space<vmem>>, %arg8: memref<32x64xbf16, #tpu.memory_space<vmem>>, %arg9: memref<1x64xf32, #tpu.memory_space<vmem>>, %arg10: memref<64x32xbf16, #tpu.memory_space<vmem>>, %arg11: memref<1x32xf32, #tpu.memory_space<vmem>>, %arg12: memref<1x32xf32, #tpu.memory_space<vmem>>, %arg13: memref<1x32xf32, #tpu.memory_space<vmem>>, %arg14: memref<1x19x32xf32, #tpu.memory_space<vmem>>) attributes {dimension_semantics = [#tpu.dimension_semantics<parallel>], iteration_bounds = array<i64: 2>, scalar_prefetch = 0 : i64, scratch_operands = 0 : i64, tpu.core_type = #tpu.core_type<tc>, window_params = [{transform_indices = @transform_0, window_bounds = array<i64: 1, 19, 32>}, {pipeline_mode = #tpu.pipeline_mode<synchronous>, transform_indices = @transform_1, window_bounds = array<i64: 32, 96>}, {pipeline_mode = #tpu.pipeline_mode<synchronous>, transform_indices = @transform_2, window_bounds = array<i64: 1, 96>}, {pipeline_mode = #tpu.pipeline_mode<synchronous>, transform_indices = @transform_3, window_bounds = array<i64: 32, 32>}, {pipeline_mode = #tpu.pipeline_mode<synchronous>, transform_indices = @transform_4, window_bounds = array<i64: 1, 32>}, {pipeline_mode = #tpu.pipeline_mode<synchronous>, transform_indices = @transform_5, window_bounds = array<i64: 1, 32>}, {pipeline_mode = #tpu.pipeline_mode<synchronous>, transform_indices = @transform_6, window_bounds = array<i64: 1, 32>}, {pipeline_mode = #tpu.pipeline_mode<synchronous>, transform_indices = @transform_7, window_bounds = array<i64: 32, 64>}, {pipeline_mode = #tpu.pipeline_mode<synchronous>, transform_indices = @transform_8, window_bounds = array<i64: 1, 64>}, {pipeline_mode = #tpu.pipeline_mode<synchronous>, transform_indices = @transform_9, window_bounds = array<i64: 64, 32>}, {pipeline_mode = #tpu.pipeline_mode<synchronous>, transform_indices = @transform_10, window_bounds = array<i64: 1, 32>}, {pipeline_mode = #tpu.pipeline_mode<synchronous>, transform_indices = @transform_11, window_bounds = array<i64: 1, 32>}, {pipeline_mode = #tpu.pipeline_mode<synchronous>, transform_indices = @transform_12, window_bounds = array<i64: 1, 32>}, {transform_indices = @transform_13, window_bounds = array<i64: 1, 19, 32>}]} {
    %c0 = arith.constant 0 : index
    %c0_0 = arith.constant 0 : index
    %c0_1 = arith.constant 0 : index
    %0 = vector.load %arg1[%c0, %c0_0, %c0_1] : memref<1x19x32xf32, #tpu.memory_space<vmem>>, vector<1x19x32xf32>
    %1 = vector.shape_cast %0 : vector<1x19x32xf32> to vector<19x32xf32>
    %2 = arith.truncf %1 : vector<19x32xf32> to vector<19x32xbf16>
    %c0_2 = arith.constant 0 : index
    %c0_3 = arith.constant 0 : index
    %3 = vector.load %arg2[%c0_2, %c0_3] : memref<32x96xbf16, #tpu.memory_space<vmem>>, vector<32x96xbf16>
    %cst = arith.constant dense<0.000000e+00> : vector<19x96xf32>
    %4 = tpu.matmul %2, %3, %cst {dimension_numbers = #tpu.dot_dimension_numbers<[1], [0], [0], [1], [0, 0, 1, 1], [], []>} : vector<19x32xbf16>, vector<32x96xbf16>, vector<19x96xf32> -> vector<19x96xf32>
    %c0_4 = arith.constant 0 : index
    %c0_5 = arith.constant 0 : index
    %5 = vector.load %arg3[%c0_4, %c0_5] : memref<1x96xf32, #tpu.memory_space<vmem>>, vector<1x96xf32>
    %6 = vector.broadcast %5 : vector<1x96xf32> to vector<19x96xf32>
    %7 = arith.addf %4, %6 : vector<19x96xf32>
    %c0_6 = arith.constant 0 : index
    %c0_7 = arith.constant 0 : index
    %8 = vector.load %arg4[%c0_6, %c0_7] : memref<32x32xbf16, #tpu.memory_space<vmem>>, vector<32x32xbf16>
    %cst_8 = arith.constant 0.000000e+00 : f32
    %9 = vector.broadcast %cst_8 : f32 to vector<19x32xf32>
    %10 = vector.extract_strided_slice %7 {offsets = [0, 0], sizes = [19, 8], strides = [1, 1]} : vector<19x96xf32> to vector<19x8xf32>
    %11 = arith.truncf %10 : vector<19x8xf32> to vector<19x8xbf16>
    %12 = vector.extract_strided_slice %7 {offsets = [0, 32], sizes = [19, 8], strides = [1, 1]} : vector<19x96xf32> to vector<19x8xf32>
    %13 = arith.truncf %12 : vector<19x8xf32> to vector<19x8xbf16>
    %14 = vector.extract_strided_slice %7 {offsets = [0, 64], sizes = [19, 8], strides = [1, 1]} : vector<19x96xf32> to vector<19x8xf32>
    %15 = arith.truncf %14 : vector<19x8xf32> to vector<19x8xbf16>
    %cst_9 = arith.constant dense<0.000000e+00> : vector<19x19xf32>
    %16 = tpu.matmul %11, %13, %cst_9 {dimension_numbers = #tpu.dot_dimension_numbers<[1], [1], [0], [0], [0, 0, 1, 0], [], []>} : vector<19x8xbf16>, vector<19x8xbf16>, vector<19x19xf32> -> vector<19x19xf32>
    %cst_10 = arith.constant 0.353553385 : f32
    %17 = vector.broadcast %cst_10 : f32 to vector<19x19xf32>
    %18 = arith.mulf %16, %17 : vector<19x19xf32>
    %cst_11 = arith.constant dense<0xFF800000> : vector<19xf32>
    %19 = vector.multi_reduction <maximumf>, %18, %cst_11 [1] : vector<19x19xf32> to vector<19xf32>
    %20 = vector.shape_cast %19 : vector<19xf32> to vector<19x1xf32>
    %21 = vector.broadcast %20 : vector<19x1xf32> to vector<19x19xf32>
    %22 = arith.subf %18, %21 : vector<19x19xf32>
    %23 = math.exp %22 : vector<19x19xf32>
    %cst_12 = arith.constant dense<0.000000e+00> : vector<19xf32>
    %24 = vector.multi_reduction <add>, %23, %cst_12 [1] : vector<19x19xf32> to vector<19xf32>
    %25 = vector.shape_cast %24 : vector<19xf32> to vector<19x1xf32>
    %26 = tpu.reciprocal %25 {approx = true} : vector<19x1xf32> -> vector<19x1xf32>
    %27 = vector.broadcast %26 : vector<19x1xf32> to vector<19x19xf32>
    %28 = arith.mulf %23, %27 : vector<19x19xf32>
    %29 = arith.truncf %28 : vector<19x19xf32> to vector<19x19xbf16>
    %cst_13 = arith.constant dense<0.000000e+00> : vector<19x8xf32>
    %30 = tpu.matmul %29, %15, %cst_13 {dimension_numbers = #tpu.dot_dimension_numbers<[1], [0], [0], [1], [0, 0, 1, 1], [], []>} : vector<19x19xbf16>, vector<19x8xbf16>, vector<19x8xf32> -> vector<19x8xf32>
    %31 = arith.truncf %30 : vector<19x8xf32> to vector<19x8xbf16>
    %32 = vector.extract_strided_slice %8 {offsets = [0, 0], sizes = [8, 32], strides = [1, 1]} : vector<32x32xbf16> to vector<8x32xbf16>
    %cst_14 = arith.constant dense<0.000000e+00> : vector<19x32xf32>
    %33 = tpu.matmul %31, %32, %cst_14 {dimension_numbers = #tpu.dot_dimension_numbers<[1], [0], [0], [1], [0, 0, 1, 1], [], []>} : vector<19x8xbf16>, vector<8x32xbf16>, vector<19x32xf32> -> vector<19x32xf32>
    %34 = arith.addf %9, %33 : vector<19x32xf32>
    %35 = vector.extract_strided_slice %7 {offsets = [0, 8], sizes = [19, 8], strides = [1, 1]} : vector<19x96xf32> to vector<19x8xf32>
    %36 = arith.truncf %35 : vector<19x8xf32> to vector<19x8xbf16>
    %37 = vector.extract_strided_slice %7 {offsets = [0, 40], sizes = [19, 8], strides = [1, 1]} : vector<19x96xf32> to vector<19x8xf32>
    %38 = arith.truncf %37 : vector<19x8xf32> to vector<19x8xbf16>
    %39 = vector.extract_strided_slice %7 {offsets = [0, 72], sizes = [19, 8], strides = [1, 1]} : vector<19x96xf32> to vector<19x8xf32>
    %40 = arith.truncf %39 : vector<19x8xf32> to vector<19x8xbf16>
    %cst_15 = arith.constant dense<0.000000e+00> : vector<19x19xf32>
    %41 = tpu.matmul %36, %38, %cst_15 {dimension_numbers = #tpu.dot_dimension_numbers<[1], [1], [0], [0], [0, 0, 1, 0], [], []>} : vector<19x8xbf16>, vector<19x8xbf16>, vector<19x19xf32> -> vector<19x19xf32>
    %cst_16 = arith.constant 0.353553385 : f32
    %42 = vector.broadcast %cst_16 : f32 to vector<19x19xf32>
    %43 = arith.mulf %41, %42 : vector<19x19xf32>
    %cst_17 = arith.constant dense<0xFF800000> : vector<19xf32>
    %44 = vector.multi_reduction <maximumf>, %43, %cst_17 [1] : vector<19x19xf32> to vector<19xf32>
    %45 = vector.shape_cast %44 : vector<19xf32> to vector<19x1xf32>
    %46 = vector.broadcast %45 : vector<19x1xf32> to vector<19x19xf32>
    %47 = arith.subf %43, %46 : vector<19x19xf32>
    %48 = math.exp %47 : vector<19x19xf32>
    %cst_18 = arith.constant dense<0.000000e+00> : vector<19xf32>
    %49 = vector.multi_reduction <add>, %48, %cst_18 [1] : vector<19x19xf32> to vector<19xf32>
    %50 = vector.shape_cast %49 : vector<19xf32> to vector<19x1xf32>
    %51 = tpu.reciprocal %50 {approx = true} : vector<19x1xf32> -> vector<19x1xf32>
    %52 = vector.broadcast %51 : vector<19x1xf32> to vector<19x19xf32>
    %53 = arith.mulf %48, %52 : vector<19x19xf32>
    %54 = arith.truncf %53 : vector<19x19xf32> to vector<19x19xbf16>
    %cst_19 = arith.constant dense<0.000000e+00> : vector<19x8xf32>
    %55 = tpu.matmul %54, %40, %cst_19 {dimension_numbers = #tpu.dot_dimension_numbers<[1], [0], [0], [1], [0, 0, 1, 1], [], []>} : vector<19x19xbf16>, vector<19x8xbf16>, vector<19x8xf32> -> vector<19x8xf32>
    %56 = arith.truncf %55 : vector<19x8xf32> to vector<19x8xbf16>
    %57 = vector.extract_strided_slice %8 {offsets = [8, 0], sizes = [8, 32], strides = [1, 1]} : vector<32x32xbf16> to vector<8x32xbf16>
    %cst_20 = arith.constant dense<0.000000e+00> : vector<19x32xf32>
    %58 = tpu.matmul %56, %57, %cst_20 {dimension_numbers = #tpu.dot_dimension_numbers<[1], [0], [0], [1], [0, 0, 1, 1], [], []>} : vector<19x8xbf16>, vector<8x32xbf16>, vector<19x32xf32> -> vector<19x32xf32>
    %59 = arith.addf %34, %58 : vector<19x32xf32>
    %60 = vector.extract_strided_slice %7 {offsets = [0, 16], sizes = [19, 8], strides = [1, 1]} : vector<19x96xf32> to vector<19x8xf32>
    %61 = arith.truncf %60 : vector<19x8xf32> to vector<19x8xbf16>
    %62 = vector.extract_strided_slice %7 {offsets = [0, 48], sizes = [19, 8], strides = [1, 1]} : vector<19x96xf32> to vector<19x8xf32>
    %63 = arith.truncf %62 : vector<19x8xf32> to vector<19x8xbf16>
    %64 = vector.extract_strided_slice %7 {offsets = [0, 80], sizes = [19, 8], strides = [1, 1]} : vector<19x96xf32> to vector<19x8xf32>
    %65 = arith.truncf %64 : vector<19x8xf32> to vector<19x8xbf16>
    %cst_21 = arith.constant dense<0.000000e+00> : vector<19x19xf32>
    %66 = tpu.matmul %61, %63, %cst_21 {dimension_numbers = #tpu.dot_dimension_numbers<[1], [1], [0], [0], [0, 0, 1, 0], [], []>} : vector<19x8xbf16>, vector<19x8xbf16>, vector<19x19xf32> -> vector<19x19xf32>
    %cst_22 = arith.constant 0.353553385 : f32
    %67 = vector.broadcast %cst_22 : f32 to vector<19x19xf32>
    %68 = arith.mulf %66, %67 : vector<19x19xf32>
    %cst_23 = arith.constant dense<0xFF800000> : vector<19xf32>
    %69 = vector.multi_reduction <maximumf>, %68, %cst_23 [1] : vector<19x19xf32> to vector<19xf32>
    %70 = vector.shape_cast %69 : vector<19xf32> to vector<19x1xf32>
    %71 = vector.broadcast %70 : vector<19x1xf32> to vector<19x19xf32>
    %72 = arith.subf %68, %71 : vector<19x19xf32>
    %73 = math.exp %72 : vector<19x19xf32>
    %cst_24 = arith.constant dense<0.000000e+00> : vector<19xf32>
    %74 = vector.multi_reduction <add>, %73, %cst_24 [1] : vector<19x19xf32> to vector<19xf32>
    %75 = vector.shape_cast %74 : vector<19xf32> to vector<19x1xf32>
    %76 = tpu.reciprocal %75 {approx = true} : vector<19x1xf32> -> vector<19x1xf32>
    %77 = vector.broadcast %76 : vector<19x1xf32> to vector<19x19xf32>
    %78 = arith.mulf %73, %77 : vector<19x19xf32>
    %79 = arith.truncf %78 : vector<19x19xf32> to vector<19x19xbf16>
    %cst_25 = arith.constant dense<0.000000e+00> : vector<19x8xf32>
    %80 = tpu.matmul %79, %65, %cst_25 {dimension_numbers = #tpu.dot_dimension_numbers<[1], [0], [0], [1], [0, 0, 1, 1], [], []>} : vector<19x19xbf16>, vector<19x8xbf16>, vector<19x8xf32> -> vector<19x8xf32>
    %81 = arith.truncf %80 : vector<19x8xf32> to vector<19x8xbf16>
    %82 = vector.extract_strided_slice %8 {offsets = [16, 0], sizes = [8, 32], strides = [1, 1]} : vector<32x32xbf16> to vector<8x32xbf16>
    %cst_26 = arith.constant dense<0.000000e+00> : vector<19x32xf32>
    %83 = tpu.matmul %81, %82, %cst_26 {dimension_numbers = #tpu.dot_dimension_numbers<[1], [0], [0], [1], [0, 0, 1, 1], [], []>} : vector<19x8xbf16>, vector<8x32xbf16>, vector<19x32xf32> -> vector<19x32xf32>
    %84 = arith.addf %59, %83 : vector<19x32xf32>
    %85 = vector.extract_strided_slice %7 {offsets = [0, 24], sizes = [19, 8], strides = [1, 1]} : vector<19x96xf32> to vector<19x8xf32>
    %86 = arith.truncf %85 : vector<19x8xf32> to vector<19x8xbf16>
    %87 = vector.extract_strided_slice %7 {offsets = [0, 56], sizes = [19, 8], strides = [1, 1]} : vector<19x96xf32> to vector<19x8xf32>
    %88 = arith.truncf %87 : vector<19x8xf32> to vector<19x8xbf16>
    %89 = vector.extract_strided_slice %7 {offsets = [0, 88], sizes = [19, 8], strides = [1, 1]} : vector<19x96xf32> to vector<19x8xf32>
    %90 = arith.truncf %89 : vector<19x8xf32> to vector<19x8xbf16>
    %cst_27 = arith.constant dense<0.000000e+00> : vector<19x19xf32>
    %91 = tpu.matmul %86, %88, %cst_27 {dimension_numbers = #tpu.dot_dimension_numbers<[1], [1], [0], [0], [0, 0, 1, 0], [], []>} : vector<19x8xbf16>, vector<19x8xbf16>, vector<19x19xf32> -> vector<19x19xf32>
    %cst_28 = arith.constant 0.353553385 : f32
    %92 = vector.broadcast %cst_28 : f32 to vector<19x19xf32>
    %93 = arith.mulf %91, %92 : vector<19x19xf32>
    %cst_29 = arith.constant dense<0xFF800000> : vector<19xf32>
    %94 = vector.multi_reduction <maximumf>, %93, %cst_29 [1] : vector<19x19xf32> to vector<19xf32>
    %95 = vector.shape_cast %94 : vector<19xf32> to vector<19x1xf32>
    %96 = vector.broadcast %95 : vector<19x1xf32> to vector<19x19xf32>
    %97 = arith.subf %93, %96 : vector<19x19xf32>
    %98 = math.exp %97 : vector<19x19xf32>
    %cst_30 = arith.constant dense<0.000000e+00> : vector<19xf32>
    %99 = vector.multi_reduction <add>, %98, %cst_30 [1] : vector<19x19xf32> to vector<19xf32>
    %100 = vector.shape_cast %99 : vector<19xf32> to vector<19x1xf32>
    %101 = tpu.reciprocal %100 {approx = true} : vector<19x1xf32> -> vector<19x1xf32>
    %102 = vector.broadcast %101 : vector<19x1xf32> to vector<19x19xf32>
    %103 = arith.mulf %98, %102 : vector<19x19xf32>
    %104 = arith.truncf %103 : vector<19x19xf32> to vector<19x19xbf16>
    %cst_31 = arith.constant dense<0.000000e+00> : vector<19x8xf32>
    %105 = tpu.matmul %104, %90, %cst_31 {dimension_numbers = #tpu.dot_dimension_numbers<[1], [0], [0], [1], [0, 0, 1, 1], [], []>} : vector<19x19xbf16>, vector<19x8xbf16>, vector<19x8xf32> -> vector<19x8xf32>
    %106 = arith.truncf %105 : vector<19x8xf32> to vector<19x8xbf16>
    %107 = vector.extract_strided_slice %8 {offsets = [24, 0], sizes = [8, 32], strides = [1, 1]} : vector<32x32xbf16> to vector<8x32xbf16>
    %cst_32 = arith.constant dense<0.000000e+00> : vector<19x32xf32>
    %108 = tpu.matmul %106, %107, %cst_32 {dimension_numbers = #tpu.dot_dimension_numbers<[1], [0], [0], [1], [0, 0, 1, 1], [], []>} : vector<19x8xbf16>, vector<8x32xbf16>, vector<19x32xf32> -> vector<19x32xf32>
    %109 = arith.addf %84, %108 : vector<19x32xf32>
    %c0_33 = arith.constant 0 : index
    %c0_34 = arith.constant 0 : index
    %110 = vector.load %arg5[%c0_33, %c0_34] : memref<1x32xf32, #tpu.memory_space<vmem>>, vector<1x32xf32>
    %111 = vector.broadcast %110 : vector<1x32xf32> to vector<19x32xf32>
    %112 = arith.addf %109, %111 : vector<19x32xf32>
    %113 = arith.addf %1, %112 : vector<19x32xf32>
    %c0_35 = arith.constant 0 : index
    %c0_36 = arith.constant 0 : index
    %114 = vector.load %arg6[%c0_35, %c0_36] : memref<1x32xf32, #tpu.memory_space<vmem>>, vector<1x32xf32>
    %c0_37 = arith.constant 0 : index
    %c0_38 = arith.constant 0 : index
    %115 = vector.load %arg7[%c0_37, %c0_38] : memref<1x32xf32, #tpu.memory_space<vmem>>, vector<1x32xf32>
    %cst_39 = arith.constant dense<0.000000e+00> : vector<19xf32>
    %116 = vector.multi_reduction <add>, %113, %cst_39 [1] : vector<19x32xf32> to vector<19xf32>
    %117 = vector.shape_cast %116 : vector<19xf32> to vector<19x1xf32>
    %cst_40 = arith.constant 3.200000e+01 : f32
    %118 = vector.broadcast %cst_40 : f32 to vector<19x1xf32>
    %119 = arith.divf %117, %118 : vector<19x1xf32>
    %120 = vector.broadcast %119 : vector<19x1xf32> to vector<19x32xf32>
    %121 = arith.subf %113, %120 : vector<19x32xf32>
    %122 = arith.mulf %121, %121 : vector<19x32xf32>
    %cst_41 = arith.constant dense<0.000000e+00> : vector<19xf32>
    %123 = vector.multi_reduction <add>, %122, %cst_41 [1] : vector<19x32xf32> to vector<19xf32>
    %124 = vector.shape_cast %123 : vector<19xf32> to vector<19x1xf32>
    %cst_42 = arith.constant 3.200000e+01 : f32
    %125 = vector.broadcast %cst_42 : f32 to vector<19x1xf32>
    %126 = arith.divf %124, %125 : vector<19x1xf32>
    %127 = vector.broadcast %119 : vector<19x1xf32> to vector<19x32xf32>
    %128 = arith.subf %113, %127 : vector<19x32xf32>
    %cst_43 = arith.constant 9.99999974E-6 : f32
    %129 = vector.broadcast %cst_43 : f32 to vector<19x1xf32>
    %130 = arith.addf %126, %129 : vector<19x1xf32>
    %131 = math.rsqrt %130 : vector<19x1xf32>
    %132 = vector.broadcast %131 : vector<19x1xf32> to vector<19x32xf32>
    %133 = arith.mulf %128, %132 : vector<19x32xf32>
    %134 = vector.broadcast %114 : vector<1x32xf32> to vector<19x32xf32>
    %135 = arith.mulf %133, %134 : vector<19x32xf32>
    %136 = vector.broadcast %115 : vector<1x32xf32> to vector<19x32xf32>
    %137 = arith.addf %135, %136 : vector<19x32xf32>
    %138 = arith.truncf %137 : vector<19x32xf32> to vector<19x32xbf16>
    %c0_44 = arith.constant 0 : index
    %c0_45 = arith.constant 0 : index
    %139 = vector.load %arg8[%c0_44, %c0_45] : memref<32x64xbf16, #tpu.memory_space<vmem>>, vector<32x64xbf16>
    %cst_46 = arith.constant dense<0.000000e+00> : vector<19x64xf32>
    %140 = tpu.matmul %138, %139, %cst_46 {dimension_numbers = #tpu.dot_dimension_numbers<[1], [0], [0], [1], [0, 0, 1, 1], [], []>} : vector<19x32xbf16>, vector<32x64xbf16>, vector<19x64xf32> -> vector<19x64xf32>
    %c0_47 = arith.constant 0 : index
    %c0_48 = arith.constant 0 : index
    %141 = vector.load %arg9[%c0_47, %c0_48] : memref<1x64xf32, #tpu.memory_space<vmem>>, vector<1x64xf32>
    %142 = vector.broadcast %141 : vector<1x64xf32> to vector<19x64xf32>
    %143 = arith.addf %140, %142 : vector<19x64xf32>
    %144 = arith.mulf %143, %143 : vector<19x64xf32>
    %145 = arith.mulf %143, %144 : vector<19x64xf32>
    %cst_49 = arith.constant 4.471500e-02 : f32
    %146 = vector.broadcast %cst_49 : f32 to vector<19x64xf32>
    %147 = arith.mulf %146, %145 : vector<19x64xf32>
    %148 = arith.addf %143, %147 : vector<19x64xf32>
    %cst_50 = arith.constant 0.797884583 : f32
    %149 = vector.broadcast %cst_50 : f32 to vector<19x64xf32>
    %150 = arith.mulf %149, %148 : vector<19x64xf32>
    %151 = math.tanh %150 : vector<19x64xf32>
    %cst_51 = arith.constant 1.000000e+00 : f32
    %152 = vector.broadcast %cst_51 : f32 to vector<19x64xf32>
    %153 = arith.addf %152, %151 : vector<19x64xf32>
    %cst_52 = arith.constant 5.000000e-01 : f32
    %154 = vector.broadcast %cst_52 : f32 to vector<19x64xf32>
    %155 = arith.mulf %154, %153 : vector<19x64xf32>
    %156 = arith.mulf %143, %155 : vector<19x64xf32>
    %157 = arith.truncf %156 : vector<19x64xf32> to vector<19x64xbf16>
    %c0_53 = arith.constant 0 : index
    %c0_54 = arith.constant 0 : index
    %158 = vector.load %arg10[%c0_53, %c0_54] : memref<64x32xbf16, #tpu.memory_space<vmem>>, vector<64x32xbf16>
    %cst_55 = arith.constant dense<0.000000e+00> : vector<19x32xf32>
    %159 = tpu.matmul %157, %158, %cst_55 {dimension_numbers = #tpu.dot_dimension_numbers<[1], [0], [0], [1], [0, 0, 1, 1], [], []>} : vector<19x64xbf16>, vector<64x32xbf16>, vector<19x32xf32> -> vector<19x32xf32>
    %c0_56 = arith.constant 0 : index
    %c0_57 = arith.constant 0 : index
    %160 = vector.load %arg11[%c0_56, %c0_57] : memref<1x32xf32, #tpu.memory_space<vmem>>, vector<1x32xf32>
    %161 = vector.broadcast %160 : vector<1x32xf32> to vector<19x32xf32>
    %162 = arith.addf %159, %161 : vector<19x32xf32>
    %163 = arith.addf %137, %162 : vector<19x32xf32>
    %c0_58 = arith.constant 0 : index
    %c0_59 = arith.constant 0 : index
    %164 = vector.load %arg12[%c0_58, %c0_59] : memref<1x32xf32, #tpu.memory_space<vmem>>, vector<1x32xf32>
    %c0_60 = arith.constant 0 : index
    %c0_61 = arith.constant 0 : index
    %165 = vector.load %arg13[%c0_60, %c0_61] : memref<1x32xf32, #tpu.memory_space<vmem>>, vector<1x32xf32>
    %cst_62 = arith.constant dense<0.000000e+00> : vector<19xf32>
    %166 = vector.multi_reduction <add>, %163, %cst_62 [1] : vector<19x32xf32> to vector<19xf32>
    %167 = vector.shape_cast %166 : vector<19xf32> to vector<19x1xf32>
    %cst_63 = arith.constant 3.200000e+01 : f32
    %168 = vector.broadcast %cst_63 : f32 to vector<19x1xf32>
    %169 = arith.divf %167, %168 : vector<19x1xf32>
    %170 = vector.broadcast %169 : vector<19x1xf32> to vector<19x32xf32>
    %171 = arith.subf %163, %170 : vector<19x32xf32>
    %172 = arith.mulf %171, %171 : vector<19x32xf32>
    %cst_64 = arith.constant dense<0.000000e+00> : vector<19xf32>
    %173 = vector.multi_reduction <add>, %172, %cst_64 [1] : vector<19x32xf32> to vector<19xf32>
    %174 = vector.shape_cast %173 : vector<19xf32> to vector<19x1xf32>
    %cst_65 = arith.constant 3.200000e+01 : f32
    %175 = vector.broadcast %cst_65 : f32 to vector<19x1xf32>
    %176 = arith.divf %174, %175 : vector<19x1xf32>
    %177 = vector.broadcast %169 : vector<19x1xf32> to vector<19x32xf32>
    %178 = arith.subf %163, %177 : vector<19x32xf32>
    %cst_66 = arith.constant 9.99999974E-6 : f32
    %179 = vector.broadcast %cst_66 : f32 to vector<19x1xf32>
    %180 = arith.addf %176, %179 : vector<19x1xf32>
    %181 = math.rsqrt %180 : vector<19x1xf32>
    %182 = vector.broadcast %181 : vector<19x1xf32> to vector<19x32xf32>
    %183 = arith.mulf %178, %182 : vector<19x32xf32>
    %184 = vector.broadcast %164 : vector<1x32xf32> to vector<19x32xf32>
    %185 = arith.mulf %183, %184 : vector<19x32xf32>
    %186 = vector.broadcast %165 : vector<1x32xf32> to vector<19x32xf32>
    %187 = arith.addf %185, %186 : vector<19x32xf32>
    %cst_67 = arith.constant 0.000000e+00 : f32
    %188 = vector.broadcast %cst_67 : f32 to vector<19x32xf32>
    %189 = arith.maximumf %187, %188 : vector<19x32xf32>
    %c0_68 = arith.constant 0 : index
    %c0_69 = arith.constant 0 : index
    %c0_70 = arith.constant 0 : index
    %190 = vector.load %arg14[%c0_68, %c0_69, %c0_70] : memref<1x19x32xf32, #tpu.memory_space<vmem>>, vector<1x19x32xf32>
    %191 = vector.shape_cast %190 : vector<1x19x32xf32> to vector<19x32xf32>
    %192 = vector.shape_cast %189 : vector<19x32xf32> to vector<1x19x32xf32>
    tpu.vector_store %arg14[%c0_68, %c0_69, %c0_70], %192 {strides = array<i32>} : memref<1x19x32xf32, #tpu.memory_space<vmem>>, vector<1x19x32xf32>,
    return
  }
  func.func @transform_0(%arg0: i32) -> (i32, i32, i32) {
    %c0_i32 = arith.constant 0 : i32
    %c0_i32_0 = arith.constant 0 : i32
    %c0_i32_1 = arith.constant 0 : i32
    return %arg0, %c0_i32, %c0_i32_0 : i32, i32, i32
  }
  func.func @transform_1(%arg0: i32) -> (i32, i32) {
    %c0_i32 = arith.constant 0 : i32
    %c0_i32_0 = arith.constant 0 : i32
    %c0_i32_1 = arith.constant 0 : i32
    return %c0_i32, %c0_i32_0 : i32, i32
  }
  func.func @transform_2(%arg0: i32) -> (i32, i32) {
    %c0_i32 = arith.constant 0 : i32
    %c0_i32_0 = arith.constant 0 : i32
    %c0_i32_1 = arith.constant 0 : i32
    return %c0_i32, %c0_i32_0 : i32, i32
  }
  func.func @transform_3(%arg0: i32) -> (i32, i32) {
    %c0_i32 = arith.constant 0 : i32
    %c0_i32_0 = arith.constant 0 : i32
    %c0_i32_1 = arith.constant 0 : i32
    return %c0_i32, %c0_i32_0 : i32, i32
  }
  func.func @transform_4(%arg0: i32) -> (i32, i32) {
    %c0_i32 = arith.constant 0 : i32
    %c0_i32_0 = arith.constant 0 : i32
    %c0_i32_1 = arith.constant 0 : i32
    return %c0_i32, %c0_i32_0 : i32, i32
  }
  func.func @transform_5(%arg0: i32) -> (i32, i32) {
    %c0_i32 = arith.constant 0 : i32
    %c0_i32_0 = arith.constant 0 : i32
    %c0_i32_1 = arith.constant 0 : i32
    return %c0_i32, %c0_i32_0 : i32, i32
  }
  func.func @transform_6(%arg0: i32) -> (i32, i32) {
    %c0_i32 = arith.constant 0 : i32
    %c0_i32_0 = arith.constant 0 : i32
    %c0_i32_1 = arith.constant 0 : i32
    return %c0_i32, %c0_i32_0 : i32, i32
  }
  func.func @transform_7(%arg0: i32) -> (i32, i32) {
    %c0_i32 = arith.constant 0 : i32
    %c0_i32_0 = arith.constant 0 : i32
    %c0_i32_1 = arith.constant 0 : i32
    return %c0_i32, %c0_i32_0 : i32, i32
  }
  func.func @transform_8(%arg0: i32) -> (i32, i32) {
    %c0_i32 = arith.constant 0 : i32
    %c0_i32_0 = arith.constant 0 : i32
    %c0_i32_1 = arith.constant 0 : i32
    return %c0_i32, %c0_i32_0 : i32, i32
  }
  func.func @transform_9(%arg0: i32) -> (i32, i32) {
    %c0_i32 = arith.constant 0 : i32
    %c0_i32_0 = arith.constant 0 : i32
    %c0_i32_1 = arith.constant 0 : i32
    return %c0_i32, %c0_i32_0 : i32, i32
  }
  func.func @transform_10(%arg0: i32) -> (i32, i32) {
    %c0_i32 = arith.constant 0 : i32
    %c0_i32_0 = arith.constant 0 : i32
    %c0_i32_1 = arith.constant 0 : i32
    return %c0_i32, %c0_i32_0 : i32, i32
  }
  func.func @transform_11(%arg0: i32) -> (i32, i32) {
    %c0_i32 = arith.constant 0 : i32
    %c0_i32_0 = arith.constant 0 : i32
    %c0_i32_1 = arith.constant 0 : i32
    return %c0_i32, %c0_i32_0 : i32, i32
  }
  func.func @transform_12(%arg0: i32) -> (i32, i32) {
    %c0_i32 = arith.constant 0 : i32
    %c0_i32_0 = arith.constant 0 : i32
    %c0_i32_1 = arith.constant 0 : i32
    return %c0_i32, %c0_i32_0 : i32, i32
  }
  func.func @transform_13(%arg0: i32) -> (i32, i32, i32) {
    %c0_i32 = arith.constant 0 : i32
    %c0_i32_0 = arith.constant 0 : i32
    %c0_i32_1 = arith.constant 0 : i32
    return %arg0, %c0_i32, %c0_i32_0 : i32, i32, i32
  }
}

module attributes {stable_mosaic.version = 11 : i64} {
  func.func @body(%arg0: i32, %arg1: memref<1x19x32xf32, #tpu.memory_space<vmem>>, %arg2: memref<32x96xbf16, #tpu.memory_space<vmem>>, %arg3: memref<1x96xf32, #tpu.memory_space<vmem>>, %arg4: memref<32x32xbf16, #tpu.memory_space<vmem>>, %arg5: memref<1x32xf32, #tpu.memory_space<vmem>>, %arg6: memref<1x32xf32, #tpu.memory_space<vmem>>, %arg7: memref<1x32xf32, #tpu.memory_space<vmem>>, %arg8: memref<32x64xbf16, #tpu.memory_space<vmem>>, %arg9: memref<1x64xf32, #tpu.memory_space<vmem>>, %arg10: memref<64x32xbf16, #tpu.memory_space<vmem>>, %arg11: memref<1x32xf32, #tpu.memory_space<vmem>>, %arg12: memref<1x32xf32, #tpu.memory_space<vmem>>, %arg13: memref<1x32xf32, #tpu.memory_space<vmem>>, %arg14: memref<1x19x32xf32, #tpu.memory_space<vmem>>) attributes {dimension_semantics = [#tpu.dimension_semantics<parallel>], iteration_bounds = array<i64: 2>, scalar_prefetch = 0 : i64, scratch_operands = 0 : i64, tpu.core_type = #tpu.core_type<tc>, window_params = [{transform_indices = @transform_0, window_bounds = array<i64: 1, 19, 32>}, {pipeline_mode = #tpu.pipeline_mode<synchronous>, transform_indices = @transform_1, window_bounds = array<i64: 32, 96>}, {pipeline_mode = #tpu.pipeline_mode<synchronous>, transform_indices = @transform_2, window_bounds = array<i64: 1, 96>}, {pipeline_mode = #tpu.pipeline_mode<synchronous>, transform_indices = @transform_3, window_bounds = array<i64: 32, 32>}, {pipeline_mode = #tpu.pipeline_mode<synchronous>, transform_indices = @transform_4, window_bounds = array<i64: 1, 32>}, {pipeline_mode = #tpu.pipeline_mode<synchronous>, transform_indices = @transform_5, window_bounds = array<i64: 1, 32>}, {pipeline_mode = #tpu.pipeline_mode<synchronous>, transform_indices = @transform_6, window_bounds = array<i64: 1, 32>}, {pipeline_mode = #tpu.pipeline_mode<synchronous>, transform_indices = @transform_7, window_bounds = array<i64: 32, 64>}, {pipeline_mode = #tpu.pipeline_mode<synchronous>, transform_indices = @transform_8, window_bounds = array<i64: 1, 64>}, {pipeline_mode = #tpu.pipeline_mode<synchronous>, transform_indices = @transform_9, window_bounds = array<i64: 64, 32>}, {pipeline_mode = #tpu.pipeline_mode<synchronous>, transform_indices = @transform_10, window_bounds = array<i64: 1, 32>}, {pipeline_mode = #tpu.pipeline_mode<synchronous>, transform_indices = @transform_11, window_bounds = array<i64: 1, 32>}, {pipeline_mode = #tpu.pipeline_mode<synchronous>, transform_indices = @transform_12, window_bounds = array<i64: 1, 32>}, {transform_indices = @transform_13, window_bounds = array<i64: 1, 19, 32>}]} {
    %c0 = arith.constant 0 : index
    %c0_0 = arith.constant 0 : index
    %c0_1 = arith.constant 0 : index
    %0 = vector.load %arg1[%c0, %c0_0, %c0_1] : memref<1x19x32xf32, #tpu.memory_space<vmem>>, vector<1x19x32xf32>
    %1 = vector.shape_cast %0 : vector<1x19x32xf32> to vector<19x32xf32>
    %2 = arith.truncf %1 : vector<19x32xf32> to vector<19x32xbf16>
    %c0_2 = arith.constant 0 : index
    %c0_3 = arith.constant 0 : index
    %3 = vector.load %arg2[%c0_2, %c0_3] : memref<32x96xbf16, #tpu.memory_space<vmem>>, vector<32x96xbf16>
    %cst = arith.constant dense<0.000000e+00> : vector<19x96xf32>
    %4 = tpu.matmul %2, %3, %cst {dimension_numbers = #tpu.dot_dimension_numbers<[1], [0], [0], [1], [0, 0, 1, 1], [], []>} : vector<19x32xbf16>, vector<32x96xbf16>, vector<19x96xf32> -> vector<19x96xf32>
    %c0_4 = arith.constant 0 : index
    %c0_5 = arith.constant 0 : index
    %5 = vector.load %arg3[%c0_4, %c0_5] : memref<1x96xf32, #tpu.memory_space<vmem>>, vector<1x96xf32>
    %6 = vector.broadcast %5 : vector<1x96xf32> to vector<19x96xf32>
    %7 = arith.addf %4, %6 : vector<19x96xf32>
    %c0_6 = arith.constant 0 : index
    %c0_7 = arith.constant 0 : index
    %8 = vector.load %arg4[%c0_6, %c0_7] : memref<32x32xbf16, #tpu.memory_space<vmem>>, vector<32x32xbf16>
    %cst_8 = arith.constant 0.000000e+00 : f32
    %9 = vector.broadcast %cst_8 : f32 to vector<19x32xf32>
    %10 = vector.extract_strided_slice %7 {offsets = [0, 0], sizes = [19, 8], strides = [1, 1]} : vector<19x96xf32> to vector<19x8xf32>
    %11 = arith.truncf %10 : vector<19x8xf32> to vector<19x8xbf16>
    %12 = vector.extract_strided_slice %7 {offsets = [0, 32], sizes = [19, 8], strides = [1, 1]} : vector<19x96xf32> to vector<19x8xf32>
    %13 = arith.truncf %12 : vector<19x8xf32> to vector<19x8xbf16>
    %14 = vector.extract_strided_slice %7 {offsets = [0, 64], sizes = [19, 8], strides = [1, 1]} : vector<19x96xf32> to vector<19x8xf32>
    %15 = arith.truncf %14 : vector<19x8xf32> to vector<19x8xbf16>
    %cst_9 = arith.constant dense<0.000000e+00> : vector<19x19xf32>
    %16 = tpu.matmul %11, %13, %cst_9 {dimension_numbers = #tpu.dot_dimension_numbers<[1], [1], [0], [0], [0, 0, 1, 0], [], []>} : vector<19x8xbf16>, vector<19x8xbf16>, vector<19x19xf32> -> vector<19x19xf32>
    %cst_10 = arith.constant 0.353553385 : f32
    %17 = vector.broadcast %cst_10 : f32 to vector<19x19xf32>
    %18 = arith.mulf %16, %17 : vector<19x19xf32>
    %cst_11 = arith.constant dense<0xFF800000> : vector<19xf32>
    %19 = vector.multi_reduction <maximumf>, %18, %cst_11 [1] : vector<19x19xf32> to vector<19xf32>
    %20 = vector.shape_cast %19 : vector<19xf32> to vector<19x1xf32>
    %21 = vector.broadcast %20 : vector<19x1xf32> to vector<19x19xf32>
    %22 = arith.subf %18, %21 : vector<19x19xf32>
    %23 = math.exp %22 : vector<19x19xf32>
    %cst_12 = arith.constant dense<0.000000e+00> : vector<19xf32>
    %24 = vector.multi_reduction <add>, %23, %cst_12 [1] : vector<19x19xf32> to vector<19xf32>
    %25 = vector.shape_cast %24 : vector<19xf32> to vector<19x1xf32>
    %26 = tpu.reciprocal %25 {approx = true} : vector<19x1xf32> -> vector<19x1xf32>
    %27 = vector.broadcast %26 : vector<19x1xf32> to vector<19x19xf32>
    %28 = arith.mulf %23, %27 : vector<19x19xf32>
    %29 = arith.truncf %28 : vector<19x19xf32> to vector<19x19xbf16>
    %cst_13 = arith.constant dense<0.000000e+00> : vector<19x8xf32>
    %30 = tpu.matmul %29, %15, %cst_13 {dimension_numbers = #tpu.dot_dimension_numbers<[1], [0], [0], [1], [0, 0, 1, 1], [], []>} : vector<19x19xbf16>, vector<19x8xbf16>, vector<19x8xf32> -> vector<19x8xf32>
    %31 = arith.truncf %30 : vector<19x8xf32> to vector<19x8xbf16>
    %32 = vector.extract_strided_slice %8 {offsets = [0, 0], sizes = [8, 32], strides = [1, 1]} : vector<32x32xbf16> to vector<8x32xbf16>
    %cst_14 = arith.constant dense<0.000000e+00> : vector<19x32xf32>
    %33 = tpu.matmul %31, %32, %cst_14 {dimension_numbers = #tpu.dot_dimension_numbers<[1], [0], [0], [1], [0, 0, 1, 1], [], []>} : vector<19x8xbf16>, vector<8x32xbf16>, vector<19x32xf32> -> vector<19x32xf32>
    %34 = arith.addf %9, %33 : vector<19x32xf32>
    %35 = vector.extract_strided_slice %7 {offsets = [0, 8], sizes = [19, 8], strides = [1, 1]} : vector<19x96xf32> to vector<19x8xf32>
    %36 = arith.truncf %35 : vector<19x8xf32> to vector<19x8xbf16>
    %37 = vector.extract_strided_slice %7 {offsets = [0, 40], sizes = [19, 8], strides = [1, 1]} : vector<19x96xf32> to vector<19x8xf32>
    %38 = arith.truncf %37 : vector<19x8xf32> to vector<19x8xbf16>
    %39 = vector.extract_strided_slice %7 {offsets = [0, 72], sizes = [19, 8], strides = [1, 1]} : vector<19x96xf32> to vector<19x8xf32>
    %40 = arith.truncf %39 : vector<19x8xf32> to vector<19x8xbf16>
    %cst_15 = arith.constant dense<0.000000e+00> : vector<19x19xf32>
    %41 = tpu.matmul %36, %38, %cst_15 {dimension_numbers = #tpu.dot_dimension_numbers<[1], [1], [0], [0], [0, 0, 1, 0], [], []>} : vector<19x8xbf16>, vector<19x8xbf16>, vector<19x19xf32> -> vector<19x19xf32>
    %cst_16 = arith.constant 0.353553385 : f32
    %42 = vector.broadcast %cst_16 : f32 to vector<19x19xf32>
    %43 = arith.mulf %41, %42 : vector<19x19xf32>
    %cst_17 = arith.constant dense<0xFF800000> : vector<19xf32>
    %44 = vector.multi_reduction <maximumf>, %43, %cst_17 [1] : vector<19x19xf32> to vector<19xf32>
    %45 = vector.shape_cast %44 : vector<19xf32> to vector<19x1xf32>
    %46 = vector.broadcast %45 : vector<19x1xf32> to vector<19x19xf32>
    %47 = arith.subf %43, %46 : vector<19x19xf32>
    %48 = math.exp %47 : vector<19x19xf32>
    %cst_18 = arith.constant dense<0.000000e+00> : vector<19xf32>
    %49 = vector.multi_reduction <add>, %48, %cst_18 [1] : vector<19x19xf32> to vector<19xf32>
    %50 = vector.shape_cast %49 : vector<19xf32> to vector<19x1xf32>
    %51 = tpu.reciprocal %50 {approx = true} : vector<19x1xf32> -> vector<19x1xf32>
    %52 = vector.broadcast %51 : vector<19x1xf32> to vector<19x19xf32>
    %53 = arith.mulf %48, %52 : vector<19x19xf32>
    %54 = arith.truncf %53 : vector<19x19xf32> to vector<19x19xbf16>
    %cst_19 = arith.constant dense<0.000000e+00> : vector<19x8xf32>
    %55 = tpu.matmul %54, %40, %cst_19 {dimension_numbers = #tpu.dot_dimension_numbers<[1], [0], [0], [1], [0, 0, 1, 1], [], []>} : vector<19x19xbf16>, vector<19x8xbf16>, vector<19x8xf32> -> vector<19x8xf32>
    %56 = arith.truncf %55 : vector<19x8xf32> to vector<19x8xbf16>
    %57 = vector.extract_strided_slice %8 {offsets = [8, 0], sizes = [8, 32], strides = [1, 1]} : vector<32x32xbf16> to vector<8x32xbf16>
    %cst_20 = arith.constant dense<0.000000e+00> : vector<19x32xf32>
    %58 = tpu.matmul %56, %57, %cst_20 {dimension_numbers = #tpu.dot_dimension_numbers<[1], [0], [0], [1], [0, 0, 1, 1], [], []>} : vector<19x8xbf16>, vector<8x32xbf16>, vector<19x32xf32> -> vector<19x32xf32>
    %59 = arith.addf %34, %58 : vector<19x32xf32>
    %60 = vector.extract_strided_slice %7 {offsets = [0, 16], sizes = [19, 8], strides = [1, 1]} : vector<19x96xf32> to vector<19x8xf32>
    %61 = arith.truncf %60 : vector<19x8xf32> to vector<19x8xbf16>
    %62 = vector.extract_strided_slice %7 {offsets = [0, 48], sizes = [19, 8], strides = [1, 1]} : vector<19x96xf32> to vector<19x8xf32>
    %63 = arith.truncf %62 : vector<19x8xf32> to vector<19x8xbf16>
    %64 = vector.extract_strided_slice %7 {offsets = [0, 80], sizes = [19, 8], strides = [1, 1]} : vector<19x96xf32> to vector<19x8xf32>
    %65 = arith.truncf %64 : vector<19x8xf32> to vector<19x8xbf16>
    %cst_21 = arith.constant dense<0.000000e+00> : vector<19x19xf32>
    %66 = tpu.matmul %61, %63, %cst_21 {dimension_numbers = #tpu.dot_dimension_numbers<[1], [1], [0], [0], [0, 0, 1, 0], [], []>} : vector<19x8xbf16>, vector<19x8xbf16>, vector<19x19xf32> -> vector<19x19xf32>
    %cst_22 = arith.constant 0.353553385 : f32
    %67 = vector.broadcast %cst_22 : f32 to vector<19x19xf32>
    %68 = arith.mulf %66, %67 : vector<19x19xf32>
    %cst_23 = arith.constant dense<0xFF800000> : vector<19xf32>
    %69 = vector.multi_reduction <maximumf>, %68, %cst_23 [1] : vector<19x19xf32> to vector<19xf32>
    %70 = vector.shape_cast %69 : vector<19xf32> to vector<19x1xf32>
    %71 = vector.broadcast %70 : vector<19x1xf32> to vector<19x19xf32>
    %72 = arith.subf %68, %71 : vector<19x19xf32>
    %73 = math.exp %72 : vector<19x19xf32>
    %cst_24 = arith.constant dense<0.000000e+00> : vector<19xf32>
    %74 = vector.multi_reduction <add>, %73, %cst_24 [1] : vector<19x19xf32> to vector<19xf32>
    %75 = vector.shape_cast %74 : vector<19xf32> to vector<19x1xf32>
    %76 = tpu.reciprocal %75 {approx = true} : vector<19x1xf32> -> vector<19x1xf32>
    %77 = vector.broadcast %76 : vector<19x1xf32> to vector<19x19xf32>
    %78 = arith.mulf %73, %77 : vector<19x19xf32>
    %79 = arith.truncf %78 : vector<19x19xf32> to vector<19x19xbf16>
    %cst_25 = arith.constant dense<0.000000e+00> : vector<19x8xf32>
    %80 = tpu.matmul %79, %65, %cst_25 {dimension_numbers = #tpu.dot_dimension_numbers<[1], [0], [0], [1], [0, 0, 1, 1], [], []>} : vector<19x19xbf16>, vector<19x8xbf16>, vector<19x8xf32> -> vector<19x8xf32>
    %81 = arith.truncf %80 : vector<19x8xf32> to vector<19x8xbf16>
    %82 = vector.extract_strided_slice %8 {offsets = [16, 0], sizes = [8, 32], strides = [1, 1]} : vector<32x32xbf16> to vector<8x32xbf16>
    %cst_26 = arith.constant dense<0.000000e+00> : vector<19x32xf32>
    %83 = tpu.matmul %81, %82, %cst_26 {dimension_numbers = #tpu.dot_dimension_numbers<[1], [0], [0], [1], [0, 0, 1, 1], [], []>} : vector<19x8xbf16>, vector<8x32xbf16>, vector<19x32xf32> -> vector<19x32xf32>
    %84 = arith.addf %59, %83 : vector<19x32xf32>
    %85 = vector.extract_strided_slice %7 {offsets = [0, 24], sizes = [19, 8], strides = [1, 1]} : vector<19x96xf32> to vector<19x8xf32>
    %86 = arith.truncf %85 : vector<19x8xf32> to vector<19x8xbf16>
    %87 = vector.extract_strided_slice %7 {offsets = [0, 56], sizes = [19, 8], strides = [1, 1]} : vector<19x96xf32> to vector<19x8xf32>
    %88 = arith.truncf %87 : vector<19x8xf32> to vector<19x8xbf16>
    %89 = vector.extract_strided_slice %7 {offsets = [0, 88], sizes = [19, 8], strides = [1, 1]} : vector<19x96xf32> to vector<19x8xf32>
    %90 = arith.truncf %89 : vector<19x8xf32> to vector<19x8xbf16>
    %cst_27 = arith.constant dense<0.000000e+00> : vector<19x19xf32>
    %91 = tpu.matmul %86, %88, %cst_27 {dimension_numbers = #tpu.dot_dimension_numbers<[1], [1], [0], [0], [0, 0, 1, 0], [], []>} : vector<19x8xbf16>, vector<19x8xbf16>, vector<19x19xf32> -> vector<19x19xf32>
    %cst_28 = arith.constant 0.353553385 : f32
    %92 = vector.broadcast %cst_28 : f32 to vector<19x19xf32>
    %93 = arith.mulf %91, %92 : vector<19x19xf32>
    %cst_29 = arith.constant dense<0xFF800000> : vector<19xf32>
    %94 = vector.multi_reduction <maximumf>, %93, %cst_29 [1] : vector<19x19xf32> to vector<19xf32>
    %95 = vector.shape_cast %94 : vector<19xf32> to vector<19x1xf32>
    %96 = vector.broadcast %95 : vector<19x1xf32> to vector<19x19xf32>
    %97 = arith.subf %93, %96 : vector<19x19xf32>
    %98 = math.exp %97 : vector<19x19xf32>
    %cst_30 = arith.constant dense<0.000000e+00> : vector<19xf32>
    %99 = vector.multi_reduction <add>, %98, %cst_30 [1] : vector<19x19xf32> to vector<19xf32>
    %100 = vector.shape_cast %99 : vector<19xf32> to vector<19x1xf32>
    %101 = tpu.reciprocal %100 {approx = true} : vector<19x1xf32> -> vector<19x1xf32>
    %102 = vector.broadcast %101 : vector<19x1xf32> to vector<19x19xf32>
    %103 = arith.mulf %98, %102 : vector<19x19xf32>
    %104 = arith.truncf %103 : vector<19x19xf32> to vector<19x19xbf16>
    %cst_31 = arith.constant dense<0.000000e+00> : vector<19x8xf32>
    %105 = tpu.matmul %104, %90, %cst_31 {dimension_numbers = #tpu.dot_dimension_numbers<[1], [0], [0], [1], [0, 0, 1, 1], [], []>} : vector<19x19xbf16>, vector<19x8xbf16>, vector<19x8xf32> -> vector<19x8xf32>
    %106 = arith.truncf %105 : vector<19x8xf32> to vector<19x8xbf16>
    %107 = vector.extract_strided_slice %8 {offsets = [24, 0], sizes = [8, 32], strides = [1, 1]} : vector<32x32xbf16> to vector<8x32xbf16>
    %cst_32 = arith.constant dense<0.000000e+00> : vector<19x32xf32>
    %108 = tpu.matmul %106, %107, %cst_32 {dimension_numbers = #tpu.dot_dimension_numbers<[1], [0], [0], [1], [0, 0, 1, 1], [], []>} : vector<19x8xbf16>, vector<8x32xbf16>, vector<19x32xf32> -> vector<19x32xf32>
    %109 = arith.addf %84, %108 : vector<19x32xf32>
    %c0_33 = arith.constant 0 : index
    %c0_34 = arith.constant 0 : index
    %110 = vector.load %arg5[%c0_33, %c0_34] : memref<1x32xf32, #tpu.memory_space<vmem>>, vector<1x32xf32>
    %111 = vector.broadcast %110 : vector<1x32xf32> to vector<19x32xf32>
    %112 = arith.addf %109, %111 : vector<19x32xf32>
    %113 = arith.addf %1, %112 : vector<19x32xf32>
    %c0_35 = arith.constant 0 : index
    %c0_36 = arith.constant 0 : index
    %114 = vector.load %arg6[%c0_35, %c0_36] : memref<1x32xf32, #tpu.memory_space<vmem>>, vector<1x32xf32>
    %c0_37 = arith.constant 0 : index
    %c0_38 = arith.constant 0 : index
    %115 = vector.load %arg7[%c0_37, %c0_38] : memref<1x32xf32, #tpu.memory_space<vmem>>, vector<1x32xf32>
    %cst_39 = arith.constant dense<0.000000e+00> : vector<19xf32>
    %116 = vector.multi_reduction <add>, %113, %cst_39 [1] : vector<19x32xf32> to vector<19xf32>
    %117 = vector.shape_cast %116 : vector<19xf32> to vector<19x1xf32>
    %cst_40 = arith.constant 3.200000e+01 : f32
    %118 = vector.broadcast %cst_40 : f32 to vector<19x1xf32>
    %119 = arith.divf %117, %118 : vector<19x1xf32>
    %120 = vector.broadcast %119 : vector<19x1xf32> to vector<19x32xf32>
    %121 = arith.subf %113, %120 : vector<19x32xf32>
    %122 = arith.mulf %121, %121 : vector<19x32xf32>
    %cst_41 = arith.constant dense<0.000000e+00> : vector<19xf32>
    %123 = vector.multi_reduction <add>, %122, %cst_41 [1] : vector<19x32xf32> to vector<19xf32>
    %124 = vector.shape_cast %123 : vector<19xf32> to vector<19x1xf32>
    %cst_42 = arith.constant 3.200000e+01 : f32
    %125 = vector.broadcast %cst_42 : f32 to vector<19x1xf32>
    %126 = arith.divf %124, %125 : vector<19x1xf32>
    %127 = vector.broadcast %119 : vector<19x1xf32> to vector<19x32xf32>
    %128 = arith.subf %113, %127 : vector<19x32xf32>
    %cst_43 = arith.constant 9.99999974E-6 : f32
    %129 = vector.broadcast %cst_43 : f32 to vector<19x1xf32>
    %130 = arith.addf %126, %129 : vector<19x1xf32>
    %131 = math.rsqrt %130 : vector<19x1xf32>
    %132 = vector.broadcast %131 : vector<19x1xf32> to vector<19x32xf32>
    %133 = arith.mulf %128, %132 : vector<19x32xf32>
    %134 = vector.broadcast %114 : vector<1x32xf32> to vector<19x32xf32>
    %135 = arith.mulf %133, %134 : vector<19x32xf32>
    %136 = vector.broadcast %115 : vector<1x32xf32> to vector<19x32xf32>
    %137 = arith.addf %135, %136 : vector<19x32xf32>
    %138 = arith.truncf %137 : vector<19x32xf32> to vector<19x32xbf16>
    %c0_44 = arith.constant 0 : index
    %c0_45 = arith.constant 0 : index
    %139 = vector.load %arg8[%c0_44, %c0_45] : memref<32x64xbf16, #tpu.memory_space<vmem>>, vector<32x64xbf16>
    %cst_46 = arith.constant dense<0.000000e+00> : vector<19x64xf32>
    %140 = tpu.matmul %138, %139, %cst_46 {dimension_numbers = #tpu.dot_dimension_numbers<[1], [0], [0], [1], [0, 0, 1, 1], [], []>} : vector<19x32xbf16>, vector<32x64xbf16>, vector<19x64xf32> -> vector<19x64xf32>
    %c0_47 = arith.constant 0 : index
    %c0_48 = arith.constant 0 : index
    %141 = vector.load %arg9[%c0_47, %c0_48] : memref<1x64xf32, #tpu.memory_space<vmem>>, vector<1x64xf32>
    %142 = vector.broadcast %141 : vector<1x64xf32> to vector<19x64xf32>
    %143 = arith.addf %140, %142 : vector<19x64xf32>
    %144 = arith.mulf %143, %143 : vector<19x64xf32>
    %145 = arith.mulf %143, %144 : vector<19x64xf32>
    %cst_49 = arith.constant 4.471500e-02 : f32
    %146 = vector.broadcast %cst_49 : f32 to vector<19x64xf32>
    %147 = arith.mulf %146, %145 : vector<19x64xf32>
    %148 = arith.addf %143, %147 : vector<19x64xf32>
    %cst_50 = arith.constant 0.797884583 : f32
    %149 = vector.broadcast %cst_50 : f32 to vector<19x64xf32>
    %150 = arith.mulf %149, %148 : vector<19x64xf32>
    %151 = math.tanh %150 : vector<19x64xf32>
    %cst_51 = arith.constant 1.000000e+00 : f32
    %152 = vector.broadcast %cst_51 : f32 to vector<19x64xf32>
    %153 = arith.addf %152, %151 : vector<19x64xf32>
    %cst_52 = arith.constant 5.000000e-01 : f32
    %154 = vector.broadcast %cst_52 : f32 to vector<19x64xf32>
    %155 = arith.mulf %154, %153 : vector<19x64xf32>
    %156 = arith.mulf %143, %155 : vector<19x64xf32>
    %157 = arith.truncf %156 : vector<19x64xf32> to vector<19x64xbf16>
    %c0_53 = arith.constant 0 : index
    %c0_54 = arith.constant 0 : index
    %158 = vector.load %arg10[%c0_53, %c0_54] : memref<64x32xbf16, #tpu.memory_space<vmem>>, vector<64x32xbf16>
    %cst_55 = arith.constant dense<0.000000e+00> : vector<19x32xf32>
    %159 = tpu.matmul %157, %158, %cst_55 {dimension_numbers = #tpu.dot_dimension_numbers<[1], [0], [0], [1], [0, 0, 1, 1], [], []>} : vector<19x64xbf16>, vector<64x32xbf16>, vector<19x32xf32> -> vector<19x32xf32>
    %c0_56 = arith.constant 0 : index
    %c0_57 = arith.constant 0 : index
    %160 = vector.load %arg11[%c0_56, %c0_57] : memref<1x32xf32, #tpu.memory_space<vmem>>, vector<1x32xf32>
    %161 = vector.broadcast %160 : vector<1x32xf32> to vector<19x32xf32>
    %162 = arith.addf %159, %161 : vector<19x32xf32>
    %163 = arith.addf %137, %162 : vector<19x32xf32>
    %c0_58 = arith.constant 0 : index
    %c0_59 = arith.constant 0 : index
    %164 = vector.load %arg12[%c0_58, %c0_59] : memref<1x32xf32, #tpu.memory_space<vmem>>, vector<1x32xf32>
    %c0_60 = arith.constant 0 : index
    %c0_61 = arith.constant 0 : index
    %165 = vector.load %arg13[%c0_60, %c0_61] : memref<1x32xf32, #tpu.memory_space<vmem>>, vector<1x32xf32>
    %cst_62 = arith.constant dense<0.000000e+00> : vector<19xf32>
    %166 = vector.multi_reduction <add>, %163, %cst_62 [1] : vector<19x32xf32> to vector<19xf32>
    %167 = vector.shape_cast %166 : vector<19xf32> to vector<19x1xf32>
    %cst_63 = arith.constant 3.200000e+01 : f32
    %168 = vector.broadcast %cst_63 : f32 to vector<19x1xf32>
    %169 = arith.divf %167, %168 : vector<19x1xf32>
    %170 = vector.broadcast %169 : vector<19x1xf32> to vector<19x32xf32>
    %171 = arith.subf %163, %170 : vector<19x32xf32>
    %172 = arith.mulf %171, %171 : vector<19x32xf32>
    %cst_64 = arith.constant dense<0.000000e+00> : vector<19xf32>
    %173 = vector.multi_reduction <add>, %172, %cst_64 [1] : vector<19x32xf32> to vector<19xf32>
    %174 = vector.shape_cast %173 : vector<19xf32> to vector<19x1xf32>
    %cst_65 = arith.constant 3.200000e+01 : f32
    %175 = vector.broadcast %cst_65 : f32 to vector<19x1xf32>
    %176 = arith.divf %174, %175 : vector<19x1xf32>
    %177 = vector.broadcast %169 : vector<19x1xf32> to vector<19x32xf32>
    %178 = arith.subf %163, %177 : vector<19x32xf32>
    %cst_66 = arith.constant 9.99999974E-6 : f32
    %179 = vector.broadcast %cst_66 : f32 to vector<19x1xf32>
    %180 = arith.addf %176, %179 : vector<19x1xf32>
    %181 = math.rsqrt %180 : vector<19x1xf32>
    %182 = vector.broadcast %181 : vector<19x1xf32> to vector<19x32xf32>
    %183 = arith.mulf %178, %182 : vector<19x32xf32>
    %184 = vector.broadcast %164 : vector<1x32xf32> to vector<19x32xf32>
    %185 = arith.mulf %183, %184 : vector<19x32xf32>
    %186 = vector.broadcast %165 : vector<1x32xf32> to vector<19x32xf32>
    %187 = arith.addf %185, %186 : vector<19x32xf32>
    %c0_67 = arith.constant 0 : index
    %c0_68 = arith.constant 0 : index
    %c0_69 = arith.constant 0 : index
    %188 = vector.load %arg14[%c0_67, %c0_68, %c0_69] : memref<1x19x32xf32, #tpu.memory_space<vmem>>, vector<1x19x32xf32>
    %189 = vector.shape_cast %188 : vector<1x19x32xf32> to vector<19x32xf32>
    %190 = vector.shape_cast %187 : vector<19x32xf32> to vector<1x19x32xf32>
    tpu.vector_store %arg14[%c0_67, %c0_68, %c0_69], %190 {strides = array<i32>} : memref<1x19x32xf32, #tpu.memory_space<vmem>>, vector<1x19x32xf32>,
    return
  }
  func.func @transform_0(%arg0: i32) -> (i32, i32, i32) {
    %c0_i32 = arith.constant 0 : i32
    %c0_i32_0 = arith.constant 0 : i32
    %c0_i32_1 = arith.constant 0 : i32
    return %arg0, %c0_i32, %c0_i32_0 : i32, i32, i32
  }
  func.func @transform_1(%arg0: i32) -> (i32, i32) {
    %c0_i32 = arith.constant 0 : i32
    %c0_i32_0 = arith.constant 0 : i32
    %c0_i32_1 = arith.constant 0 : i32
    return %c0_i32, %c0_i32_0 : i32, i32
  }
  func.func @transform_2(%arg0: i32) -> (i32, i32) {
    %c0_i32 = arith.constant 0 : i32
    %c0_i32_0 = arith.constant 0 : i32
    %c0_i32_1 = arith.constant 0 : i32
    return %c0_i32, %c0_i32_0 : i32, i32
  }
  func.func @transform_3(%arg0: i32) -> (i32, i32) {
    %c0_i32 = arith.constant 0 : i32
    %c0_i32_0 = arith.constant 0 : i32
    %c0_i32_1 = arith.constant 0 : i32
    return %c0_i32, %c0_i32_0 : i32, i32
  }
  func.func @transform_4(%arg0: i32) -> (i32, i32) {
    %c0_i32 = arith.constant 0 : i32
    %c0_i32_0 = arith.constant 0 : i32
    %c0_i32_1 = arith.constant 0 : i32
    return %c0_i32, %c0_i32_0 : i32, i32
  }
  func.func @transform_5(%arg0: i32) -> (i32, i32) {
    %c0_i32 = arith.constant 0 : i32
    %c0_i32_0 = arith.constant 0 : i32
    %c0_i32_1 = arith.constant 0 : i32
    return %c0_i32, %c0_i32_0 : i32, i32
  }
  func.func @transform_6(%arg0: i32) -> (i32, i32) {
    %c0_i32 = arith.constant 0 : i32
    %c0_i32_0 = arith.constant 0 : i32
    %c0_i32_1 = arith.constant 0 : i32
    return %c0_i32, %c0_i32_0 : i32, i32
  }
  func.func @transform_7(%arg0: i32) -> (i32, i32) {
    %c0_i32 = arith.constant 0 : i32
    %c0_i32_0 = arith.constant 0 : i32
    %c0_i32_1 = arith.constant 0 : i32
    return %c0_i32, %c0_i32_0 : i32, i32
  }
  func.func @transform_8(%arg0: i32) -> (i32, i32) {
    %c0_i32 = arith.constant 0 : i32
    %c0_i32_0 = arith.constant 0 : i32
    %c0_i32_1 = arith.constant 0 : i32
    return %c0_i32, %c0_i32_0 : i32, i32
  }
  func.func @transform_9(%arg0: i32) -> (i32, i32) {
    %c0_i32 = arith.constant 0 : i32
    %c0_i32_0 = arith.constant 0 : i32
    %c0_i32_1 = arith.constant 0 : i32
    return %c0_i32, %c0_i32_0 : i32, i32
  }
  func.func @transform_10(%arg0: i32) -> (i32, i32) {
    %c0_i32 = arith.constant 0 : i32
    %c0_i32_0 = arith.constant 0 : i32
    %c0_i32_1 = arith.constant 0 : i32
    return %c0_i32, %c0_i32_0 : i32, i32
  }
  func.func @transform_11(%arg0: i32) -> (i32, i32) {
    %c0_i32 = arith.constant 0 : i32
    %c0_i32_0 = arith.constant 0 : i32
    %c0_i32_1 = arith.constant 0 : i32
    return %c0_i32, %c0_i32_0 : i32, i32
  }
  func.func @transform_12(%arg0: i32) -> (i32, i32) {
    %c0_i32 = arith.constant 0 : i32
    %c0_i32_0 = arith.constant 0 : i32
    %c0_i32_1 = arith.constant 0 : i32
    return %c0_i32, %c0_i32_0 : i32, i32
  }
  func.func @transform_13(%arg0: i32) -> (i32, i32, i32) {
    %c0_i32 = arith.constant 0 : i32
    %c0_i32_0 = arith.constant 0 : i32
    %c0_i32_1 = arith.constant 0 : i32
    return %arg0, %c0_i32, %c0_i32_0 : i32, i32, i32
  }
}

</mosaic_0001>

<llo_original>
// kernel: wavlm_wrapper_forward.9
$region0: #{wavlm_wrapper_forward.9}
  #allocation0 [shape = 'u32[]', space=smem, size = 0x4, offset = 0x4, fixed_abs, tag = 'smem constant byte address 0x4 - core index']
  #allocation1 [shape = 'u32[144,128]{1,0:T(1,128)}', space=vmem, size = 0x12000, scoped, tag = 'internal scratch']
  %s0 = inlined_call_operand.vmem [shape: f32[2,20,64], index: 0, kind: input, shape index: {}]
  %s1 = inlined_call_operand.vmem [shape: bf16[2,64,32], index: 1, kind: input, shape index: {}]
  %s2 = inlined_call_operand.vmem [shape: f32[2,19,32], index: 2, kind: output, shape index: {}]
  %s3 = sld [smem:[#allocation0]]
  $region41: #{wavlm_wrapper_forward.9} parent=0
    _
  %s5 = ssub.s32 1, %s3
  %s6 = scalar_select 0, %s5, %s3
  loop: start=0, step=1, limit=4
  $region2: #{wavlm_wrapper_forward.9} parent=0 // loop_pre_header
    _
  $region3: #{wavlm_wrapper_forward.9} parent=0 // loop_header
    %s8 = sphi 0, %s12
    %p9 = scmp.ge.s32.totalorder %s8, 4
    %s18 = sphi 0, %s20
    %s21 = sphi 0, %s18
    %s22 = sphi 0, %s21
    %s38 = sphi 0, %s22
    %s42 = sphi 0, %s42
    %s44 = sphi 0, %s42
    %s45 = sphi 0, %s44
    %s59 = sphi 0, %s45
    %s65 = sphi 0, %s67
    %s68 = sphi 0, %s65
    %s69 = sphi 0, %s68
    %s85 = sphi 0, %s69
  $region4: #{wavlm_wrapper_forward.9} parent=0 // loop_header_branch
    %11 = sbr.rel (%p9) target = $region8
  $region5: #{wavlm_wrapper_forward.9} parent=0 // loop_body
    %s13 = ssub.s32 %s8, 1
    %s14 = ssub.s32 %s8, 2
    %s15 = sadd.s32 %s8, 1
    %s16 = ssub.s32 %s8, %s15
    %p17 = scmp.eq.s32.totalorder %s16, 0
    %s19 = sadd.s32 %s18, 1
    %s20 = scalar_select %p17, %s18, %s19
    %p23 = pneg %p17
    %p24 = scmp.eq.s32.totalorder %s8, 1
    %p25 = por %p23, %p24
    %p26 = scmp.ne.s32.totalorder %s18, %s21
    %p27 = scmp.eq.s32.totalorder %s8, 0
    %p28 = por %p26, %p27
    %p29 = scmp.ne.s32.totalorder %s18, %s21
    %p30 = scmp.eq.s32.totalorder %s13, 1
    %p31 = por %p29, %p30
    %p32 = scmp.ne.s32.totalorder %s21, %s22
    %p33 = scmp.eq.s32.totalorder %s13, 0
    %p34 = por %p32, %p33
    %p35 = scmp.ne.s32.totalorder %s21, %s22
    %p36 = scmp.eq.s32.totalorder %s14, 1
    %p37 = por %p35, %p36
    %p39 = scmp.ne.s32.totalorder %s22, %s38
    %p40 = scmp.eq.s32.totalorder %s14, 0
    %p41 = por %p39, %p40
    %s43 = sadd.s32 %s42, 1
    %p46 = scmp.eq.s32.totalorder %s8, 1
    %p47 = scmp.ne.s32.totalorder %s42, %s44
    %p48 = scmp.eq.s32.totalorder %s8, 0
    %p49 = por %p47, %p48
    %p50 = scmp.ne.s32.totalorder %s42, %s44
    %p51 = scmp.eq.s32.totalorder %s13, 1
    %p52 = por %p50, %p51
    %p53 = scmp.ne.s32.totalorder %s44, %s45
    %p54 = scmp.eq.s32.totalorder %s13, 0
    %p55 = por %p53, %p54
    %p56 = scmp.ne.s32.totalorder %s44, %s45
    %p57 = scmp.eq.s32.totalorder %s14, 1
    %p58 = por %p56, %p57
    %p60 = scmp.ne.s32.totalorder %s45, %s59
    %p61 = scmp.eq.s32.totalorder %s14, 0
    %p62 = por %p60, %p61
    %s63 = ssub.s32 %s8, %s15
    %p64 = scmp.eq.s32.totalorder %s63, 0
    %s66 = sadd.s32 %s65, 1
    %s67 = scalar_select %p64, %s65, %s66
    %p70 = pneg %p64
    %p71 = scmp.eq.s32.totalorder %s8, 1
    %p72 = por %p70, %p71
    %p73 = scmp.ne.s32.totalorder %s65, %s68
    %p74 = scmp.eq.s32.totalorder %s8, 0
    %p75 = por %p73, %p74
    %p76 = scmp.ne.s32.totalorder %s65, %s68
    %p77 = scmp.eq.s32.totalorder %s13, 1
    %p78 = por %p76, %p77
    %p79 = scmp.ne.s32.totalorder %s68, %s69
    %p80 = scmp.eq.s32.totalorder %s13, 0
    %p81 = por %p79, %p80
    %p82 = scmp.ne.s32.totalorder %s68, %s69
    %p83 = scmp.eq.s32.totalorder %s14, 1
    %p84 = por %p82, %p83
    %p86 = scmp.ne.s32.totalorder %s69, %s85
    %p87 = scmp.eq.s32.totalorder %s14, 0
    %p88 = por %p86, %p87
    %p89 = scmp.le.s32.totalorder 1, %s8
    %p90 = scmp.lt.s32.totalorder %s8, 3
    %p91 = pnand %p89, %p90
    %p92 = pneg %p91
    // Predicated region
    $region9: #{wavlm_wrapper_forward.9} parent=5 // pred_check
      _
    $region10: #{wavlm_wrapper_forward.9} parent=5 // pred_check_branch
      %94 = sbr.rel (%p91) target = $region12
    $region11: #{wavlm_wrapper_forward.9} parent=5 // pred_region
      %s95 = ssub.s32 %s8, 1
      // Predicated region
      $region13: #{wavlm_wrapper_forward.9} parent=11 // pred_check
        %p96 = pneg %p55
      $region14: #{wavlm_wrapper_forward.9} parent=11 // pred_check_branch
        %98 = sbr.rel (%p96) target = $region16
      $region15: #{wavlm_wrapper_forward.9} parent=11 // pred_region
        _
      $region16: #{wavlm_wrapper_forward.9} parent=11 // pred_fallthru
        _
    $region12: #{wavlm_wrapper_forward.9} parent=5 // pred_fallthru
      _
    %p99 = scmp.lt.s32.totalorder %s8, 2
    // Predicated region
    $region17: #{wavlm_wrapper_forward.9} parent=5 // pred_check
      %p100 = pneg %p99
    $region18: #{wavlm_wrapper_forward.9} parent=5 // pred_check_branch
      %102 = sbr.rel (%p100) target = $region20
    $region19: #{wavlm_wrapper_forward.9} parent=5 // pred_region
      // Predicated region
      $region21: #{wavlm_wrapper_forward.9} parent=19 // pred_check
        %p103 = pneg %p28
      $region22: #{wavlm_wrapper_forward.9} parent=19 // pred_check_branch
        %105 = sbr.rel (%p103) target = $region24
      $region23: #{wavlm_wrapper_forward.9} parent=19 // pred_region
        %p106 = scmp.lt.s32.totalorder %s8, 1
        %s107 = scalar_select %p106, %s8, 1
        %s108 = smul.addr %s107, 3
        %s109 = smul.addr %s108, 8
        %s110 = scalar_lea.vmem %s0, %s109
      $region24: #{wavlm_wrapper_forward.9} parent=19 // pred_fallthru
        _
    $region20: #{wavlm_wrapper_forward.9} parent=5 // pred_fallthru
      _
    %p111 = scmp.le.s32.totalorder 1, %s8
    %p112 = scmp.lt.s32.totalorder %s8, 3
    %p113 = pnand %p111, %p112
    %p114 = pneg %p113
    // Predicated region
    $region25: #{wavlm_wrapper_forward.9} parent=5 // pred_check
      _
    $region26: #{wavlm_wrapper_forward.9} parent=5 // pred_check_branch
      %116 = sbr.rel (%p113) target = $region28
    $region27: #{wavlm_wrapper_forward.9} parent=5 // pred_region
      %s117 = ssub.s32 %s8, 1
      %p118 = scmp.lt.s32.totalorder %s13, 1
      %s119 = scalar_select %p118, %s13, 1
      %s120 = smul.addr %s119, 3
      %s121 = smul.addr %s120, 8
      %s122 = scalar_lea.vmem %s0, %s121
      %p123 = pneg %p34
      %p124 = pneg %p31
      %p125 = pneg %p55
      %p126 = pneg %p52
      %p127 = pneg %p81
      %p128 = pneg %p78
      %p129 = scmp.lt.s32.totalorder %s13, 1
      %s130 = scalar_select %p129, %s13, 1
      %s131 = smul.addr %s130, 3
      %s132 = smul.addr %s131, 8
      %s133 = scalar_lea.vmem %s2, %s132
      %p134 = scmp.lt.s32.totalorder %s13, 1
      %s135 = scalar_select %p134, %s13, 1
      %s136 = smul.addr %s135, 3
      %s137 = smul.addr %s136, 8
      %s138 = scalar_lea.vmem %s0, %s137
      %p139 = scmp.lt.s32.totalorder %s13, 1
      %s140 = scalar_select %p139, %s13, 1
      %s141 = smul.addr %s140, 3
      %s142 = smul.addr %s141, 8
      %s143 = scalar_lea.vmem %s2, %s142
      %v145 = vld [vmem:[%s138] sm:$0xff]
      %v146 = vld [vmem:[%s138 + $0x8] sm:$0xff]
      %v147 = vld [vmem:[%s138 + $0x10] sm:$0xf]
      %v148 = vpack.c.bf16 %v146, %v145
      %v149 = vpack.c.bf16 %v147, %v147
      %v150 = vld [vmem:[%s1] sm:$0xf]
      %v151 = vld [vmem:[%s1 + $0x4] sm:$0xf]
      %v152 = vld [vmem:[%s1 + $0x8] sm:$0xf]
      %v153 = vld [vmem:[%s1 + $0xc] sm:$0xf]
      %v154 = vld [vmem:[%s1 + $0x10] sm:$0xf]
      %v155 = vld [vmem:[%s1 + $0x14] sm:$0xf]
      %v156 = vld [vmem:[%s1 + $0x18] sm:$0xf]
      %v157 = vld [vmem:[%s1 + $0x1c] sm:$0xf]
      %s158 = scalar_lea.vmem %s1, 32
      %v159 = vld [vmem:[%s158] sm:$0xf]
      %v160 = vld [vmem:[%s158 + $0x4] sm:$0xf]
      %v161 = vld [vmem:[%s158 + $0x8] sm:$0xf]
      %v162 = vld [vmem:[%s158 + $0xc] sm:$0xf]
      %v163 = vld [vmem:[%s158 + $0x10] sm:$0xf]
      %v164 = vld [vmem:[%s158 + $0x14] sm:$0xf]
      %v165 = vld [vmem:[%s158 + $0x18] sm:$0xf]
      %v166 = vld [vmem:[%s158 + $0x1c] sm:$0xf]
      %vm167 = vsmask.f32 7424
      %v169 = vshrl.u32 %v148, 16
      %v171 = vshll.u32 %v148, 16
      %v173 = vrot.slane %v171, 1
      %v174 = vor.u32 %v169, %v173
      %v176 = vshll.u32 %v149, 16
      %v178 = vrot.slane %v176, 1
      %v179 = vsel %vm167, %v174, %v178
      %v180 = vshrl.u32 %v149, 16
      %v182 = vor.u32 %v180, %v178
      %v191 = vunpack.c.l.b16 %v159
      %v192 = vunpack.c.l.b16 %v160
      %v193 = vunpack.c.l.b16 %v161
      %v194 = vunpack.c.l.b16 %v162
      %v195 = vunpack.c.l.b16 %v163
      %v196 = vunpack.c.l.b16 %v164
      %v197 = vunpack.c.l.b16 %v165
      %v198 = vunpack.c.l.b16 %v166
      %v199 = vpack.c.b16 %v192, %v191
      %v200 = vpack.c.b16 %v194, %v193
      %v201 = vpack.c.b16 %v196, %v195
      %v202 = vpack.c.b16 %v198, %v197
      %vm207 = vcmask 523264
      %v209 = vsel %vm207, %v179, 0
      %v212 = vsel %vm207, %v182, 0
      %214 = vmatprep.subr.bf16.mxu0 0
      %215 = vmatpush1.bf16.msra.mxu0 0
      %216 = vmatprep.subr.bf16.mxu0 0
      %217 = vmatpush1.bf16.msra.mxu0 0
      %218 = vmatprep.subr.bf16.mxu0 0
      %219 = vmatpush1.bf16.msra.mxu0 0
      %220 = vmatprep.subr.bf16.mxu0 0
      %221 = vmatpush1.bf16.msra.mxu0 0
      %222 = vmatprep.subr.bf16.mxu0 0
      %223 = vmatpush1.bf16.msra.mxu0 %v202
      %224 = vmatprep.subr.bf16.mxu0 0
      %225 = vmatpush1.bf16.msra.mxu0 %v201
      %226 = vmatprep.subr.bf16.mxu0 0
      %227 = vmatpush1.bf16.msra.mxu0 %v200
      %228 = vmatprep.subr.bf16.mxu0 0
      %229 = vmatpush1.bf16.msra.mxu0 %v199
      %230 = vmatprep.subr.bf16.mxu0 0
      %231 = vmatpush2.bf16.msra.mxu0 0
      %232 = vmatprep.subr.bf16.mxu0 0
      %233 = vmatpush2.bf16.msra.mxu0 0
      %234 = vmatprep.subr.bf16.mxu0 0
      %235 = vmatpush2.bf16.msra.mxu0 0
      %236 = vmatprep.subr.bf16.mxu0 0
      %237 = vmatpush2.bf16.msra.mxu0 0
      %238 = vmatprep.subr.bf16.mxu0 0
      %239 = vmatpush2.bf16.msra.mxu0 0
      %240 = vmatprep.subr.bf16.mxu0 0
      %241 = vmatpush2.bf16.msra.mxu0 0
      %242 = vmatprep.subr.bf16.mxu0 0
      %243 = vmatpush2.bf16.msra.mxu0 0
      %244 = vmatprep.subr.bf16.mxu0 0
      %245 = vmatpush2.bf16.msra.mxu0 0
      %246 = vmatprep.mubr.bf16.mxu0 0
      %247 = vmatmul.mubr.bf16.gmra.mxu0 %v209
      %v248 = vpop.f32.mrf.mxu0
      %v249 = vadd.f32 0.0, %v248
      %v250 = vpop.f32.mrf.mxu0
      %v251 = vpop.f32.mrf.mxu0
      %v252 = vadd.f32 0.0, %v251
      %v253 = vpop.f32.mrf.mxu0
      %254 = vmatprep.mubr.bf16.mxu0 0
      %255 = vmatmul.mubr.bf16.gmra.mxu0 %v212
      %v256 = vpop.f32.mrf.mxu0
      %v257 = vadd.f32 0.0, %v256
      %v258 = vpop.f32.mrf.mxu0
      %v259 = vpop.f32.mrf.mxu0
      %v260 = vpop.f32.mrf.mxu0
      %261 = vdwg.mxu0
      %v270 = vunpack.c.l.b16 %v150
      %v271 = vunpack.c.l.b16 %v151
      %v272 = vunpack.c.l.b16 %v152
      %v273 = vunpack.c.l.b16 %v153
      %v274 = vunpack.c.l.b16 %v154
      %v275 = vunpack.c.l.b16 %v155
      %v276 = vunpack.c.l.b16 %v156
      %v277 = vunpack.c.l.b16 %v157
      %v278 = vpack.c.b16 %v271, %v270
      %v279 = vpack.c.b16 %v273, %v272
      %v280 = vpack.c.b16 %v275, %v274
      %v281 = vpack.c.b16 %v277, %v276
      %v286 = vsel %vm207, %v148, 0
      %v288 = vsel %vm207, %v149, 0
      %290 = vmatprep.subr.bf16.mxu0 0
      %291 = vmatpush1.bf16.msra.mxu0 0
      %292 = vmatprep.subr.bf16.mxu0 0
      %293 = vmatpush1.bf16.msra.mxu0 0
      %294 = vmatprep.subr.bf16.mxu0 0
      %295 = vmatpush1.bf16.msra.mxu0 0
      %296 = vmatprep.subr.bf16.mxu0 0
      %297 = vmatpush1.bf16.msra.mxu0 0
      %298 = vmatprep.subr.bf16.mxu0 0
      %299 = vmatpush1.bf16.msra.mxu0 %v281
      %300 = vmatprep.subr.bf16.mxu0 0
      %301 = vmatpush1.bf16.msra.mxu0 %v280
      %302 = vmatprep.subr.bf16.mxu0 0
      %303 = vmatpush1.bf16.msra.mxu0 %v279
      %304 = vmatprep.subr.bf16.mxu0 0
      %305 = vmatpush1.bf16.msra.mxu0 %v278
      %306 = vmatprep.subr.bf16.mxu0 0
      %307 = vmatpush2.bf16.msra.mxu0 0
      %308 = vmatprep.subr.bf16.mxu0 0
      %309 = vmatpush2.bf16.msra.mxu0 0
      %310 = vmatprep.subr.bf16.mxu0 0
      %311 = vmatpush2.bf16.msra.mxu0 0
      %312 = vmatprep.subr.bf16.mxu0 0
      %313 = vmatpush2.bf16.msra.mxu0 0
      %314 = vmatprep.subr.bf16.mxu0 0
      %315 = vmatpush2.bf16.msra.mxu0 0
      %316 = vmatprep.subr.bf16.mxu0 0
      %317 = vmatpush2.bf16.msra.mxu0 0
      %318 = vmatprep.subr.bf16.mxu0 0
      %319 = vmatpush2.bf16.msra.mxu0 0
      %320 = vmatprep.subr.bf16.mxu0 0
      %321 = vmatpush2.bf16.msra.mxu0 0
      %322 = vmatprep.mubr.bf16.mxu0 0
      %323 = vmatmul.mubr.bf16.gmra.mxu0 %v286
      %v324 = vpop.f32.mrf.mxu0
      %v325 = vadd.f32 %v249, %v324
      %v326 = vpop.f32.mrf.mxu0
      %v327 = vpop.f32.mrf.mxu0
      %v328 = vadd.f32 %v252, %v327
      %v329 = vpop.f32.mrf.mxu0
      %330 = vmatprep.mubr.bf16.mxu0 0
      %331 = vmatmul.mubr.bf16.gmra.mxu0 %v288
      %v332 = vpop.f32.mrf.mxu0
      %v333 = vadd.f32 %v257, %v332
      %v334 = vpop.f32.mrf.mxu0
      %v335 = vpop.f32.mrf.mxu0
      %v336 = vpop.f32.mrf.mxu0
      %337 = vdwg.mxu0
      %v338 = vmul.f32 %v325, %v325
      %v339 = vmul.f32 %v328, %v328
      %v340 = vmul.f32 %v333, %v333
      %v341 = vmul.f32 %v325, %v338
      %v342 = vmul.f32 %v328, %v339
      %v343 = vmul.f32 %v333, %v340
      %v344 = vmul.f32 %v341, 0.044715
      %v345 = vmul.f32 %v342, 0.044715
      %v346 = vmul.f32 %v343, 0.044715
      %v347 = vadd.f32 %v325, %v344
      %v348 = vadd.f32 %v328, %v345
      %v349 = vadd.f32 %v333, %v346
      %v350 = vmul.f32 %v347, 0.7978846
      %v351 = vmul.f32 %v348, 0.7978846
      %v352 = vmul.f32 %v349, 0.7978846
      %v353 = vtanh.pop %v350
      %v354 = vtanh.pop %v351
      %v355 = vtanh.pop %v352
      %v356 = vadd.f32 %v353, 1.0
      %v357 = vadd.f32 %v354, 1.0
      %v358 = vadd.f32 %v355, 1.0
      %v359 = vmul.f32 %v356, 0.5
      %v360 = vmul.f32 %v357, 0.5
      %v361 = vmul.f32 %v358, 0.5
      %v362 = vmul.f32 %v325, %v359
      %v363 = vmul.f32 %v328, %v360
      %v364 = vmul.f32 %v333, %v361
      %vm365 = vcmask 261120
      %366 = vst.msk [vmem:[%s143] sm:$0xff] %vm365, %v362
      %367 = vst.msk [vmem:[%s143 + $0x8] sm:$0xff] %vm365, %v363
      %vm368 = vcmask 256000
      %369 = vst.msk [vmem:[%s143 + $0x10] sm:$0x7] %vm368, %v364
      %p370 = scmp.lt.s32.totalorder %s13, 1
      %s371 = scalar_select %p370, %s13, 1
      %s372 = smul.addr %s371, 3
      %s373 = smul.addr %s372, 8
      %s374 = scalar_lea.vmem %s2, %s373
      // Predicated region
      $region29: #{wavlm_wrapper_forward.9} parent=27 // pred_check
        %p375 = pneg %p78
      $region30: #{wavlm_wrapper_forward.9} parent=27 // pred_check_branch
        %377 = sbr.rel (%p375) target = $region32
      $region31: #{wavlm_wrapper_forward.9} parent=27 // pred_region
        _
      $region32: #{wavlm_wrapper_forward.9} parent=27 // pred_fallthru
        _
    $region28: #{wavlm_wrapper_forward.9} parent=5 // pred_fallthru
      _
    %p378 = scmp.le.s32.totalorder 2, %s8
    // Predicated region
    $region33: #{wavlm_wrapper_forward.9} parent=5 // pred_check
      %p379 = pneg %p378
    $region34: #{wavlm_wrapper_forward.9} parent=5 // pred_check_branch
      %381 = sbr.rel (%p379) target = $region36
    $region35: #{wavlm_wrapper_forward.9} parent=5 // pred_region
      %s382 = ssub.s32 %s8, 2
      // Predicated region
      $region37: #{wavlm_wrapper_forward.9} parent=35 // pred_check
        %p383 = pneg %p84
      $region38: #{wavlm_wrapper_forward.9} parent=35 // pred_check_branch
        %385 = sbr.rel (%p383) target = $region40
      $region39: #{wavlm_wrapper_forward.9} parent=35 // pred_region
        %p386 = scmp.lt.s32.totalorder %s14, 1
        %s387 = scalar_select %p386, %s14, 1
        %s388 = smul.addr %s387, 3
        %s389 = smul.addr %s388, 8
        %s390 = scalar_lea.vmem %s2, %s389
      $region40: #{wavlm_wrapper_forward.9} parent=35 // pred_fallthru
        _
    $region36: #{wavlm_wrapper_forward.9} parent=5 // pred_fallthru
      _
  $region6: #{wavlm_wrapper_forward.9} parent=0 // loop_footer
    %s12 = sadd.s32 1, %s8
  $region7: #{wavlm_wrapper_forward.9} parent=0 // loop_footer_branch
    %7 = sbr.rel target = $region3
  $region8: #{wavlm_wrapper_forward.9} parent=0 // loop_exit
    _

// kernel: wavlm_wrapper_forward.7
$region0: #{wavlm_wrapper_forward.7}
  #allocation0 [shape = 'u32[]', space=smem, size = 0x4, offset = 0x4, fixed_abs, tag = 'smem constant byte address 0x4 - core index']
  #allocation1 [shape = 'u32[144,128]{1,0:T(1,128)}', space=vmem, size = 0x12000, scoped, tag = 'internal scratch']
  %s0 = inlined_call_operand.vmem [shape: f32[2,80,5], index: 0, kind: input, shape index: {}]
  %s1 = inlined_call_operand.vmem [shape: bf16[2,5,32], index: 1, kind: input, shape index: {}]
  %s2 = inlined_call_operand.vmem [shape: f32[1,32], index: 2, kind: input, shape index: {}]
  %s3 = inlined_call_operand.vmem [shape: f32[1,32], index: 3, kind: input, shape index: {}]
  %s4 = inlined_call_operand.vmem [shape: f32[2,79,32], index: 4, kind: output, shape index: {}]
  %s5 = sld [smem:[#allocation0]]
  $region49: #{wavlm_wrapper_forward.7} parent=0
    _
  %s7 = ssub.s32 1, %s5
  %s8 = scalar_select 0, %s7, %s5
  loop: start=0, step=1, limit=4
  $region2: #{wavlm_wrapper_forward.7} parent=0 // loop_pre_header
    _
  $region3: #{wavlm_wrapper_forward.7} parent=0 // loop_header
    %s10 = sphi 0, %s14
    %p11 = scmp.ge.s32.totalorder %s10, 4
    %s20 = sphi 0, %s22
    %s23 = sphi 0, %s20
    %s24 = sphi 0, %s23
    %s40 = sphi 0, %s24
    %s44 = sphi 0, %s44
    %s46 = sphi 0, %s44
    %s47 = sphi 0, %s46
    %s61 = sphi 0, %s47
    %s65 = sphi 0, %s65
    %s67 = sphi 0, %s65
    %s68 = sphi 0, %s67
    %s82 = sphi 0, %s68
    %s86 = sphi 0, %s86
    %s88 = sphi 0, %s86
    %s89 = sphi 0, %s88
    %s103 = sphi 0, %s89
    %s109 = sphi 0, %s111
    %s112 = sphi 0, %s109
    %s113 = sphi 0, %s112
    %s129 = sphi 0, %s113
  $region4: #{wavlm_wrapper_forward.7} parent=0 // loop_header_branch
    %13 = sbr.rel (%p11) target = $region8
  $region5: #{wavlm_wrapper_forward.7} parent=0 // loop_body
    %s15 = ssub.s32 %s10, 1
    %s16 = ssub.s32 %s10, 2
    %s17 = sadd.s32 %s10, 1
    %s18 = ssub.s32 %s10, %s17
    %p19 = scmp.eq.s32.totalorder %s18, 0
    %s21 = sadd.s32 %s20, 1
    %s22 = scalar_select %p19, %s20, %s21
    %p25 = pneg %p19
    %p26 = scmp.eq.s32.totalorder %s10, 1
    %p27 = por %p25, %p26
    %p28 = scmp.ne.s32.totalorder %s20, %s23
    %p29 = scmp.eq.s32.totalorder %s10, 0
    %p30 = por %p28, %p29
    %p31 = scmp.ne.s32.totalorder %s20, %s23
    %p32 = scmp.eq.s32.totalorder %s15, 1
    %p33 = por %p31, %p32
    %p34 = scmp.ne.s32.totalorder %s23, %s24
    %p35 = scmp.eq.s32.totalorder %s15, 0
    %p36 = por %p34, %p35
    %p37 = scmp.ne.s32.totalorder %s23, %s24
    %p38 = scmp.eq.s32.totalorder %s16, 1
    %p39 = por %p37, %p38
    %p41 = scmp.ne.s32.totalorder %s24, %s40
    %p42 = scmp.eq.s32.totalorder %s16, 0
    %p43 = por %p41, %p42
    %s45 = sadd.s32 %s44, 1
    %p48 = scmp.eq.s32.totalorder %s10, 1
    %p49 = scmp.ne.s32.totalorder %s44, %s46
    %p50 = scmp.eq.s32.totalorder %s10, 0
    %p51 = por %p49, %p50
    %p52 = scmp.ne.s32.totalorder %s44, %s46
    %p53 = scmp.eq.s32.totalorder %s15, 1
    %p54 = por %p52, %p53
    %p55 = scmp.ne.s32.totalorder %s46, %s47
    %p56 = scmp.eq.s32.totalorder %s15, 0
    %p57 = por %p55, %p56
    %p58 = scmp.ne.s32.totalorder %s46, %s47
    %p59 = scmp.eq.s32.totalorder %s16, 1
    %p60 = por %p58, %p59
    %p62 = scmp.ne.s32.totalorder %s47, %s61
    %p63 = scmp.eq.s32.totalorder %s16, 0
    %p64 = por %p62, %p63
    %s66 = sadd.s32 %s65, 1
    %p69 = scmp.eq.s32.totalorder %s10, 1
    %p70 = scmp.ne.s32.totalorder %s65, %s67
    %p71 = scmp.eq.s32.totalorder %s10, 0
    %p72 = por %p70, %p71
    %p73 = scmp.ne.s32.totalorder %s65, %s67
    %p74 = scmp.eq.s32.totalorder %s15, 1
    %p75 = por %p73, %p74
    %p76 = scmp.ne.s32.totalorder %s67, %s68
    %p77 = scmp.eq.s32.totalorder %s15, 0
    %p78 = por %p76, %p77
    %p79 = scmp.ne.s32.totalorder %s67, %s68
    %p80 = scmp.eq.s32.totalorder %s16, 1
    %p81 = por %p79, %p80
    %p83 = scmp.ne.s32.totalorder %s68, %s82
    %p84 = scmp.eq.s32.totalorder %s16, 0
    %p85 = por %p83, %p84
    %s87 = sadd.s32 %s86, 1
    %p90 = scmp.eq.s32.totalorder %s10, 1
    %p91 = scmp.ne.s32.totalorder %s86, %s88
    %p92 = scmp.eq.s32.totalorder %s10, 0
    %p93 = por %p91, %p92
    %p94 = scmp.ne.s32.totalorder %s86, %s88
    %p95 = scmp.eq.s32.totalorder %s15, 1
    %p96 = por %p94, %p95
    %p97 = scmp.ne.s32.totalorder %s88, %s89
    %p98 = scmp.eq.s32.totalorder %s15, 0
    %p99 = por %p97, %p98
    %p100 = scmp.ne.s32.totalorder %s88, %s89
    %p101 = scmp.eq.s32.totalorder %s16, 1
    %p102 = por %p100, %p101
    %p104 = scmp.ne.s32.totalorder %s89, %s103
    %p105 = scmp.eq.s32.totalorder %s16, 0
    %p106 = por %p104, %p105
    %s107 = ssub.s32 %s10, %s17
    %p108 = scmp.eq.s32.totalorder %s107, 0
    %s110 = sadd.s32 %s109, 1
    %s111 = scalar_select %p108, %s109, %s110
    %p114 = pneg %p108
    %p115 = scmp.eq.s32.totalorder %s10, 1
    %p116 = por %p114, %p115
    %p117 = scmp.ne.s32.totalorder %s109, %s112
    %p118 = scmp.eq.s32.totalorder %s10, 0
    %p119 = por %p117, %p118
    %p120 = scmp.ne.s32.totalorder %s109, %s112
    %p121 = scmp.eq.s32.totalorder %s15, 1
    %p122 = por %p120, %p121
    %p123 = scmp.ne.s32.totalorder %s112, %s113
    %p124 = scmp.eq.s32.totalorder %s15, 0
    %p125 = por %p123, %p124
    %p126 = scmp.ne.s32.totalorder %s112, %s113
    %p127 = scmp.eq.s32.totalorder %s16, 1
    %p128 = por %p126, %p127
    %p130 = scmp.ne.s32.totalorder %s113, %s129
    %p131 = scmp.eq.s32.totalorder %s16, 0
    %p132 = por %p130, %p131
    %p133 = scmp.le.s32.totalorder 1, %s10
    %p134 = scmp.lt.s32.totalorder %s10, 3
    %p135 = pnand %p133, %p134
    %p136 = pneg %p135
    // Predicated region
    $region9: #{wavlm_wrapper_forward.7} parent=5 // pred_check
      _
    $region10: #{wavlm_wrapper_forward.7} parent=5 // pred_check_branch
      %138 = sbr.rel (%p135) target = $region12
    $region11: #{wavlm_wrapper_forward.7} parent=5 // pred_region
      %s139 = ssub.s32 %s10, 1
      // Predicated region
      $region13: #{wavlm_wrapper_forward.7} parent=11 // pred_check
        %p140 = pneg %p57
      $region14: #{wavlm_wrapper_forward.7} parent=11 // pred_check_branch
        %142 = sbr.rel (%p140) target = $region16
      $region15: #{wavlm_wrapper_forward.7} parent=11 // pred_region
        _
      $region16: #{wavlm_wrapper_forward.7} parent=11 // pred_fallthru
        _
      // Predicated region
      $region17: #{wavlm_wrapper_forward.7} parent=11 // pred_check
        %p143 = pneg %p78
      $region18: #{wavlm_wrapper_forward.7} parent=11 // pred_check_branch
        %145 = sbr.rel (%p143) target = $region20
      $region19: #{wavlm_wrapper_forward.7} parent=11 // pred_region
        _
      $region20: #{wavlm_wrapper_forward.7} parent=11 // pred_fallthru
        _
      // Predicated region
      $region21: #{wavlm_wrapper_forward.7} parent=11 // pred_check
        %p146 = pneg %p99
      $region22: #{wavlm_wrapper_forward.7} parent=11 // pred_check_branch
        %148 = sbr.rel (%p146) target = $region24
      $region23: #{wavlm_wrapper_forward.7} parent=11 // pred_region
        _
      $region24: #{wavlm_wrapper_forward.7} parent=11 // pred_fallthru
        _
    $region12: #{wavlm_wrapper_forward.7} parent=5 // pred_fallthru
      _
    %p149 = scmp.lt.s32.totalorder %s10, 2
    // Predicated region
    $region25: #{wavlm_wrapper_forward.7} parent=5 // pred_check
      %p150 = pneg %p149
    $region26: #{wavlm_wrapper_forward.7} parent=5 // pred_check_branch
      %152 = sbr.rel (%p150) target = $region28
    $region27: #{wavlm_wrapper_forward.7} parent=5 // pred_region
      // Predicated region
      $region29: #{wavlm_wrapper_forward.7} parent=27 // pred_check
        %p153 = pneg %p30
      $region30: #{wavlm_wrapper_forward.7} parent=27 // pred_check_branch
        %155 = sbr.rel (%p153) target = $region32
      $region31: #{wavlm_wrapper_forward.7} parent=27 // pred_region
        %p156 = scmp.lt.s32.totalorder %s10, 1
        %s157 = scalar_select %p156, %s10, 1
        %s158 = smul.addr %s157, 10
        %s159 = smul.addr %s158, 8
        %s160 = scalar_lea.vmem %s0, %s159
      $region32: #{wavlm_wrapper_forward.7} parent=27 // pred_fallthru
        _
    $region28: #{wavlm_wrapper_forward.7} parent=5 // pred_fallthru
      _
    %p161 = scmp.le.s32.totalorder 1, %s10
    %p162 = scmp.lt.s32.totalorder %s10, 3
    %p163 = pnand %p161, %p162
    %p164 = pneg %p163
    // Predicated region
    $region33: #{wavlm_wrapper_forward.7} parent=5 // pred_check
      _
    $region34: #{wavlm_wrapper_forward.7} parent=5 // pred_check_branch
      %166 = sbr.rel (%p163) target = $region36
    $region35: #{wavlm_wrapper_forward.7} parent=5 // pred_region
      %s167 = ssub.s32 %s10, 1
      %p168 = scmp.lt.s32.totalorder %s15, 1
      %s169 = scalar_select %p168, %s15, 1
      %s170 = smul.addr %s169, 10
      %s171 = smul.addr %s170, 8
      %s172 = scalar_lea.vmem %s0, %s171
      %p173 = pneg %p36
      %p174 = pneg %p33
      %p175 = pneg %p57
      %p176 = pneg %p54
      %p177 = pneg %p78
      %p178 = pneg %p75
      %p179 = pneg %p99
      %p180 = pneg %p96
      %p181 = pneg %p125
      %p182 = pneg %p122
      %p183 = scmp.lt.s32.totalorder %s15, 1
      %s184 = scalar_select %p183, %s15, 1
      %s185 = smul.addr %s184, 10
      %s186 = smul.addr %s185, 8
      %s187 = scalar_lea.vmem %s4, %s186
      %p188 = scmp.lt.s32.totalorder %s15, 1
      %s189 = scalar_select %p188, %s15, 1
      %s190 = smul.addr %s189, 10
      %s191 = smul.addr %s190, 8
      %s192 = scalar_lea.vmem %s0, %s191
      %p193 = scmp.lt.s32.totalorder %s15, 1
      %s194 = scalar_select %p193, %s15, 1
      %s195 = smul.addr %s194, 10
      %s196 = smul.addr %s195, 8
      %s197 = scalar_lea.vmem %s4, %s196
      %v199 = vld [vmem:[%s192] sm:$0xff]
      %v200 = vld [vmem:[%s192 + $0x8] sm:$0xff]
      %v201 = vld [vmem:[%s192 + $0x10] sm:$0xff]
      %v202 = vld [vmem:[%s192 + $0x18] sm:$0xff]
      %v203 = vld [vmem:[%s192 + $0x20] sm:$0xff]
      %v204 = vld [vmem:[%s192 + $0x28] sm:$0xff]
      %v205 = vld [vmem:[%s192 + $0x30] sm:$0xff]
      %v206 = vld [vmem:[%s192 + $0x38] sm:$0xff]
      %v207 = vld [vmem:[%s192 + $0x40] sm:$0xff]
      %v208 = vld [vmem:[%s192 + $0x48] sm:$0xff]
      %v209 = vpack.c.bf16 %v200, %v199
      %v210 = vpack.c.bf16 %v202, %v201
      %v211 = vpack.c.bf16 %v204, %v203
      %v212 = vpack.c.bf16 %v206, %v205
      %v213 = vpack.c.bf16 %v208, %v207
      %v214 = vld [vmem:[%s1] sm:$0x7]
      %s215 = scalar_lea.vmem %s1, 4
      %v216 = vld [vmem:[%s215] sm:$0x7]
      %vm217 = vsmask.f32 7424
      %v219 = vshrl.u32 %v209, 16
      %v221 = vshll.u32 %v209, 16
      %v223 = vrot.slane %v221, 1
      %v224 = vor.u32 %v219, %v223
      %v226 = vshll.u32 %v210, 16
      %v228 = vrot.slane %v226, 1
      %v229 = vsel %vm217, %v224, %v228
      %v230 = vshrl.u32 %v210, 16
      %v232 = vor.u32 %v230, %v228
      %v234 = vshll.u32 %v211, 16
      %v236 = vrot.slane %v234, 1
      %v237 = vsel %vm217, %v232, %v236
      %v238 = vshrl.u32 %v211, 16
      %v240 = vor.u32 %v238, %v236
      %v242 = vshll.u32 %v212, 16
      %v244 = vrot.slane %v242, 1
      %v245 = vsel %vm217, %v240, %v244
      %v246 = vshrl.u32 %v212, 16
      %v248 = vor.u32 %v246, %v244
      %v250 = vshll.u32 %v213, 16
      %v252 = vrot.slane %v250, 1
      %v253 = vsel %vm217, %v248, %v252
      %v254 = vshrl.u32 %v213, 16
      %v256 = vor.u32 %v254, %v252
      %vm257 = vcmask 39936
      %v259 = vsel %vm257, %v229, 0
      %v262 = vsel %vm257, %v237, 0
      %v265 = vsel %vm257, %v245, 0
      %v268 = vsel %vm257, %v253, 0
      %v271 = vsel %vm257, %v256, 0
      %vm273 = vcmask 1041408
      %vm274 = vcmask 1042432
      %v275 = vsel %vm273, 4294967295, 65535
      %v276 = vsel %vm274, %v275, 0
      %v278 = vand.u32 %v216, %v276
      %280 = vmatprep.subr.bf16.mxu0 0
      %281 = vmatpush1.bf16.msra.mxu0 0
      %282 = vmatprep.subr.bf16.mxu0 0
      %283 = vmatpush1.bf16.msra.mxu0 0
      %284 = vmatprep.subr.bf16.mxu0 0
      %285 = vmatpush1.bf16.msra.mxu0 0
      %286 = vmatprep.subr.bf16.mxu0 0
      %287 = vmatpush1.bf16.msra.mxu0 0
      %288 = vmatprep.subr.bf16.mxu0 0
      %289 = vmatpush1.bf16.msra.mxu0 0
      %290 = vmatprep.subr.bf16.mxu0 0
      %291 = vmatpush1.bf16.msra.mxu0 0
      %292 = vmatprep.subr.bf16.mxu0 0
      %293 = vmatpush1.bf16.msra.mxu0 0
      %294 = vmatprep.subr.bf16.mxu0 0
      %295 = vmatpush1.bf16.msra.mxu0 %v278
      %296 = vmatprep.subr.bf16.mxu0 0
      %297 = vmatpush2.bf16.msra.mxu0 0
      %298 = vmatprep.subr.bf16.mxu0 0
      %299 = vmatpush2.bf16.msra.mxu0 0
      %300 = vmatprep.subr.bf16.mxu0 0
      %301 = vmatpush2.bf16.msra.mxu0 0
      %302 = vmatprep.subr.bf16.mxu0 0
      %303 = vmatpush2.bf16.msra.mxu0 0
      %304 = vmatprep.subr.bf16.mxu0 0
      %305 = vmatpush2.bf16.msra.mxu0 0
      %306 = vmatprep.subr.bf16.mxu0 0
      %307 = vmatpush2.bf16.msra.mxu0 0
      %308 = vmatprep.subr.bf16.mxu0 0
      %309 = vmatpush2.bf16.msra.mxu0 0
      %310 = vmatprep.subr.bf16.mxu0 0
      %311 = vmatpush2.bf16.msra.mxu0 0
      %312 = vmatprep.mubr.bf16.mxu0 0
      %313 = vmatmul.mubr.bf16.gmra.mxu0 %v259
      %v314 = vpop.f32.mrf.mxu0
      %v315 = vadd.f32 0.0, %v314
      %v316 = vpop.f32.mrf.mxu0
      %v317 = vpop.f32.mrf.mxu0
      %v318 = vadd.f32 0.0, %v317
      %v319 = vpop.f32.mrf.mxu0
      %320 = vmatprep.mubr.bf16.mxu0 0
      %321 = vmatmul.mubr.bf16.gmra.mxu0 %v262
      %v322 = vpop.f32.mrf.mxu0
      %v323 = vadd.f32 0.0, %v322
      %v324 = vpop.f32.mrf.mxu0
      %v325 = vpop.f32.mrf.mxu0
      %v326 = vadd.f32 0.0, %v325
      %v327 = vpop.f32.mrf.mxu0
      %328 = vmatprep.mubr.bf16.mxu0 0
      %329 = vmatmul.mubr.bf16.gmra.mxu0 %v265
      %v330 = vpop.f32.mrf.mxu0
      %v331 = vadd.f32 0.0, %v330
      %v332 = vpop.f32.mrf.mxu0
      %v333 = vpop.f32.mrf.mxu0
      %v334 = vadd.f32 0.0, %v333
      %v335 = vpop.f32.mrf.mxu0
      %336 = vmatprep.mubr.bf16.mxu0 0
      %337 = vmatmul.mubr.bf16.gmra.mxu0 %v268
      %v338 = vpop.f32.mrf.mxu0
      %v339 = vadd.f32 0.0, %v338
      %v340 = vpop.f32.mrf.mxu0
      %v341 = vpop.f32.mrf.mxu0
      %v342 = vadd.f32 0.0, %v341
      %v343 = vpop.f32.mrf.mxu0
      %344 = vmatprep.mubr.bf16.mxu0 0
      %345 = vmatmul.mubr.bf16.gmra.mxu0 %v271
      %v346 = vpop.f32.mrf.mxu0
      %v347 = vadd.f32 0.0, %v346
      %v348 = vpop.f32.mrf.mxu0
      %v349 = vpop.f32.mrf.mxu0
      %v350 = vadd.f32 0.0, %v349
      %v351 = vpop.f32.mrf.mxu0
      %352 = vdwg.mxu0
      %v353 = vsel %vm257, %v209, 0
      %v355 = vsel %vm257, %v210, 0
      %v357 = vsel %vm257, %v211, 0
      %v359 = vsel %vm257, %v212, 0
      %v361 = vsel %vm257, %v213, 0
      %v364 = vand.u32 %v214, %v276
      %366 = vmatprep.subr.bf16.mxu0 0
      %367 = vmatpush1.bf16.msra.mxu0 0
      %368 = vmatprep.subr.bf16.mxu0 0
      %369 = vmatpush1.bf16.msra.mxu0 0
      %370 = vmatprep.subr.bf16.mxu0 0
      %371 = vmatpush1.bf16.msra.mxu0 0
      %372 = vmatprep.subr.bf16.mxu0 0
      %373 = vmatpush1.bf16.msra.mxu0 0
      %374 = vmatprep.subr.bf16.mxu0 0
      %375 = vmatpush1.bf16.msra.mxu0 0
      %376 = vmatprep.subr.bf16.mxu0 0
      %377 = vmatpush1.bf16.msra.mxu0 0
      %378 = vmatprep.subr.bf16.mxu0 0
      %379 = vmatpush1.bf16.msra.mxu0 0
      %380 = vmatprep.subr.bf16.mxu0 0
      %381 = vmatpush1.bf16.msra.mxu0 %v364
      %382 = vmatprep.subr.bf16.mxu0 0
      %383 = vmatpush2.bf16.msra.mxu0 0
      %384 = vmatprep.subr.bf16.mxu0 0
      %385 = vmatpush2.bf16.msra.mxu0 0
      %386 = vmatprep.subr.bf16.mxu0 0
      %387 = vmatpush2.bf16.msra.mxu0 0
      %388 = vmatprep.subr.bf16.mxu0 0
      %389 = vmatpush2.bf16.msra.mxu0 0
      %390 = vmatprep.subr.bf16.mxu0 0
      %391 = vmatpush2.bf16.msra.mxu0 0
      %392 = vmatprep.subr.bf16.mxu0 0
      %393 = vmatpush2.bf16.msra.mxu0 0
      %394 = vmatprep.subr.bf16.mxu0 0
      %395 = vmatpush2.bf16.msra.mxu0 0
      %396 = vmatprep.subr.bf16.mxu0 0
      %397 = vmatpush2.bf16.msra.mxu0 0
      %398 = vmatprep.mubr.bf16.mxu0 0
      %399 = vmatmul.mubr.bf16.gmra.mxu0 %v353
      %v400 = vpop.f32.mrf.mxu0
      %v401 = vadd.f32 %v315, %v400
      %v402 = vpop.f32.mrf.mxu0
      %v403 = vpop.f32.mrf.mxu0
      %v404 = vadd.f32 %v318, %v403
      %v405 = vpop.f32.mrf.mxu0
      %406 = vmatprep.mubr.bf16.mxu0 0
      %407 = vmatmul.mubr.bf16.gmra.mxu0 %v355
      %v408 = vpop.f32.mrf.mxu0
      %v409 = vadd.f32 %v323, %v408
      %v410 = vpop.f32.mrf.mxu0
      %v411 = vpop.f32.mrf.mxu0
      %v412 = vadd.f32 %v326, %v411
      %v413 = vpop.f32.mrf.mxu0
      %414 = vmatprep.mubr.bf16.mxu0 0
      %415 = vmatmul.mubr.bf16.gmra.mxu0 %v357
      %v416 = vpop.f32.mrf.mxu0
      %v417 = vadd.f32 %v331, %v416
      %v418 = vpop.f32.mrf.mxu0
      %v419 = vpop.f32.mrf.mxu0
      %v420 = vadd.f32 %v334, %v419
      %v421 = vpop.f32.mrf.mxu0
      %422 = vmatprep.mubr.bf16.mxu0 0
      %423 = vmatmul.mubr.bf16.gmra.mxu0 %v359
      %v424 = vpop.f32.mrf.mxu0
      %v425 = vadd.f32 %v339, %v424
      %v426 = vpop.f32.mrf.mxu0
      %v427 = vpop.f32.mrf.mxu0
      %v428 = vadd.f32 %v342, %v427
      %v429 = vpop.f32.mrf.mxu0
      %430 = vmatprep.mubr.bf16.mxu0 0
      %431 = vmatmul.mubr.bf16.gmra.mxu0 %v361
      %v432 = vpop.f32.mrf.mxu0
      %v433 = vadd.f32 %v347, %v432
      %v434 = vpop.f32.mrf.mxu0
      %v435 = vpop.f32.mrf.mxu0
      %v436 = vadd.f32 %v350, %v435
      %v437 = vpop.f32.mrf.mxu0
      %438 = vdwg.mxu0
      %vm439 = vcmask 261120
      %v440 = vsel %vm439, %v401, 0.0
      %v441 = vsel %vm439, %v404, 0.0
      %v442 = vadd.f32 %v440, %v441
      %v443 = vsel %vm439, %v409, 0.0
      %v444 = vadd.f32 %v442, %v443
      %v445 = vsel %vm439, %v412, 0.0
      %v446 = vadd.f32 %v444, %v445
      %v447 = vsel %vm439, %v417, 0.0
      %v448 = vadd.f32 %v446, %v447
      %v449 = vsel %vm439, %v420, 0.0
      %v450 = vadd.f32 %v448, %v449
      %v451 = vsel %vm439, %v425, 0.0
      %v452 = vadd.f32 %v450, %v451
      %v453 = vsel %vm439, %v428, 0.0
      %v454 = vadd.f32 %v452, %v453
      %v455 = vsel %vm439, %v433, 0.0
      %v456 = vadd.f32 %v454, %v455
      %vm457 = vcmask 260096
      %v458 = vsel %vm457, %v436, 0.0
      %v459 = vadd.f32 %v456, %v458
      %v460 = vrot.slane %v459, 4
      %v461 = vadd.f32 %v459, %v460
      %v462 = vrot.slane %v461, 2
      %v463 = vadd.f32 %v461, %v462
      %v464 = vrot.slane %v463, 1
      %v465 = vadd.f32 %v463, %v464
      %v466 = vrcp.pop 79.0
      %v467 = vmul.f32 %v465, %v466
      %v468 = vsub.f32 %v401, %v467
      %v469 = vsub.f32 %v404, %v467
      %v470 = vsub.f32 %v409, %v467
      %v471 = vsub.f32 %v412, %v467
      %v472 = vsub.f32 %v417, %v467
      %v473 = vsub.f32 %v420, %v467
      %v474 = vsub.f32 %v425, %v467
      %v475 = vsub.f32 %v428, %v467
      %v476 = vsub.f32 %v433, %v467
      %v477 = vsub.f32 %v436, %v467
      %v478 = vmul.f32 %v468, %v468
      %v479 = vmul.f32 %v469, %v469
      %v480 = vmul.f32 %v470, %v470
      %v481 = vmul.f32 %v471, %v471
      %v482 = vmul.f32 %v472, %v472
      %v483 = vmul.f32 %v473, %v473
      %v484 = vmul.f32 %v474, %v474
      %v485 = vmul.f32 %v475, %v475
      %v486 = vmul.f32 %v476, %v476
      %v487 = vmul.f32 %v477, %v477
      %v488 = vsel %vm439, %v478, 0.0
      %v489 = vsel %vm439, %v479, 0.0
      %v490 = vadd.f32 %v488, %v489
      %v491 = vsel %vm439, %v480, 0.0
      %v492 = vadd.f32 %v490, %v491
      %v493 = vsel %vm439, %v481, 0.0
      %v494 = vadd.f32 %v492, %v493
      %v495 = vsel %vm439, %v482, 0.0
      %v496 = vadd.f32 %v494, %v495
      %v497 = vsel %vm439, %v483, 0.0
      %v498 = vadd.f32 %v496, %v497
      %v499 = vsel %vm439, %v484, 0.0
      %v500 = vadd.f32 %v498, %v499
      %v501 = vsel %vm439, %v485, 0.0
      %v502 = vadd.f32 %v500, %v501
      %v503 = vsel %vm439, %v486, 0.0
      %v504 = vadd.f32 %v502, %v503
      %v505 = vsel %vm457, %v487, 0.0
      %v506 = vadd.f32 %v504, %v505
      %v507 = vrot.slane %v506, 4
      %v508 = vadd.f32 %v506, %v507
      %v509 = vrot.slane %v508, 2
      %v510 = vadd.f32 %v508, %v509
      %v511 = vrot.slane %v510, 1
      %v512 = vadd.f32 %v510, %v511
      %v513 = vmul.f32 %v512, %v466
      %v514 = vadd.f32 %v513, 1e-05
      %v515 = vrsqrt.pop %v514
      %v516 = vmul.f32 %v468, %v515
      %v517 = vmul.f32 %v469, %v515
      %v518 = vmul.f32 %v470, %v515
      %v519 = vmul.f32 %v471, %v515
      %v520 = vmul.f32 %v472, %v515
      %v521 = vmul.f32 %v473, %v515
      %v522 = vmul.f32 %v474, %v515
      %v523 = vmul.f32 %v475, %v515
      %v524 = vmul.f32 %v476, %v515
      %v525 = vmul.f32 %v477, %v515
      %v526 = vld [vmem:[%s2] sm:$0x1]
      %v528 = vlaneseq
      %v529 = vshrl.u32 %v528, 7
      %v530 = vsub.s32 0, %v529
      %v531 = vrot.slane %v526, %v530
      %v533 = vmul.f32 %v516, %v531
      %v534 = vmul.f32 %v517, %v531
      %v535 = vmul.f32 %v518, %v531
      %v536 = vmul.f32 %v519, %v531
      %v537 = vmul.f32 %v520, %v531
      %v538 = vmul.f32 %v521, %v531
      %v539 = vmul.f32 %v522, %v531
      %v540 = vmul.f32 %v523, %v531
      %v541 = vmul.f32 %v524, %v531
      %v542 = vmul.f32 %v525, %v531
      %v543 = vld [vmem:[%s3] sm:$0x1]
      %v545 = vlaneseq
      %v546 = vshrl.u32 %v545, 7
      %v547 = vsub.s32 0, %v546
      %v548 = vrot.slane %v543, %v547
      %v550 = vadd.f32 %v533, %v548
      %v551 = vadd.f32 %v534, %v548
      %v552 = vadd.f32 %v535, %v548
      %v553 = vadd.f32 %v536, %v548
      %v554 = vadd.f32 %v537, %v548
      %v555 = vadd.f32 %v538, %v548
      %v556 = vadd.f32 %v539, %v548
      %v557 = vadd.f32 %v540, %v548
      %v558 = vadd.f32 %v541, %v548
      %v559 = vadd.f32 %v542, %v548
      %v560 = vmul.f32 %v550, %v550
      %v561 = vmul.f32 %v551, %v551
      %v562 = vmul.f32 %v552, %v552
      %v563 = vmul.f32 %v553, %v553
      %v564 = vmul.f32 %v554, %v554
      %v565 = vmul.f32 %v555, %v555
      %v566 = vmul.f32 %v556, %v556
      %v567 = vmul.f32 %v557, %v557
      %v568 = vmul.f32 %v558, %v558
      %v569 = vmul.f32 %v559, %v559
      %v570 = vmul.f32 %v550, %v560
      %v571 = vmul.f32 %v551, %v561
      %v572 = vmul.f32 %v552, %v562
      %v573 = vmul.f32 %v553, %v563
      %v574 = vmul.f32 %v554, %v564
      %v575 = vmul.f32 %v555, %v565
      %v576 = vmul.f32 %v556, %v566
      %v577 = vmul.f32 %v557, %v567
      %v578 = vmul.f32 %v558, %v568
      %v579 = vmul.f32 %v559, %v569
      %v580 = vmul.f32 %v570, 0.044715
      %v581 = vmul.f32 %v571, 0.044715
      %v582 = vmul.f32 %v572, 0.044715
      %v583 = vmul.f32 %v573, 0.044715
      %v584 = vmul.f32 %v574, 0.044715
      %v585 = vmul.f32 %v575, 0.044715
      %v586 = vmul.f32 %v576, 0.044715
      %v587 = vmul.f32 %v577, 0.044715
      %v588 = vmul.f32 %v578, 0.044715
      %v589 = vmul.f32 %v579, 0.044715
      %v590 = vadd.f32 %v550, %v580
      %v591 = vadd.f32 %v551, %v581
      %v592 = vadd.f32 %v552, %v582
      %v593 = vadd.f32 %v553, %v583
      %v594 = vadd.f32 %v554, %v584
      %v595 = vadd.f32 %v555, %v585
      %v596 = vadd.f32 %v556, %v586
      %v597 = vadd.f32 %v557, %v587
      %v598 = vadd.f32 %v558, %v588
      %v599 = vadd.f32 %v559, %v589
      %v600 = vmul.f32 %v590, 0.7978846
      %v601 = vmul.f32 %v591, 0.7978846
      %v602 = vmul.f32 %v592, 0.7978846
      %v603 = vmul.f32 %v593, 0.7978846
      %v604 = vmul.f32 %v594, 0.7978846
      %v605 = vmul.f32 %v595, 0.7978846
      %v606 = vmul.f32 %v596, 0.7978846
      %v607 = vmul.f32 %v597, 0.7978846
      %v608 = vmul.f32 %v598, 0.7978846
      %v609 = vmul.f32 %v599, 0.7978846
      %v610 = vtanh.pop %v600
      %v611 = vtanh.pop %v601
      %v612 = vtanh.pop %v602
      %v613 = vtanh.pop %v603
      %v614 = vtanh.pop %v604
      %v615 = vtanh.pop %v605
      %v616 = vtanh.pop %v606
      %v617 = vtanh.pop %v607
      %v618 = vtanh.pop %v608
      %v619 = vtanh.pop %v609
      %v620 = vadd.f32 %v610, 1.0
      %v621 = vadd.f32 %v611, 1.0
      %v622 = vadd.f32 %v612, 1.0
      %v623 = vadd.f32 %v613, 1.0
      %v624 = vadd.f32 %v614, 1.0
      %v625 = vadd.f32 %v615, 1.0
      %v626 = vadd.f32 %v616, 1.0
      %v627 = vadd.f32 %v617, 1.0
      %v628 = vadd.f32 %v618, 1.0
      %v629 = vadd.f32 %v619, 1.0
      %v630 = vmul.f32 %v620, 0.5
      %v631 = vmul.f32 %v621, 0.5
      %v632 = vmul.f32 %v622, 0.5
      %v633 = vmul.f32 %v623, 0.5
      %v634 = vmul.f32 %v624, 0.5
      %v635 = vmul.f32 %v625, 0.5
      %v636 = vmul.f32 %v626, 0.5
      %v637 = vmul.f32 %v627, 0.5
      %v638 = vmul.f32 %v628, 0.5
      %v639 = vmul.f32 %v629, 0.5
      %v640 = vmul.f32 %v550, %v630
      %v641 = vmul.f32 %v551, %v631
      %v642 = vmul.f32 %v552, %v632
      %v643 = vmul.f32 %v553, %v633
      %v644 = vmul.f32 %v554, %v634
      %v645 = vmul.f32 %v555, %v635
      %v646 = vmul.f32 %v556, %v636
      %v647 = vmul.f32 %v557, %v637
      %v648 = vmul.f32 %v558, %v638
      %v649 = vmul.f32 %v559, %v639
      %650 = vst.msk [vmem:[%s197] sm:$0xff] %vm439, %v640
      %651 = vst.msk [vmem:[%s197 + $0x8] sm:$0xff] %vm439, %v641
      %652 = vst.msk [vmem:[%s197 + $0x10] sm:$0xff] %vm439, %v642
      %653 = vst.msk [vmem:[%s197 + $0x18] sm:$0xff] %vm439, %v643
      %654 = vst.msk [vmem:[%s197 + $0x20] sm:$0xff] %vm439, %v644
      %655 = vst.msk [vmem:[%s197 + $0x28] sm:$0xff] %vm439, %v645
      %656 = vst.msk [vmem:[%s197 + $0x30] sm:$0xff] %vm439, %v646
      %657 = vst.msk [vmem:[%s197 + $0x38] sm:$0xff] %vm439, %v647
      %658 = vst.msk [vmem:[%s197 + $0x40] sm:$0xff] %vm439, %v648
      %659 = vst.msk [vmem:[%s197 + $0x48] sm:$0x7f] %vm457, %v649
      %p660 = scmp.lt.s32.totalorder %s15, 1
      %s661 = scalar_select %p660, %s15, 1
      %s662 = smul.addr %s661, 10
      %s663 = smul.addr %s662, 8
      %s664 = scalar_lea.vmem %s4, %s663
      // Predicated region
      $region37: #{wavlm_wrapper_forward.7} parent=35 // pred_check
        %p665 = pneg %p122
      $region38: #{wavlm_wrapper_forward.7} parent=35 // pred_check_branch
        %667 = sbr.rel (%p665) target = $region40
      $region39: #{wavlm_wrapper_forward.7} parent=35 // pred_region
        _
      $region40: #{wavlm_wrapper_forward.7} parent=35 // pred_fallthru
        _
    $region36: #{wavlm_wrapper_forward.7} parent=5 // pred_fallthru
      _
    %p668 = scmp.le.s32.totalorder 2, %s10
    // Predicated region
    $region41: #{wavlm_wrapper_forward.7} parent=5 // pred_check
      %p669 = pneg %p668
    $region42: #{wavlm_wrapper_forward.7} parent=5 // pred_check_branch
      %671 = sbr.rel (%p669) target = $region44
    $region43: #{wavlm_wrapper_forward.7} parent=5 // pred_region
      %s672 = ssub.s32 %s10, 2
      // Predicated region
      $region45: #{wavlm_wrapper_forward.7} parent=43 // pred_check
        %p673 = pneg %p128
      $region46: #{wavlm_wrapper_forward.7} parent=43 // pred_check_branch
        %675 = sbr.rel (%p673) target = $region48
      $region47: #{wavlm_wrapper_forward.7} parent=43 // pred_region
        %p676 = scmp.lt.s32.totalorder %s16, 1
        %s677 = scalar_select %p676, %s16, 1
        %s678 = smul.addr %s677, 10
        %s679 = smul.addr %s678, 8
        %s680 = scalar_lea.vmem %s4, %s679
      $region48: #{wavlm_wrapper_forward.7} parent=43 // pred_fallthru
        _
    $region44: #{wavlm_wrapper_forward.7} parent=5 // pred_fallthru
      _
  $region6: #{wavlm_wrapper_forward.7} parent=0 // loop_footer
    %s14 = sadd.s32 1, %s10
  $region7: #{wavlm_wrapper_forward.7} parent=0 // loop_footer_branch
    %9 = sbr.rel target = $region3
  $region8: #{wavlm_wrapper_forward.7} parent=0 // loop_exit
    _

// kernel: wavlm_wrapper_forward.10
$region0: #{wavlm_wrapper_forward.10}
  #allocation0 [shape = 'u32[]', space=smem, size = 0x4, offset = 0x4, fixed_abs, tag = 'smem constant byte address 0x4 - core index']
  #allocation1 [shape = 'u32[144,128]{1,0:T(1,128)}', space=vmem, size = 0x12000, scoped, tag = 'internal scratch']
  %s0 = inlined_call_operand.vmem [shape: f32[38,32], index: 0, kind: input, shape index: {}]
  %s1 = inlined_call_operand.vmem [shape: f32[1,32], index: 1, kind: input, shape index: {}]
  %s2 = inlined_call_operand.vmem [shape: f32[1,32], index: 2, kind: input, shape index: {}]
  %s3 = inlined_call_operand.vmem [shape: bf16[32,32], index: 3, kind: input, shape index: {}]
  %s4 = inlined_call_operand.vmem [shape: f32[1,32], index: 4, kind: input, shape index: {}]
  %s5 = inlined_call_operand.vmem [shape: f32[38,32], index: 5, kind: output, shape index: {}]
  %s6 = sld [smem:[#allocation0]]
  $region30: #{wavlm_wrapper_forward.10} parent=0
    _
  %s8 = ssub.s32 1, %s6
  %s9 = scalar_select 0, %s8, %s6
  // Predicated region
  $region2: #{wavlm_wrapper_forward.10} parent=0 // pred_check
    _
  $region3: #{wavlm_wrapper_forward.10} parent=0 // pred_check_branch
    %11 = sbr.rel (0) target = $region5
  $region4: #{wavlm_wrapper_forward.10} parent=0 // pred_region
    _
  $region5: #{wavlm_wrapper_forward.10} parent=0 // pred_fallthru
    _
  // Predicated region
  $region6: #{wavlm_wrapper_forward.10} parent=0 // pred_check
    _
  $region7: #{wavlm_wrapper_forward.10} parent=0 // pred_check_branch
    %13 = sbr.rel (0) target = $region9
  $region8: #{wavlm_wrapper_forward.10} parent=0 // pred_region
    _
  $region9: #{wavlm_wrapper_forward.10} parent=0 // pred_fallthru
    _
  // Predicated region
  $region10: #{wavlm_wrapper_forward.10} parent=0 // pred_check
    _
  $region11: #{wavlm_wrapper_forward.10} parent=0 // pred_check_branch
    %15 = sbr.rel (0) target = $region13
  $region12: #{wavlm_wrapper_forward.10} parent=0 // pred_region
    _
  $region13: #{wavlm_wrapper_forward.10} parent=0 // pred_fallthru
    _
  // Predicated region
  $region14: #{wavlm_wrapper_forward.10} parent=0 // pred_check
    _
  $region15: #{wavlm_wrapper_forward.10} parent=0 // pred_check_branch
    %17 = sbr.rel (0) target = $region17
  $region16: #{wavlm_wrapper_forward.10} parent=0 // pred_region
    _
  $region17: #{wavlm_wrapper_forward.10} parent=0 // pred_fallthru
    _
  // Predicated region
  $region18: #{wavlm_wrapper_forward.10} parent=0 // pred_check
    _
  $region19: #{wavlm_wrapper_forward.10} parent=0 // pred_check_branch
    %19 = sbr.rel (0) target = $region21
  $region20: #{wavlm_wrapper_forward.10} parent=0 // pred_region
    _
  $region21: #{wavlm_wrapper_forward.10} parent=0 // pred_fallthru
    _
  %v21 = vld [vmem:[%s0] sm:$0xff]
  %v22 = vld [vmem:[%s0 + $0x8] sm:$0xff]
  %v23 = vld [vmem:[%s0 + $0x10] sm:$0xff]
  %v24 = vld [vmem:[%s0 + $0x18] sm:$0xff]
  %v25 = vld [vmem:[%s0 + $0x20] sm:$0x3f]
  %v26 = vld [vmem:[%s1] sm:$0x1]
  %v27 = vld [vmem:[%s2] sm:$0x1]
  %vm28 = vcmask 261120
  %v29 = vsel %vm28, %v21, 0.0
  %30 = vadd.xlane.f32.xlu0 %v29
  %v31 = vpop.xlane.xlu0 %30
  %v32 = vsel %vm28, %v22, 0.0
  %33 = vadd.xlane.f32.xlu0 %v32
  %v34 = vpop.xlane.xlu0 %33
  %v35 = vsel %vm28, %v23, 0.0
  %36 = vadd.xlane.f32.xlu0 %v35
  %v37 = vpop.xlane.xlu0 %36
  %v38 = vsel %vm28, %v24, 0.0
  %39 = vadd.xlane.f32.xlu0 %v38
  %v40 = vpop.xlane.xlu0 %39
  %vm41 = vcmask 259072
  %v42 = vsel %vm41, %v25, 0.0
  %43 = vadd.xlane.f32.xlu0 %v42
  %v44 = vpop.xlane.xlu0 %43
  %v45 = vrcp.pop 32.0
  %v46 = vmul.f32 %v31, %v45
  %v47 = vmul.f32 %v34, %v45
  %v48 = vmul.f32 %v37, %v45
  %v49 = vmul.f32 %v40, %v45
  %v50 = vmul.f32 %v44, %v45
  %v51 = vsub.f32 %v21, %v46
  %v52 = vsub.f32 %v22, %v47
  %v53 = vsub.f32 %v23, %v48
  %v54 = vsub.f32 %v24, %v49
  %v55 = vsub.f32 %v25, %v50
  %v56 = vmul.f32 %v51, %v51
  %v57 = vmul.f32 %v52, %v52
  %v58 = vmul.f32 %v53, %v53
  %v59 = vmul.f32 %v54, %v54
  %v60 = vmul.f32 %v55, %v55
  %v61 = vsel %vm28, %v56, 0.0
  %62 = vadd.xlane.f32.xlu0 %v61
  %v63 = vpop.xlane.xlu0 %62
  %v64 = vsel %vm28, %v57, 0.0
  %65 = vadd.xlane.f32.xlu0 %v64
  %v66 = vpop.xlane.xlu0 %65
  %v67 = vsel %vm28, %v58, 0.0
  %68 = vadd.xlane.f32.xlu0 %v67
  %v69 = vpop.xlane.xlu0 %68
  %v70 = vsel %vm28, %v59, 0.0
  %71 = vadd.xlane.f32.xlu0 %v70
  %v72 = vpop.xlane.xlu0 %71
  %v73 = vsel %vm41, %v60, 0.0
  %74 = vadd.xlane.f32.xlu0 %v73
  %v75 = vpop.xlane.xlu0 %74
  %v76 = vmul.f32 %v63, %v45
  %v77 = vmul.f32 %v66, %v45
  %v78 = vmul.f32 %v69, %v45
  %v79 = vmul.f32 %v72, %v45
  %v80 = vmul.f32 %v75, %v45
  %v81 = vadd.f32 %v76, 1e-05
  %v82 = vadd.f32 %v77, 1e-05
  %v83 = vadd.f32 %v78, 1e-05
  %v84 = vadd.f32 %v79, 1e-05
  %v85 = vadd.f32 %v80, 1e-05
  %v86 = vrsqrt.pop %v81
  %v87 = vrsqrt.pop %v82
  %v88 = vrsqrt.pop %v83
  %v89 = vrsqrt.pop %v84
  %v90 = vrsqrt.pop %v85
  %v91 = vmul.f32 %v51, %v86
  %v92 = vmul.f32 %v52, %v87
  %v93 = vmul.f32 %v53, %v88
  %v94 = vmul.f32 %v54, %v89
  %v95 = vmul.f32 %v55, %v90
  %v97 = vlaneseq
  %v98 = vshrl.u32 %v97, 7
  %v99 = vsub.s32 0, %v98
  %v100 = vrot.slane %v26, %v99
  %v102 = vmul.f32 %v91, %v100
  %v103 = vmul.f32 %v92, %v100
  %v104 = vmul.f32 %v93, %v100
  %v105 = vmul.f32 %v94, %v100
  %v106 = vmul.f32 %v95, %v100
  %v108 = vlaneseq
  %v109 = vshrl.u32 %v108, 7
  %v110 = vsub.s32 0, %v109
  %v111 = vrot.slane %v27, %v110
  %v113 = vadd.f32 %v102, %v111
  %v114 = vadd.f32 %v103, %v111
  %v115 = vadd.f32 %v104, %v111
  %v116 = vadd.f32 %v105, %v111
  %v117 = vadd.f32 %v106, %v111
  %v118 = vpack.c.bf16 %v114, %v113
  %v119 = vpack.c.bf16 %v116, %v115
  %v120 = vpack.c.bf16 %v117, %v117
  %v121 = vld [vmem:[%s3] sm:$0xf]
  %v122 = vld [vmem:[%s3 + $0x4] sm:$0xf]
  %v123 = vld [vmem:[%s3 + $0x8] sm:$0xf]
  %v124 = vld [vmem:[%s3 + $0xc] sm:$0xf]
  %v125 = vld [vmem:[%s4] sm:$0x1]
  %v127 = vlaneseq
  %v128 = vshrl.u32 %v127, 7
  %v129 = vsub.s32 0, %v128
  %v130 = vrot.slane %v125, %v129
  %v136 = vunpack.c.l.b16 %v121
  %v137 = vunpack.c.l.b16 %v122
  %v138 = vunpack.c.l.b16 %v123
  %v139 = vunpack.c.l.b16 %v124
  %v140 = vpack.c.b16 %v137, %v136
  %v141 = vpack.c.b16 %v139, %v138
  %v145 = vsel %vm28, %v118, 0
  %v148 = vsel %vm28, %v119, 0
  %v151 = vsel %vm28, %v120, 0
  %153 = vmatprep.subr.bf16.mxu0 0
  %154 = vmatpush1.bf16.msra.mxu0 0
  %155 = vmatprep.subr.bf16.mxu0 0
  %156 = vmatpush1.bf16.msra.mxu0 0
  %157 = vmatprep.subr.bf16.mxu0 0
  %158 = vmatpush1.bf16.msra.mxu0 0
  %159 = vmatprep.subr.bf16.mxu0 0
  %160 = vmatpush1.bf16.msra.mxu0 0
  %161 = vmatprep.subr.bf16.mxu0 0
  %162 = vmatpush1.bf16.msra.mxu0 0
  %163 = vmatprep.subr.bf16.mxu0 0
  %164 = vmatpush1.bf16.msra.mxu0 0
  %165 = vmatprep.subr.bf16.mxu0 0
  %166 = vmatpush1.bf16.msra.mxu0 %v141
  %167 = vmatprep.subr.bf16.mxu0 0
  %168 = vmatpush1.bf16.msra.mxu0 %v140
  %169 = vmatprep.subr.bf16.mxu0 0
  %170 = vmatpush2.bf16.msra.mxu0 0
  %171 = vmatprep.subr.bf16.mxu0 0
  %172 = vmatpush2.bf16.msra.mxu0 0
  %173 = vmatprep.subr.bf16.mxu0 0
  %174 = vmatpush2.bf16.msra.mxu0 0
  %175 = vmatprep.subr.bf16.mxu0 0
  %176 = vmatpush2.bf16.msra.mxu0 0
  %177 = vmatprep.subr.bf16.mxu0 0
  %178 = vmatpush2.bf16.msra.mxu0 0
  %179 = vmatprep.subr.bf16.mxu0 0
  %180 = vmatpush2.bf16.msra.mxu0 0
  %181 = vmatprep.subr.bf16.mxu0 0
  %182 = vmatpush2.bf16.msra.mxu0 0
  %183 = vmatprep.subr.bf16.mxu0 0
  %184 = vmatpush2.bf16.msra.mxu0 0
  %185 = vmatprep.mubr.bf16.mxu0 0
  %186 = vmatmul.mubr.bf16.gmra.mxu0 %v145
  %v187 = vpop.f32.mrf.mxu0
  %v188 = vadd.f32 %v130, %v187
  %v189 = vpop.f32.mrf.mxu0
  %v190 = vpop.f32.mrf.mxu0
  %v191 = vadd.f32 %v130, %v190
  %v192 = vpop.f32.mrf.mxu0
  %193 = vmatprep.mubr.bf16.mxu0 0
  %194 = vmatmul.mubr.bf16.gmra.mxu0 %v148
  %v195 = vpop.f32.mrf.mxu0
  %v196 = vadd.f32 %v130, %v195
  %v197 = vpop.f32.mrf.mxu0
  %v198 = vpop.f32.mrf.mxu0
  %v199 = vadd.f32 %v130, %v198
  %v200 = vpop.f32.mrf.mxu0
  %201 = vmatprep.mubr.bf16.mxu0 0
  %202 = vmatmul.mubr.bf16.gmra.mxu0 %v151
  %v203 = vpop.f32.mrf.mxu0
  %v204 = vadd.f32 %v130, %v203
  %v205 = vpop.f32.mrf.mxu0
  %v206 = vpop.f32.mrf.mxu0
  %v207 = vpop.f32.mrf.mxu0
  %208 = vdwg.mxu0
  %209 = vst.msk [vmem:[%s5] sm:$0xff] %vm28, %v188
  %210 = vst.msk [vmem:[%s5 + $0x8] sm:$0xff] %vm28, %v191
  %211 = vst.msk [vmem:[%s5 + $0x10] sm:$0xff] %vm28, %v196
  %212 = vst.msk [vmem:[%s5 + $0x18] sm:$0xff] %vm28, %v199
  %213 = vst.msk [vmem:[%s5 + $0x20] sm:$0x3f] %vm41, %v204
  // Predicated region
  $region22: #{wavlm_wrapper_forward.10} parent=0 // pred_check
    _
  $region23: #{wavlm_wrapper_forward.10} parent=0 // pred_check_branch
    %215 = sbr.rel (0) target = $region25
  $region24: #{wavlm_wrapper_forward.10} parent=0 // pred_region
    _
  $region25: #{wavlm_wrapper_forward.10} parent=0 // pred_fallthru
    _
  // Predicated region
  $region26: #{wavlm_wrapper_forward.10} parent=0 // pred_check
    _
  $region27: #{wavlm_wrapper_forward.10} parent=0 // pred_check_branch
    %217 = sbr.rel (0) target = $region29
  $region28: #{wavlm_wrapper_forward.10} parent=0 // pred_region
    _
  $region29: #{wavlm_wrapper_forward.10} parent=0 // pred_fallthru
    _

// kernel: wavlm_wrapper_forward.8
$region0: #{wavlm_wrapper_forward.8}
  #allocation0 [shape = 'u32[]', space=smem, size = 0x4, offset = 0x4, fixed_abs, tag = 'smem constant byte address 0x4 - core index']
  #allocation1 [shape = 'u32[144,128]{1,0:T(1,128)}', space=vmem, size = 0x12000, scoped, tag = 'internal scratch']
  %s0 = inlined_call_operand.vmem [shape: f32[2,40,64], index: 0, kind: input, shape index: {}]
  %s1 = inlined_call_operand.vmem [shape: bf16[2,64,32], index: 1, kind: input, shape index: {}]
  %s2 = inlined_call_operand.vmem [shape: f32[2,39,32], index: 2, kind: output, shape index: {}]
  %s3 = sld [smem:[#allocation0]]
  $region41: #{wavlm_wrapper_forward.8} parent=0
    _
  %s5 = ssub.s32 1, %s3
  %s6 = scalar_select 0, %s5, %s3
  loop: start=0, step=1, limit=4
  $region2: #{wavlm_wrapper_forward.8} parent=0 // loop_pre_header
    _
  $region3: #{wavlm_wrapper_forward.8} parent=0 // loop_header
    %s8 = sphi 0, %s12
    %p9 = scmp.ge.s32.totalorder %s8, 4
    %s18 = sphi 0, %s20
    %s21 = sphi 0, %s18
    %s22 = sphi 0, %s21
    %s38 = sphi 0, %s22
    %s42 = sphi 0, %s42
    %s44 = sphi 0, %s42
    %s45 = sphi 0, %s44
    %s59 = sphi 0, %s45
    %s65 = sphi 0, %s67
    %s68 = sphi 0, %s65
    %s69 = sphi 0, %s68
    %s85 = sphi 0, %s69
  $region4: #{wavlm_wrapper_forward.8} parent=0 // loop_header_branch
    %11 = sbr.rel (%p9) target = $region8
  $region5: #{wavlm_wrapper_forward.8} parent=0 // loop_body
    %s13 = ssub.s32 %s8, 1
    %s14 = ssub.s32 %s8, 2
    %s15 = sadd.s32 %s8, 1
    %s16 = ssub.s32 %s8, %s15
    %p17 = scmp.eq.s32.totalorder %s16, 0
    %s19 = sadd.s32 %s18, 1
    %s20 = scalar_select %p17, %s18, %s19
    %p23 = pneg %p17
    %p24 = scmp.eq.s32.totalorder %s8, 1
    %p25 = por %p23, %p24
    %p26 = scmp.ne.s32.totalorder %s18, %s21
    %p27 = scmp.eq.s32.totalorder %s8, 0
    %p28 = por %p26, %p27
    %p29 = scmp.ne.s32.totalorder %s18, %s21
    %p30 = scmp.eq.s32.totalorder %s13, 1
    %p31 = por %p29, %p30
    %p32 = scmp.ne.s32.totalorder %s21, %s22
    %p33 = scmp.eq.s32.totalorder %s13, 0
    %p34 = por %p32, %p33
    %p35 = scmp.ne.s32.totalorder %s21, %s22
    %p36 = scmp.eq.s32.totalorder %s14, 1
    %p37 = por %p35, %p36
    %p39 = scmp.ne.s32.totalorder %s22, %s38
    %p40 = scmp.eq.s32.totalorder %s14, 0
    %p41 = por %p39, %p40
    %s43 = sadd.s32 %s42, 1
    %p46 = scmp.eq.s32.totalorder %s8, 1
    %p47 = scmp.ne.s32.totalorder %s42, %s44
    %p48 = scmp.eq.s32.totalorder %s8, 0
    %p49 = por %p47, %p48
    %p50 = scmp.ne.s32.totalorder %s42, %s44
    %p51 = scmp.eq.s32.totalorder %s13, 1
    %p52 = por %p50, %p51
    %p53 = scmp.ne.s32.totalorder %s44, %s45
    %p54 = scmp.eq.s32.totalorder %s13, 0
    %p55 = por %p53, %p54
    %p56 = scmp.ne.s32.totalorder %s44, %s45
    %p57 = scmp.eq.s32.totalorder %s14, 1
    %p58 = por %p56, %p57
    %p60 = scmp.ne.s32.totalorder %s45, %s59
    %p61 = scmp.eq.s32.totalorder %s14, 0
    %p62 = por %p60, %p61
    %s63 = ssub.s32 %s8, %s15
    %p64 = scmp.eq.s32.totalorder %s63, 0
    %s66 = sadd.s32 %s65, 1
    %s67 = scalar_select %p64, %s65, %s66
    %p70 = pneg %p64
    %p71 = scmp.eq.s32.totalorder %s8, 1
    %p72 = por %p70, %p71
    %p73 = scmp.ne.s32.totalorder %s65, %s68
    %p74 = scmp.eq.s32.totalorder %s8, 0
    %p75 = por %p73, %p74
    %p76 = scmp.ne.s32.totalorder %s65, %s68
    %p77 = scmp.eq.s32.totalorder %s13, 1
    %p78 = por %p76, %p77
    %p79 = scmp.ne.s32.totalorder %s68, %s69
    %p80 = scmp.eq.s32.totalorder %s13, 0
    %p81 = por %p79, %p80
    %p82 = scmp.ne.s32.totalorder %s68, %s69
    %p83 = scmp.eq.s32.totalorder %s14, 1
    %p84 = por %p82, %p83
    %p86 = scmp.ne.s32.totalorder %s69, %s85
    %p87 = scmp.eq.s32.totalorder %s14, 0
    %p88 = por %p86, %p87
    %p89 = scmp.le.s32.totalorder 1, %s8
    %p90 = scmp.lt.s32.totalorder %s8, 3
    %p91 = pnand %p89, %p90
    %p92 = pneg %p91
    // Predicated region
    $region9: #{wavlm_wrapper_forward.8} parent=5 // pred_check
      _
    $region10: #{wavlm_wrapper_forward.8} parent=5 // pred_check_branch
      %94 = sbr.rel (%p91) target = $region12
    $region11: #{wavlm_wrapper_forward.8} parent=5 // pred_region
      %s95 = ssub.s32 %s8, 1
      // Predicated region
      $region13: #{wavlm_wrapper_forward.8} parent=11 // pred_check
        %p96 = pneg %p55
      $region14: #{wavlm_wrapper_forward.8} parent=11 // pred_check_branch
        %98 = sbr.rel (%p96) target = $region16
      $region15: #{wavlm_wrapper_forward.8} parent=11 // pred_region
        _
      $region16: #{wavlm_wrapper_forward.8} parent=11 // pred_fallthru
        _
    $region12: #{wavlm_wrapper_forward.8} parent=5 // pred_fallthru
      _
    %p99 = scmp.lt.s32.totalorder %s8, 2
    // Predicated region
    $region17: #{wavlm_wrapper_forward.8} parent=5 // pred_check
      %p100 = pneg %p99
    $region18: #{wavlm_wrapper_forward.8} parent=5 // pred_check_branch
      %102 = sbr.rel (%p100) target = $region20
    $region19: #{wavlm_wrapper_forward.8} parent=5 // pred_region
      // Predicated region
      $region21: #{wavlm_wrapper_forward.8} parent=19 // pred_check
        %p103 = pneg %p28
      $region22: #{wavlm_wrapper_forward.8} parent=19 // pred_check_branch
        %105 = sbr.rel (%p103) target = $region24
      $region23: #{wavlm_wrapper_forward.8} parent=19 // pred_region
        %p106 = scmp.lt.s32.totalorder %s8, 1
        %s107 = scalar_select %p106, %s8, 1
        %s108 = smul.addr %s107, 5
        %s109 = smul.addr %s108, 8
        %s110 = scalar_lea.vmem %s0, %s109
      $region24: #{wavlm_wrapper_forward.8} parent=19 // pred_fallthru
        _
    $region20: #{wavlm_wrapper_forward.8} parent=5 // pred_fallthru
      _
    %p111 = scmp.le.s32.totalorder 1, %s8
    %p112 = scmp.lt.s32.totalorder %s8, 3
    %p113 = pnand %p111, %p112
    %p114 = pneg %p113
    // Predicated region
    $region25: #{wavlm_wrapper_forward.8} parent=5 // pred_check
      _
    $region26: #{wavlm_wrapper_forward.8} parent=5 // pred_check_branch
      %116 = sbr.rel (%p113) target = $region28
    $region27: #{wavlm_wrapper_forward.8} parent=5 // pred_region
      %s117 = ssub.s32 %s8, 1
      %p118 = scmp.lt.s32.totalorder %s13, 1
      %s119 = scalar_select %p118, %s13, 1
      %s120 = smul.addr %s119, 5
      %s121 = smul.addr %s120, 8
      %s122 = scalar_lea.vmem %s0, %s121
      %p123 = pneg %p34
      %p124 = pneg %p31
      %p125 = pneg %p55
      %p126 = pneg %p52
      %p127 = pneg %p81
      %p128 = pneg %p78
      %p129 = scmp.lt.s32.totalorder %s13, 1
      %s130 = scalar_select %p129, %s13, 1
      %s131 = smul.addr %s130, 5
      %s132 = smul.addr %s131, 8
      %s133 = scalar_lea.vmem %s2, %s132
      %p134 = scmp.lt.s32.totalorder %s13, 1
      %s135 = scalar_select %p134, %s13, 1
      %s136 = smul.addr %s135, 5
      %s137 = smul.addr %s136, 8
      %s138 = scalar_lea.vmem %s0, %s137
      %p139 = scmp.lt.s32.totalorder %s13, 1
      %s140 = scalar_select %p139, %s13, 1
      %s141 = smul.addr %s140, 5
      %s142 = smul.addr %s141, 8
      %s143 = scalar_lea.vmem %s2, %s142
      %v145 = vld [vmem:[%s138] sm:$0xff]
      %v146 = vld [vmem:[%s138 + $0x8] sm:$0xff]
      %v147 = vld [vmem:[%s138 + $0x10] sm:$0xff]
      %v148 = vld [vmem:[%s138 + $0x18] sm:$0xff]
      %v149 = vld [vmem:[%s138 + $0x20] sm:$0xff]
      %v150 = vpack.c.bf16 %v146, %v145
      %v151 = vpack.c.bf16 %v148, %v147
      %v152 = vpack.c.bf16 %v149, %v149
      %v153 = vld [vmem:[%s1] sm:$0xf]
      %v154 = vld [vmem:[%s1 + $0x4] sm:$0xf]
      %v155 = vld [vmem:[%s1 + $0x8] sm:$0xf]
      %v156 = vld [vmem:[%s1 + $0xc] sm:$0xf]
      %v157 = vld [vmem:[%s1 + $0x10] sm:$0xf]
      %v158 = vld [vmem:[%s1 + $0x14] sm:$0xf]
      %v159 = vld [vmem:[%s1 + $0x18] sm:$0xf]
      %v160 = vld [vmem:[%s1 + $0x1c] sm:$0xf]
      %s161 = scalar_lea.vmem %s1, 32
      %v162 = vld [vmem:[%s161] sm:$0xf]
      %v163 = vld [vmem:[%s161 + $0x4] sm:$0xf]
      %v164 = vld [vmem:[%s161 + $0x8] sm:$0xf]
      %v165 = vld [vmem:[%s161 + $0xc] sm:$0xf]
      %v166 = vld [vmem:[%s161 + $0x10] sm:$0xf]
      %v167 = vld [vmem:[%s161 + $0x14] sm:$0xf]
      %v168 = vld [vmem:[%s161 + $0x18] sm:$0xf]
      %v169 = vld [vmem:[%s161 + $0x1c] sm:$0xf]
      %vm170 = vsmask.f32 7424
      %v172 = vshrl.u32 %v150, 16
      %v174 = vshll.u32 %v150, 16
      %v176 = vrot.slane %v174, 1
      %v177 = vor.u32 %v172, %v176
      %v179 = vshll.u32 %v151, 16
      %v181 = vrot.slane %v179, 1
      %v182 = vsel %vm170, %v177, %v181
      %v183 = vshrl.u32 %v151, 16
      %v185 = vor.u32 %v183, %v181
      %v187 = vshll.u32 %v152, 16
      %v189 = vrot.slane %v187, 1
      %v190 = vsel %vm170, %v185, %v189
      %v191 = vshrl.u32 %v152, 16
      %v193 = vor.u32 %v191, %v189
      %v202 = vunpack.c.l.b16 %v162
      %v203 = vunpack.c.l.b16 %v163
      %v204 = vunpack.c.l.b16 %v164
      %v205 = vunpack.c.l.b16 %v165
      %v206 = vunpack.c.l.b16 %v166
      %v207 = vunpack.c.l.b16 %v167
      %v208 = vunpack.c.l.b16 %v168
      %v209 = vunpack.c.l.b16 %v169
      %v210 = vpack.c.b16 %v203, %v202
      %v211 = vpack.c.b16 %v205, %v204
      %v212 = vpack.c.b16 %v207, %v206
      %v213 = vpack.c.b16 %v209, %v208
      %vm218 = vcmask 523264
      %v220 = vsel %vm218, %v182, 0
      %v223 = vsel %vm218, %v190, 0
      %v226 = vsel %vm218, %v193, 0
      %228 = vmatprep.subr.bf16.mxu0 0
      %229 = vmatpush1.bf16.msra.mxu0 0
      %230 = vmatprep.subr.bf16.mxu0 0
      %231 = vmatpush1.bf16.msra.mxu0 0
      %232 = vmatprep.subr.bf16.mxu0 0
      %233 = vmatpush1.bf16.msra.mxu0 0
      %234 = vmatprep.subr.bf16.mxu0 0
      %235 = vmatpush1.bf16.msra.mxu0 0
      %236 = vmatprep.subr.bf16.mxu0 0
      %237 = vmatpush1.bf16.msra.mxu0 %v213
      %238 = vmatprep.subr.bf16.mxu0 0
      %239 = vmatpush1.bf16.msra.mxu0 %v212
      %240 = vmatprep.subr.bf16.mxu0 0
      %241 = vmatpush1.bf16.msra.mxu0 %v211
      %242 = vmatprep.subr.bf16.mxu0 0
      %243 = vmatpush1.bf16.msra.mxu0 %v210
      %244 = vmatprep.subr.bf16.mxu0 0
      %245 = vmatpush2.bf16.msra.mxu0 0
      %246 = vmatprep.subr.bf16.mxu0 0
      %247 = vmatpush2.bf16.msra.mxu0 0
      %248 = vmatprep.subr.bf16.mxu0 0
      %249 = vmatpush2.bf16.msra.mxu0 0
      %250 = vmatprep.subr.bf16.mxu0 0
      %251 = vmatpush2.bf16.msra.mxu0 0
      %252 = vmatprep.subr.bf16.mxu0 0
      %253 = vmatpush2.bf16.msra.mxu0 0
      %254 = vmatprep.subr.bf16.mxu0 0
      %255 = vmatpush2.bf16.msra.mxu0 0
      %256 = vmatprep.subr.bf16.mxu0 0
      %257 = vmatpush2.bf16.msra.mxu0 0
      %258 = vmatprep.subr.bf16.mxu0 0
      %259 = vmatpush2.bf16.msra.mxu0 0
      %260 = vmatprep.mubr.bf16.mxu0 0
      %261 = vmatmul.mubr.bf16.gmra.mxu0 %v220
      %v262 = vpop.f32.mrf.mxu0
      %v263 = vadd.f32 0.0, %v262
      %v264 = vpop.f32.mrf.mxu0
      %v265 = vpop.f32.mrf.mxu0
      %v266 = vadd.f32 0.0, %v265
      %v267 = vpop.f32.mrf.mxu0
      %268 = vmatprep.mubr.bf16.mxu0 0
      %269 = vmatmul.mubr.bf16.gmra.mxu0 %v223
      %v270 = vpop.f32.mrf.mxu0
      %v271 = vadd.f32 0.0, %v270
      %v272 = vpop.f32.mrf.mxu0
      %v273 = vpop.f32.mrf.mxu0
      %v274 = vadd.f32 0.0, %v273
      %v275 = vpop.f32.mrf.mxu0
      %276 = vmatprep.mubr.bf16.mxu0 0
      %277 = vmatmul.mubr.bf16.gmra.mxu0 %v226
      %v278 = vpop.f32.mrf.mxu0
      %v279 = vadd.f32 0.0, %v278
      %v280 = vpop.f32.mrf.mxu0
      %v281 = vpop.f32.mrf.mxu0
      %v282 = vpop.f32.mrf.mxu0
      %283 = vdwg.mxu0
      %v292 = vunpack.c.l.b16 %v153
      %v293 = vunpack.c.l.b16 %v154
      %v294 = vunpack.c.l.b16 %v155
      %v295 = vunpack.c.l.b16 %v156
      %v296 = vunpack.c.l.b16 %v157
      %v297 = vunpack.c.l.b16 %v158
      %v298 = vunpack.c.l.b16 %v159
      %v299 = vunpack.c.l.b16 %v160
      %v300 = vpack.c.b16 %v293, %v292
      %v301 = vpack.c.b16 %v295, %v294
      %v302 = vpack.c.b16 %v297, %v296
      %v303 = vpack.c.b16 %v299, %v298
      %v308 = vsel %vm218, %v150, 0
      %v310 = vsel %vm218, %v151, 0
      %v312 = vsel %vm218, %v152, 0
      %314 = vmatprep.subr.bf16.mxu0 0
      %315 = vmatpush1.bf16.msra.mxu0 0
      %316 = vmatprep.subr.bf16.mxu0 0
      %317 = vmatpush1.bf16.msra.mxu0 0
      %318 = vmatprep.subr.bf16.mxu0 0
      %319 = vmatpush1.bf16.msra.mxu0 0
      %320 = vmatprep.subr.bf16.mxu0 0
      %321 = vmatpush1.bf16.msra.mxu0 0
      %322 = vmatprep.subr.bf16.mxu0 0
      %323 = vmatpush1.bf16.msra.mxu0 %v303
      %324 = vmatprep.subr.bf16.mxu0 0
      %325 = vmatpush1.bf16.msra.mxu0 %v302
      %326 = vmatprep.subr.bf16.mxu0 0
      %327 = vmatpush1.bf16.msra.mxu0 %v301
      %328 = vmatprep.subr.bf16.mxu0 0
      %329 = vmatpush1.bf16.msra.mxu0 %v300
      %330 = vmatprep.subr.bf16.mxu0 0
      %331 = vmatpush2.bf16.msra.mxu0 0
      %332 = vmatprep.subr.bf16.mxu0 0
      %333 = vmatpush2.bf16.msra.mxu0 0
      %334 = vmatprep.subr.bf16.mxu0 0
      %335 = vmatpush2.bf16.msra.mxu0 0
      %336 = vmatprep.subr.bf16.mxu0 0
      %337 = vmatpush2.bf16.msra.mxu0 0
      %338 = vmatprep.subr.bf16.mxu0 0
      %339 = vmatpush2.bf16.msra.mxu0 0
      %340 = vmatprep.subr.bf16.mxu0 0
      %341 = vmatpush2.bf16.msra.mxu0 0
      %342 = vmatprep.subr.bf16.mxu0 0
      %343 = vmatpush2.bf16.msra.mxu0 0
      %344 = vmatprep.subr.bf16.mxu0 0
      %345 = vmatpush2.bf16.msra.mxu0 0
      %346 = vmatprep.mubr.bf16.mxu0 0
      %347 = vmatmul.mubr.bf16.gmra.mxu0 %v308
      %v348 = vpop.f32.mrf.mxu0
      %v349 = vadd.f32 %v263, %v348
      %v350 = vpop.f32.mrf.mxu0
      %v351 = vpop.f32.mrf.mxu0
      %v352 = vadd.f32 %v266, %v351
      %v353 = vpop.f32.mrf.mxu0
      %354 = vmatprep.mubr.bf16.mxu0 0
      %355 = vmatmul.mubr.bf16.gmra.mxu0 %v310
      %v356 = vpop.f32.mrf.mxu0
      %v357 = vadd.f32 %v271, %v356
      %v358 = vpop.f32.mrf.mxu0
      %v359 = vpop.f32.mrf.mxu0
      %v360 = vadd.f32 %v274, %v359
      %v361 = vpop.f32.mrf.mxu0
      %362 = vmatprep.mubr.bf16.mxu0 0
      %363 = vmatmul.mubr.bf16.gmra.mxu0 %v312
      %v364 = vpop.f32.mrf.mxu0
      %v365 = vadd.f32 %v279, %v364
      %v366 = vpop.f32.mrf.mxu0
      %v367 = vpop.f32.mrf.mxu0
      %v368 = vpop.f32.mrf.mxu0
      %369 = vdwg.mxu0
      %v370 = vmul.f32 %v349, %v349
      %v371 = vmul.f32 %v352, %v352
      %v372 = vmul.f32 %v357, %v357
      %v373 = vmul.f32 %v360, %v360
      %v374 = vmul.f32 %v365, %v365
      %v375 = vmul.f32 %v349, %v370
      %v376 = vmul.f32 %v352, %v371
      %v377 = vmul.f32 %v357, %v372
      %v378 = vmul.f32 %v360, %v373
      %v379 = vmul.f32 %v365, %v374
      %v380 = vmul.f32 %v375, 0.044715
      %v381 = vmul.f32 %v376, 0.044715
      %v382 = vmul.f32 %v377, 0.044715
      %v383 = vmul.f32 %v378, 0.044715
      %v384 = vmul.f32 %v379, 0.044715
      %v385 = vadd.f32 %v349, %v380
      %v386 = vadd.f32 %v352, %v381
      %v387 = vadd.f32 %v357, %v382
      %v388 = vadd.f32 %v360, %v383
      %v389 = vadd.f32 %v365, %v384
      %v390 = vmul.f32 %v385, 0.7978846
      %v391 = vmul.f32 %v386, 0.7978846
      %v392 = vmul.f32 %v387, 0.7978846
      %v393 = vmul.f32 %v388, 0.7978846
      %v394 = vmul.f32 %v389, 0.7978846
      %v395 = vtanh.pop %v390
      %v396 = vtanh.pop %v391
      %v397 = vtanh.pop %v392
      %v398 = vtanh.pop %v393
      %v399 = vtanh.pop %v394
      %v400 = vadd.f32 %v395, 1.0
      %v401 = vadd.f32 %v396, 1.0
      %v402 = vadd.f32 %v397, 1.0
      %v403 = vadd.f32 %v398, 1.0
      %v404 = vadd.f32 %v399, 1.0
      %v405 = vmul.f32 %v400, 0.5
      %v406 = vmul.f32 %v401, 0.5
      %v407 = vmul.f32 %v402, 0.5
      %v408 = vmul.f32 %v403, 0.5
      %v409 = vmul.f32 %v404, 0.5
      %v410 = vmul.f32 %v349, %v405
      %v411 = vmul.f32 %v352, %v406
      %v412 = vmul.f32 %v357, %v407
      %v413 = vmul.f32 %v360, %v408
      %v414 = vmul.f32 %v365, %v409
      %vm415 = vcmask 261120
      %416 = vst.msk [vmem:[%s143] sm:$0xff] %vm415, %v410
      %417 = vst.msk [vmem:[%s143 + $0x8] sm:$0xff] %vm415, %v411
      %418 = vst.msk [vmem:[%s143 + $0x10] sm:$0xff] %vm415, %v412
      %419 = vst.msk [vmem:[%s143 + $0x18] sm:$0xff] %vm415, %v413
      %vm420 = vcmask 260096
      %421 = vst.msk [vmem:[%s143 + $0x20] sm:$0x7f] %vm420, %v414
      %p422 = scmp.lt.s32.totalorder %s13, 1
      %s423 = scalar_select %p422, %s13, 1
      %s424 = smul.addr %s423, 5
      %s425 = smul.addr %s424, 8
      %s426 = scalar_lea.vmem %s2, %s425
      // Predicated region
      $region29: #{wavlm_wrapper_forward.8} parent=27 // pred_check
        %p427 = pneg %p78
      $region30: #{wavlm_wrapper_forward.8} parent=27 // pred_check_branch
        %429 = sbr.rel (%p427) target = $region32
      $region31: #{wavlm_wrapper_forward.8} parent=27 // pred_region
        _
      $region32: #{wavlm_wrapper_forward.8} parent=27 // pred_fallthru
        _
    $region28: #{wavlm_wrapper_forward.8} parent=5 // pred_fallthru
      _
    %p430 = scmp.le.s32.totalorder 2, %s8
    // Predicated region
    $region33: #{wavlm_wrapper_forward.8} parent=5 // pred_check
      %p431 = pneg %p430
    $region34: #{wavlm_wrapper_forward.8} parent=5 // pred_check_branch
      %433 = sbr.rel (%p431) target = $region36
    $region35: #{wavlm_wrapper_forward.8} parent=5 // pred_region
      %s434 = ssub.s32 %s8, 2
      // Predicated region
      $region37: #{wavlm_wrapper_forward.8} parent=35 // pred_check
        %p435 = pneg %p84
      $region38: #{wavlm_wrapper_forward.8} parent=35 // pred_check_branch
        %437 = sbr.rel (%p435) target = $region40
      $region39: #{wavlm_wrapper_forward.8} parent=35 // pred_region
        %p438 = scmp.lt.s32.totalorder %s14, 1
        %s439 = scalar_select %p438, %s14, 1
        %s440 = smul.addr %s439, 5
        %s441 = smul.addr %s440, 8
        %s442 = scalar_lea.vmem %s2, %s441
      $region40: #{wavlm_wrapper_forward.8} parent=35 // pred_fallthru
        _
    $region36: #{wavlm_wrapper_forward.8} parent=5 // pred_fallthru
      _
  $region6: #{wavlm_wrapper_forward.8} parent=0 // loop_footer
    %s12 = sadd.s32 1, %s8
  $region7: #{wavlm_wrapper_forward.8} parent=0 // loop_footer_branch
    %7 = sbr.rel target = $region3
  $region8: #{wavlm_wrapper_forward.8} parent=0 // loop_exit
    _

// kernel: wavlm_wrapper_forward.11
$region0: #{wavlm_wrapper_forward.11}
  #allocation0 [shape = 'u32[]', space=smem, size = 0x4, offset = 0x4, fixed_abs, tag = 'smem constant byte address 0x4 - core index']
  #allocation1 [shape = 'u32[144,128]{1,0:T(1,128)}', space=vmem, size = 0x12000, scoped, tag = 'internal scratch']
  %s0 = inlined_call_operand.vmem [shape: f32[2,21,32], index: 0, kind: input, shape index: {}]
  %s1 = inlined_call_operand.vmem [shape: bf16[3,32,32], index: 1, kind: input, shape index: {}]
  %s2 = inlined_call_operand.vmem [shape: f32[1,32], index: 2, kind: input, shape index: {}]
  %s3 = inlined_call_operand.vmem [shape: f32[1,32], index: 3, kind: input, shape index: {}]
  %s4 = inlined_call_operand.vmem [shape: f32[1,32], index: 4, kind: input, shape index: {}]
  %s5 = inlined_call_operand.vmem [shape: f32[2,19,32], index: 5, kind: output, shape index: {}]
  %s6 = sld [smem:[#allocation0]]
  $region53: #{wavlm_wrapper_forward.11} parent=0
    _
  %s8 = ssub.s32 1, %s6
  %s9 = scalar_select 0, %s8, %s6
  loop: start=0, step=1, limit=4
  $region2: #{wavlm_wrapper_forward.11} parent=0 // loop_pre_header
    _
  $region3: #{wavlm_wrapper_forward.11} parent=0 // loop_header
    %s11 = sphi 0, %s15
    %p12 = scmp.ge.s32.totalorder %s11, 4
    %s21 = sphi 0, %s23
    %s24 = sphi 0, %s21
    %s25 = sphi 0, %s24
    %s41 = sphi 0, %s25
    %s45 = sphi 0, %s45
    %s47 = sphi 0, %s45
    %s48 = sphi 0, %s47
    %s62 = sphi 0, %s48
    %s66 = sphi 0, %s66
    %s68 = sphi 0, %s66
    %s69 = sphi 0, %s68
    %s83 = sphi 0, %s69
    %s87 = sphi 0, %s87
    %s89 = sphi 0, %s87
    %s90 = sphi 0, %s89
    %s104 = sphi 0, %s90
    %s108 = sphi 0, %s108
    %s110 = sphi 0, %s108
    %s111 = sphi 0, %s110
    %s125 = sphi 0, %s111
    %s131 = sphi 0, %s133
    %s134 = sphi 0, %s131
    %s135 = sphi 0, %s134
    %s151 = sphi 0, %s135
  $region4: #{wavlm_wrapper_forward.11} parent=0 // loop_header_branch
    %14 = sbr.rel (%p12) target = $region8
  $region5: #{wavlm_wrapper_forward.11} parent=0 // loop_body
    %s16 = ssub.s32 %s11, 1
    %s17 = ssub.s32 %s11, 2
    %s18 = sadd.s32 %s11, 1
    %s19 = ssub.s32 %s11, %s18
    %p20 = scmp.eq.s32.totalorder %s19, 0
    %s22 = sadd.s32 %s21, 1
    %s23 = scalar_select %p20, %s21, %s22
    %p26 = pneg %p20
    %p27 = scmp.eq.s32.totalorder %s11, 1
    %p28 = por %p26, %p27
    %p29 = scmp.ne.s32.totalorder %s21, %s24
    %p30 = scmp.eq.s32.totalorder %s11, 0
    %p31 = por %p29, %p30
    %p32 = scmp.ne.s32.totalorder %s21, %s24
    %p33 = scmp.eq.s32.totalorder %s16, 1
    %p34 = por %p32, %p33
    %p35 = scmp.ne.s32.totalorder %s24, %s25
    %p36 = scmp.eq.s32.totalorder %s16, 0
    %p37 = por %p35, %p36
    %p38 = scmp.ne.s32.totalorder %s24, %s25
    %p39 = scmp.eq.s32.totalorder %s17, 1
    %p40 = por %p38, %p39
    %p42 = scmp.ne.s32.totalorder %s25, %s41
    %p43 = scmp.eq.s32.totalorder %s17, 0
    %p44 = por %p42, %p43
    %s46 = sadd.s32 %s45, 1
    %p49 = scmp.eq.s32.totalorder %s11, 1
    %p50 = scmp.ne.s32.totalorder %s45, %s47
    %p51 = scmp.eq.s32.totalorder %s11, 0
    %p52 = por %p50, %p51
    %p53 = scmp.ne.s32.totalorder %s45, %s47
    %p54 = scmp.eq.s32.totalorder %s16, 1
    %p55 = por %p53, %p54
    %p56 = scmp.ne.s32.totalorder %s47, %s48
    %p57 = scmp.eq.s32.totalorder %s16, 0
    %p58 = por %p56, %p57
    %p59 = scmp.ne.s32.totalorder %s47, %s48
    %p60 = scmp.eq.s32.totalorder %s17, 1
    %p61 = por %p59, %p60
    %p63 = scmp.ne.s32.totalorder %s48, %s62
    %p64 = scmp.eq.s32.totalorder %s17, 0
    %p65 = por %p63, %p64
    %s67 = sadd.s32 %s66, 1
    %p70 = scmp.eq.s32.totalorder %s11, 1
    %p71 = scmp.ne.s32.totalorder %s66, %s68
    %p72 = scmp.eq.s32.totalorder %s11, 0
    %p73 = por %p71, %p72
    %p74 = scmp.ne.s32.totalorder %s66, %s68
    %p75 = scmp.eq.s32.totalorder %s16, 1
    %p76 = por %p74, %p75
    %p77 = scmp.ne.s32.totalorder %s68, %s69
    %p78 = scmp.eq.s32.totalorder %s16, 0
    %p79 = por %p77, %p78
    %p80 = scmp.ne.s32.totalorder %s68, %s69
    %p81 = scmp.eq.s32.totalorder %s17, 1
    %p82 = por %p80, %p81
    %p84 = scmp.ne.s32.totalorder %s69, %s83
    %p85 = scmp.eq.s32.totalorder %s17, 0
    %p86 = por %p84, %p85
    %s88 = sadd.s32 %s87, 1
    %p91 = scmp.eq.s32.totalorder %s11, 1
    %p92 = scmp.ne.s32.totalorder %s87, %s89
    %p93 = scmp.eq.s32.totalorder %s11, 0
    %p94 = por %p92, %p93
    %p95 = scmp.ne.s32.totalorder %s87, %s89
    %p96 = scmp.eq.s32.totalorder %s16, 1
    %p97 = por %p95, %p96
    %p98 = scmp.ne.s32.totalorder %s89, %s90
    %p99 = scmp.eq.s32.totalorder %s16, 0
    %p100 = por %p98, %p99
    %p101 = scmp.ne.s32.totalorder %s89, %s90
    %p102 = scmp.eq.s32.totalorder %s17, 1
    %p103 = por %p101, %p102
    %p105 = scmp.ne.s32.totalorder %s90, %s104
    %p106 = scmp.eq.s32.totalorder %s17, 0
    %p107 = por %p105, %p106
    %s109 = sadd.s32 %s108, 1
    %p112 = scmp.eq.s32.totalorder %s11, 1
    %p113 = scmp.ne.s32.totalorder %s108, %s110
    %p114 = scmp.eq.s32.totalorder %s11, 0
    %p115 = por %p113, %p114
    %p116 = scmp.ne.s32.totalorder %s108, %s110
    %p117 = scmp.eq.s32.totalorder %s16, 1
    %p118 = por %p116, %p117
    %p119 = scmp.ne.s32.totalorder %s110, %s111
    %p120 = scmp.eq.s32.totalorder %s16, 0
    %p121 = por %p119, %p120
    %p122 = scmp.ne.s32.totalorder %s110, %s111
    %p123 = scmp.eq.s32.totalorder %s17, 1
    %p124 = por %p122, %p123
    %p126 = scmp.ne.s32.totalorder %s111, %s125
    %p127 = scmp.eq.s32.totalorder %s17, 0
    %p128 = por %p126, %p127
    %s129 = ssub.s32 %s11, %s18
    %p130 = scmp.eq.s32.totalorder %s129, 0
    %s132 = sadd.s32 %s131, 1
    %s133 = scalar_select %p130, %s131, %s132
    %p136 = pneg %p130
    %p137 = scmp.eq.s32.totalorder %s11, 1
    %p138 = por %p136, %p137
    %p139 = scmp.ne.s32.totalorder %s131, %s134
    %p140 = scmp.eq.s32.totalorder %s11, 0
    %p141 = por %p139, %p140
    %p142 = scmp.ne.s32.totalorder %s131, %s134
    %p143 = scmp.eq.s32.totalorder %s16, 1
    %p144 = por %p142, %p143
    %p145 = scmp.ne.s32.totalorder %s134, %s135
    %p146 = scmp.eq.s32.totalorder %s16, 0
    %p147 = por %p145, %p146
    %p148 = scmp.ne.s32.totalorder %s134, %s135
    %p149 = scmp.eq.s32.totalorder %s17, 1
    %p150 = por %p148, %p149
    %p152 = scmp.ne.s32.totalorder %s135, %s151
    %p153 = scmp.eq.s32.totalorder %s17, 0
    %p154 = por %p152, %p153
    %p155 = scmp.le.s32.totalorder 1, %s11
    %p156 = scmp.lt.s32.totalorder %s11, 3
    %p157 = pnand %p155, %p156
    %p158 = pneg %p157
    // Predicated region
    $region9: #{wavlm_wrapper_forward.11} parent=5 // pred_check
      _
    $region10: #{wavlm_wrapper_forward.11} parent=5 // pred_check_branch
      %160 = sbr.rel (%p157) target = $region12
    $region11: #{wavlm_wrapper_forward.11} parent=5 // pred_region
      %s161 = ssub.s32 %s11, 1
      // Predicated region
      $region13: #{wavlm_wrapper_forward.11} parent=11 // pred_check
        %p162 = pneg %p58
      $region14: #{wavlm_wrapper_forward.11} parent=11 // pred_check_branch
        %164 = sbr.rel (%p162) target = $region16
      $region15: #{wavlm_wrapper_forward.11} parent=11 // pred_region
        _
      $region16: #{wavlm_wrapper_forward.11} parent=11 // pred_fallthru
        _
      // Predicated region
      $region17: #{wavlm_wrapper_forward.11} parent=11 // pred_check
        %p165 = pneg %p79
      $region18: #{wavlm_wrapper_forward.11} parent=11 // pred_check_branch
        %167 = sbr.rel (%p165) target = $region20
      $region19: #{wavlm_wrapper_forward.11} parent=11 // pred_region
        _
      $region20: #{wavlm_wrapper_forward.11} parent=11 // pred_fallthru
        _
      // Predicated region
      $region21: #{wavlm_wrapper_forward.11} parent=11 // pred_check
        %p168 = pneg %p100
      $region22: #{wavlm_wrapper_forward.11} parent=11 // pred_check_branch
        %170 = sbr.rel (%p168) target = $region24
      $region23: #{wavlm_wrapper_forward.11} parent=11 // pred_region
        _
      $region24: #{wavlm_wrapper_forward.11} parent=11 // pred_fallthru
        _
      // Predicated region
      $region25: #{wavlm_wrapper_forward.11} parent=11 // pred_check
        %p171 = pneg %p121
      $region26: #{wavlm_wrapper_forward.11} parent=11 // pred_check_branch
        %173 = sbr.rel (%p171) target = $region28
      $region27: #{wavlm_wrapper_forward.11} parent=11 // pred_region
        _
      $region28: #{wavlm_wrapper_forward.11} parent=11 // pred_fallthru
        _
    $region12: #{wavlm_wrapper_forward.11} parent=5 // pred_fallthru
      _
    %p174 = scmp.lt.s32.totalorder %s11, 2
    // Predicated region
    $region29: #{wavlm_wrapper_forward.11} parent=5 // pred_check
      %p175 = pneg %p174
    $region30: #{wavlm_wrapper_forward.11} parent=5 // pred_check_branch
      %177 = sbr.rel (%p175) target = $region32
    $region31: #{wavlm_wrapper_forward.11} parent=5 // pred_region
      // Predicated region
      $region33: #{wavlm_wrapper_forward.11} parent=31 // pred_check
        %p178 = pneg %p31
      $region34: #{wavlm_wrapper_forward.11} parent=31 // pred_check_branch
        %180 = sbr.rel (%p178) target = $region36
      $region35: #{wavlm_wrapper_forward.11} parent=31 // pred_region
        %p181 = scmp.lt.s32.totalorder %s11, 1
        %s182 = scalar_select %p181, %s11, 1
        %s183 = smul.addr %s182, 3
        %s184 = smul.addr %s183, 8
        %s185 = scalar_lea.vmem %s0, %s184
      $region36: #{wavlm_wrapper_forward.11} parent=31 // pred_fallthru
        _
    $region32: #{wavlm_wrapper_forward.11} parent=5 // pred_fallthru
      _
    %p186 = scmp.le.s32.totalorder 1, %s11
    %p187 = scmp.lt.s32.totalorder %s11, 3
    %p188 = pnand %p186, %p187
    %p189 = pneg %p188
    // Predicated region
    $region37: #{wavlm_wrapper_forward.11} parent=5 // pred_check
      _
    $region38: #{wavlm_wrapper_forward.11} parent=5 // pred_check_branch
      %191 = sbr.rel (%p188) target = $region40
    $region39: #{wavlm_wrapper_forward.11} parent=5 // pred_region
      %s192 = ssub.s32 %s11, 1
      %p193 = scmp.lt.s32.totalorder %s16, 1
      %s194 = scalar_select %p193, %s16, 1
      %s195 = smul.addr %s194, 3
      %s196 = smul.addr %s195, 8
      %s197 = scalar_lea.vmem %s0, %s196
      %p198 = pneg %p37
      %p199 = pneg %p34
      %p200 = pneg %p58
      %p201 = pneg %p55
      %p202 = pneg %p79
      %p203 = pneg %p76
      %p204 = pneg %p100
      %p205 = pneg %p97
      %p206 = pneg %p121
      %p207 = pneg %p118
      %p208 = pneg %p147
      %p209 = pneg %p144
      %p210 = scmp.lt.s32.totalorder %s16, 1
      %s211 = scalar_select %p210, %s16, 1
      %s212 = smul.addr %s211, 3
      %s213 = smul.addr %s212, 8
      %s214 = scalar_lea.vmem %s5, %s213
      %p215 = scmp.lt.s32.totalorder %s16, 1
      %s216 = scalar_select %p215, %s16, 1
      %s217 = smul.addr %s216, 3
      %s218 = smul.addr %s217, 8
      %s219 = scalar_lea.vmem %s0, %s218
      %p220 = scmp.lt.s32.totalorder %s16, 1
      %s221 = scalar_select %p220, %s16, 1
      %s222 = smul.addr %s221, 3
      %s223 = smul.addr %s222, 8
      %s224 = scalar_lea.vmem %s5, %s223
      %v226 = vld [vmem:[%s219] sm:$0xff]
      %v227 = vld [vmem:[%s219 + $0x8] sm:$0xff]
      %v228 = vld [vmem:[%s219 + $0x10] sm:$0x1f]
      %v229 = vpack.c.bf16 %v227, %v226
      %v230 = vpack.c.bf16 %v228, %v228
      %v231 = vld [vmem:[%s1] sm:$0xf]
      %v232 = vld [vmem:[%s1 + $0x4] sm:$0xf]
      %v233 = vld [vmem:[%s1 + $0x8] sm:$0xf]
      %v234 = vld [vmem:[%s1 + $0xc] sm:$0xf]
      %s235 = scalar_lea.vmem %s1, 16
      %v236 = vld [vmem:[%s235] sm:$0xf]
      %v237 = vld [vmem:[%s235 + $0x4] sm:$0xf]
      %v238 = vld [vmem:[%s235 + $0x8] sm:$0xf]
      %v239 = vld [vmem:[%s235 + $0xc] sm:$0xf]
      %vm240 = vsmask.f32 7424
      %v242 = vshrl.u32 %v229, 16
      %v244 = vshll.u32 %v229, 16
      %v246 = vrot.slane %v244, 1
      %v247 = vor.u32 %v242, %v246
      %v249 = vshll.u32 %v230, 16
      %v251 = vrot.slane %v249, 1
      %v252 = vsel %vm240, %v247, %v251
      %v253 = vshrl.u32 %v230, 16
      %v255 = vor.u32 %v253, %v251
      %v260 = vunpack.c.l.b16 %v236
      %v261 = vunpack.c.l.b16 %v237
      %v262 = vunpack.c.l.b16 %v238
      %v263 = vunpack.c.l.b16 %v239
      %v264 = vpack.c.b16 %v261, %v260
      %v265 = vpack.c.b16 %v263, %v262
      %vm268 = vcmask 261120
      %v270 = vsel %vm268, %v252, 0
      %v273 = vsel %vm268, %v255, 0
      %275 = vmatprep.subr.bf16.mxu0 0
      %276 = vmatpush1.bf16.msra.mxu0 0
      %277 = vmatprep.subr.bf16.mxu0 0
      %278 = vmatpush1.bf16.msra.mxu0 0
      %279 = vmatprep.subr.bf16.mxu0 0
      %280 = vmatpush1.bf16.msra.mxu0 0
      %281 = vmatprep.subr.bf16.mxu0 0
      %282 = vmatpush1.bf16.msra.mxu0 0
      %283 = vmatprep.subr.bf16.mxu0 0
      %284 = vmatpush1.bf16.msra.mxu0 0
      %285 = vmatprep.subr.bf16.mxu0 0
      %286 = vmatpush1.bf16.msra.mxu0 0
      %287 = vmatprep.subr.bf16.mxu0 0
      %288 = vmatpush1.bf16.msra.mxu0 %v265
      %289 = vmatprep.subr.bf16.mxu0 0
      %290 = vmatpush1.bf16.msra.mxu0 %v264
      %291 = vmatprep.subr.bf16.mxu0 0
      %292 = vmatpush2.bf16.msra.mxu0 0
      %293 = vmatprep.subr.bf16.mxu0 0
      %294 = vmatpush2.bf16.msra.mxu0 0
      %295 = vmatprep.subr.bf16.mxu0 0
      %296 = vmatpush2.bf16.msra.mxu0 0
      %297 = vmatprep.subr.bf16.mxu0 0
      %298 = vmatpush2.bf16.msra.mxu0 0
      %299 = vmatprep.subr.bf16.mxu0 0
      %300 = vmatpush2.bf16.msra.mxu0 0
      %301 = vmatprep.subr.bf16.mxu0 0
      %302 = vmatpush2.bf16.msra.mxu0 0
      %303 = vmatprep.subr.bf16.mxu0 0
      %304 = vmatpush2.bf16.msra.mxu0 0
      %305 = vmatprep.subr.bf16.mxu0 0
      %306 = vmatpush2.bf16.msra.mxu0 0
      %307 = vmatprep.mubr.bf16.mxu0 0
      %308 = vmatmul.mubr.bf16.gmra.mxu0 %v270
      %v309 = vpop.f32.mrf.mxu0
      %v310 = vadd.f32 0.0, %v309
      %v311 = vpop.f32.mrf.mxu0
      %v312 = vpop.f32.mrf.mxu0
      %v313 = vadd.f32 0.0, %v312
      %v314 = vpop.f32.mrf.mxu0
      %315 = vmatprep.mubr.bf16.mxu0 0
      %316 = vmatmul.mubr.bf16.gmra.mxu0 %v273
      %v317 = vpop.f32.mrf.mxu0
      %v318 = vadd.f32 0.0, %v317
      %v319 = vpop.f32.mrf.mxu0
      %v320 = vpop.f32.mrf.mxu0
      %v321 = vpop.f32.mrf.mxu0
      %322 = vdwg.mxu0
      %v327 = vunpack.c.l.b16 %v231
      %v328 = vunpack.c.l.b16 %v232
      %v329 = vunpack.c.l.b16 %v233
      %v330 = vunpack.c.l.b16 %v234
      %v331 = vpack.c.b16 %v328, %v327
      %v332 = vpack.c.b16 %v330, %v329
      %v335 = vsel %vm268, %v229, 0
      %v337 = vsel %vm268, %v230, 0
      %339 = vmatprep.subr.bf16.mxu0 0
      %340 = vmatpush1.bf16.msra.mxu0 0
      %341 = vmatprep.subr.bf16.mxu0 0
      %342 = vmatpush1.bf16.msra.mxu0 0
      %343 = vmatprep.subr.bf16.mxu0 0
      %344 = vmatpush1.bf16.msra.mxu0 0
      %345 = vmatprep.subr.bf16.mxu0 0
      %346 = vmatpush1.bf16.msra.mxu0 0
      %347 = vmatprep.subr.bf16.mxu0 0
      %348 = vmatpush1.bf16.msra.mxu0 0
      %349 = vmatprep.subr.bf16.mxu0 0
      %350 = vmatpush1.bf16.msra.mxu0 0
      %351 = vmatprep.subr.bf16.mxu0 0
      %352 = vmatpush1.bf16.msra.mxu0 %v332
      %353 = vmatprep.subr.bf16.mxu0 0
      %354 = vmatpush1.bf16.msra.mxu0 %v331
      %355 = vmatprep.subr.bf16.mxu0 0
      %356 = vmatpush2.bf16.msra.mxu0 0
      %357 = vmatprep.subr.bf16.mxu0 0
      %358 = vmatpush2.bf16.msra.mxu0 0
      %359 = vmatprep.subr.bf16.mxu0 0
      %360 = vmatpush2.bf16.msra.mxu0 0
      %361 = vmatprep.subr.bf16.mxu0 0
      %362 = vmatpush2.bf16.msra.mxu0 0
      %363 = vmatprep.subr.bf16.mxu0 0
      %364 = vmatpush2.bf16.msra.mxu0 0
      %365 = vmatprep.subr.bf16.mxu0 0
      %366 = vmatpush2.bf16.msra.mxu0 0
      %367 = vmatprep.subr.bf16.mxu0 0
      %368 = vmatpush2.bf16.msra.mxu0 0
      %369 = vmatprep.subr.bf16.mxu0 0
      %370 = vmatpush2.bf16.msra.mxu0 0
      %371 = vmatprep.mubr.bf16.mxu0 0
      %372 = vmatmul.mubr.bf16.gmra.mxu0 %v335
      %v373 = vpop.f32.mrf.mxu0
      %v374 = vadd.f32 %v310, %v373
      %v375 = vpop.f32.mrf.mxu0
      %v376 = vpop.f32.mrf.mxu0
      %v377 = vadd.f32 %v313, %v376
      %v378 = vpop.f32.mrf.mxu0
      %379 = vmatprep.mubr.bf16.mxu0 0
      %380 = vmatmul.mubr.bf16.gmra.mxu0 %v337
      %v381 = vpop.f32.mrf.mxu0
      %v382 = vadd.f32 %v318, %v381
      %v383 = vpop.f32.mrf.mxu0
      %v384 = vpop.f32.mrf.mxu0
      %v385 = vpop.f32.mrf.mxu0
      %386 = vdwg.mxu0
      %s387 = scalar_lea.vmem %s1, 32
      %v388 = vld [vmem:[%s387] sm:$0xf]
      %v389 = vld [vmem:[%s387 + $0x4] sm:$0xf]
      %v390 = vld [vmem:[%s387 + $0x8] sm:$0xf]
      %v391 = vld [vmem:[%s387 + $0xc] sm:$0xf]
      %vm394 = vcmask 1046528
      %v395 = vrot.slane %v229, 1
      %v396 = vrot.slane %v230, 1
      %v397 = vsel %vm394, %v395, %v396
      %v402 = vunpack.c.l.b16 %v388
      %v403 = vunpack.c.l.b16 %v389
      %v404 = vunpack.c.l.b16 %v390
      %v405 = vunpack.c.l.b16 %v391
      %v406 = vpack.c.b16 %v403, %v402
      %v407 = vpack.c.b16 %v405, %v404
      %v411 = vsel %vm268, %v397, 0
      %v414 = vsel %vm268, %v396, 0
      %416 = vmatprep.subr.bf16.mxu0 0
      %417 = vmatpush1.bf16.msra.mxu0 0
      %418 = vmatprep.subr.bf16.mxu0 0
      %419 = vmatpush1.bf16.msra.mxu0 0
      %420 = vmatprep.subr.bf16.mxu0 0
      %421 = vmatpush1.bf16.msra.mxu0 0
      %422 = vmatprep.subr.bf16.mxu0 0
      %423 = vmatpush1.bf16.msra.mxu0 0
      %424 = vmatprep.subr.bf16.mxu0 0
      %425 = vmatpush1.bf16.msra.mxu0 0
      %426 = vmatprep.subr.bf16.mxu0 0
      %427 = vmatpush1.bf16.msra.mxu0 0
      %428 = vmatprep.subr.bf16.mxu0 0
      %429 = vmatpush1.bf16.msra.mxu0 %v407
      %430 = vmatprep.subr.bf16.mxu0 0
      %431 = vmatpush1.bf16.msra.mxu0 %v406
      %432 = vmatprep.subr.bf16.mxu0 0
      %433 = vmatpush2.bf16.msra.mxu0 0
      %434 = vmatprep.subr.bf16.mxu0 0
      %435 = vmatpush2.bf16.msra.mxu0 0
      %436 = vmatprep.subr.bf16.mxu0 0
      %437 = vmatpush2.bf16.msra.mxu0 0
      %438 = vmatprep.subr.bf16.mxu0 0
      %439 = vmatpush2.bf16.msra.mxu0 0
      %440 = vmatprep.subr.bf16.mxu0 0
      %441 = vmatpush2.bf16.msra.mxu0 0
      %442 = vmatprep.subr.bf16.mxu0 0
      %443 = vmatpush2.bf16.msra.mxu0 0
      %444 = vmatprep.subr.bf16.mxu0 0
      %445 = vmatpush2.bf16.msra.mxu0 0
      %446 = vmatprep.subr.bf16.mxu0 0
      %447 = vmatpush2.bf16.msra.mxu0 0
      %448 = vmatprep.mubr.bf16.mxu0 0
      %449 = vmatmul.mubr.bf16.gmra.mxu0 %v411
      %v450 = vpop.f32.mrf.mxu0
      %v451 = vadd.f32 0.0, %v450
      %v452 = vpop.f32.mrf.mxu0
      %v453 = vpop.f32.mrf.mxu0
      %v454 = vadd.f32 0.0, %v453
      %v455 = vpop.f32.mrf.mxu0
      %456 = vmatprep.mubr.bf16.mxu0 0
      %457 = vmatmul.mubr.bf16.gmra.mxu0 %v414
      %v458 = vpop.f32.mrf.mxu0
      %v459 = vadd.f32 0.0, %v458
      %v460 = vpop.f32.mrf.mxu0
      %v461 = vpop.f32.mrf.mxu0
      %v462 = vpop.f32.mrf.mxu0
      %463 = vdwg.mxu0
      %v464 = vadd.f32 %v374, %v451
      %v465 = vadd.f32 %v377, %v454
      %v466 = vadd.f32 %v382, %v459
      %v467 = vld [vmem:[%s2] sm:$0x1]
      %v469 = vlaneseq
      %v470 = vshrl.u32 %v469, 7
      %v471 = vsub.s32 0, %v470
      %v472 = vrot.slane %v467, %v471
      %v474 = vadd.f32 %v464, %v472
      %v475 = vadd.f32 %v465, %v472
      %v476 = vadd.f32 %v466, %v472
      %v477 = vmul.f32 %v474, %v474
      %v478 = vmul.f32 %v475, %v475
      %v479 = vmul.f32 %v476, %v476
      %v480 = vmul.f32 %v474, %v477
      %v481 = vmul.f32 %v475, %v478
      %v482 = vmul.f32 %v476, %v479
      %v483 = vmul.f32 %v480, 0.044715
      %v484 = vmul.f32 %v481, 0.044715
      %v485 = vmul.f32 %v482, 0.044715
      %v486 = vadd.f32 %v474, %v483
      %v487 = vadd.f32 %v475, %v484
      %v488 = vadd.f32 %v476, %v485
      %v489 = vmul.f32 %v486, 0.7978846
      %v490 = vmul.f32 %v487, 0.7978846
      %v491 = vmul.f32 %v488, 0.7978846
      %v492 = vtanh.pop %v489
      %v493 = vtanh.pop %v490
      %v494 = vtanh.pop %v491
      %v495 = vadd.f32 %v492, 1.0
      %v496 = vadd.f32 %v493, 1.0
      %v497 = vadd.f32 %v494, 1.0
      %v498 = vmul.f32 %v495, 0.5
      %v499 = vmul.f32 %v496, 0.5
      %v500 = vmul.f32 %v497, 0.5
      %v501 = vmul.f32 %v474, %v498
      %v502 = vmul.f32 %v475, %v499
      %v503 = vmul.f32 %v476, %v500
      %vm507 = vcmask 1040384
      %v508 = vrot.slane %v501, 7
      %v509 = vrot.slane %v502, 7
      %v510 = vsel %vm507, %v508, %v509
      %v511 = vrot.slane %v503, 7
      %v512 = vsel %vm507, %v509, %v511
      %v516 = vadd.f32 %v226, %v508
      %v517 = vadd.f32 %v227, %v510
      %v518 = vadd.f32 %v228, %v512
      %v519 = vld [vmem:[%s3] sm:$0x1]
      %v520 = vld [vmem:[%s4] sm:$0x1]
      %vm521 = vcmask 261121
      %v522 = vsel %vm521, %v516, 0.0
      %523 = vadd.xlane.f32.xlu0 %v522
      %v524 = vpop.xlane.xlu0 %523
      %v525 = vsel %vm268, %v517, 0.0
      %526 = vadd.xlane.f32.xlu0 %v525
      %v527 = vpop.xlane.xlu0 %526
      %vm528 = vcmask 257024
      %v529 = vsel %vm528, %v518, 0.0
      %530 = vadd.xlane.f32.xlu0 %v529
      %v531 = vpop.xlane.xlu0 %530
      %v532 = vrcp.pop 32.0
      %v533 = vmul.f32 %v524, %v532
      %v534 = vmul.f32 %v527, %v532
      %v535 = vmul.f32 %v531, %v532
      %v536 = vsub.f32 %v516, %v533
      %v537 = vsub.f32 %v517, %v534
      %v538 = vsub.f32 %v518, %v535
      %v539 = vmul.f32 %v536, %v536
      %v540 = vmul.f32 %v537, %v537
      %v541 = vmul.f32 %v538, %v538
      %v542 = vsel %vm521, %v539, 0.0
      %543 = vadd.xlane.f32.xlu0 %v542
      %v544 = vpop.xlane.xlu0 %543
      %v545 = vsel %vm268, %v540, 0.0
      %546 = vadd.xlane.f32.xlu0 %v545
      %v547 = vpop.xlane.xlu0 %546
      %v548 = vsel %vm528, %v541, 0.0
      %549 = vadd.xlane.f32.xlu0 %v548
      %v550 = vpop.xlane.xlu0 %549
      %v551 = vmul.f32 %v544, %v532
      %v552 = vmul.f32 %v547, %v532
      %v553 = vmul.f32 %v550, %v532
      %v554 = vadd.f32 %v551, 1e-05
      %v555 = vadd.f32 %v552, 1e-05
      %v556 = vadd.f32 %v553, 1e-05
      %v557 = vrsqrt.pop %v554
      %v558 = vrsqrt.pop %v555
      %v559 = vrsqrt.pop %v556
      %v560 = vmul.f32 %v536, %v557
      %v561 = vmul.f32 %v537, %v558
      %v562 = vmul.f32 %v538, %v559
      %v564 = vlaneseq
      %v565 = vshrl.u32 %v564, 7
      %v566 = vsub.s32 0, %v565
      %v567 = vrot.slane %v519, %v566
      %v569 = vmul.f32 %v560, %v567
      %v570 = vmul.f32 %v561, %v567
      %v571 = vmul.f32 %v562, %v567
      %v573 = vlaneseq
      %v574 = vshrl.u32 %v573, 7
      %v575 = vsub.s32 0, %v574
      %v576 = vrot.slane %v520, %v575
      %v578 = vadd.f32 %v569, %v576
      %v579 = vadd.f32 %v570, %v576
      %v580 = vadd.f32 %v571, %v576
      %581 = vst.msk [vmem:[%s224 - $0x1] sm:$0xfe] %vm521, %v578
      %582 = vst.msk [vmem:[%s224 + $0x7] sm:$0xff] %vm268, %v579
      %583 = vst.msk [vmem:[%s224 + $0xf] sm:$0xf] %vm528, %v580
      %p584 = scmp.lt.s32.totalorder %s16, 1
      %s585 = scalar_select %p584, %s16, 1
      %s586 = smul.addr %s585, 3
      %s587 = smul.addr %s586, 8
      %s588 = scalar_lea.vmem %s5, %s587
      // Predicated region
      $region41: #{wavlm_wrapper_forward.11} parent=39 // pred_check
        %p589 = pneg %p144
      $region42: #{wavlm_wrapper_forward.11} parent=39 // pred_check_branch
        %591 = sbr.rel (%p589) target = $region44
      $region43: #{wavlm_wrapper_forward.11} parent=39 // pred_region
        _
      $region44: #{wavlm_wrapper_forward.11} parent=39 // pred_fallthru
        _
    $region40: #{wavlm_wrapper_forward.11} parent=5 // pred_fallthru
      _
    %p592 = scmp.le.s32.totalorder 2, %s11
    // Predicated region
    $region45: #{wavlm_wrapper_forward.11} parent=5 // pred_check
      %p593 = pneg %p592
    $region46: #{wavlm_wrapper_forward.11} parent=5 // pred_check_branch
      %595 = sbr.rel (%p593) target = $region48
    $region47: #{wavlm_wrapper_forward.11} parent=5 // pred_region
      %s596 = ssub.s32 %s11, 2
      // Predicated region
      $region49: #{wavlm_wrapper_forward.11} parent=47 // pred_check
        %p597 = pneg %p150
      $region50: #{wavlm_wrapper_forward.11} parent=47 // pred_check_branch
        %599 = sbr.rel (%p597) target = $region52
      $region51: #{wavlm_wrapper_forward.11} parent=47 // pred_region
        %p600 = scmp.lt.s32.totalorder %s17, 1
        %s601 = scalar_select %p600, %s17, 1
        %s602 = smul.addr %s601, 3
        %s603 = smul.addr %s602, 8
        %s604 = scalar_lea.vmem %s5, %s603
      $region52: #{wavlm_wrapper_forward.11} parent=47 // pred_fallthru
        _
    $region48: #{wavlm_wrapper_forward.11} parent=5 // pred_fallthru
      _
  $region6: #{wavlm_wrapper_forward.11} parent=0 // loop_footer
    %s15 = sadd.s32 1, %s11
  $region7: #{wavlm_wrapper_forward.11} parent=0 // loop_footer_branch
    %10 = sbr.rel target = $region3
  $region8: #{wavlm_wrapper_forward.11} parent=0 // loop_exit
    _

// kernel: wavlm_wrapper_forward.12
$region0: #{wavlm_wrapper_forward.12}
  #allocation0 [shape = 'u32[]', space=smem, size = 0x4, offset = 0x4, fixed_abs, tag = 'smem constant byte address 0x4 - core index']
  #allocation1 [shape = 'u32[144,128]{1,0:T(1,128)}', space=vmem, size = 0x12000, scoped, tag = 'internal scratch']
  %s0 = inlined_call_operand.vmem [shape: f32[2,19,32], index: 0, kind: input, shape index: {}]
  %s1 = inlined_call_operand.vmem [shape: bf16[32,96], index: 1, kind: input, shape index: {}]
  %s2 = inlined_call_operand.vmem [shape: f32[1,96], index: 2, kind: input, shape index: {}]
  %s3 = inlined_call_operand.vmem [shape: bf16[32,32], index: 3, kind: input, shape index: {}]
  %s4 = inlined_call_operand.vmem [shape: f32[1,32], index: 4, kind: input, shape index: {}]
  %s5 = inlined_call_operand.vmem [shape: f32[1,32], index: 5, kind: input, shape index: {}]
  %s6 = inlined_call_operand.vmem [shape: f32[1,32], index: 6, kind: input, shape index: {}]
  %s7 = inlined_call_operand.vmem [shape: bf16[32,64], index: 7, kind: input, shape index: {}]
  %s8 = inlined_call_operand.vmem [shape: f32[1,64], index: 8, kind: input, shape index: {}]
  %s9 = inlined_call_operand.vmem [shape: bf16[64,32], index: 9, kind: input, shape index: {}]
  %s10 = inlined_call_operand.vmem [shape: f32[1,32], index: 10, kind: input, shape index: {}]
  %s11 = inlined_call_operand.vmem [shape: f32[1,32], index: 11, kind: input, shape index: {}]
  %s12 = inlined_call_operand.vmem [shape: f32[1,32], index: 12, kind: input, shape index: {}]
  %s13 = inlined_call_operand.vmem [shape: f32[2,19,32], index: 13, kind: output, shape index: {}]
  %s14 = sld [smem:[#allocation0]]
  $region85: #{wavlm_wrapper_forward.12} parent=0
    _
  %s16 = ssub.s32 1, %s14
  %s17 = scalar_select 0, %s16, %s14
  loop: start=0, step=1, limit=4
  $region2: #{wavlm_wrapper_forward.12} parent=0 // loop_pre_header
    _
  $region3: #{wavlm_wrapper_forward.12} parent=0 // loop_header
    %s19 = sphi 0, %s23
    %p20 = scmp.ge.s32.totalorder %s19, 4
    %s29 = sphi 0, %s31
    %s32 = sphi 0, %s29
    %s33 = sphi 0, %s32
    %s49 = sphi 0, %s33
    %s53 = sphi 0, %s53
    %s55 = sphi 0, %s53
    %s56 = sphi 0, %s55
    %s70 = sphi 0, %s56
    %s74 = sphi 0, %s74
    %s76 = sphi 0, %s74
    %s77 = sphi 0, %s76
    %s91 = sphi 0, %s77
    %s95 = sphi 0, %s95
    %s97 = sphi 0, %s95
    %s98 = sphi 0, %s97
    %s112 = sphi 0, %s98
    %s116 = sphi 0, %s116
    %s118 = sphi 0, %s116
    %s119 = sphi 0, %s118
    %s133 = sphi 0, %s119
    %s137 = sphi 0, %s137
    %s139 = sphi 0, %s137
    %s140 = sphi 0, %s139
    %s154 = sphi 0, %s140
    %s158 = sphi 0, %s158
    %s160 = sphi 0, %s158
    %s161 = sphi 0, %s160
    %s175 = sphi 0, %s161
    %s179 = sphi 0, %s179
    %s181 = sphi 0, %s179
    %s182 = sphi 0, %s181
    %s196 = sphi 0, %s182
    %s200 = sphi 0, %s200
    %s202 = sphi 0, %s200
    %s203 = sphi 0, %s202
    %s217 = sphi 0, %s203
    %s221 = sphi 0, %s221
    %s223 = sphi 0, %s221
    %s224 = sphi 0, %s223
    %s238 = sphi 0, %s224
    %s242 = sphi 0, %s242
    %s244 = sphi 0, %s242
    %s245 = sphi 0, %s244
    %s259 = sphi 0, %s245
    %s263 = sphi 0, %s263
    %s265 = sphi 0, %s263
    %s266 = sphi 0, %s265
    %s280 = sphi 0, %s266
    %s284 = sphi 0, %s284
    %s286 = sphi 0, %s284
    %s287 = sphi 0, %s286
    %s301 = sphi 0, %s287
    %s307 = sphi 0, %s309
    %s310 = sphi 0, %s307
    %s311 = sphi 0, %s310
    %s327 = sphi 0, %s311
  $region4: #{wavlm_wrapper_forward.12} parent=0 // loop_header_branch
    %22 = sbr.rel (%p20) target = $region8
  $region5: #{wavlm_wrapper_forward.12} parent=0 // loop_body
    %s24 = ssub.s32 %s19, 1
    %s25 = ssub.s32 %s19, 2
    %s26 = sadd.s32 %s19, 1
    %s27 = ssub.s32 %s19, %s26
    %p28 = scmp.eq.s32.totalorder %s27, 0
    %s30 = sadd.s32 %s29, 1
    %s31 = scalar_select %p28, %s29, %s30
    %p34 = pneg %p28
    %p35 = scmp.eq.s32.totalorder %s19, 1
    %p36 = por %p34, %p35
    %p37 = scmp.ne.s32.totalorder %s29, %s32
    %p38 = scmp.eq.s32.totalorder %s19, 0
    %p39 = por %p37, %p38
    %p40 = scmp.ne.s32.totalorder %s29, %s32
    %p41 = scmp.eq.s32.totalorder %s24, 1
    %p42 = por %p40, %p41
    %p43 = scmp.ne.s32.totalorder %s32, %s33
    %p44 = scmp.eq.s32.totalorder %s24, 0
    %p45 = por %p43, %p44
    %p46 = scmp.ne.s32.totalorder %s32, %s33
    %p47 = scmp.eq.s32.totalorder %s25, 1
    %p48 = por %p46, %p47
    %p50 = scmp.ne.s32.totalorder %s33, %s49
    %p51 = scmp.eq.s32.totalorder %s25, 0
    %p52 = por %p50, %p51
    %s54 = sadd.s32 %s53, 1
    %p57 = scmp.eq.s32.totalorder %s19, 1
    %p58 = scmp.ne.s32.totalorder %s53, %s55
    %p59 = scmp.eq.s32.totalorder %s19, 0
    %p60 = por %p58, %p59
    %p61 = scmp.ne.s32.totalorder %s53, %s55
    %p62 = scmp.eq.s32.totalorder %s24, 1
    %p63 = por %p61, %p62
    %p64 = scmp.ne.s32.totalorder %s55, %s56
    %p65 = scmp.eq.s32.totalorder %s24, 0
    %p66 = por %p64, %p65
    %p67 = scmp.ne.s32.totalorder %s55, %s56
    %p68 = scmp.eq.s32.totalorder %s25, 1
    %p69 = por %p67, %p68
    %p71 = scmp.ne.s32.totalorder %s56, %s70
    %p72 = scmp.eq.s32.totalorder %s25, 0
    %p73 = por %p71, %p72
    %s75 = sadd.s32 %s74, 1
    %p78 = scmp.eq.s32.totalorder %s19, 1
    %p79 = scmp.ne.s32.totalorder %s74, %s76
    %p80 = scmp.eq.s32.totalorder %s19, 0
    %p81 = por %p79, %p80
    %p82 = scmp.ne.s32.totalorder %s74, %s76
    %p83 = scmp.eq.s32.totalorder %s24, 1
    %p84 = por %p82, %p83
    %p85 = scmp.ne.s32.totalorder %s76, %s77
    %p86 = scmp.eq.s32.totalorder %s24, 0
    %p87 = por %p85, %p86
    %p88 = scmp.ne.s32.totalorder %s76, %s77
    %p89 = scmp.eq.s32.totalorder %s25, 1
    %p90 = por %p88, %p89
    %p92 = scmp.ne.s32.totalorder %s77, %s91
    %p93 = scmp.eq.s32.totalorder %s25, 0
    %p94 = por %p92, %p93
    %s96 = sadd.s32 %s95, 1
    %p99 = scmp.eq.s32.totalorder %s19, 1
    %p100 = scmp.ne.s32.totalorder %s95, %s97
    %p101 = scmp.eq.s32.totalorder %s19, 0
    %p102 = por %p100, %p101
    %p103 = scmp.ne.s32.totalorder %s95, %s97
    %p104 = scmp.eq.s32.totalorder %s24, 1
    %p105 = por %p103, %p104
    %p106 = scmp.ne.s32.totalorder %s97, %s98
    %p107 = scmp.eq.s32.totalorder %s24, 0
    %p108 = por %p106, %p107
    %p109 = scmp.ne.s32.totalorder %s97, %s98
    %p110 = scmp.eq.s32.totalorder %s25, 1
    %p111 = por %p109, %p110
    %p113 = scmp.ne.s32.totalorder %s98, %s112
    %p114 = scmp.eq.s32.totalorder %s25, 0
    %p115 = por %p113, %p114
    %s117 = sadd.s32 %s116, 1
    %p120 = scmp.eq.s32.totalorder %s19, 1
    %p121 = scmp.ne.s32.totalorder %s116, %s118
    %p122 = scmp.eq.s32.totalorder %s19, 0
    %p123 = por %p121, %p122
    %p124 = scmp.ne.s32.totalorder %s116, %s118
    %p125 = scmp.eq.s32.totalorder %s24, 1
    %p126 = por %p124, %p125
    %p127 = scmp.ne.s32.totalorder %s118, %s119
    %p128 = scmp.eq.s32.totalorder %s24, 0
    %p129 = por %p127, %p128
    %p130 = scmp.ne.s32.totalorder %s118, %s119
    %p131 = scmp.eq.s32.totalorder %s25, 1
    %p132 = por %p130, %p131
    %p134 = scmp.ne.s32.totalorder %s119, %s133
    %p135 = scmp.eq.s32.totalorder %s25, 0
    %p136 = por %p134, %p135
    %s138 = sadd.s32 %s137, 1
    %p141 = scmp.eq.s32.totalorder %s19, 1
    %p142 = scmp.ne.s32.totalorder %s137, %s139
    %p143 = scmp.eq.s32.totalorder %s19, 0
    %p144 = por %p142, %p143
    %p145 = scmp.ne.s32.totalorder %s137, %s139
    %p146 = scmp.eq.s32.totalorder %s24, 1
    %p147 = por %p145, %p146
    %p148 = scmp.ne.s32.totalorder %s139, %s140
    %p149 = scmp.eq.s32.totalorder %s24, 0
    %p150 = por %p148, %p149
    %p151 = scmp.ne.s32.totalorder %s139, %s140
    %p152 = scmp.eq.s32.totalorder %s25, 1
    %p153 = por %p151, %p152
    %p155 = scmp.ne.s32.totalorder %s140, %s154
    %p156 = scmp.eq.s32.totalorder %s25, 0
    %p157 = por %p155, %p156
    %s159 = sadd.s32 %s158, 1
    %p162 = scmp.eq.s32.totalorder %s19, 1
    %p163 = scmp.ne.s32.totalorder %s158, %s160
    %p164 = scmp.eq.s32.totalorder %s19, 0
    %p165 = por %p163, %p164
    %p166 = scmp.ne.s32.totalorder %s158, %s160
    %p167 = scmp.eq.s32.totalorder %s24, 1
    %p168 = por %p166, %p167
    %p169 = scmp.ne.s32.totalorder %s160, %s161
    %p170 = scmp.eq.s32.totalorder %s24, 0
    %p171 = por %p169, %p170
    %p172 = scmp.ne.s32.totalorder %s160, %s161
    %p173 = scmp.eq.s32.totalorder %s25, 1
    %p174 = por %p172, %p173
    %p176 = scmp.ne.s32.totalorder %s161, %s175
    %p177 = scmp.eq.s32.totalorder %s25, 0
    %p178 = por %p176, %p177
    %s180 = sadd.s32 %s179, 1
    %p183 = scmp.eq.s32.totalorder %s19, 1
    %p184 = scmp.ne.s32.totalorder %s179, %s181
    %p185 = scmp.eq.s32.totalorder %s19, 0
    %p186 = por %p184, %p185
    %p187 = scmp.ne.s32.totalorder %s179, %s181
    %p188 = scmp.eq.s32.totalorder %s24, 1
    %p189 = por %p187, %p188
    %p190 = scmp.ne.s32.totalorder %s181, %s182
    %p191 = scmp.eq.s32.totalorder %s24, 0
    %p192 = por %p190, %p191
    %p193 = scmp.ne.s32.totalorder %s181, %s182
    %p194 = scmp.eq.s32.totalorder %s25, 1
    %p195 = por %p193, %p194
    %p197 = scmp.ne.s32.totalorder %s182, %s196
    %p198 = scmp.eq.s32.totalorder %s25, 0
    %p199 = por %p197, %p198
    %s201 = sadd.s32 %s200, 1
    %p204 = scmp.eq.s32.totalorder %s19, 1
    %p205 = scmp.ne.s32.totalorder %s200, %s202
    %p206 = scmp.eq.s32.totalorder %s19, 0
    %p207 = por %p205, %p206
    %p208 = scmp.ne.s32.totalorder %s200, %s202
    %p209 = scmp.eq.s32.totalorder %s24, 1
    %p210 = por %p208, %p209
    %p211 = scmp.ne.s32.totalorder %s202, %s203
    %p212 = scmp.eq.s32.totalorder %s24, 0
    %p213 = por %p211, %p212
    %p214 = scmp.ne.s32.totalorder %s202, %s203
    %p215 = scmp.eq.s32.totalorder %s25, 1
    %p216 = por %p214, %p215
    %p218 = scmp.ne.s32.totalorder %s203, %s217
    %p219 = scmp.eq.s32.totalorder %s25, 0
    %p220 = por %p218, %p219
    %s222 = sadd.s32 %s221, 1
    %p225 = scmp.eq.s32.totalorder %s19, 1
    %p226 = scmp.ne.s32.totalorder %s221, %s223
    %p227 = scmp.eq.s32.totalorder %s19, 0
    %p228 = por %p226, %p227
    %p229 = scmp.ne.s32.totalorder %s221, %s223
    %p230 = scmp.eq.s32.totalorder %s24, 1
    %p231 = por %p229, %p230
    %p232 = scmp.ne.s32.totalorder %s223, %s224
    %p233 = scmp.eq.s32.totalorder %s24, 0
    %p234 = por %p232, %p233
    %p235 = scmp.ne.s32.totalorder %s223, %s224
    %p236 = scmp.eq.s32.totalorder %s25, 1
    %p237 = por %p235, %p236
    %p239 = scmp.ne.s32.totalorder %s224, %s238
    %p240 = scmp.eq.s32.totalorder %s25, 0
    %p241 = por %p239, %p240
    %s243 = sadd.s32 %s242, 1
    %p246 = scmp.eq.s32.totalorder %s19, 1
    %p247 = scmp.ne.s32.totalorder %s242, %s244
    %p248 = scmp.eq.s32.totalorder %s19, 0
    %p249 = por %p247, %p248
    %p250 = scmp.ne.s32.totalorder %s242, %s244
    %p251 = scmp.eq.s32.totalorder %s24, 1
    %p252 = por %p250, %p251
    %p253 = scmp.ne.s32.totalorder %s244, %s245
    %p254 = scmp.eq.s32.totalorder %s24, 0
    %p255 = por %p253, %p254
    %p256 = scmp.ne.s32.totalorder %s244, %s245
    %p257 = scmp.eq.s32.totalorder %s25, 1
    %p258 = por %p256, %p257
    %p260 = scmp.ne.s32.totalorder %s245, %s259
    %p261 = scmp.eq.s32.totalorder %s25, 0
    %p262 = por %p260, %p261
    %s264 = sadd.s32 %s263, 1
    %p267 = scmp.eq.s32.totalorder %s19, 1
    %p268 = scmp.ne.s32.totalorder %s263, %s265
    %p269 = scmp.eq.s32.totalorder %s19, 0
    %p270 = por %p268, %p269
    %p271 = scmp.ne.s32.totalorder %s263, %s265
    %p272 = scmp.eq.s32.totalorder %s24, 1
    %p273 = por %p271, %p272
    %p274 = scmp.ne.s32.totalorder %s265, %s266
    %p275 = scmp.eq.s32.totalorder %s24, 0
    %p276 = por %p274, %p275
    %p277 = scmp.ne.s32.totalorder %s265, %s266
    %p278 = scmp.eq.s32.totalorder %s25, 1
    %p279 = por %p277, %p278
    %p281 = scmp.ne.s32.totalorder %s266, %s280
    %p282 = scmp.eq.s32.totalorder %s25, 0
    %p283 = por %p281, %p282
    %s285 = sadd.s32 %s284, 1
    %p288 = scmp.eq.s32.totalorder %s19, 1
    %p289 = scmp.ne.s32.totalorder %s284, %s286
    %p290 = scmp.eq.s32.totalorder %s19, 0
    %p291 = por %p289, %p290
    %p292 = scmp.ne.s32.totalorder %s284, %s286
    %p293 = scmp.eq.s32.totalorder %s24, 1
    %p294 = por %p292, %p293
    %p295 = scmp.ne.s32.totalorder %s286, %s287
    %p296 = scmp.eq.s32.totalorder %s24, 0
    %p297 = por %p295, %p296
    %p298 = scmp.ne.s32.totalorder %s286, %s287
    %p299 = scmp.eq.s32.totalorder %s25, 1
    %p300 = por %p298, %p299
    %p302 = scmp.ne.s32.totalorder %s287, %s301
    %p303 = scmp.eq.s32.totalorder %s25, 0
    %p304 = por %p302, %p303
    %s305 = ssub.s32 %s19, %s26
    %p306 = scmp.eq.s32.totalorder %s305, 0
    %s308 = sadd.s32 %s307, 1
    %s309 = scalar_select %p306, %s307, %s308
    %p312 = pneg %p306
    %p313 = scmp.eq.s32.totalorder %s19, 1
    %p314 = por %p312, %p313
    %p315 = scmp.ne.s32.totalorder %s307, %s310
    %p316 = scmp.eq.s32.totalorder %s19, 0
    %p317 = por %p315, %p316
    %p318 = scmp.ne.s32.totalorder %s307, %s310
    %p319 = scmp.eq.s32.totalorder %s24, 1
    %p320 = por %p318, %p319
    %p321 = scmp.ne.s32.totalorder %s310, %s311
    %p322 = scmp.eq.s32.totalorder %s24, 0
    %p323 = por %p321, %p322
    %p324 = scmp.ne.s32.totalorder %s310, %s311
    %p325 = scmp.eq.s32.totalorder %s25, 1
    %p326 = por %p324, %p325
    %p328 = scmp.ne.s32.totalorder %s311, %s327
    %p329 = scmp.eq.s32.totalorder %s25, 0
    %p330 = por %p328, %p329
    %p331 = scmp.le.s32.totalorder 1, %s19
    %p332 = scmp.lt.s32.totalorder %s19, 3
    %p333 = pnand %p331, %p332
    %p334 = pneg %p333
    // Predicated region
    $region9: #{wavlm_wrapper_forward.12} parent=5 // pred_check
      _
    $region10: #{wavlm_wrapper_forward.12} parent=5 // pred_check_branch
      %336 = sbr.rel (%p333) target = $region12
    $region11: #{wavlm_wrapper_forward.12} parent=5 // pred_region
      %s337 = ssub.s32 %s19, 1
      // Predicated region
      $region13: #{wavlm_wrapper_forward.12} parent=11 // pred_check
        %p338 = pneg %p66
      $region14: #{wavlm_wrapper_forward.12} parent=11 // pred_check_branch
        %340 = sbr.rel (%p338) target = $region16
      $region15: #{wavlm_wrapper_forward.12} parent=11 // pred_region
        _
      $region16: #{wavlm_wrapper_forward.12} parent=11 // pred_fallthru
        _
      // Predicated region
      $region17: #{wavlm_wrapper_forward.12} parent=11 // pred_check
        %p341 = pneg %p87
      $region18: #{wavlm_wrapper_forward.12} parent=11 // pred_check_branch
        %343 = sbr.rel (%p341) target = $region20
      $region19: #{wavlm_wrapper_forward.12} parent=11 // pred_region
        _
      $region20: #{wavlm_wrapper_forward.12} parent=11 // pred_fallthru
        _
      // Predicated region
      $region21: #{wavlm_wrapper_forward.12} parent=11 // pred_check
        %p344 = pneg %p108
      $region22: #{wavlm_wrapper_forward.12} parent=11 // pred_check_branch
        %346 = sbr.rel (%p344) target = $region24
      $region23: #{wavlm_wrapper_forward.12} parent=11 // pred_region
        _
      $region24: #{wavlm_wrapper_forward.12} parent=11 // pred_fallthru
        _
      // Predicated region
      $region25: #{wavlm_wrapper_forward.12} parent=11 // pred_check
        %p347 = pneg %p129
      $region26: #{wavlm_wrapper_forward.12} parent=11 // pred_check_branch
        %349 = sbr.rel (%p347) target = $region28
      $region27: #{wavlm_wrapper_forward.12} parent=11 // pred_region
        _
      $region28: #{wavlm_wrapper_forward.12} parent=11 // pred_fallthru
        _
      // Predicated region
      $region29: #{wavlm_wrapper_forward.12} parent=11 // pred_check
        %p350 = pneg %p150
      $region30: #{wavlm_wrapper_forward.12} parent=11 // pred_check_branch
        %352 = sbr.rel (%p350) target = $region32
      $region31: #{wavlm_wrapper_forward.12} parent=11 // pred_region
        _
      $region32: #{wavlm_wrapper_forward.12} parent=11 // pred_fallthru
        _
      // Predicated region
      $region33: #{wavlm_wrapper_forward.12} parent=11 // pred_check
        %p353 = pneg %p171
      $region34: #{wavlm_wrapper_forward.12} parent=11 // pred_check_branch
        %355 = sbr.rel (%p353) target = $region36
      $region35: #{wavlm_wrapper_forward.12} parent=11 // pred_region
        _
      $region36: #{wavlm_wrapper_forward.12} parent=11 // pred_fallthru
        _
      // Predicated region
      $region37: #{wavlm_wrapper_forward.12} parent=11 // pred_check
        %p356 = pneg %p192
      $region38: #{wavlm_wrapper_forward.12} parent=11 // pred_check_branch
        %358 = sbr.rel (%p356) target = $region40
      $region39: #{wavlm_wrapper_forward.12} parent=11 // pred_region
        _
      $region40: #{wavlm_wrapper_forward.12} parent=11 // pred_fallthru
        _
      // Predicated region
      $region41: #{wavlm_wrapper_forward.12} parent=11 // pred_check
        %p359 = pneg %p213
      $region42: #{wavlm_wrapper_forward.12} parent=11 // pred_check_branch
        %361 = sbr.rel (%p359) target = $region44
      $region43: #{wavlm_wrapper_forward.12} parent=11 // pred_region
        _
      $region44: #{wavlm_wrapper_forward.12} parent=11 // pred_fallthru
        _
      // Predicated region
      $region45: #{wavlm_wrapper_forward.12} parent=11 // pred_check
        %p362 = pneg %p234
      $region46: #{wavlm_wrapper_forward.12} parent=11 // pred_check_branch
        %364 = sbr.rel (%p362) target = $region48
      $region47: #{wavlm_wrapper_forward.12} parent=11 // pred_region
        _
      $region48: #{wavlm_wrapper_forward.12} parent=11 // pred_fallthru
        _
      // Predicated region
      $region49: #{wavlm_wrapper_forward.12} parent=11 // pred_check
        %p365 = pneg %p255
      $region50: #{wavlm_wrapper_forward.12} parent=11 // pred_check_branch
        %367 = sbr.rel (%p365) target = $region52
      $region51: #{wavlm_wrapper_forward.12} parent=11 // pred_region
        _
      $region52: #{wavlm_wrapper_forward.12} parent=11 // pred_fallthru
        _
      // Predicated region
      $region53: #{wavlm_wrapper_forward.12} parent=11 // pred_check
        %p368 = pneg %p276
      $region54: #{wavlm_wrapper_forward.12} parent=11 // pred_check_branch
        %370 = sbr.rel (%p368) target = $region56
      $region55: #{wavlm_wrapper_forward.12} parent=11 // pred_region
        _
      $region56: #{wavlm_wrapper_forward.12} parent=11 // pred_fallthru
        _
      // Predicated region
      $region57: #{wavlm_wrapper_forward.12} parent=11 // pred_check
        %p371 = pneg %p297
      $region58: #{wavlm_wrapper_forward.12} parent=11 // pred_check_branch
        %373 = sbr.rel (%p371) target = $region60
      $region59: #{wavlm_wrapper_forward.12} parent=11 // pred_region
        _
      $region60: #{wavlm_wrapper_forward.12} parent=11 // pred_fallthru
        _
    $region12: #{wavlm_wrapper_forward.12} parent=5 // pred_fallthru
      _
    %p374 = scmp.lt.s32.totalorder %s19, 2
    // Predicated region
    $region61: #{wavlm_wrapper_forward.12} parent=5 // pred_check
      %p375 = pneg %p374
    $region62: #{wavlm_wrapper_forward.12} parent=5 // pred_check_branch
      %377 = sbr.rel (%p375) target = $region64
    $region63: #{wavlm_wrapper_forward.12} parent=5 // pred_region
      // Predicated region
      $region65: #{wavlm_wrapper_forward.12} parent=63 // pred_check
        %p378 = pneg %p39
      $region66: #{wavlm_wrapper_forward.12} parent=63 // pred_check_branch
        %380 = sbr.rel (%p378) target = $region68
      $region67: #{wavlm_wrapper_forward.12} parent=63 // pred_region
        %p381 = scmp.lt.s32.totalorder %s19, 1
        %s382 = scalar_select %p381, %s19, 1
        %s383 = smul.addr %s382, 3
        %s384 = smul.addr %s383, 8
        %s385 = scalar_lea.vmem %s0, %s384
      $region68: #{wavlm_wrapper_forward.12} parent=63 // pred_fallthru
        _
    $region64: #{wavlm_wrapper_forward.12} parent=5 // pred_fallthru
      _
    %p386 = scmp.le.s32.totalorder 1, %s19
    %p387 = scmp.lt.s32.totalorder %s19, 3
    %p388 = pnand %p386, %p387
    %p389 = pneg %p388
    // Predicated region
    $region69: #{wavlm_wrapper_forward.12} parent=5 // pred_check
      _
    $region70: #{wavlm_wrapper_forward.12} parent=5 // pred_check_branch
      %391 = sbr.rel (%p388) target = $region72
    $region71: #{wavlm_wrapper_forward.12} parent=5 // pred_region
      %s392 = ssub.s32 %s19, 1
      %p393 = scmp.lt.s32.totalorder %s24, 1
      %s394 = scalar_select %p393, %s24, 1
      %s395 = smul.addr %s394, 3
      %s396 = smul.addr %s395, 8
      %s397 = scalar_lea.vmem %s0, %s396
      %p398 = pneg %p45
      %p399 = pneg %p42
      %p400 = pneg %p66
      %p401 = pneg %p63
      %p402 = pneg %p87
      %p403 = pneg %p84
      %p404 = pneg %p108
      %p405 = pneg %p105
      %p406 = pneg %p129
      %p407 = pneg %p126
      %p408 = pneg %p150
      %p409 = pneg %p147
      %p410 = pneg %p171
      %p411 = pneg %p168
      %p412 = pneg %p192
      %p413 = pneg %p189
      %p414 = pneg %p213
      %p415 = pneg %p210
      %p416 = pneg %p234
      %p417 = pneg %p231
      %p418 = pneg %p255
      %p419 = pneg %p252
      %p420 = pneg %p276
      %p421 = pneg %p273
      %p422 = pneg %p297
      %p423 = pneg %p294
      %p424 = pneg %p323
      %p425 = pneg %p320
      %p426 = scmp.lt.s32.totalorder %s24, 1
      %s427 = scalar_select %p426, %s24, 1
      %s428 = smul.addr %s427, 3
      %s429 = smul.addr %s428, 8
      %s430 = scalar_lea.vmem %s13, %s429
      %p431 = scmp.lt.s32.totalorder %s24, 1
      %s432 = scalar_select %p431, %s24, 1
      %s433 = smul.addr %s432, 3
      %s434 = smul.addr %s433, 8
      %s435 = scalar_lea.vmem %s0, %s434
      %p436 = scmp.lt.s32.totalorder %s24, 1
      %s437 = scalar_select %p436, %s24, 1
      %s438 = smul.addr %s437, 3
      %s439 = smul.addr %s438, 8
      %s440 = scalar_lea.vmem %s13, %s439
      %v442 = vld [vmem:[%s435] sm:$0xff]
      %v443 = vld [vmem:[%s435 + $0x8] sm:$0xff]
      %v444 = vld [vmem:[%s435 + $0x10] sm:$0x7]
      %v445 = vpack.c.bf16 %v443, %v442
      %v446 = vpack.c.bf16 %v444, %v444
      %v447 = vld [vmem:[%s1] sm:$0xf]
      %v448 = vld [vmem:[%s1 + $0x4] sm:$0xf]
      %v449 = vld [vmem:[%s1 + $0x8] sm:$0xf]
      %v450 = vld [vmem:[%s1 + $0xc] sm:$0xf]
      %v451 = vld [vmem:[%s2] sm:$0x1]
      %v453 = vlaneseq
      %v454 = vshrl.u32 %v453, 7
      %v455 = vsub.s32 0, %v454
      %v456 = vrot.slane %v451, %v455
      %v462 = vunpack.c.l.b16 %v447
      %v463 = vunpack.c.l.b16 %v448
      %v464 = vunpack.c.l.b16 %v449
      %v465 = vunpack.c.l.b16 %v450
      %v466 = vpack.c.b16 %v463, %v462
      %v467 = vpack.c.b16 %v465, %v464
      %vm470 = vcmask 261120
      %v472 = vsel %vm470, %v445, 0
      %v475 = vsel %vm470, %v446, 0
      %477 = vmatprep.subr.bf16.mxu0 0
      %478 = vmatpush1.bf16.msra.mxu0 0
      %479 = vmatprep.subr.bf16.mxu0 0
      %480 = vmatpush1.bf16.msra.mxu0 0
      %481 = vmatprep.subr.bf16.mxu0 0
      %482 = vmatpush1.bf16.msra.mxu0 0
      %483 = vmatprep.subr.bf16.mxu0 0
      %484 = vmatpush1.bf16.msra.mxu0 0
      %485 = vmatprep.subr.bf16.mxu0 0
      %486 = vmatpush1.bf16.msra.mxu0 0
      %487 = vmatprep.subr.bf16.mxu0 0
      %488 = vmatpush1.bf16.msra.mxu0 0
      %489 = vmatprep.subr.bf16.mxu0 0
      %490 = vmatpush1.bf16.msra.mxu0 %v467
      %491 = vmatprep.subr.bf16.mxu0 0
      %492 = vmatpush1.bf16.msra.mxu0 %v466
      %493 = vmatprep.subr.bf16.mxu0 0
      %494 = vmatpush2.bf16.msra.mxu0 0
      %495 = vmatprep.subr.bf16.mxu0 0
      %496 = vmatpush2.bf16.msra.mxu0 0
      %497 = vmatprep.subr.bf16.mxu0 0
      %498 = vmatpush2.bf16.msra.mxu0 0
      %499 = vmatprep.subr.bf16.mxu0 0
      %500 = vmatpush2.bf16.msra.mxu0 0
      %501 = vmatprep.subr.bf16.mxu0 0
      %502 = vmatpush2.bf16.msra.mxu0 0
      %503 = vmatprep.subr.bf16.mxu0 0
      %504 = vmatpush2.bf16.msra.mxu0 0
      %505 = vmatprep.subr.bf16.mxu0 0
      %506 = vmatpush2.bf16.msra.mxu0 0
      %507 = vmatprep.subr.bf16.mxu0 0
      %508 = vmatpush2.bf16.msra.mxu0 0
      %509 = vmatprep.mubr.bf16.mxu0 0
      %510 = vmatmul.mubr.bf16.gmra.mxu0 %v472
      %v511 = vpop.f32.mrf.mxu0
      %v512 = vadd.f32 %v456, %v511
      %v513 = vpop.f32.mrf.mxu0
      %v514 = vpop.f32.mrf.mxu0
      %v515 = vadd.f32 %v456, %v514
      %v516 = vpop.f32.mrf.mxu0
      %517 = vmatprep.mubr.bf16.mxu0 0
      %518 = vmatmul.mubr.bf16.gmra.mxu0 %v475
      %v519 = vpop.f32.mrf.mxu0
      %v520 = vadd.f32 %v456, %v519
      %v521 = vpop.f32.mrf.mxu0
      %v522 = vpop.f32.mrf.mxu0
      %v523 = vpop.f32.mrf.mxu0
      %524 = vdwg.mxu0
      %v525 = vld [vmem:[%s3] sm:$0xf]
      %v526 = vld [vmem:[%s3 + $0x4] sm:$0xf]
      %v527 = vld [vmem:[%s3 + $0x8] sm:$0xf]
      %v528 = vld [vmem:[%s3 + $0xc] sm:$0xf]
      %v529 = vpack.c.bf16 %v515, %v512
      %v530 = vpack.c.bf16 %v520, %v520
      %533 = vrot.lane.b32.xlu0 %v529, 96
      %v534 = vpop.permute.xlu0 %533
      %535 = vrot.lane.b32.xlu0 %v530, 96
      %v536 = vpop.permute.xlu0 %535
      %vm537 = vcmask 64512
      %v539 = vsel %vm537, %v529, 0
      %v542 = vsel %vm537, %v530, 0
      %v545 = vsel %vm537, %v534, 0
      %v548 = vsel %vm537, %v536, 0
      %550 = vmatprep.subr.bf16.mxu0 0
      %551 = vmatpush1.bf16.xpose.msra.mxu0 0
      %552 = vmatprep.subr.bf16.mxu0 0
      %553 = vmatpush1.bf16.xpose.msra.mxu0 0
      %554 = vmatprep.subr.bf16.mxu0 0
      %555 = vmatpush1.bf16.xpose.msra.mxu0 0
      %556 = vmatprep.subr.bf16.mxu0 0
      %557 = vmatpush1.bf16.xpose.msra.mxu0 0
      %558 = vmatprep.subr.bf16.mxu0 0
      %559 = vmatpush1.bf16.xpose.msra.mxu0 0
      %560 = vmatprep.subr.bf16.mxu0 0
      %561 = vmatpush1.bf16.xpose.msra.mxu0 0
      %562 = vmatprep.subr.bf16.mxu0 0
      %563 = vmatpush1.bf16.xpose.msra.mxu0 %v548
      %564 = vmatprep.subr.bf16.mxu0 0
      %565 = vmatpush1.bf16.xpose.msra.mxu0 %v545
      %566 = vmatprep.subr.bf16.mxu0 0
      %567 = vmatpush2.bf16.xpose.msra.mxu0 0
      %568 = vmatprep.subr.bf16.mxu0 0
      %569 = vmatpush2.bf16.xpose.msra.mxu0 0
      %570 = vmatprep.subr.bf16.mxu0 0
      %571 = vmatpush2.bf16.xpose.msra.mxu0 0
      %572 = vmatprep.subr.bf16.mxu0 0
      %573 = vmatpush2.bf16.xpose.msra.mxu0 0
      %574 = vmatprep.subr.bf16.mxu0 0
      %575 = vmatpush2.bf16.xpose.msra.mxu0 0
      %576 = vmatprep.subr.bf16.mxu0 0
      %577 = vmatpush2.bf16.xpose.msra.mxu0 0
      %578 = vmatprep.subr.bf16.mxu0 0
      %579 = vmatpush2.bf16.xpose.msra.mxu0 0
      %580 = vmatprep.subr.bf16.mxu0 0
      %581 = vmatpush2.bf16.xpose.msra.mxu0 0
      %582 = vmatprep.mubr.bf16.mxu0 0
      %583 = vmatmul.mubr.bf16.gmra.mxu0 %v539
      %v584 = vpop.f32.mrf.mxu0
      %v585 = vadd.f32 0.0, %v584
      %v586 = vpop.f32.mrf.mxu0
      %v587 = vpop.f32.mrf.mxu0
      %v588 = vadd.f32 0.0, %v587
      %v589 = vpop.f32.mrf.mxu0
      %590 = vmatprep.mubr.bf16.mxu0 0
      %591 = vmatmul.mubr.bf16.gmra.mxu0 %v542
      %v592 = vpop.f32.mrf.mxu0
      %v593 = vadd.f32 0.0, %v592
      %v594 = vpop.f32.mrf.mxu0
      %v595 = vpop.f32.mrf.mxu0
      %v596 = vpop.f32.mrf.mxu0
      %597 = vdwg.mxu0
      %v598 = vmul.f32 %v585, 0.35355338
      %v599 = vmul.f32 %v588, 0.35355338
      %v600 = vmul.f32 %v593, 0.35355338
      %vm601 = vcmask 154624
      %v602 = vsel %vm601, %v598, -inf
      %603 = vmax.xlane.f32.xlu0 %v602
      %v604 = vpop.xlane.xlu0 %603
      %v605 = vsel %vm601, %v599, -inf
      %606 = vmax.xlane.f32.xlu0 %v605
      %v607 = vpop.xlane.xlu0 %606
      %vm608 = vcmask 149504
      %v609 = vsel %vm608, %v600, -inf
      %610 = vmax.xlane.f32.xlu0 %v609
      %v611 = vpop.xlane.xlu0 %610
      %v612 = vsub.f32 %v598, %v604
      %v613 = vsub.f32 %v599, %v607
      %v614 = vsub.f32 %v600, %v611
      %v615 = vmul.f32 %v612, 1.442695
      %v616 = vpow.pop %v615
      %v617 = vmul.f32 %v613, 1.442695
      %v618 = vpow.pop %v617
      %v619 = vmul.f32 %v614, 1.442695
      %v620 = vpow.pop %v619
      %v621 = vsel %vm601, %v616, 0.0
      %622 = vadd.xlane.f32.xlu0 %v621
      %v623 = vpop.xlane.xlu0 %622
      %v624 = vsel %vm601, %v618, 0.0
      %625 = vadd.xlane.f32.xlu0 %v624
      %v626 = vpop.xlane.xlu0 %625
      %v627 = vsel %vm608, %v620, 0.0
      %628 = vadd.xlane.f32.xlu0 %v627
      %v629 = vpop.xlane.xlu0 %628
      %v630 = vrcp.pop %v623
      %v631 = vrcp.pop %v626
      %v632 = vrcp.pop %v629
      %v633 = vmul.f32 %v616, %v630
      %v634 = vmul.f32 %v618, %v631
      %v635 = vmul.f32 %v620, %v632
      %v636 = vpack.c.bf16 %v634, %v633
      %v637 = vpack.c.bf16 %v635, %v635
      %638 = vrot.lane.b32.xlu0 %v529, 64
      %v639 = vpop.permute.xlu0 %638
      %640 = vrot.lane.b32.xlu0 %v530, 64
      %v641 = vpop.permute.xlu0 %640
      %v644 = vsel %vm601, %v636, 0
      %v647 = vsel %vm601, %v637, 0
      %vm649 = vcmask 1040384
      %vm650 = vcmask 1041408
      %v651 = vsel %vm649, 4294967295, 65535
      %v652 = vsel %vm650, %v651, 0
      %v654 = vand.u32 %v641, %v652
      %656 = vmatprep.subr.bf16.mxu0 0
      %657 = vmatpush1.bf16.msra.mxu0 0
      %658 = vmatprep.subr.bf16.mxu0 0
      %659 = vmatpush1.bf16.msra.mxu0 0
      %660 = vmatprep.subr.bf16.mxu0 0
      %661 = vmatpush1.bf16.msra.mxu0 0
      %662 = vmatprep.subr.bf16.mxu0 0
      %663 = vmatpush1.bf16.msra.mxu0 0
      %664 = vmatprep.subr.bf16.mxu0 0
      %665 = vmatpush1.bf16.msra.mxu0 0
      %666 = vmatprep.subr.bf16.mxu0 0
      %667 = vmatpush1.bf16.msra.mxu0 0
      %668 = vmatprep.subr.bf16.mxu0 0
      %669 = vmatpush1.bf16.msra.mxu0 %v654
      %670 = vmatprep.subr.bf16.mxu0 0
      %671 = vmatpush1.bf16.msra.mxu0 %v639
      %672 = vmatprep.subr.bf16.mxu0 0
      %673 = vmatpush2.bf16.msra.mxu0 0
      %674 = vmatprep.subr.bf16.mxu0 0
      %675 = vmatpush2.bf16.msra.mxu0 0
      %676 = vmatprep.subr.bf16.mxu0 0
      %677 = vmatpush2.bf16.msra.mxu0 0
      %678 = vmatprep.subr.bf16.mxu0 0
      %679 = vmatpush2.bf16.msra.mxu0 0
      %680 = vmatprep.subr.bf16.mxu0 0
      %681 = vmatpush2.bf16.msra.mxu0 0
      %682 = vmatprep.subr.bf16.mxu0 0
      %683 = vmatpush2.bf16.msra.mxu0 0
      %684 = vmatprep.subr.bf16.mxu0 0
      %685 = vmatpush2.bf16.msra.mxu0 0
      %686 = vmatprep.subr.bf16.mxu0 0
      %687 = vmatpush2.bf16.msra.mxu0 0
      %688 = vmatprep.mubr.bf16.mxu0 0
      %689 = vmatmul.mubr.bf16.gmra.mxu0 %v644
      %v690 = vpop.f32.mrf.mxu0
      %v691 = vadd.f32 0.0, %v690
      %v692 = vpop.f32.mrf.mxu0
      %v693 = vpop.f32.mrf.mxu0
      %v694 = vadd.f32 0.0, %v693
      %v695 = vpop.f32.mrf.mxu0
      %696 = vmatprep.mubr.bf16.mxu0 0
      %697 = vmatmul.mubr.bf16.gmra.mxu0 %v647
      %v698 = vpop.f32.mrf.mxu0
      %v699 = vadd.f32 0.0, %v698
      %v700 = vpop.f32.mrf.mxu0
      %v701 = vpop.f32.mrf.mxu0
      %v702 = vpop.f32.mrf.mxu0
      %703 = vdwg.mxu0
      %v704 = vpack.c.bf16 %v694, %v691
      %v705 = vpack.c.bf16 %v699, %v699
      %706 = vrot.lane.b32.xlu0 %v529, 120
      %v707 = vpop.permute.xlu0 %706
      %708 = vrot.lane.b32.xlu0 %v530, 120
      %v709 = vpop.permute.xlu0 %708
      %710 = vrot.lane.b32.xlu0 %v529, 88
      %v711 = vpop.permute.xlu0 %710
      %712 = vrot.lane.b32.xlu0 %v530, 88
      %v713 = vpop.permute.xlu0 %712
      %v715 = vsel %vm537, %v707, 0
      %v718 = vsel %vm537, %v709, 0
      %v721 = vsel %vm537, %v711, 0
      %v724 = vsel %vm537, %v713, 0
      %726 = vmatprep.subr.bf16.mxu0 0
      %727 = vmatpush1.bf16.xpose.msra.mxu0 0
      %728 = vmatprep.subr.bf16.mxu0 0
      %729 = vmatpush1.bf16.xpose.msra.mxu0 0
      %730 = vmatprep.subr.bf16.mxu0 0
      %731 = vmatpush1.bf16.xpose.msra.mxu0 0
      %732 = vmatprep.subr.bf16.mxu0 0
      %733 = vmatpush1.bf16.xpose.msra.mxu0 0
      %734 = vmatprep.subr.bf16.mxu0 0
      %735 = vmatpush1.bf16.xpose.msra.mxu0 0
      %736 = vmatprep.subr.bf16.mxu0 0
      %737 = vmatpush1.bf16.xpose.msra.mxu0 0
      %738 = vmatprep.subr.bf16.mxu0 0
      %739 = vmatpush1.bf16.xpose.msra.mxu0 %v724
      %740 = vmatprep.subr.bf16.mxu0 0
      %741 = vmatpush1.bf16.xpose.msra.mxu0 %v721
      %742 = vmatprep.subr.bf16.mxu0 0
      %743 = vmatpush2.bf16.xpose.msra.mxu0 0
      %744 = vmatprep.subr.bf16.mxu0 0
      %745 = vmatpush2.bf16.xpose.msra.mxu0 0
      %746 = vmatprep.subr.bf16.mxu0 0
      %747 = vmatpush2.bf16.xpose.msra.mxu0 0
      %748 = vmatprep.subr.bf16.mxu0 0
      %749 = vmatpush2.bf16.xpose.msra.mxu0 0
      %750 = vmatprep.subr.bf16.mxu0 0
      %751 = vmatpush2.bf16.xpose.msra.mxu0 0
      %752 = vmatprep.subr.bf16.mxu0 0
      %753 = vmatpush2.bf16.xpose.msra.mxu0 0
      %754 = vmatprep.subr.bf16.mxu0 0
      %755 = vmatpush2.bf16.xpose.msra.mxu0 0
      %756 = vmatprep.subr.bf16.mxu0 0
      %757 = vmatpush2.bf16.xpose.msra.mxu0 0
      %758 = vmatprep.mubr.bf16.mxu0 0
      %759 = vmatmul.mubr.bf16.gmra.mxu0 %v715
      %v760 = vpop.f32.mrf.mxu0
      %v761 = vadd.f32 0.0, %v760
      %v762 = vpop.f32.mrf.mxu0
      %v763 = vpop.f32.mrf.mxu0
      %v764 = vadd.f32 0.0, %v763
      %v765 = vpop.f32.mrf.mxu0
      %766 = vmatprep.mubr.bf16.mxu0 0
      %767 = vmatmul.mubr.bf16.gmra.mxu0 %v718
      %v768 = vpop.f32.mrf.mxu0
      %v769 = vadd.f32 0.0, %v768
      %v770 = vpop.f32.mrf.mxu0
      %v771 = vpop.f32.mrf.mxu0
      %v772 = vpop.f32.mrf.mxu0
      %773 = vdwg.mxu0
      %v774 = vmul.f32 %v761, 0.35355338
      %v775 = vmul.f32 %v764, 0.35355338
      %v776 = vmul.f32 %v769, 0.35355338
      %v777 = vsel %vm601, %v774, -inf
      %778 = vmax.xlane.f32.xlu0 %v777
      %v779 = vpop.xlane.xlu0 %778
      %v780 = vsel %vm601, %v775, -inf
      %781 = vmax.xlane.f32.xlu0 %v780
      %v782 = vpop.xlane.xlu0 %781
      %v783 = vsel %vm608, %v776, -inf
      %784 = vmax.xlane.f32.xlu0 %v783
      %v785 = vpop.xlane.xlu0 %784
      %v786 = vsub.f32 %v774, %v779
      %v787 = vsub.f32 %v775, %v782
      %v788 = vsub.f32 %v776, %v785
      %v789 = vmul.f32 %v786, 1.442695
      %v790 = vpow.pop %v789
      %v791 = vmul.f32 %v787, 1.442695
      %v792 = vpow.pop %v791
      %v793 = vmul.f32 %v788, 1.442695
      %v794 = vpow.pop %v793
      %v795 = vsel %vm601, %v790, 0.0
      %796 = vadd.xlane.f32.xlu0 %v795
      %v797 = vpop.xlane.xlu0 %796
      %v798 = vsel %vm601, %v792, 0.0
      %799 = vadd.xlane.f32.xlu0 %v798
      %v800 = vpop.xlane.xlu0 %799
      %v801 = vsel %vm608, %v794, 0.0
      %802 = vadd.xlane.f32.xlu0 %v801
      %v803 = vpop.xlane.xlu0 %802
      %v804 = vrcp.pop %v797
      %v805 = vrcp.pop %v800
      %v806 = vrcp.pop %v803
      %v807 = vmul.f32 %v790, %v804
      %v808 = vmul.f32 %v792, %v805
      %v809 = vmul.f32 %v794, %v806
      %v810 = vpack.c.bf16 %v808, %v807
      %v811 = vpack.c.bf16 %v809, %v809
      %812 = vrot.lane.b32.xlu0 %v529, 56
      %v813 = vpop.permute.xlu0 %812
      %814 = vrot.lane.b32.xlu0 %v530, 56
      %v815 = vpop.permute.xlu0 %814
      %v818 = vsel %vm601, %v810, 0
      %v821 = vsel %vm601, %v811, 0
      %v824 = vand.u32 %v815, %v652
      %826 = vmatprep.subr.bf16.mxu0 0
      %827 = vmatpush1.bf16.msra.mxu0 0
      %828 = vmatprep.subr.bf16.mxu0 0
      %829 = vmatpush1.bf16.msra.mxu0 0
      %830 = vmatprep.subr.bf16.mxu0 0
      %831 = vmatpush1.bf16.msra.mxu0 0
      %832 = vmatprep.subr.bf16.mxu0 0
      %833 = vmatpush1.bf16.msra.mxu0 0
      %834 = vmatprep.subr.bf16.mxu0 0
      %835 = vmatpush1.bf16.msra.mxu0 0
      %836 = vmatprep.subr.bf16.mxu0 0
      %837 = vmatpush1.bf16.msra.mxu0 0
      %838 = vmatprep.subr.bf16.mxu0 0
      %839 = vmatpush1.bf16.msra.mxu0 %v824
      %840 = vmatprep.subr.bf16.mxu0 0
      %841 = vmatpush1.bf16.msra.mxu0 %v813
      %842 = vmatprep.subr.bf16.mxu0 0
      %843 = vmatpush2.bf16.msra.mxu0 0
      %844 = vmatprep.subr.bf16.mxu0 0
      %845 = vmatpush2.bf16.msra.mxu0 0
      %846 = vmatprep.subr.bf16.mxu0 0
      %847 = vmatpush2.bf16.msra.mxu0 0
      %848 = vmatprep.subr.bf16.mxu0 0
      %849 = vmatpush2.bf16.msra.mxu0 0
      %850 = vmatprep.subr.bf16.mxu0 0
      %851 = vmatpush2.bf16.msra.mxu0 0
      %852 = vmatprep.subr.bf16.mxu0 0
      %853 = vmatpush2.bf16.msra.mxu0 0
      %854 = vmatprep.subr.bf16.mxu0 0
      %855 = vmatpush2.bf16.msra.mxu0 0
      %856 = vmatprep.subr.bf16.mxu0 0
      %857 = vmatpush2.bf16.msra.mxu0 0
      %858 = vmatprep.mubr.bf16.mxu0 0
      %859 = vmatmul.mubr.bf16.gmra.mxu0 %v818
      %v860 = vpop.f32.mrf.mxu0
      %v861 = vadd.f32 0.0, %v860
      %v862 = vpop.f32.mrf.mxu0
      %v863 = vpop.f32.mrf.mxu0
      %v864 = vadd.f32 0.0, %v863
      %v865 = vpop.f32.mrf.mxu0
      %866 = vmatprep.mubr.bf16.mxu0 0
      %867 = vmatmul.mubr.bf16.gmra.mxu0 %v821
      %v868 = vpop.f32.mrf.mxu0
      %v869 = vadd.f32 0.0, %v868
      %v870 = vpop.f32.mrf.mxu0
      %v871 = vpop.f32.mrf.mxu0
      %v872 = vpop.f32.mrf.mxu0
      %873 = vdwg.mxu0
      %v874 = vpack.c.bf16 %v864, %v861
      %v875 = vpack.c.bf16 %v869, %v869
      %v877 = vsel %vm537, %v874, 0
      %v880 = vsel %vm537, %v875, 0
      %vm882 = vcmask 1043456
      %v884 = vsel %vm882, %v526, 0
      %886 = vmatprep.subr.bf16.mxu0 0
      %887 = vmatpush1.bf16.msra.mxu0 0
      %888 = vmatprep.subr.bf16.mxu0 0
      %889 = vmatpush1.bf16.msra.mxu0 0
      %890 = vmatprep.subr.bf16.mxu0 0
      %891 = vmatpush1.bf16.msra.mxu0 0
      %892 = vmatprep.subr.bf16.mxu0 0
      %893 = vmatpush1.bf16.msra.mxu0 0
      %894 = vmatprep.subr.bf16.mxu0 0
      %895 = vmatpush1.bf16.msra.mxu0 0
      %896 = vmatprep.subr.bf16.mxu0 0
      %897 = vmatpush1.bf16.msra.mxu0 0
      %898 = vmatprep.subr.bf16.mxu0 0
      %899 = vmatpush1.bf16.msra.mxu0 0
      %900 = vmatprep.subr.bf16.mxu0 0
      %901 = vmatpush1.bf16.msra.mxu0 %v884
      %902 = vmatprep.subr.bf16.mxu0 0
      %903 = vmatpush2.bf16.msra.mxu0 0
      %904 = vmatprep.subr.bf16.mxu0 0
      %905 = vmatpush2.bf16.msra.mxu0 0
      %906 = vmatprep.subr.bf16.mxu0 0
      %907 = vmatpush2.bf16.msra.mxu0 0
      %908 = vmatprep.subr.bf16.mxu0 0
      %909 = vmatpush2.bf16.msra.mxu0 0
      %910 = vmatprep.subr.bf16.mxu0 0
      %911 = vmatpush2.bf16.msra.mxu0 0
      %912 = vmatprep.subr.bf16.mxu0 0
      %913 = vmatpush2.bf16.msra.mxu0 0
      %914 = vmatprep.subr.bf16.mxu0 0
      %915 = vmatpush2.bf16.msra.mxu0 0
      %916 = vmatprep.subr.bf16.mxu0 0
      %917 = vmatpush2.bf16.msra.mxu0 0
      %918 = vmatprep.mubr.bf16.mxu0 0
      %919 = vmatmul.mubr.bf16.gmra.mxu0 %v877
      %v920 = vpop.f32.mrf.mxu0
      %v921 = vadd.f32 0.0, %v920
      %v922 = vpop.f32.mrf.mxu0
      %v923 = vpop.f32.mrf.mxu0
      %v924 = vadd.f32 0.0, %v923
      %v925 = vpop.f32.mrf.mxu0
      %926 = vmatprep.mubr.bf16.mxu0 0
      %927 = vmatmul.mubr.bf16.gmra.mxu0 %v880
      %v928 = vpop.f32.mrf.mxu0
      %v929 = vadd.f32 0.0, %v928
      %v930 = vpop.f32.mrf.mxu0
      %v931 = vpop.f32.mrf.mxu0
      %v932 = vpop.f32.mrf.mxu0
      %933 = vdwg.mxu0
      %v935 = vsel %vm537, %v704, 0
      %v938 = vsel %vm537, %v705, 0
      %v941 = vsel %vm882, %v525, 0
      %943 = vmatprep.subr.bf16.mxu0 0
      %944 = vmatpush1.bf16.msra.mxu0 0
      %945 = vmatprep.subr.bf16.mxu0 0
      %946 = vmatpush1.bf16.msra.mxu0 0
      %947 = vmatprep.subr.bf16.mxu0 0
      %948 = vmatpush1.bf16.msra.mxu0 0
      %949 = vmatprep.subr.bf16.mxu0 0
      %950 = vmatpush1.bf16.msra.mxu0 0
      %951 = vmatprep.subr.bf16.mxu0 0
      %952 = vmatpush1.bf16.msra.mxu0 0
      %953 = vmatprep.subr.bf16.mxu0 0
      %954 = vmatpush1.bf16.msra.mxu0 0
      %955 = vmatprep.subr.bf16.mxu0 0
      %956 = vmatpush1.bf16.msra.mxu0 0
      %957 = vmatprep.subr.bf16.mxu0 0
      %958 = vmatpush1.bf16.msra.mxu0 %v941
      %959 = vmatprep.subr.bf16.mxu0 0
      %960 = vmatpush2.bf16.msra.mxu0 0
      %961 = vmatprep.subr.bf16.mxu0 0
      %962 = vmatpush2.bf16.msra.mxu0 0
      %963 = vmatprep.subr.bf16.mxu0 0
      %964 = vmatpush2.bf16.msra.mxu0 0
      %965 = vmatprep.subr.bf16.mxu0 0
      %966 = vmatpush2.bf16.msra.mxu0 0
      %967 = vmatprep.subr.bf16.mxu0 0
      %968 = vmatpush2.bf16.msra.mxu0 0
      %969 = vmatprep.subr.bf16.mxu0 0
      %970 = vmatpush2.bf16.msra.mxu0 0
      %971 = vmatprep.subr.bf16.mxu0 0
      %972 = vmatpush2.bf16.msra.mxu0 0
      %973 = vmatprep.subr.bf16.mxu0 0
      %974 = vmatpush2.bf16.msra.mxu0 0
      %975 = vmatprep.mubr.bf16.mxu0 0
      %976 = vmatmul.mubr.bf16.gmra.mxu0 %v935
      %v977 = vpop.f32.mrf.mxu0
      %v978 = vadd.f32 %v921, %v977
      %v979 = vpop.f32.mrf.mxu0
      %v980 = vpop.f32.mrf.mxu0
      %v981 = vadd.f32 %v924, %v980
      %v982 = vpop.f32.mrf.mxu0
      %983 = vmatprep.mubr.bf16.mxu0 0
      %984 = vmatmul.mubr.bf16.gmra.mxu0 %v938
      %v985 = vpop.f32.mrf.mxu0
      %v986 = vadd.f32 %v929, %v985
      %v987 = vpop.f32.mrf.mxu0
      %v988 = vpop.f32.mrf.mxu0
      %v989 = vpop.f32.mrf.mxu0
      %990 = vdwg.mxu0
      %991 = vrot.lane.b32.xlu0 %v529, 112
      %v992 = vpop.permute.xlu0 %991
      %993 = vrot.lane.b32.xlu0 %v530, 112
      %v994 = vpop.permute.xlu0 %993
      %995 = vrot.lane.b32.xlu0 %v529, 80
      %v996 = vpop.permute.xlu0 %995
      %997 = vrot.lane.b32.xlu0 %v530, 80
      %v998 = vpop.permute.xlu0 %997
      %v1000 = vsel %vm537, %v992, 0
      %v1003 = vsel %vm537, %v994, 0
      %v1006 = vsel %vm537, %v996, 0
      %v1009 = vsel %vm537, %v998, 0
      %1011 = vmatprep.subr.bf16.mxu0 0
      %1012 = vmatpush1.bf16.xpose.msra.mxu0 0
      %1013 = vmatprep.subr.bf16.mxu0 0
      %1014 = vmatpush1.bf16.xpose.msra.mxu0 0
      %1015 = vmatprep.subr.bf16.mxu0 0
      %1016 = vmatpush1.bf16.xpose.msra.mxu0 0
      %1017 = vmatprep.subr.bf16.mxu0 0
      %1018 = vmatpush1.bf16.xpose.msra.mxu0 0
      %1019 = vmatprep.subr.bf16.mxu0 0
      %1020 = vmatpush1.bf16.xpose.msra.mxu0 0
      %1021 = vmatprep.subr.bf16.mxu0 0
      %1022 = vmatpush1.bf16.xpose.msra.mxu0 0
      %1023 = vmatprep.subr.bf16.mxu0 0
      %1024 = vmatpush1.bf16.xpose.msra.mxu0 %v1009
      %1025 = vmatprep.subr.bf16.mxu0 0
      %1026 = vmatpush1.bf16.xpose.msra.mxu0 %v1006
      %1027 = vmatprep.subr.bf16.mxu0 0
      %1028 = vmatpush2.bf16.xpose.msra.mxu0 0
      %1029 = vmatprep.subr.bf16.mxu0 0
      %1030 = vmatpush2.bf16.xpose.msra.mxu0 0
      %1031 = vmatprep.subr.bf16.mxu0 0
      %1032 = vmatpush2.bf16.xpose.msra.mxu0 0
      %1033 = vmatprep.subr.bf16.mxu0 0
      %1034 = vmatpush2.bf16.xpose.msra.mxu0 0
      %1035 = vmatprep.subr.bf16.mxu0 0
      %1036 = vmatpush2.bf16.xpose.msra.mxu0 0
      %1037 = vmatprep.subr.bf16.mxu0 0
      %1038 = vmatpush2.bf16.xpose.msra.mxu0 0
      %1039 = vmatprep.subr.bf16.mxu0 0
      %1040 = vmatpush2.bf16.xpose.msra.mxu0 0
      %1041 = vmatprep.subr.bf16.mxu0 0
      %1042 = vmatpush2.bf16.xpose.msra.mxu0 0
      %1043 = vmatprep.mubr.bf16.mxu0 0
      %1044 = vmatmul.mubr.bf16.gmra.mxu0 %v1000
      %v1045 = vpop.f32.mrf.mxu0
      %v1046 = vadd.f32 0.0, %v1045
      %v1047 = vpop.f32.mrf.mxu0
      %v1048 = vpop.f32.mrf.mxu0
      %v1049 = vadd.f32 0.0, %v1048
      %v1050 = vpop.f32.mrf.mxu0
      %1051 = vmatprep.mubr.bf16.mxu0 0
      %1052 = vmatmul.mubr.bf16.gmra.mxu0 %v1003
      %v1053 = vpop.f32.mrf.mxu0
      %v1054 = vadd.f32 0.0, %v1053
      %v1055 = vpop.f32.mrf.mxu0
      %v1056 = vpop.f32.mrf.mxu0
      %v1057 = vpop.f32.mrf.mxu0
      %1058 = vdwg.mxu0
      %v1059 = vmul.f32 %v1046, 0.35355338
      %v1060 = vmul.f32 %v1049, 0.35355338
      %v1061 = vmul.f32 %v1054, 0.35355338
      %v1062 = vsel %vm601, %v1059, -inf
      %1063 = vmax.xlane.f32.xlu0 %v1062
      %v1064 = vpop.xlane.xlu0 %1063
      %v1065 = vsel %vm601, %v1060, -inf
      %1066 = vmax.xlane.f32.xlu0 %v1065
      %v1067 = vpop.xlane.xlu0 %1066
      %v1068 = vsel %vm608, %v1061, -inf
      %1069 = vmax.xlane.f32.xlu0 %v1068
      %v1070 = vpop.xlane.xlu0 %1069
      %v1071 = vsub.f32 %v1059, %v1064
      %v1072 = vsub.f32 %v1060, %v1067
      %v1073 = vsub.f32 %v1061, %v1070
      %v1074 = vmul.f32 %v1071, 1.442695
      %v1075 = vpow.pop %v1074
      %v1076 = vmul.f32 %v1072, 1.442695
      %v1077 = vpow.pop %v1076
      %v1078 = vmul.f32 %v1073, 1.442695
      %v1079 = vpow.pop %v1078
      %v1080 = vsel %vm601, %v1075, 0.0
      %1081 = vadd.xlane.f32.xlu0 %v1080
      %v1082 = vpop.xlane.xlu0 %1081
      %v1083 = vsel %vm601, %v1077, 0.0
      %1084 = vadd.xlane.f32.xlu0 %v1083
      %v1085 = vpop.xlane.xlu0 %1084
      %v1086 = vsel %vm608, %v1079, 0.0
      %1087 = vadd.xlane.f32.xlu0 %v1086
      %v1088 = vpop.xlane.xlu0 %1087
      %v1089 = vrcp.pop %v1082
      %v1090 = vrcp.pop %v1085
      %v1091 = vrcp.pop %v1088
      %v1092 = vmul.f32 %v1075, %v1089
      %v1093 = vmul.f32 %v1077, %v1090
      %v1094 = vmul.f32 %v1079, %v1091
      %v1095 = vpack.c.bf16 %v1093, %v1092
      %v1096 = vpack.c.bf16 %v1094, %v1094
      %1097 = vrot.lane.b32.xlu0 %v529, 48
      %v1098 = vpop.permute.xlu0 %1097
      %1099 = vrot.lane.b32.xlu0 %v530, 48
      %v1100 = vpop.permute.xlu0 %1099
      %v1103 = vsel %vm601, %v1095, 0
      %v1106 = vsel %vm601, %v1096, 0
      %v1109 = vand.u32 %v1100, %v652
      %1111 = vmatprep.subr.bf16.mxu0 0
      %1112 = vmatpush1.bf16.msra.mxu0 0
      %1113 = vmatprep.subr.bf16.mxu0 0
      %1114 = vmatpush1.bf16.msra.mxu0 0
      %1115 = vmatprep.subr.bf16.mxu0 0
      %1116 = vmatpush1.bf16.msra.mxu0 0
      %1117 = vmatprep.subr.bf16.mxu0 0
      %1118 = vmatpush1.bf16.msra.mxu0 0
      %1119 = vmatprep.subr.bf16.mxu0 0
      %1120 = vmatpush1.bf16.msra.mxu0 0
      %1121 = vmatprep.subr.bf16.mxu0 0
      %1122 = vmatpush1.bf16.msra.mxu0 0
      %1123 = vmatprep.subr.bf16.mxu0 0
      %1124 = vmatpush1.bf16.msra.mxu0 %v1109
      %1125 = vmatprep.subr.bf16.mxu0 0
      %1126 = vmatpush1.bf16.msra.mxu0 %v1098
      %1127 = vmatprep.subr.bf16.mxu0 0
      %1128 = vmatpush2.bf16.msra.mxu0 0
      %1129 = vmatprep.subr.bf16.mxu0 0
      %1130 = vmatpush2.bf16.msra.mxu0 0
      %1131 = vmatprep.subr.bf16.mxu0 0
      %1132 = vmatpush2.bf16.msra.mxu0 0
      %1133 = vmatprep.subr.bf16.mxu0 0
      %1134 = vmatpush2.bf16.msra.mxu0 0
      %1135 = vmatprep.subr.bf16.mxu0 0
      %1136 = vmatpush2.bf16.msra.mxu0 0
      %1137 = vmatprep.subr.bf16.mxu0 0
      %1138 = vmatpush2.bf16.msra.mxu0 0
      %1139 = vmatprep.subr.bf16.mxu0 0
      %1140 = vmatpush2.bf16.msra.mxu0 0
      %1141 = vmatprep.subr.bf16.mxu0 0
      %1142 = vmatpush2.bf16.msra.mxu0 0
      %1143 = vmatprep.mubr.bf16.mxu0 0
      %1144 = vmatmul.mubr.bf16.gmra.mxu0 %v1103
      %v1145 = vpop.f32.mrf.mxu0
      %v1146 = vadd.f32 0.0, %v1145
      %v1147 = vpop.f32.mrf.mxu0
      %v1148 = vpop.f32.mrf.mxu0
      %v1149 = vadd.f32 0.0, %v1148
      %v1150 = vpop.f32.mrf.mxu0
      %1151 = vmatprep.mubr.bf16.mxu0 0
      %1152 = vmatmul.mubr.bf16.gmra.mxu0 %v1106
      %v1153 = vpop.f32.mrf.mxu0
      %v1154 = vadd.f32 0.0, %v1153
      %v1155 = vpop.f32.mrf.mxu0
      %v1156 = vpop.f32.mrf.mxu0
      %v1157 = vpop.f32.mrf.mxu0
      %1158 = vdwg.mxu0
      %v1159 = vpack.c.bf16 %v1149, %v1146
      %v1160 = vpack.c.bf16 %v1154, %v1154
      %v1162 = vsel %vm537, %v1159, 0
      %v1165 = vsel %vm537, %v1160, 0
      %v1168 = vsel %vm882, %v527, 0
      %1170 = vmatprep.subr.bf16.mxu0 0
      %1171 = vmatpush1.bf16.msra.mxu0 0
      %1172 = vmatprep.subr.bf16.mxu0 0
      %1173 = vmatpush1.bf16.msra.mxu0 0
      %1174 = vmatprep.subr.bf16.mxu0 0
      %1175 = vmatpush1.bf16.msra.mxu0 0
      %1176 = vmatprep.subr.bf16.mxu0 0
      %1177 = vmatpush1.bf16.msra.mxu0 0
      %1178 = vmatprep.subr.bf16.mxu0 0
      %1179 = vmatpush1.bf16.msra.mxu0 0
      %1180 = vmatprep.subr.bf16.mxu0 0
      %1181 = vmatpush1.bf16.msra.mxu0 0
      %1182 = vmatprep.subr.bf16.mxu0 0
      %1183 = vmatpush1.bf16.msra.mxu0 0
      %1184 = vmatprep.subr.bf16.mxu0 0
      %1185 = vmatpush1.bf16.msra.mxu0 %v1168
      %1186 = vmatprep.subr.bf16.mxu0 0
      %1187 = vmatpush2.bf16.msra.mxu0 0
      %1188 = vmatprep.subr.bf16.mxu0 0
      %1189 = vmatpush2.bf16.msra.mxu0 0
      %1190 = vmatprep.subr.bf16.mxu0 0
      %1191 = vmatpush2.bf16.msra.mxu0 0
      %1192 = vmatprep.subr.bf16.mxu0 0
      %1193 = vmatpush2.bf16.msra.mxu0 0
      %1194 = vmatprep.subr.bf16.mxu0 0
      %1195 = vmatpush2.bf16.msra.mxu0 0
      %1196 = vmatprep.subr.bf16.mxu0 0
      %1197 = vmatpush2.bf16.msra.mxu0 0
      %1198 = vmatprep.subr.bf16.mxu0 0
      %1199 = vmatpush2.bf16.msra.mxu0 0
      %1200 = vmatprep.subr.bf16.mxu0 0
      %1201 = vmatpush2.bf16.msra.mxu0 0
      %1202 = vmatprep.mubr.bf16.mxu0 0
      %1203 = vmatmul.mubr.bf16.gmra.mxu0 %v1162
      %v1204 = vpop.f32.mrf.mxu0
      %v1205 = vadd.f32 0.0, %v1204
      %v1206 = vpop.f32.mrf.mxu0
      %v1207 = vpop.f32.mrf.mxu0
      %v1208 = vadd.f32 0.0, %v1207
      %v1209 = vpop.f32.mrf.mxu0
      %1210 = vmatprep.mubr.bf16.mxu0 0
      %1211 = vmatmul.mubr.bf16.gmra.mxu0 %v1165
      %v1212 = vpop.f32.mrf.mxu0
      %v1213 = vadd.f32 0.0, %v1212
      %v1214 = vpop.f32.mrf.mxu0
      %v1215 = vpop.f32.mrf.mxu0
      %v1216 = vpop.f32.mrf.mxu0
      %1217 = vdwg.mxu0
      %v1218 = vadd.f32 %v978, %v1205
      %v1219 = vadd.f32 %v981, %v1208
      %v1220 = vadd.f32 %v986, %v1213
      %1221 = vrot.lane.b32.xlu0 %v529, 104
      %v1222 = vpop.permute.xlu0 %1221
      %1223 = vrot.lane.b32.xlu0 %v530, 104
      %v1224 = vpop.permute.xlu0 %1223
      %1225 = vrot.lane.b32.xlu0 %v529, 72
      %v1226 = vpop.permute.xlu0 %1225
      %1227 = vrot.lane.b32.xlu0 %v530, 72
      %v1228 = vpop.permute.xlu0 %1227
      %v1230 = vsel %vm537, %v1222, 0
      %v1233 = vsel %vm537, %v1224, 0
      %v1236 = vsel %vm537, %v1226, 0
      %v1239 = vsel %vm537, %v1228, 0
      %1241 = vmatprep.subr.bf16.mxu0 0
      %1242 = vmatpush1.bf16.xpose.msra.mxu0 0
      %1243 = vmatprep.subr.bf16.mxu0 0
      %1244 = vmatpush1.bf16.xpose.msra.mxu0 0
      %1245 = vmatprep.subr.bf16.mxu0 0
      %1246 = vmatpush1.bf16.xpose.msra.mxu0 0
      %1247 = vmatprep.subr.bf16.mxu0 0
      %1248 = vmatpush1.bf16.xpose.msra.mxu0 0
      %1249 = vmatprep.subr.bf16.mxu0 0
      %1250 = vmatpush1.bf16.xpose.msra.mxu0 0
      %1251 = vmatprep.subr.bf16.mxu0 0
      %1252 = vmatpush1.bf16.xpose.msra.mxu0 0
      %1253 = vmatprep.subr.bf16.mxu0 0
      %1254 = vmatpush1.bf16.xpose.msra.mxu0 %v1239
      %1255 = vmatprep.subr.bf16.mxu0 0
      %1256 = vmatpush1.bf16.xpose.msra.mxu0 %v1236
      %1257 = vmatprep.subr.bf16.mxu0 0
      %1258 = vmatpush2.bf16.xpose.msra.mxu0 0
      %1259 = vmatprep.subr.bf16.mxu0 0
      %1260 = vmatpush2.bf16.xpose.msra.mxu0 0
      %1261 = vmatprep.subr.bf16.mxu0 0
      %1262 = vmatpush2.bf16.xpose.msra.mxu0 0
      %1263 = vmatprep.subr.bf16.mxu0 0
      %1264 = vmatpush2.bf16.xpose.msra.mxu0 0
      %1265 = vmatprep.subr.bf16.mxu0 0
      %1266 = vmatpush2.bf16.xpose.msra.mxu0 0
      %1267 = vmatprep.subr.bf16.mxu0 0
      %1268 = vmatpush2.bf16.xpose.msra.mxu0 0
      %1269 = vmatprep.subr.bf16.mxu0 0
      %1270 = vmatpush2.bf16.xpose.msra.mxu0 0
      %1271 = vmatprep.subr.bf16.mxu0 0
      %1272 = vmatpush2.bf16.xpose.msra.mxu0 0
      %1273 = vmatprep.mubr.bf16.mxu0 0
      %1274 = vmatmul.mubr.bf16.gmra.mxu0 %v1230
      %v1275 = vpop.f32.mrf.mxu0
      %v1276 = vadd.f32 0.0, %v1275
      %v1277 = vpop.f32.mrf.mxu0
      %v1278 = vpop.f32.mrf.mxu0
      %v1279 = vadd.f32 0.0, %v1278
      %v1280 = vpop.f32.mrf.mxu0
      %1281 = vmatprep.mubr.bf16.mxu0 0
      %1282 = vmatmul.mubr.bf16.gmra.mxu0 %v1233
      %v1283 = vpop.f32.mrf.mxu0
      %v1284 = vadd.f32 0.0, %v1283
      %v1285 = vpop.f32.mrf.mxu0
      %v1286 = vpop.f32.mrf.mxu0
      %v1287 = vpop.f32.mrf.mxu0
      %1288 = vdwg.mxu0
      %v1289 = vmul.f32 %v1276, 0.35355338
      %v1290 = vmul.f32 %v1279, 0.35355338
      %v1291 = vmul.f32 %v1284, 0.35355338
      %v1292 = vsel %vm601, %v1289, -inf
      %1293 = vmax.xlane.f32.xlu0 %v1292
      %v1294 = vpop.xlane.xlu0 %1293
      %v1295 = vsel %vm601, %v1290, -inf
      %1296 = vmax.xlane.f32.xlu0 %v1295
      %v1297 = vpop.xlane.xlu0 %1296
      %v1298 = vsel %vm608, %v1291, -inf
      %1299 = vmax.xlane.f32.xlu0 %v1298
      %v1300 = vpop.xlane.xlu0 %1299
      %v1301 = vsub.f32 %v1289, %v1294
      %v1302 = vsub.f32 %v1290, %v1297
      %v1303 = vsub.f32 %v1291, %v1300
      %v1304 = vmul.f32 %v1301, 1.442695
      %v1305 = vpow.pop %v1304
      %v1306 = vmul.f32 %v1302, 1.442695
      %v1307 = vpow.pop %v1306
      %v1308 = vmul.f32 %v1303, 1.442695
      %v1309 = vpow.pop %v1308
      %v1310 = vsel %vm601, %v1305, 0.0
      %1311 = vadd.xlane.f32.xlu0 %v1310
      %v1312 = vpop.xlane.xlu0 %1311
      %v1313 = vsel %vm601, %v1307, 0.0
      %1314 = vadd.xlane.f32.xlu0 %v1313
      %v1315 = vpop.xlane.xlu0 %1314
      %v1316 = vsel %vm608, %v1309, 0.0
      %1317 = vadd.xlane.f32.xlu0 %v1316
      %v1318 = vpop.xlane.xlu0 %1317
      %v1319 = vrcp.pop %v1312
      %v1320 = vrcp.pop %v1315
      %v1321 = vrcp.pop %v1318
      %v1322 = vmul.f32 %v1305, %v1319
      %v1323 = vmul.f32 %v1307, %v1320
      %v1324 = vmul.f32 %v1309, %v1321
      %v1325 = vpack.c.bf16 %v1323, %v1322
      %v1326 = vpack.c.bf16 %v1324, %v1324
      %1327 = vrot.lane.b32.xlu0 %v529, 40
      %v1328 = vpop.permute.xlu0 %1327
      %1329 = vrot.lane.b32.xlu0 %v530, 40
      %v1330 = vpop.permute.xlu0 %1329
      %v1333 = vsel %vm601, %v1325, 0
      %v1336 = vsel %vm601, %v1326, 0
      %v1339 = vand.u32 %v1330, %v652
      %1341 = vmatprep.subr.bf16.mxu0 0
      %1342 = vmatpush1.bf16.msra.mxu0 0
      %1343 = vmatprep.subr.bf16.mxu0 0
      %1344 = vmatpush1.bf16.msra.mxu0 0
      %1345 = vmatprep.subr.bf16.mxu0 0
      %1346 = vmatpush1.bf16.msra.mxu0 0
      %1347 = vmatprep.subr.bf16.mxu0 0
      %1348 = vmatpush1.bf16.msra.mxu0 0
      %1349 = vmatprep.subr.bf16.mxu0 0
      %1350 = vmatpush1.bf16.msra.mxu0 0
      %1351 = vmatprep.subr.bf16.mxu0 0
      %1352 = vmatpush1.bf16.msra.mxu0 0
      %1353 = vmatprep.subr.bf16.mxu0 0
      %1354 = vmatpush1.bf16.msra.mxu0 %v1339
      %1355 = vmatprep.subr.bf16.mxu0 0
      %1356 = vmatpush1.bf16.msra.mxu0 %v1328
      %1357 = vmatprep.subr.bf16.mxu0 0
      %1358 = vmatpush2.bf16.msra.mxu0 0
      %1359 = vmatprep.subr.bf16.mxu0 0
      %1360 = vmatpush2.bf16.msra.mxu0 0
      %1361 = vmatprep.subr.bf16.mxu0 0
      %1362 = vmatpush2.bf16.msra.mxu0 0
      %1363 = vmatprep.subr.bf16.mxu0 0
      %1364 = vmatpush2.bf16.msra.mxu0 0
      %1365 = vmatprep.subr.bf16.mxu0 0
      %1366 = vmatpush2.bf16.msra.mxu0 0
      %1367 = vmatprep.subr.bf16.mxu0 0
      %1368 = vmatpush2.bf16.msra.mxu0 0
      %1369 = vmatprep.subr.bf16.mxu0 0
      %1370 = vmatpush2.bf16.msra.mxu0 0
      %1371 = vmatprep.subr.bf16.mxu0 0
      %1372 = vmatpush2.bf16.msra.mxu0 0
      %1373 = vmatprep.mubr.bf16.mxu0 0
      %1374 = vmatmul.mubr.bf16.gmra.mxu0 %v1333
      %v1375 = vpop.f32.mrf.mxu0
      %v1376 = vadd.f32 0.0, %v1375
      %v1377 = vpop.f32.mrf.mxu0
      %v1378 = vpop.f32.mrf.mxu0
      %v1379 = vadd.f32 0.0, %v1378
      %v1380 = vpop.f32.mrf.mxu0
      %1381 = vmatprep.mubr.bf16.mxu0 0
      %1382 = vmatmul.mubr.bf16.gmra.mxu0 %v1336
      %v1383 = vpop.f32.mrf.mxu0
      %v1384 = vadd.f32 0.0, %v1383
      %v1385 = vpop.f32.mrf.mxu0
      %v1386 = vpop.f32.mrf.mxu0
      %v1387 = vpop.f32.mrf.mxu0
      %1388 = vdwg.mxu0
      %v1389 = vpack.c.bf16 %v1379, %v1376
      %v1390 = vpack.c.bf16 %v1384, %v1384
      %v1392 = vsel %vm537, %v1389, 0
      %v1395 = vsel %vm537, %v1390, 0
      %v1398 = vsel %vm882, %v528, 0
      %1400 = vmatprep.subr.bf16.mxu0 0
      %1401 = vmatpush1.bf16.msra.mxu0 0
      %1402 = vmatprep.subr.bf16.mxu0 0
      %1403 = vmatpush1.bf16.msra.mxu0 0
      %1404 = vmatprep.subr.bf16.mxu0 0
      %1405 = vmatpush1.bf16.msra.mxu0 0
      %1406 = vmatprep.subr.bf16.mxu0 0
      %1407 = vmatpush1.bf16.msra.mxu0 0
      %1408 = vmatprep.subr.bf16.mxu0 0
      %1409 = vmatpush1.bf16.msra.mxu0 0
      %1410 = vmatprep.subr.bf16.mxu0 0
      %1411 = vmatpush1.bf16.msra.mxu0 0
      %1412 = vmatprep.subr.bf16.mxu0 0
      %1413 = vmatpush1.bf16.msra.mxu0 0
      %1414 = vmatprep.subr.bf16.mxu0 0
      %1415 = vmatpush1.bf16.msra.mxu0 %v1398
      %1416 = vmatprep.subr.bf16.mxu0 0
      %1417 = vmatpush2.bf16.msra.mxu0 0
      %1418 = vmatprep.subr.bf16.mxu0 0
      %1419 = vmatpush2.bf16.msra.mxu0 0
      %1420 = vmatprep.subr.bf16.mxu0 0
      %1421 = vmatpush2.bf16.msra.mxu0 0
      %1422 = vmatprep.subr.bf16.mxu0 0
      %1423 = vmatpush2.bf16.msra.mxu0 0
      %1424 = vmatprep.subr.bf16.mxu0 0
      %1425 = vmatpush2.bf16.msra.mxu0 0
      %1426 = vmatprep.subr.bf16.mxu0 0
      %1427 = vmatpush2.bf16.msra.mxu0 0
      %1428 = vmatprep.subr.bf16.mxu0 0
      %1429 = vmatpush2.bf16.msra.mxu0 0
      %1430 = vmatprep.subr.bf16.mxu0 0
      %1431 = vmatpush2.bf16.msra.mxu0 0
      %1432 = vmatprep.mubr.bf16.mxu0 0
      %1433 = vmatmul.mubr.bf16.gmra.mxu0 %v1392
      %v1434 = vpop.f32.mrf.mxu0
      %v1435 = vadd.f32 0.0, %v1434
      %v1436 = vpop.f32.mrf.mxu0
      %v1437 = vpop.f32.mrf.mxu0
      %v1438 = vadd.f32 0.0, %v1437
      %v1439 = vpop.f32.mrf.mxu0
      %1440 = vmatprep.mubr.bf16.mxu0 0
      %1441 = vmatmul.mubr.bf16.gmra.mxu0 %v1395
      %v1442 = vpop.f32.mrf.mxu0
      %v1443 = vadd.f32 0.0, %v1442
      %v1444 = vpop.f32.mrf.mxu0
      %v1445 = vpop.f32.mrf.mxu0
      %v1446 = vpop.f32.mrf.mxu0
      %1447 = vdwg.mxu0
      %v1448 = vadd.f32 %v1218, %v1435
      %v1449 = vadd.f32 %v1219, %v1438
      %v1450 = vadd.f32 %v1220, %v1443
      %v1451 = vld [vmem:[%s4] sm:$0x1]
      %v1453 = vlaneseq
      %v1454 = vshrl.u32 %v1453, 7
      %v1455 = vsub.s32 0, %v1454
      %v1456 = vrot.slane %v1451, %v1455
      %v1458 = vadd.f32 %v1448, %v1456
      %v1459 = vadd.f32 %v1449, %v1456
      %v1460 = vadd.f32 %v1450, %v1456
      %v1461 = vadd.f32 %v442, %v1458
      %v1462 = vadd.f32 %v443, %v1459
      %v1463 = vadd.f32 %v444, %v1460
      %v1464 = vld [vmem:[%s5] sm:$0x1]
      %v1465 = vld [vmem:[%s6] sm:$0x1]
      %v1466 = vsel %vm470, %v1461, 0.0
      %1467 = vadd.xlane.f32.xlu0 %v1466
      %v1468 = vpop.xlane.xlu0 %1467
      %v1469 = vsel %vm470, %v1462, 0.0
      %1470 = vadd.xlane.f32.xlu0 %v1469
      %v1471 = vpop.xlane.xlu0 %1470
      %vm1472 = vcmask 256000
      %v1473 = vsel %vm1472, %v1463, 0.0
      %1474 = vadd.xlane.f32.xlu0 %v1473
      %v1475 = vpop.xlane.xlu0 %1474
      %v1476 = vrcp.pop 32.0
      %v1477 = vmul.f32 %v1468, %v1476
      %v1478 = vmul.f32 %v1471, %v1476
      %v1479 = vmul.f32 %v1475, %v1476
      %v1480 = vsub.f32 %v1461, %v1477
      %v1481 = vsub.f32 %v1462, %v1478
      %v1482 = vsub.f32 %v1463, %v1479
      %v1483 = vmul.f32 %v1480, %v1480
      %v1484 = vmul.f32 %v1481, %v1481
      %v1485 = vmul.f32 %v1482, %v1482
      %v1486 = vsel %vm470, %v1483, 0.0
      %1487 = vadd.xlane.f32.xlu0 %v1486
      %v1488 = vpop.xlane.xlu0 %1487
      %v1489 = vsel %vm470, %v1484, 0.0
      %1490 = vadd.xlane.f32.xlu0 %v1489
      %v1491 = vpop.xlane.xlu0 %1490
      %v1492 = vsel %vm1472, %v1485, 0.0
      %1493 = vadd.xlane.f32.xlu0 %v1492
      %v1494 = vpop.xlane.xlu0 %1493
      %v1495 = vmul.f32 %v1488, %v1476
      %v1496 = vmul.f32 %v1491, %v1476
      %v1497 = vmul.f32 %v1494, %v1476
      %v1498 = vadd.f32 %v1495, 1e-05
      %v1499 = vadd.f32 %v1496, 1e-05
      %v1500 = vadd.f32 %v1497, 1e-05
      %v1501 = vrsqrt.pop %v1498
      %v1502 = vrsqrt.pop %v1499
      %v1503 = vrsqrt.pop %v1500
      %v1504 = vmul.f32 %v1480, %v1501
      %v1505 = vmul.f32 %v1481, %v1502
      %v1506 = vmul.f32 %v1482, %v1503
      %v1508 = vlaneseq
      %v1509 = vshrl.u32 %v1508, 7
      %v1510 = vsub.s32 0, %v1509
      %v1511 = vrot.slane %v1464, %v1510
      %v1513 = vmul.f32 %v1504, %v1511
      %v1514 = vmul.f32 %v1505, %v1511
      %v1515 = vmul.f32 %v1506, %v1511
      %v1517 = vlaneseq
      %v1518 = vshrl.u32 %v1517, 7
      %v1519 = vsub.s32 0, %v1518
      %v1520 = vrot.slane %v1465, %v1519
      %v1522 = vadd.f32 %v1513, %v1520
      %v1523 = vadd.f32 %v1514, %v1520
      %v1524 = vadd.f32 %v1515, %v1520
      %v1525 = vpack.c.bf16 %v1523, %v1522
      %v1526 = vpack.c.bf16 %v1524, %v1524
      %v1527 = vld [vmem:[%s7] sm:$0xf]
      %v1528 = vld [vmem:[%s7 + $0x4] sm:$0xf]
      %v1529 = vld [vmem:[%s7 + $0x8] sm:$0xf]
      %v1530 = vld [vmem:[%s7 + $0xc] sm:$0xf]
      %v1531 = vld [vmem:[%s8] sm:$0x1]
      %v1533 = vlaneseq
      %v1534 = vshrl.u32 %v1533, 7
      %v1535 = vsub.s32 0, %v1534
      %v1536 = vrot.slane %v1531, %v1535
      %v1542 = vunpack.c.l.b16 %v1527
      %v1543 = vunpack.c.l.b16 %v1528
      %v1544 = vunpack.c.l.b16 %v1529
      %v1545 = vunpack.c.l.b16 %v1530
      %v1546 = vpack.c.b16 %v1543, %v1542
      %v1547 = vpack.c.b16 %v1545, %v1544
      %v1551 = vsel %vm470, %v1525, 0
      %v1554 = vsel %vm470, %v1526, 0
      %1556 = vmatprep.subr.bf16.mxu0 0
      %1557 = vmatpush1.bf16.msra.mxu0 0
      %1558 = vmatprep.subr.bf16.mxu0 0
      %1559 = vmatpush1.bf16.msra.mxu0 0
      %1560 = vmatprep.subr.bf16.mxu0 0
      %1561 = vmatpush1.bf16.msra.mxu0 0
      %1562 = vmatprep.subr.bf16.mxu0 0
      %1563 = vmatpush1.bf16.msra.mxu0 0
      %1564 = vmatprep.subr.bf16.mxu0 0
      %1565 = vmatpush1.bf16.msra.mxu0 0
      %1566 = vmatprep.subr.bf16.mxu0 0
      %1567 = vmatpush1.bf16.msra.mxu0 0
      %1568 = vmatprep.subr.bf16.mxu0 0
      %1569 = vmatpush1.bf16.msra.mxu0 %v1547
      %1570 = vmatprep.subr.bf16.mxu0 0
      %1571 = vmatpush1.bf16.msra.mxu0 %v1546
      %1572 = vmatprep.subr.bf16.mxu0 0
      %1573 = vmatpush2.bf16.msra.mxu0 0
      %1574 = vmatprep.subr.bf16.mxu0 0
      %1575 = vmatpush2.bf16.msra.mxu0 0
      %1576 = vmatprep.subr.bf16.mxu0 0
      %1577 = vmatpush2.bf16.msra.mxu0 0
      %1578 = vmatprep.subr.bf16.mxu0 0
      %1579 = vmatpush2.bf16.msra.mxu0 0
      %1580 = vmatprep.subr.bf16.mxu0 0
      %1581 = vmatpush2.bf16.msra.mxu0 0
      %1582 = vmatprep.subr.bf16.mxu0 0
      %1583 = vmatpush2.bf16.msra.mxu0 0
      %1584 = vmatprep.subr.bf16.mxu0 0
      %1585 = vmatpush2.bf16.msra.mxu0 0
      %1586 = vmatprep.subr.bf16.mxu0 0
      %1587 = vmatpush2.bf16.msra.mxu0 0
      %1588 = vmatprep.mubr.bf16.mxu0 0
      %1589 = vmatmul.mubr.bf16.gmra.mxu0 %v1551
      %v1590 = vpop.f32.mrf.mxu0
      %v1591 = vadd.f32 %v1536, %v1590
      %v1592 = vpop.f32.mrf.mxu0
      %v1593 = vpop.f32.mrf.mxu0
      %v1594 = vadd.f32 %v1536, %v1593
      %v1595 = vpop.f32.mrf.mxu0
      %1596 = vmatprep.mubr.bf16.mxu0 0
      %1597 = vmatmul.mubr.bf16.gmra.mxu0 %v1554
      %v1598 = vpop.f32.mrf.mxu0
      %v1599 = vadd.f32 %v1536, %v1598
      %v1600 = vpop.f32.mrf.mxu0
      %v1601 = vpop.f32.mrf.mxu0
      %v1602 = vpop.f32.mrf.mxu0
      %1603 = vdwg.mxu0
      %v1604 = vmul.f32 %v1591, %v1591
      %v1605 = vmul.f32 %v1594, %v1594
      %v1606 = vmul.f32 %v1599, %v1599
      %v1607 = vmul.f32 %v1591, %v1604
      %v1608 = vmul.f32 %v1594, %v1605
      %v1609 = vmul.f32 %v1599, %v1606
      %v1610 = vmul.f32 %v1607, 0.044715
      %v1611 = vmul.f32 %v1608, 0.044715
      %v1612 = vmul.f32 %v1609, 0.044715
      %v1613 = vadd.f32 %v1591, %v1610
      %v1614 = vadd.f32 %v1594, %v1611
      %v1615 = vadd.f32 %v1599, %v1612
      %v1616 = vmul.f32 %v1613, 0.7978846
      %v1617 = vmul.f32 %v1614, 0.7978846
      %v1618 = vmul.f32 %v1615, 0.7978846
      %v1619 = vtanh.pop %v1616
      %v1620 = vtanh.pop %v1617
      %v1621 = vtanh.pop %v1618
      %v1622 = vadd.f32 %v1619, 1.0
      %v1623 = vadd.f32 %v1620, 1.0
      %v1624 = vadd.f32 %v1621, 1.0
      %v1625 = vmul.f32 %v1622, 0.5
      %v1626 = vmul.f32 %v1623, 0.5
      %v1627 = vmul.f32 %v1624, 0.5
      %v1628 = vmul.f32 %v1591, %v1625
      %v1629 = vmul.f32 %v1594, %v1626
      %v1630 = vmul.f32 %v1599, %v1627
      %v1631 = vpack.c.bf16 %v1629, %v1628
      %v1632 = vpack.c.bf16 %v1630, %v1630
      %v1633 = vld [vmem:[%s9] sm:$0xf]
      %v1634 = vld [vmem:[%s9 + $0x4] sm:$0xf]
      %v1635 = vld [vmem:[%s9 + $0x8] sm:$0xf]
      %v1636 = vld [vmem:[%s9 + $0xc] sm:$0xf]
      %v1637 = vld [vmem:[%s9 + $0x10] sm:$0xf]
      %v1638 = vld [vmem:[%s9 + $0x14] sm:$0xf]
      %v1639 = vld [vmem:[%s9 + $0x18] sm:$0xf]
      %v1640 = vld [vmem:[%s9 + $0x1c] sm:$0xf]
      %v1641 = vld [vmem:[%s10] sm:$0x1]
      %v1643 = vlaneseq
      %v1644 = vshrl.u32 %v1643, 7
      %v1645 = vsub.s32 0, %v1644
      %v1646 = vrot.slane %v1641, %v1645
      %v1656 = vunpack.c.l.b16 %v1633
      %v1657 = vunpack.c.l.b16 %v1634
      %v1658 = vunpack.c.l.b16 %v1635
      %v1659 = vunpack.c.l.b16 %v1636
      %v1660 = vunpack.c.l.b16 %v1637
      %v1661 = vunpack.c.l.b16 %v1638
      %v1662 = vunpack.c.l.b16 %v1639
      %v1663 = vunpack.c.l.b16 %v1640
      %v1664 = vpack.c.b16 %v1657, %v1656
      %v1665 = vpack.c.b16 %v1659, %v1658
      %v1666 = vpack.c.b16 %v1661, %v1660
      %v1667 = vpack.c.b16 %v1663, %v1662
      %vm1672 = vcmask 523264
      %v1674 = vsel %vm1672, %v1631, 0
      %v1677 = vsel %vm1672, %v1632, 0
      %1679 = vmatprep.subr.bf16.mxu0 0
      %1680 = vmatpush1.bf16.msra.mxu0 0
      %1681 = vmatprep.subr.bf16.mxu0 0
      %1682 = vmatpush1.bf16.msra.mxu0 0
      %1683 = vmatprep.subr.bf16.mxu0 0
      %1684 = vmatpush1.bf16.msra.mxu0 0
      %1685 = vmatprep.subr.bf16.mxu0 0
      %1686 = vmatpush1.bf16.msra.mxu0 0
      %1687 = vmatprep.subr.bf16.mxu0 0
      %1688 = vmatpush1.bf16.msra.mxu0 %v1667
      %1689 = vmatprep.subr.bf16.mxu0 0
      %1690 = vmatpush1.bf16.msra.mxu0 %v1666
      %1691 = vmatprep.subr.bf16.mxu0 0
      %1692 = vmatpush1.bf16.msra.mxu0 %v1665
      %1693 = vmatprep.subr.bf16.mxu0 0
      %1694 = vmatpush1.bf16.msra.mxu0 %v1664
      %1695 = vmatprep.subr.bf16.mxu0 0
      %1696 = vmatpush2.bf16.msra.mxu0 0
      %1697 = vmatprep.subr.bf16.mxu0 0
      %1698 = vmatpush2.bf16.msra.mxu0 0
      %1699 = vmatprep.subr.bf16.mxu0 0
      %1700 = vmatpush2.bf16.msra.mxu0 0
      %1701 = vmatprep.subr.bf16.mxu0 0
      %1702 = vmatpush2.bf16.msra.mxu0 0
      %1703 = vmatprep.subr.bf16.mxu0 0
      %1704 = vmatpush2.bf16.msra.mxu0 0
      %1705 = vmatprep.subr.bf16.mxu0 0
      %1706 = vmatpush2.bf16.msra.mxu0 0
      %1707 = vmatprep.subr.bf16.mxu0 0
      %1708 = vmatpush2.bf16.msra.mxu0 0
      %1709 = vmatprep.subr.bf16.mxu0 0
      %1710 = vmatpush2.bf16.msra.mxu0 0
      %1711 = vmatprep.mubr.bf16.mxu0 0
      %1712 = vmatmul.mubr.bf16.gmra.mxu0 %v1674
      %v1713 = vpop.f32.mrf.mxu0
      %v1714 = vadd.f32 %v1646, %v1713
      %v1715 = vpop.f32.mrf.mxu0
      %v1716 = vpop.f32.mrf.mxu0
      %v1717 = vadd.f32 %v1646, %v1716
      %v1718 = vpop.f32.mrf.mxu0
      %1719 = vmatprep.mubr.bf16.mxu0 0
      %1720 = vmatmul.mubr.bf16.gmra.mxu0 %v1677
      %v1721 = vpop.f32.mrf.mxu0
      %v1722 = vadd.f32 %v1646, %v1721
      %v1723 = vpop.f32.mrf.mxu0
      %v1724 = vpop.f32.mrf.mxu0
      %v1725 = vpop.f32.mrf.mxu0
      %1726 = vdwg.mxu0
      %v1727 = vadd.f32 %v1522, %v1714
      %v1728 = vadd.f32 %v1523, %v1717
      %v1729 = vadd.f32 %v1524, %v1722
      %v1730 = vld [vmem:[%s11] sm:$0x1]
      %v1731 = vld [vmem:[%s12] sm:$0x1]
      %v1732 = vsel %vm470, %v1727, 0.0
      %1733 = vadd.xlane.f32.xlu0 %v1732
      %v1734 = vpop.xlane.xlu0 %1733
      %v1735 = vsel %vm470, %v1728, 0.0
      %1736 = vadd.xlane.f32.xlu0 %v1735
      %v1737 = vpop.xlane.xlu0 %1736
      %v1738 = vsel %vm1472, %v1729, 0.0
      %1739 = vadd.xlane.f32.xlu0 %v1738
      %v1740 = vpop.xlane.xlu0 %1739
      %v1741 = vmul.f32 %v1734, %v1476
      %v1742 = vmul.f32 %v1737, %v1476
      %v1743 = vmul.f32 %v1740, %v1476
      %v1744 = vsub.f32 %v1727, %v1741
      %v1745 = vsub.f32 %v1728, %v1742
      %v1746 = vsub.f32 %v1729, %v1743
      %v1747 = vmul.f32 %v1744, %v1744
      %v1748 = vmul.f32 %v1745, %v1745
      %v1749 = vmul.f32 %v1746, %v1746
      %v1750 = vsel %vm470, %v1747, 0.0
      %1751 = vadd.xlane.f32.xlu0 %v1750
      %v1752 = vpop.xlane.xlu0 %1751
      %v1753 = vsel %vm470, %v1748, 0.0
      %1754 = vadd.xlane.f32.xlu0 %v1753
      %v1755 = vpop.xlane.xlu0 %1754
      %v1756 = vsel %vm1472, %v1749, 0.0
      %1757 = vadd.xlane.f32.xlu0 %v1756
      %v1758 = vpop.xlane.xlu0 %1757
      %v1759 = vmul.f32 %v1752, %v1476
      %v1760 = vmul.f32 %v1755, %v1476
      %v1761 = vmul.f32 %v1758, %v1476
      %v1762 = vadd.f32 %v1759, 1e-05
      %v1763 = vadd.f32 %v1760, 1e-05
      %v1764 = vadd.f32 %v1761, 1e-05
      %v1765 = vrsqrt.pop %v1762
      %v1766 = vrsqrt.pop %v1763
      %v1767 = vrsqrt.pop %v1764
      %v1768 = vmul.f32 %v1744, %v1765
      %v1769 = vmul.f32 %v1745, %v1766
      %v1770 = vmul.f32 %v1746, %v1767
      %v1772 = vlaneseq
      %v1773 = vshrl.u32 %v1772, 7
      %v1774 = vsub.s32 0, %v1773
      %v1775 = vrot.slane %v1730, %v1774
      %v1777 = vmul.f32 %v1768, %v1775
      %v1778 = vmul.f32 %v1769, %v1775
      %v1779 = vmul.f32 %v1770, %v1775
      %v1781 = vlaneseq
      %v1782 = vshrl.u32 %v1781, 7
      %v1783 = vsub.s32 0, %v1782
      %v1784 = vrot.slane %v1731, %v1783
      %v1786 = vadd.f32 %v1777, %v1784
      %v1787 = vadd.f32 %v1778, %v1784
      %v1788 = vadd.f32 %v1779, %v1784
      %1789 = vst.msk [vmem:[%s440] sm:$0xff] %vm470, %v1786
      %1790 = vst.msk [vmem:[%s440 + $0x8] sm:$0xff] %vm470, %v1787
      %1791 = vst.msk [vmem:[%s440 + $0x10] sm:$0x7] %vm1472, %v1788
      %p1792 = scmp.lt.s32.totalorder %s24, 1
      %s1793 = scalar_select %p1792, %s24, 1
      %s1794 = smul.addr %s1793, 3
      %s1795 = smul.addr %s1794, 8
      %s1796 = scalar_lea.vmem %s13, %s1795
      // Predicated region
      $region73: #{wavlm_wrapper_forward.12} parent=71 // pred_check
        %p1797 = pneg %p320
      $region74: #{wavlm_wrapper_forward.12} parent=71 // pred_check_branch
        %1799 = sbr.rel (%p1797) target = $region76
      $region75: #{wavlm_wrapper_forward.12} parent=71 // pred_region
        _
      $region76: #{wavlm_wrapper_forward.12} parent=71 // pred_fallthru
        _
    $region72: #{wavlm_wrapper_forward.12} parent=5 // pred_fallthru
      _
    %p1800 = scmp.le.s32.totalorder 2, %s19
    // Predicated region
    $region77: #{wavlm_wrapper_forward.12} parent=5 // pred_check
      %p1801 = pneg %p1800
    $region78: #{wavlm_wrapper_forward.12} parent=5 // pred_check_branch
      %1803 = sbr.rel (%p1801) target = $region80
    $region79: #{wavlm_wrapper_forward.12} parent=5 // pred_region
      %s1804 = ssub.s32 %s19, 2
      // Predicated region
      $region81: #{wavlm_wrapper_forward.12} parent=79 // pred_check
        %p1805 = pneg %p326
      $region82: #{wavlm_wrapper_forward.12} parent=79 // pred_check_branch
        %1807 = sbr.rel (%p1805) target = $region84
      $region83: #{wavlm_wrapper_forward.12} parent=79 // pred_region
        %p1808 = scmp.lt.s32.totalorder %s25, 1
        %s1809 = scalar_select %p1808, %s25, 1
        %s1810 = smul.addr %s1809, 3
        %s1811 = smul.addr %s1810, 8
        %s1812 = scalar_lea.vmem %s13, %s1811
      $region84: #{wavlm_wrapper_forward.12} parent=79 // pred_fallthru
        _
    $region80: #{wavlm_wrapper_forward.12} parent=5 // pred_fallthru
      _
  $region6: #{wavlm_wrapper_forward.12} parent=0 // loop_footer
    %s23 = sadd.s32 1, %s19
  $region7: #{wavlm_wrapper_forward.12} parent=0 // loop_footer_branch
    %18 = sbr.rel target = $region3
  $region8: #{wavlm_wrapper_forward.12} parent=0 // loop_exit
    _

// kernel: wavlm_wrapper_forward.13
$region0: #{wavlm_wrapper_forward.13}
  #allocation0 [shape = 'u32[]', space=smem, size = 0x4, offset = 0x4, fixed_abs, tag = 'smem constant byte address 0x4 - core index']
  #allocation1 [shape = 'u32[144,128]{1,0:T(1,128)}', space=vmem, size = 0x12000, scoped, tag = 'internal scratch']
  %s0 = inlined_call_operand.vmem [shape: f32[2,19,32], index: 0, kind: input, shape index: {}]
  %s1 = inlined_call_operand.vmem [shape: bf16[32,96], index: 1, kind: input, shape index: {}]
  %s2 = inlined_call_operand.vmem [shape: f32[1,96], index: 2, kind: input, shape index: {}]
  %s3 = inlined_call_operand.vmem [shape: bf16[32,32], index: 3, kind: input, shape index: {}]
  %s4 = inlined_call_operand.vmem [shape: f32[1,32], index: 4, kind: input, shape index: {}]
  %s5 = inlined_call_operand.vmem [shape: f32[1,32], index: 5, kind: input, shape index: {}]
  %s6 = inlined_call_operand.vmem [shape: f32[1,32], index: 6, kind: input, shape index: {}]
  %s7 = inlined_call_operand.vmem [shape: bf16[32,64], index: 7, kind: input, shape index: {}]
  %s8 = inlined_call_operand.vmem [shape: f32[1,64], index: 8, kind: input, shape index: {}]
  %s9 = inlined_call_operand.vmem [shape: bf16[64,32], index: 9, kind: input, shape index: {}]
  %s10 = inlined_call_operand.vmem [shape: f32[1,32], index: 10, kind: input, shape index: {}]
  %s11 = inlined_call_operand.vmem [shape: f32[1,32], index: 11, kind: input, shape index: {}]
  %s12 = inlined_call_operand.vmem [shape: f32[1,32], index: 12, kind: input, shape index: {}]
  %s13 = inlined_call_operand.vmem [shape: f32[2,19,32], index: 13, kind: output, shape index: {}]
  %s14 = sld [smem:[#allocation0]]
  $region85: #{wavlm_wrapper_forward.13} parent=0
    _
  %s16 = ssub.s32 1, %s14
  %s17 = scalar_select 0, %s16, %s14
  loop: start=0, step=1, limit=4
  $region2: #{wavlm_wrapper_forward.13} parent=0 // loop_pre_header
    _
  $region3: #{wavlm_wrapper_forward.13} parent=0 // loop_header
    %s19 = sphi 0, %s23
    %p20 = scmp.ge.s32.totalorder %s19, 4
    %s29 = sphi 0, %s31
    %s32 = sphi 0, %s29
    %s33 = sphi 0, %s32
    %s49 = sphi 0, %s33
    %s53 = sphi 0, %s53
    %s55 = sphi 0, %s53
    %s56 = sphi 0, %s55
    %s70 = sphi 0, %s56
    %s74 = sphi 0, %s74
    %s76 = sphi 0, %s74
    %s77 = sphi 0, %s76
    %s91 = sphi 0, %s77
    %s95 = sphi 0, %s95
    %s97 = sphi 0, %s95
    %s98 = sphi 0, %s97
    %s112 = sphi 0, %s98
    %s116 = sphi 0, %s116
    %s118 = sphi 0, %s116
    %s119 = sphi 0, %s118
    %s133 = sphi 0, %s119
    %s137 = sphi 0, %s137
    %s139 = sphi 0, %s137
    %s140 = sphi 0, %s139
    %s154 = sphi 0, %s140
    %s158 = sphi 0, %s158
    %s160 = sphi 0, %s158
    %s161 = sphi 0, %s160
    %s175 = sphi 0, %s161
    %s179 = sphi 0, %s179
    %s181 = sphi 0, %s179
    %s182 = sphi 0, %s181
    %s196 = sphi 0, %s182
    %s200 = sphi 0, %s200
    %s202 = sphi 0, %s200
    %s203 = sphi 0, %s202
    %s217 = sphi 0, %s203
    %s221 = sphi 0, %s221
    %s223 = sphi 0, %s221
    %s224 = sphi 0, %s223
    %s238 = sphi 0, %s224
    %s242 = sphi 0, %s242
    %s244 = sphi 0, %s242
    %s245 = sphi 0, %s244
    %s259 = sphi 0, %s245
    %s263 = sphi 0, %s263
    %s265 = sphi 0, %s263
    %s266 = sphi 0, %s265
    %s280 = sphi 0, %s266
    %s284 = sphi 0, %s284
    %s286 = sphi 0, %s284
    %s287 = sphi 0, %s286
    %s301 = sphi 0, %s287
    %s307 = sphi 0, %s309
    %s310 = sphi 0, %s307
    %s311 = sphi 0, %s310
    %s327 = sphi 0, %s311
  $region4: #{wavlm_wrapper_forward.13} parent=0 // loop_header_branch
    %22 = sbr.rel (%p20) target = $region8
  $region5: #{wavlm_wrapper_forward.13} parent=0 // loop_body
    %s24 = ssub.s32 %s19, 1
    %s25 = ssub.s32 %s19, 2
    %s26 = sadd.s32 %s19, 1
    %s27 = ssub.s32 %s19, %s26
    %p28 = scmp.eq.s32.totalorder %s27, 0
    %s30 = sadd.s32 %s29, 1
    %s31 = scalar_select %p28, %s29, %s30
    %p34 = pneg %p28
    %p35 = scmp.eq.s32.totalorder %s19, 1
    %p36 = por %p34, %p35
    %p37 = scmp.ne.s32.totalorder %s29, %s32
    %p38 = scmp.eq.s32.totalorder %s19, 0
    %p39 = por %p37, %p38
    %p40 = scmp.ne.s32.totalorder %s29, %s32
    %p41 = scmp.eq.s32.totalorder %s24, 1
    %p42 = por %p40, %p41
    %p43 = scmp.ne.s32.totalorder %s32, %s33
    %p44 = scmp.eq.s32.totalorder %s24, 0
    %p45 = por %p43, %p44
    %p46 = scmp.ne.s32.totalorder %s32, %s33
    %p47 = scmp.eq.s32.totalorder %s25, 1
    %p48 = por %p46, %p47
    %p50 = scmp.ne.s32.totalorder %s33, %s49
    %p51 = scmp.eq.s32.totalorder %s25, 0
    %p52 = por %p50, %p51
    %s54 = sadd.s32 %s53, 1
    %p57 = scmp.eq.s32.totalorder %s19, 1
    %p58 = scmp.ne.s32.totalorder %s53, %s55
    %p59 = scmp.eq.s32.totalorder %s19, 0
    %p60 = por %p58, %p59
    %p61 = scmp.ne.s32.totalorder %s53, %s55
    %p62 = scmp.eq.s32.totalorder %s24, 1
    %p63 = por %p61, %p62
    %p64 = scmp.ne.s32.totalorder %s55, %s56
    %p65 = scmp.eq.s32.totalorder %s24, 0
    %p66 = por %p64, %p65
    %p67 = scmp.ne.s32.totalorder %s55, %s56
    %p68 = scmp.eq.s32.totalorder %s25, 1
    %p69 = por %p67, %p68
    %p71 = scmp.ne.s32.totalorder %s56, %s70
    %p72 = scmp.eq.s32.totalorder %s25, 0
    %p73 = por %p71, %p72
    %s75 = sadd.s32 %s74, 1
    %p78 = scmp.eq.s32.totalorder %s19, 1
    %p79 = scmp.ne.s32.totalorder %s74, %s76
    %p80 = scmp.eq.s32.totalorder %s19, 0
    %p81 = por %p79, %p80
    %p82 = scmp.ne.s32.totalorder %s74, %s76
    %p83 = scmp.eq.s32.totalorder %s24, 1
    %p84 = por %p82, %p83
    %p85 = scmp.ne.s32.totalorder %s76, %s77
    %p86 = scmp.eq.s32.totalorder %s24, 0
    %p87 = por %p85, %p86
    %p88 = scmp.ne.s32.totalorder %s76, %s77
    %p89 = scmp.eq.s32.totalorder %s25, 1
    %p90 = por %p88, %p89
    %p92 = scmp.ne.s32.totalorder %s77, %s91
    %p93 = scmp.eq.s32.totalorder %s25, 0
    %p94 = por %p92, %p93
    %s96 = sadd.s32 %s95, 1
    %p99 = scmp.eq.s32.totalorder %s19, 1
    %p100 = scmp.ne.s32.totalorder %s95, %s97
    %p101 = scmp.eq.s32.totalorder %s19, 0
    %p102 = por %p100, %p101
    %p103 = scmp.ne.s32.totalorder %s95, %s97
    %p104 = scmp.eq.s32.totalorder %s24, 1
    %p105 = por %p103, %p104
    %p106 = scmp.ne.s32.totalorder %s97, %s98
    %p107 = scmp.eq.s32.totalorder %s24, 0
    %p108 = por %p106, %p107
    %p109 = scmp.ne.s32.totalorder %s97, %s98
    %p110 = scmp.eq.s32.totalorder %s25, 1
    %p111 = por %p109, %p110
    %p113 = scmp.ne.s32.totalorder %s98, %s112
    %p114 = scmp.eq.s32.totalorder %s25, 0
    %p115 = por %p113, %p114
    %s117 = sadd.s32 %s116, 1
    %p120 = scmp.eq.s32.totalorder %s19, 1
    %p121 = scmp.ne.s32.totalorder %s116, %s118
    %p122 = scmp.eq.s32.totalorder %s19, 0
    %p123 = por %p121, %p122
    %p124 = scmp.ne.s32.totalorder %s116, %s118
    %p125 = scmp.eq.s32.totalorder %s24, 1
    %p126 = por %p124, %p125
    %p127 = scmp.ne.s32.totalorder %s118, %s119
    %p128 = scmp.eq.s32.totalorder %s24, 0
    %p129 = por %p127, %p128
    %p130 = scmp.ne.s32.totalorder %s118, %s119
    %p131 = scmp.eq.s32.totalorder %s25, 1
    %p132 = por %p130, %p131
    %p134 = scmp.ne.s32.totalorder %s119, %s133
    %p135 = scmp.eq.s32.totalorder %s25, 0
    %p136 = por %p134, %p135
    %s138 = sadd.s32 %s137, 1
    %p141 = scmp.eq.s32.totalorder %s19, 1
    %p142 = scmp.ne.s32.totalorder %s137, %s139
    %p143 = scmp.eq.s32.totalorder %s19, 0
    %p144 = por %p142, %p143
    %p145 = scmp.ne.s32.totalorder %s137, %s139
    %p146 = scmp.eq.s32.totalorder %s24, 1
    %p147 = por %p145, %p146
    %p148 = scmp.ne.s32.totalorder %s139, %s140
    %p149 = scmp.eq.s32.totalorder %s24, 0
    %p150 = por %p148, %p149
    %p151 = scmp.ne.s32.totalorder %s139, %s140
    %p152 = scmp.eq.s32.totalorder %s25, 1
    %p153 = por %p151, %p152
    %p155 = scmp.ne.s32.totalorder %s140, %s154
    %p156 = scmp.eq.s32.totalorder %s25, 0
    %p157 = por %p155, %p156
    %s159 = sadd.s32 %s158, 1
    %p162 = scmp.eq.s32.totalorder %s19, 1
    %p163 = scmp.ne.s32.totalorder %s158, %s160
    %p164 = scmp.eq.s32.totalorder %s19, 0
    %p165 = por %p163, %p164
    %p166 = scmp.ne.s32.totalorder %s158, %s160
    %p167 = scmp.eq.s32.totalorder %s24, 1
    %p168 = por %p166, %p167
    %p169 = scmp.ne.s32.totalorder %s160, %s161
    %p170 = scmp.eq.s32.totalorder %s24, 0
    %p171 = por %p169, %p170
    %p172 = scmp.ne.s32.totalorder %s160, %s161
    %p173 = scmp.eq.s32.totalorder %s25, 1
    %p174 = por %p172, %p173
    %p176 = scmp.ne.s32.totalorder %s161, %s175
    %p177 = scmp.eq.s32.totalorder %s25, 0
    %p178 = por %p176, %p177
    %s180 = sadd.s32 %s179, 1
    %p183 = scmp.eq.s32.totalorder %s19, 1
    %p184 = scmp.ne.s32.totalorder %s179, %s181
    %p185 = scmp.eq.s32.totalorder %s19, 0
    %p186 = por %p184, %p185
    %p187 = scmp.ne.s32.totalorder %s179, %s181
    %p188 = scmp.eq.s32.totalorder %s24, 1
    %p189 = por %p187, %p188
    %p190 = scmp.ne.s32.totalorder %s181, %s182
    %p191 = scmp.eq.s32.totalorder %s24, 0
    %p192 = por %p190, %p191
    %p193 = scmp.ne.s32.totalorder %s181, %s182
    %p194 = scmp.eq.s32.totalorder %s25, 1
    %p195 = por %p193, %p194
    %p197 = scmp.ne.s32.totalorder %s182, %s196
    %p198 = scmp.eq.s32.totalorder %s25, 0
    %p199 = por %p197, %p198
    %s201 = sadd.s32 %s200, 1
    %p204 = scmp.eq.s32.totalorder %s19, 1
    %p205 = scmp.ne.s32.totalorder %s200, %s202
    %p206 = scmp.eq.s32.totalorder %s19, 0
    %p207 = por %p205, %p206
    %p208 = scmp.ne.s32.totalorder %s200, %s202
    %p209 = scmp.eq.s32.totalorder %s24, 1
    %p210 = por %p208, %p209
    %p211 = scmp.ne.s32.totalorder %s202, %s203
    %p212 = scmp.eq.s32.totalorder %s24, 0
    %p213 = por %p211, %p212
    %p214 = scmp.ne.s32.totalorder %s202, %s203
    %p215 = scmp.eq.s32.totalorder %s25, 1
    %p216 = por %p214, %p215
    %p218 = scmp.ne.s32.totalorder %s203, %s217
    %p219 = scmp.eq.s32.totalorder %s25, 0
    %p220 = por %p218, %p219
    %s222 = sadd.s32 %s221, 1
    %p225 = scmp.eq.s32.totalorder %s19, 1
    %p226 = scmp.ne.s32.totalorder %s221, %s223
    %p227 = scmp.eq.s32.totalorder %s19, 0
    %p228 = por %p226, %p227
    %p229 = scmp.ne.s32.totalorder %s221, %s223
    %p230 = scmp.eq.s32.totalorder %s24, 1
    %p231 = por %p229, %p230
    %p232 = scmp.ne.s32.totalorder %s223, %s224
    %p233 = scmp.eq.s32.totalorder %s24, 0
    %p234 = por %p232, %p233
    %p235 = scmp.ne.s32.totalorder %s223, %s224
    %p236 = scmp.eq.s32.totalorder %s25, 1
    %p237 = por %p235, %p236
    %p239 = scmp.ne.s32.totalorder %s224, %s238
    %p240 = scmp.eq.s32.totalorder %s25, 0
    %p241 = por %p239, %p240
    %s243 = sadd.s32 %s242, 1
    %p246 = scmp.eq.s32.totalorder %s19, 1
    %p247 = scmp.ne.s32.totalorder %s242, %s244
    %p248 = scmp.eq.s32.totalorder %s19, 0
    %p249 = por %p247, %p248
    %p250 = scmp.ne.s32.totalorder %s242, %s244
    %p251 = scmp.eq.s32.totalorder %s24, 1
    %p252 = por %p250, %p251
    %p253 = scmp.ne.s32.totalorder %s244, %s245
    %p254 = scmp.eq.s32.totalorder %s24, 0
    %p255 = por %p253, %p254
    %p256 = scmp.ne.s32.totalorder %s244, %s245
    %p257 = scmp.eq.s32.totalorder %s25, 1
    %p258 = por %p256, %p257
    %p260 = scmp.ne.s32.totalorder %s245, %s259
    %p261 = scmp.eq.s32.totalorder %s25, 0
    %p262 = por %p260, %p261
    %s264 = sadd.s32 %s263, 1
    %p267 = scmp.eq.s32.totalorder %s19, 1
    %p268 = scmp.ne.s32.totalorder %s263, %s265
    %p269 = scmp.eq.s32.totalorder %s19, 0
    %p270 = por %p268, %p269
    %p271 = scmp.ne.s32.totalorder %s263, %s265
    %p272 = scmp.eq.s32.totalorder %s24, 1
    %p273 = por %p271, %p272
    %p274 = scmp.ne.s32.totalorder %s265, %s266
    %p275 = scmp.eq.s32.totalorder %s24, 0
    %p276 = por %p274, %p275
    %p277 = scmp.ne.s32.totalorder %s265, %s266
    %p278 = scmp.eq.s32.totalorder %s25, 1
    %p279 = por %p277, %p278
    %p281 = scmp.ne.s32.totalorder %s266, %s280
    %p282 = scmp.eq.s32.totalorder %s25, 0
    %p283 = por %p281, %p282
    %s285 = sadd.s32 %s284, 1
    %p288 = scmp.eq.s32.totalorder %s19, 1
    %p289 = scmp.ne.s32.totalorder %s284, %s286
    %p290 = scmp.eq.s32.totalorder %s19, 0
    %p291 = por %p289, %p290
    %p292 = scmp.ne.s32.totalorder %s284, %s286
    %p293 = scmp.eq.s32.totalorder %s24, 1
    %p294 = por %p292, %p293
    %p295 = scmp.ne.s32.totalorder %s286, %s287
    %p296 = scmp.eq.s32.totalorder %s24, 0
    %p297 = por %p295, %p296
    %p298 = scmp.ne.s32.totalorder %s286, %s287
    %p299 = scmp.eq.s32.totalorder %s25, 1
    %p300 = por %p298, %p299
    %p302 = scmp.ne.s32.totalorder %s287, %s301
    %p303 = scmp.eq.s32.totalorder %s25, 0
    %p304 = por %p302, %p303
    %s305 = ssub.s32 %s19, %s26
    %p306 = scmp.eq.s32.totalorder %s305, 0
    %s308 = sadd.s32 %s307, 1
    %s309 = scalar_select %p306, %s307, %s308
    %p312 = pneg %p306
    %p313 = scmp.eq.s32.totalorder %s19, 1
    %p314 = por %p312, %p313
    %p315 = scmp.ne.s32.totalorder %s307, %s310
    %p316 = scmp.eq.s32.totalorder %s19, 0
    %p317 = por %p315, %p316
    %p318 = scmp.ne.s32.totalorder %s307, %s310
    %p319 = scmp.eq.s32.totalorder %s24, 1
    %p320 = por %p318, %p319
    %p321 = scmp.ne.s32.totalorder %s310, %s311
    %p322 = scmp.eq.s32.totalorder %s24, 0
    %p323 = por %p321, %p322
    %p324 = scmp.ne.s32.totalorder %s310, %s311
    %p325 = scmp.eq.s32.totalorder %s25, 1
    %p326 = por %p324, %p325
    %p328 = scmp.ne.s32.totalorder %s311, %s327
    %p329 = scmp.eq.s32.totalorder %s25, 0
    %p330 = por %p328, %p329
    %p331 = scmp.le.s32.totalorder 1, %s19
    %p332 = scmp.lt.s32.totalorder %s19, 3
    %p333 = pnand %p331, %p332
    %p334 = pneg %p333
    // Predicated region
    $region9: #{wavlm_wrapper_forward.13} parent=5 // pred_check
      _
    $region10: #{wavlm_wrapper_forward.13} parent=5 // pred_check_branch
      %336 = sbr.rel (%p333) target = $region12
    $region11: #{wavlm_wrapper_forward.13} parent=5 // pred_region
      %s337 = ssub.s32 %s19, 1
      // Predicated region
      $region13: #{wavlm_wrapper_forward.13} parent=11 // pred_check
        %p338 = pneg %p66
      $region14: #{wavlm_wrapper_forward.13} parent=11 // pred_check_branch
        %340 = sbr.rel (%p338) target = $region16
      $region15: #{wavlm_wrapper_forward.13} parent=11 // pred_region
        _
      $region16: #{wavlm_wrapper_forward.13} parent=11 // pred_fallthru
        _
      // Predicated region
      $region17: #{wavlm_wrapper_forward.13} parent=11 // pred_check
        %p341 = pneg %p87
      $region18: #{wavlm_wrapper_forward.13} parent=11 // pred_check_branch
        %343 = sbr.rel (%p341) target = $region20
      $region19: #{wavlm_wrapper_forward.13} parent=11 // pred_region
        _
      $region20: #{wavlm_wrapper_forward.13} parent=11 // pred_fallthru
        _
      // Predicated region
      $region21: #{wavlm_wrapper_forward.13} parent=11 // pred_check
        %p344 = pneg %p108
      $region22: #{wavlm_wrapper_forward.13} parent=11 // pred_check_branch
        %346 = sbr.rel (%p344) target = $region24
      $region23: #{wavlm_wrapper_forward.13} parent=11 // pred_region
        _
      $region24: #{wavlm_wrapper_forward.13} parent=11 // pred_fallthru
        _
      // Predicated region
      $region25: #{wavlm_wrapper_forward.13} parent=11 // pred_check
        %p347 = pneg %p129
      $region26: #{wavlm_wrapper_forward.13} parent=11 // pred_check_branch
        %349 = sbr.rel (%p347) target = $region28
      $region27: #{wavlm_wrapper_forward.13} parent=11 // pred_region
        _
      $region28: #{wavlm_wrapper_forward.13} parent=11 // pred_fallthru
        _
      // Predicated region
      $region29: #{wavlm_wrapper_forward.13} parent=11 // pred_check
        %p350 = pneg %p150
      $region30: #{wavlm_wrapper_forward.13} parent=11 // pred_check_branch
        %352 = sbr.rel (%p350) target = $region32
      $region31: #{wavlm_wrapper_forward.13} parent=11 // pred_region
        _
      $region32: #{wavlm_wrapper_forward.13} parent=11 // pred_fallthru
        _
      // Predicated region
      $region33: #{wavlm_wrapper_forward.13} parent=11 // pred_check
        %p353 = pneg %p171
      $region34: #{wavlm_wrapper_forward.13} parent=11 // pred_check_branch
        %355 = sbr.rel (%p353) target = $region36
      $region35: #{wavlm_wrapper_forward.13} parent=11 // pred_region
        _
      $region36: #{wavlm_wrapper_forward.13} parent=11 // pred_fallthru
        _
      // Predicated region
      $region37: #{wavlm_wrapper_forward.13} parent=11 // pred_check
        %p356 = pneg %p192
      $region38: #{wavlm_wrapper_forward.13} parent=11 // pred_check_branch
        %358 = sbr.rel (%p356) target = $region40
      $region39: #{wavlm_wrapper_forward.13} parent=11 // pred_region
        _
      $region40: #{wavlm_wrapper_forward.13} parent=11 // pred_fallthru
        _
      // Predicated region
      $region41: #{wavlm_wrapper_forward.13} parent=11 // pred_check
        %p359 = pneg %p213
      $region42: #{wavlm_wrapper_forward.13} parent=11 // pred_check_branch
        %361 = sbr.rel (%p359) target = $region44
      $region43: #{wavlm_wrapper_forward.13} parent=11 // pred_region
        _
      $region44: #{wavlm_wrapper_forward.13} parent=11 // pred_fallthru
        _
      // Predicated region
      $region45: #{wavlm_wrapper_forward.13} parent=11 // pred_check
        %p362 = pneg %p234
      $region46: #{wavlm_wrapper_forward.13} parent=11 // pred_check_branch
        %364 = sbr.rel (%p362) target = $region48
      $region47: #{wavlm_wrapper_forward.13} parent=11 // pred_region
        _
      $region48: #{wavlm_wrapper_forward.13} parent=11 // pred_fallthru
        _
      // Predicated region
      $region49: #{wavlm_wrapper_forward.13} parent=11 // pred_check
        %p365 = pneg %p255
      $region50: #{wavlm_wrapper_forward.13} parent=11 // pred_check_branch
        %367 = sbr.rel (%p365) target = $region52
      $region51: #{wavlm_wrapper_forward.13} parent=11 // pred_region
        _
      $region52: #{wavlm_wrapper_forward.13} parent=11 // pred_fallthru
        _
      // Predicated region
      $region53: #{wavlm_wrapper_forward.13} parent=11 // pred_check
        %p368 = pneg %p276
      $region54: #{wavlm_wrapper_forward.13} parent=11 // pred_check_branch
        %370 = sbr.rel (%p368) target = $region56
      $region55: #{wavlm_wrapper_forward.13} parent=11 // pred_region
        _
      $region56: #{wavlm_wrapper_forward.13} parent=11 // pred_fallthru
        _
      // Predicated region
      $region57: #{wavlm_wrapper_forward.13} parent=11 // pred_check
        %p371 = pneg %p297
      $region58: #{wavlm_wrapper_forward.13} parent=11 // pred_check_branch
        %373 = sbr.rel (%p371) target = $region60
      $region59: #{wavlm_wrapper_forward.13} parent=11 // pred_region
        _
      $region60: #{wavlm_wrapper_forward.13} parent=11 // pred_fallthru
        _
    $region12: #{wavlm_wrapper_forward.13} parent=5 // pred_fallthru
      _
    %p374 = scmp.lt.s32.totalorder %s19, 2
    // Predicated region
    $region61: #{wavlm_wrapper_forward.13} parent=5 // pred_check
      %p375 = pneg %p374
    $region62: #{wavlm_wrapper_forward.13} parent=5 // pred_check_branch
      %377 = sbr.rel (%p375) target = $region64
    $region63: #{wavlm_wrapper_forward.13} parent=5 // pred_region
      // Predicated region
      $region65: #{wavlm_wrapper_forward.13} parent=63 // pred_check
        %p378 = pneg %p39
      $region66: #{wavlm_wrapper_forward.13} parent=63 // pred_check_branch
        %380 = sbr.rel (%p378) target = $region68
      $region67: #{wavlm_wrapper_forward.13} parent=63 // pred_region
        %p381 = scmp.lt.s32.totalorder %s19, 1
        %s382 = scalar_select %p381, %s19, 1
        %s383 = smul.addr %s382, 3
        %s384 = smul.addr %s383, 8
        %s385 = scalar_lea.vmem %s0, %s384
      $region68: #{wavlm_wrapper_forward.13} parent=63 // pred_fallthru
        _
    $region64: #{wavlm_wrapper_forward.13} parent=5 // pred_fallthru
      _
    %p386 = scmp.le.s32.totalorder 1, %s19
    %p387 = scmp.lt.s32.totalorder %s19, 3
    %p388 = pnand %p386, %p387
    %p389 = pneg %p388
    // Predicated region
    $region69: #{wavlm_wrapper_forward.13} parent=5 // pred_check
      _
    $region70: #{wavlm_wrapper_forward.13} parent=5 // pred_check_branch
      %391 = sbr.rel (%p388) target = $region72
    $region71: #{wavlm_wrapper_forward.13} parent=5 // pred_region
      %s392 = ssub.s32 %s19, 1
      %p393 = scmp.lt.s32.totalorder %s24, 1
      %s394 = scalar_select %p393, %s24, 1
      %s395 = smul.addr %s394, 3
      %s396 = smul.addr %s395, 8
      %s397 = scalar_lea.vmem %s0, %s396
      %p398 = pneg %p45
      %p399 = pneg %p42
      %p400 = pneg %p66
      %p401 = pneg %p63
      %p402 = pneg %p87
      %p403 = pneg %p84
      %p404 = pneg %p108
      %p405 = pneg %p105
      %p406 = pneg %p129
      %p407 = pneg %p126
      %p408 = pneg %p150
      %p409 = pneg %p147
      %p410 = pneg %p171
      %p411 = pneg %p168
      %p412 = pneg %p192
      %p413 = pneg %p189
      %p414 = pneg %p213
      %p415 = pneg %p210
      %p416 = pneg %p234
      %p417 = pneg %p231
      %p418 = pneg %p255
      %p419 = pneg %p252
      %p420 = pneg %p276
      %p421 = pneg %p273
      %p422 = pneg %p297
      %p423 = pneg %p294
      %p424 = pneg %p323
      %p425 = pneg %p320
      %p426 = scmp.lt.s32.totalorder %s24, 1
      %s427 = scalar_select %p426, %s24, 1
      %s428 = smul.addr %s427, 3
      %s429 = smul.addr %s428, 8
      %s430 = scalar_lea.vmem %s13, %s429
      %p431 = scmp.lt.s32.totalorder %s24, 1
      %s432 = scalar_select %p431, %s24, 1
      %s433 = smul.addr %s432, 3
      %s434 = smul.addr %s433, 8
      %s435 = scalar_lea.vmem %s0, %s434
      %p436 = scmp.lt.s32.totalorder %s24, 1
      %s437 = scalar_select %p436, %s24, 1
      %s438 = smul.addr %s437, 3
      %s439 = smul.addr %s438, 8
      %s440 = scalar_lea.vmem %s13, %s439
      %v442 = vld [vmem:[%s435] sm:$0xff]
      %v443 = vld [vmem:[%s435 + $0x8] sm:$0xff]
      %v444 = vld [vmem:[%s435 + $0x10] sm:$0x7]
      %v445 = vpack.c.bf16 %v443, %v442
      %v446 = vpack.c.bf16 %v444, %v444
      %v447 = vld [vmem:[%s1] sm:$0xf]
      %v448 = vld [vmem:[%s1 + $0x4] sm:$0xf]
      %v449 = vld [vmem:[%s1 + $0x8] sm:$0xf]
      %v450 = vld [vmem:[%s1 + $0xc] sm:$0xf]
      %v451 = vld [vmem:[%s2] sm:$0x1]
      %v453 = vlaneseq
      %v454 = vshrl.u32 %v453, 7
      %v455 = vsub.s32 0, %v454
      %v456 = vrot.slane %v451, %v455
      %v462 = vunpack.c.l.b16 %v447
      %v463 = vunpack.c.l.b16 %v448
      %v464 = vunpack.c.l.b16 %v449
      %v465 = vunpack.c.l.b16 %v450
      %v466 = vpack.c.b16 %v463, %v462
      %v467 = vpack.c.b16 %v465, %v464
      %vm470 = vcmask 261120
      %v472 = vsel %vm470, %v445, 0
      %v475 = vsel %vm470, %v446, 0
      %477 = vmatprep.subr.bf16.mxu0 0
      %478 = vmatpush1.bf16.msra.mxu0 0
      %479 = vmatprep.subr.bf16.mxu0 0
      %480 = vmatpush1.bf16.msra.mxu0 0
      %481 = vmatprep.subr.bf16.mxu0 0
      %482 = vmatpush1.bf16.msra.mxu0 0
      %483 = vmatprep.subr.bf16.mxu0 0
      %484 = vmatpush1.bf16.msra.mxu0 0
      %485 = vmatprep.subr.bf16.mxu0 0
      %486 = vmatpush1.bf16.msra.mxu0 0
      %487 = vmatprep.subr.bf16.mxu0 0
      %488 = vmatpush1.bf16.msra.mxu0 0
      %489 = vmatprep.subr.bf16.mxu0 0
      %490 = vmatpush1.bf16.msra.mxu0 %v467
      %491 = vmatprep.subr.bf16.mxu0 0
      %492 = vmatpush1.bf16.msra.mxu0 %v466
      %493 = vmatprep.subr.bf16.mxu0 0
      %494 = vmatpush2.bf16.msra.mxu0 0
      %495 = vmatprep.subr.bf16.mxu0 0
      %496 = vmatpush2.bf16.msra.mxu0 0
      %497 = vmatprep.subr.bf16.mxu0 0
      %498 = vmatpush2.bf16.msra.mxu0 0
      %499 = vmatprep.subr.bf16.mxu0 0
      %500 = vmatpush2.bf16.msra.mxu0 0
      %501 = vmatprep.subr.bf16.mxu0 0
      %502 = vmatpush2.bf16.msra.mxu0 0
      %503 = vmatprep.subr.bf16.mxu0 0
      %504 = vmatpush2.bf16.msra.mxu0 0
      %505 = vmatprep.subr.bf16.mxu0 0
      %506 = vmatpush2.bf16.msra.mxu0 0
      %507 = vmatprep.subr.bf16.mxu0 0
      %508 = vmatpush2.bf16.msra.mxu0 0
      %509 = vmatprep.mubr.bf16.mxu0 0
      %510 = vmatmul.mubr.bf16.gmra.mxu0 %v472
      %v511 = vpop.f32.mrf.mxu0
      %v512 = vadd.f32 %v456, %v511
      %v513 = vpop.f32.mrf.mxu0
      %v514 = vpop.f32.mrf.mxu0
      %v515 = vadd.f32 %v456, %v514
      %v516 = vpop.f32.mrf.mxu0
      %517 = vmatprep.mubr.bf16.mxu0 0
      %518 = vmatmul.mubr.bf16.gmra.mxu0 %v475
      %v519 = vpop.f32.mrf.mxu0
      %v520 = vadd.f32 %v456, %v519
      %v521 = vpop.f32.mrf.mxu0
      %v522 = vpop.f32.mrf.mxu0
      %v523 = vpop.f32.mrf.mxu0
      %524 = vdwg.mxu0
      %v525 = vld [vmem:[%s3] sm:$0xf]
      %v526 = vld [vmem:[%s3 + $0x4] sm:$0xf]
      %v527 = vld [vmem:[%s3 + $0x8] sm:$0xf]
      %v528 = vld [vmem:[%s3 + $0xc] sm:$0xf]
      %v529 = vpack.c.bf16 %v515, %v512
      %v530 = vpack.c.bf16 %v520, %v520
      %533 = vrot.lane.b32.xlu0 %v529, 96
      %v534 = vpop.permute.xlu0 %533
      %535 = vrot.lane.b32.xlu0 %v530, 96
      %v536 = vpop.permute.xlu0 %535
      %vm537 = vcmask 64512
      %v539 = vsel %vm537, %v529, 0
      %v542 = vsel %vm537, %v530, 0
      %v545 = vsel %vm537, %v534, 0
      %v548 = vsel %vm537, %v536, 0
      %550 = vmatprep.subr.bf16.mxu0 0
      %551 = vmatpush1.bf16.xpose.msra.mxu0 0
      %552 = vmatprep.subr.bf16.mxu0 0
      %553 = vmatpush1.bf16.xpose.msra.mxu0 0
      %554 = vmatprep.subr.bf16.mxu0 0
      %555 = vmatpush1.bf16.xpose.msra.mxu0 0
      %556 = vmatprep.subr.bf16.mxu0 0
      %557 = vmatpush1.bf16.xpose.msra.mxu0 0
      %558 = vmatprep.subr.bf16.mxu0 0
      %559 = vmatpush1.bf16.xpose.msra.mxu0 0
      %560 = vmatprep.subr.bf16.mxu0 0
      %561 = vmatpush1.bf16.xpose.msra.mxu0 0
      %562 = vmatprep.subr.bf16.mxu0 0
      %563 = vmatpush1.bf16.xpose.msra.mxu0 %v548
      %564 = vmatprep.subr.bf16.mxu0 0
      %565 = vmatpush1.bf16.xpose.msra.mxu0 %v545
      %566 = vmatprep.subr.bf16.mxu0 0
      %567 = vmatpush2.bf16.xpose.msra.mxu0 0
      %568 = vmatprep.subr.bf16.mxu0 0
      %569 = vmatpush2.bf16.xpose.msra.mxu0 0
      %570 = vmatprep.subr.bf16.mxu0 0
      %571 = vmatpush2.bf16.xpose.msra.mxu0 0
      %572 = vmatprep.subr.bf16.mxu0 0
      %573 = vmatpush2.bf16.xpose.msra.mxu0 0
      %574 = vmatprep.subr.bf16.mxu0 0
      %575 = vmatpush2.bf16.xpose.msra.mxu0 0
      %576 = vmatprep.subr.bf16.mxu0 0
      %577 = vmatpush2.bf16.xpose.msra.mxu0 0
      %578 = vmatprep.subr.bf16.mxu0 0
      %579 = vmatpush2.bf16.xpose.msra.mxu0 0
      %580 = vmatprep.subr.bf16.mxu0 0
      %581 = vmatpush2.bf16.xpose.msra.mxu0 0
      %582 = vmatprep.mubr.bf16.mxu0 0
      %583 = vmatmul.mubr.bf16.gmra.mxu0 %v539
      %v584 = vpop.f32.mrf.mxu0
      %v585 = vadd.f32 0.0, %v584
      %v586 = vpop.f32.mrf.mxu0
      %v587 = vpop.f32.mrf.mxu0
      %v588 = vadd.f32 0.0, %v587
      %v589 = vpop.f32.mrf.mxu0
      %590 = vmatprep.mubr.bf16.mxu0 0
      %591 = vmatmul.mubr.bf16.gmra.mxu0 %v542
      %v592 = vpop.f32.mrf.mxu0
      %v593 = vadd.f32 0.0, %v592
      %v594 = vpop.f32.mrf.mxu0
      %v595 = vpop.f32.mrf.mxu0
      %v596 = vpop.f32.mrf.mxu0
      %597 = vdwg.mxu0
      %v598 = vmul.f32 %v585, 0.35355338
      %v599 = vmul.f32 %v588, 0.35355338
      %v600 = vmul.f32 %v593, 0.35355338
      %vm601 = vcmask 154624
      %v602 = vsel %vm601, %v598, -inf
      %603 = vmax.xlane.f32.xlu0 %v602
      %v604 = vpop.xlane.xlu0 %603
      %v605 = vsel %vm601, %v599, -inf
      %606 = vmax.xlane.f32.xlu0 %v605
      %v607 = vpop.xlane.xlu0 %606
      %vm608 = vcmask 149504
      %v609 = vsel %vm608, %v600, -inf
      %610 = vmax.xlane.f32.xlu0 %v609
      %v611 = vpop.xlane.xlu0 %610
      %v612 = vsub.f32 %v598, %v604
      %v613 = vsub.f32 %v599, %v607
      %v614 = vsub.f32 %v600, %v611
      %v615 = vmul.f32 %v612, 1.442695
      %v616 = vpow.pop %v615
      %v617 = vmul.f32 %v613, 1.442695
      %v618 = vpow.pop %v617
      %v619 = vmul.f32 %v614, 1.442695
      %v620 = vpow.pop %v619
      %v621 = vsel %vm601, %v616, 0.0
      %622 = vadd.xlane.f32.xlu0 %v621
      %v623 = vpop.xlane.xlu0 %622
      %v624 = vsel %vm601, %v618, 0.0
      %625 = vadd.xlane.f32.xlu0 %v624
      %v626 = vpop.xlane.xlu0 %625
      %v627 = vsel %vm608, %v620, 0.0
      %628 = vadd.xlane.f32.xlu0 %v627
      %v629 = vpop.xlane.xlu0 %628
      %v630 = vrcp.pop %v623
      %v631 = vrcp.pop %v626
      %v632 = vrcp.pop %v629
      %v633 = vmul.f32 %v616, %v630
      %v634 = vmul.f32 %v618, %v631
      %v635 = vmul.f32 %v620, %v632
      %v636 = vpack.c.bf16 %v634, %v633
      %v637 = vpack.c.bf16 %v635, %v635
      %638 = vrot.lane.b32.xlu0 %v529, 64
      %v639 = vpop.permute.xlu0 %638
      %640 = vrot.lane.b32.xlu0 %v530, 64
      %v641 = vpop.permute.xlu0 %640
      %v644 = vsel %vm601, %v636, 0
      %v647 = vsel %vm601, %v637, 0
      %vm649 = vcmask 1040384
      %vm650 = vcmask 1041408
      %v651 = vsel %vm649, 4294967295, 65535
      %v652 = vsel %vm650, %v651, 0
      %v654 = vand.u32 %v641, %v652
      %656 = vmatprep.subr.bf16.mxu0 0
      %657 = vmatpush1.bf16.msra.mxu0 0
      %658 = vmatprep.subr.bf16.mxu0 0
      %659 = vmatpush1.bf16.msra.mxu0 0
      %660 = vmatprep.subr.bf16.mxu0 0
      %661 = vmatpush1.bf16.msra.mxu0 0
      %662 = vmatprep.subr.bf16.mxu0 0
      %663 = vmatpush1.bf16.msra.mxu0 0
      %664 = vmatprep.subr.bf16.mxu0 0
      %665 = vmatpush1.bf16.msra.mxu0 0
      %666 = vmatprep.subr.bf16.mxu0 0
      %667 = vmatpush1.bf16.msra.mxu0 0
      %668 = vmatprep.subr.bf16.mxu0 0
      %669 = vmatpush1.bf16.msra.mxu0 %v654
      %670 = vmatprep.subr.bf16.mxu0 0
      %671 = vmatpush1.bf16.msra.mxu0 %v639
      %672 = vmatprep.subr.bf16.mxu0 0
      %673 = vmatpush2.bf16.msra.mxu0 0
      %674 = vmatprep.subr.bf16.mxu0 0
      %675 = vmatpush2.bf16.msra.mxu0 0
      %676 = vmatprep.subr.bf16.mxu0 0
      %677 = vmatpush2.bf16.msra.mxu0 0
      %678 = vmatprep.subr.bf16.mxu0 0
      %679 = vmatpush2.bf16.msra.mxu0 0
      %680 = vmatprep.subr.bf16.mxu0 0
      %681 = vmatpush2.bf16.msra.mxu0 0
      %682 = vmatprep.subr.bf16.mxu0 0
      %683 = vmatpush2.bf16.msra.mxu0 0
      %684 = vmatprep.subr.bf16.mxu0 0
      %685 = vmatpush2.bf16.msra.mxu0 0
      %686 = vmatprep.subr.bf16.mxu0 0
      %687 = vmatpush2.bf16.msra.mxu0 0
      %688 = vmatprep.mubr.bf16.mxu0 0
      %689 = vmatmul.mubr.bf16.gmra.mxu0 %v644
      %v690 = vpop.f32.mrf.mxu0
      %v691 = vadd.f32 0.0, %v690
      %v692 = vpop.f32.mrf.mxu0
      %v693 = vpop.f32.mrf.mxu0
      %v694 = vadd.f32 0.0, %v693
      %v695 = vpop.f32.mrf.mxu0
      %696 = vmatprep.mubr.bf16.mxu0 0
      %697 = vmatmul.mubr.bf16.gmra.mxu0 %v647
      %v698 = vpop.f32.mrf.mxu0
      %v699 = vadd.f32 0.0, %v698
      %v700 = vpop.f32.mrf.mxu0
      %v701 = vpop.f32.mrf.mxu0
      %v702 = vpop.f32.mrf.mxu0
      %703 = vdwg.mxu0
      %v704 = vpack.c.bf16 %v694, %v691
      %v705 = vpack.c.bf16 %v699, %v699
      %706 = vrot.lane.b32.xlu0 %v529, 120
      %v707 = vpop.permute.xlu0 %706
      %708 = vrot.lane.b32.xlu0 %v530, 120
      %v709 = vpop.permute.xlu0 %708
      %710 = vrot.lane.b32.xlu0 %v529, 88
      %v711 = vpop.permute.xlu0 %710
      %712 = vrot.lane.b32.xlu0 %v530, 88
      %v713 = vpop.permute.xlu0 %712
      %v715 = vsel %vm537, %v707, 0
      %v718 = vsel %vm537, %v709, 0
      %v721 = vsel %vm537, %v711, 0
      %v724 = vsel %vm537, %v713, 0
      %726 = vmatprep.subr.bf16.mxu0 0
      %727 = vmatpush1.bf16.xpose.msra.mxu0 0
      %728 = vmatprep.subr.bf16.mxu0 0
      %729 = vmatpush1.bf16.xpose.msra.mxu0 0
      %730 = vmatprep.subr.bf16.mxu0 0
      %731 = vmatpush1.bf16.xpose.msra.mxu0 0
      %732 = vmatprep.subr.bf16.mxu0 0
      %733 = vmatpush1.bf16.xpose.msra.mxu0 0
      %734 = vmatprep.subr.bf16.mxu0 0
      %735 = vmatpush1.bf16.xpose.msra.mxu0 0
      %736 = vmatprep.subr.bf16.mxu0 0
      %737 = vmatpush1.bf16.xpose.msra.mxu0 0
      %738 = vmatprep.subr.bf16.mxu0 0
      %739 = vmatpush1.bf16.xpose.msra.mxu0 %v724
      %740 = vmatprep.subr.bf16.mxu0 0
      %741 = vmatpush1.bf16.xpose.msra.mxu0 %v721
      %742 = vmatprep.subr.bf16.mxu0 0
      %743 = vmatpush2.bf16.xpose.msra.mxu0 0
      %744 = vmatprep.subr.bf16.mxu0 0
      %745 = vmatpush2.bf16.xpose.msra.mxu0 0
      %746 = vmatprep.subr.bf16.mxu0 0
      %747 = vmatpush2.bf16.xpose.msra.mxu0 0
      %748 = vmatprep.subr.bf16.mxu0 0
      %749 = vmatpush2.bf16.xpose.msra.mxu0 0
      %750 = vmatprep.subr.bf16.mxu0 0
      %751 = vmatpush2.bf16.xpose.msra.mxu0 0
      %752 = vmatprep.subr.bf16.mxu0 0
      %753 = vmatpush2.bf16.xpose.msra.mxu0 0
      %754 = vmatprep.subr.bf16.mxu0 0
      %755 = vmatpush2.bf16.xpose.msra.mxu0 0
      %756 = vmatprep.subr.bf16.mxu0 0
      %757 = vmatpush2.bf16.xpose.msra.mxu0 0
      %758 = vmatprep.mubr.bf16.mxu0 0
      %759 = vmatmul.mubr.bf16.gmra.mxu0 %v715
      %v760 = vpop.f32.mrf.mxu0
      %v761 = vadd.f32 0.0, %v760
      %v762 = vpop.f32.mrf.mxu0
      %v763 = vpop.f32.mrf.mxu0
      %v764 = vadd.f32 0.0, %v763
      %v765 = vpop.f32.mrf.mxu0
      %766 = vmatprep.mubr.bf16.mxu0 0
      %767 = vmatmul.mubr.bf16.gmra.mxu0 %v718
      %v768 = vpop.f32.mrf.mxu0
      %v769 = vadd.f32 0.0, %v768
      %v770 = vpop.f32.mrf.mxu0
      %v771 = vpop.f32.mrf.mxu0
      %v772 = vpop.f32.mrf.mxu0
      %773 = vdwg.mxu0
      %v774 = vmul.f32 %v761, 0.35355338
      %v775 = vmul.f32 %v764, 0.35355338
      %v776 = vmul.f32 %v769, 0.35355338
      %v777 = vsel %vm601, %v774, -inf
      %778 = vmax.xlane.f32.xlu0 %v777
      %v779 = vpop.xlane.xlu0 %778
      %v780 = vsel %vm601, %v775, -inf
      %781 = vmax.xlane.f32.xlu0 %v780
      %v782 = vpop.xlane.xlu0 %781
      %v783 = vsel %vm608, %v776, -inf
      %784 = vmax.xlane.f32.xlu0 %v783
      %v785 = vpop.xlane.xlu0 %784
      %v786 = vsub.f32 %v774, %v779
      %v787 = vsub.f32 %v775, %v782
      %v788 = vsub.f32 %v776, %v785
      %v789 = vmul.f32 %v786, 1.442695
      %v790 = vpow.pop %v789
      %v791 = vmul.f32 %v787, 1.442695
      %v792 = vpow.pop %v791
      %v793 = vmul.f32 %v788, 1.442695
      %v794 = vpow.pop %v793
      %v795 = vsel %vm601, %v790, 0.0
      %796 = vadd.xlane.f32.xlu0 %v795
      %v797 = vpop.xlane.xlu0 %796
      %v798 = vsel %vm601, %v792, 0.0
      %799 = vadd.xlane.f32.xlu0 %v798
      %v800 = vpop.xlane.xlu0 %799
      %v801 = vsel %vm608, %v794, 0.0
      %802 = vadd.xlane.f32.xlu0 %v801
      %v803 = vpop.xlane.xlu0 %802
      %v804 = vrcp.pop %v797
      %v805 = vrcp.pop %v800
      %v806 = vrcp.pop %v803
      %v807 = vmul.f32 %v790, %v804
      %v808 = vmul.f32 %v792, %v805
      %v809 = vmul.f32 %v794, %v806
      %v810 = vpack.c.bf16 %v808, %v807
      %v811 = vpack.c.bf16 %v809, %v809
      %812 = vrot.lane.b32.xlu0 %v529, 56
      %v813 = vpop.permute.xlu0 %812
      %814 = vrot.lane.b32.xlu0 %v530, 56
      %v815 = vpop.permute.xlu0 %814
      %v818 = vsel %vm601, %v810, 0
      %v821 = vsel %vm601, %v811, 0
      %v824 = vand.u32 %v815, %v652
      %826 = vmatprep.subr.bf16.mxu0 0
      %827 = vmatpush1.bf16.msra.mxu0 0
      %828 = vmatprep.subr.bf16.mxu0 0
      %829 = vmatpush1.bf16.msra.mxu0 0
      %830 = vmatprep.subr.bf16.mxu0 0
      %831 = vmatpush1.bf16.msra.mxu0 0
      %832 = vmatprep.subr.bf16.mxu0 0
      %833 = vmatpush1.bf16.msra.mxu0 0
      %834 = vmatprep.subr.bf16.mxu0 0
      %835 = vmatpush1.bf16.msra.mxu0 0
      %836 = vmatprep.subr.bf16.mxu0 0
      %837 = vmatpush1.bf16.msra.mxu0 0
      %838 = vmatprep.subr.bf16.mxu0 0
      %839 = vmatpush1.bf16.msra.mxu0 %v824
      %840 = vmatprep.subr.bf16.mxu0 0
      %841 = vmatpush1.bf16.msra.mxu0 %v813
      %842 = vmatprep.subr.bf16.mxu0 0
      %843 = vmatpush2.bf16.msra.mxu0 0
      %844 = vmatprep.subr.bf16.mxu0 0
      %845 = vmatpush2.bf16.msra.mxu0 0
      %846 = vmatprep.subr.bf16.mxu0 0
      %847 = vmatpush2.bf16.msra.mxu0 0
      %848 = vmatprep.subr.bf16.mxu0 0
      %849 = vmatpush2.bf16.msra.mxu0 0
      %850 = vmatprep.subr.bf16.mxu0 0
      %851 = vmatpush2.bf16.msra.mxu0 0
      %852 = vmatprep.subr.bf16.mxu0 0
      %853 = vmatpush2.bf16.msra.mxu0 0
      %854 = vmatprep.subr.bf16.mxu0 0
      %855 = vmatpush2.bf16.msra.mxu0 0
      %856 = vmatprep.subr.bf16.mxu0 0
      %857 = vmatpush2.bf16.msra.mxu0 0
      %858 = vmatprep.mubr.bf16.mxu0 0
      %859 = vmatmul.mubr.bf16.gmra.mxu0 %v818
      %v860 = vpop.f32.mrf.mxu0
      %v861 = vadd.f32 0.0, %v860
      %v862 = vpop.f32.mrf.mxu0
      %v863 = vpop.f32.mrf.mxu0
      %v864 = vadd.f32 0.0, %v863
      %v865 = vpop.f32.mrf.mxu0
      %866 = vmatprep.mubr.bf16.mxu0 0
      %867 = vmatmul.mubr.bf16.gmra.mxu0 %v821
      %v868 = vpop.f32.mrf.mxu0
      %v869 = vadd.f32 0.0, %v868
      %v870 = vpop.f32.mrf.mxu0
      %v871 = vpop.f32.mrf.mxu0
      %v872 = vpop.f32.mrf.mxu0
      %873 = vdwg.mxu0
      %v874 = vpack.c.bf16 %v864, %v861
      %v875 = vpack.c.bf16 %v869, %v869
      %v877 = vsel %vm537, %v874, 0
      %v880 = vsel %vm537, %v875, 0
      %vm882 = vcmask 1043456
      %v884 = vsel %vm882, %v526, 0
      %886 = vmatprep.subr.bf16.mxu0 0
      %887 = vmatpush1.bf16.msra.mxu0 0
      %888 = vmatprep.subr.bf16.mxu0 0
      %889 = vmatpush1.bf16.msra.mxu0 0
      %890 = vmatprep.subr.bf16.mxu0 0
      %891 = vmatpush1.bf16.msra.mxu0 0
      %892 = vmatprep.subr.bf16.mxu0 0
      %893 = vmatpush1.bf16.msra.mxu0 0
      %894 = vmatprep.subr.bf16.mxu0 0
      %895 = vmatpush1.bf16.msra.mxu0 0
      %896 = vmatprep.subr.bf16.mxu0 0
      %897 = vmatpush1.bf16.msra.mxu0 0
      %898 = vmatprep.subr.bf16.mxu0 0
      %899 = vmatpush1.bf16.msra.mxu0 0
      %900 = vmatprep.subr.bf16.mxu0 0
      %901 = vmatpush1.bf16.msra.mxu0 %v884
      %902 = vmatprep.subr.bf16.mxu0 0
      %903 = vmatpush2.bf16.msra.mxu0 0
      %904 = vmatprep.subr.bf16.mxu0 0
      %905 = vmatpush2.bf16.msra.mxu0 0
      %906 = vmatprep.subr.bf16.mxu0 0
      %907 = vmatpush2.bf16.msra.mxu0 0
      %908 = vmatprep.subr.bf16.mxu0 0
      %909 = vmatpush2.bf16.msra.mxu0 0
      %910 = vmatprep.subr.bf16.mxu0 0
      %911 = vmatpush2.bf16.msra.mxu0 0
      %912 = vmatprep.subr.bf16.mxu0 0
      %913 = vmatpush2.bf16.msra.mxu0 0
      %914 = vmatprep.subr.bf16.mxu0 0
      %915 = vmatpush2.bf16.msra.mxu0 0
      %916 = vmatprep.subr.bf16.mxu0 0
      %917 = vmatpush2.bf16.msra.mxu0 0
      %918 = vmatprep.mubr.bf16.mxu0 0
      %919 = vmatmul.mubr.bf16.gmra.mxu0 %v877
      %v920 = vpop.f32.mrf.mxu0
      %v921 = vadd.f32 0.0, %v920
      %v922 = vpop.f32.mrf.mxu0
      %v923 = vpop.f32.mrf.mxu0
      %v924 = vadd.f32 0.0, %v923
      %v925 = vpop.f32.mrf.mxu0
      %926 = vmatprep.mubr.bf16.mxu0 0
      %927 = vmatmul.mubr.bf16.gmra.mxu0 %v880
      %v928 = vpop.f32.mrf.mxu0
      %v929 = vadd.f32 0.0, %v928
      %v930 = vpop.f32.mrf.mxu0
      %v931 = vpop.f32.mrf.mxu0
      %v932 = vpop.f32.mrf.mxu0
      %933 = vdwg.mxu0
      %v935 = vsel %vm537, %v704, 0
      %v938 = vsel %vm537, %v705, 0
      %v941 = vsel %vm882, %v525, 0
      %943 = vmatprep.subr.bf16.mxu0 0
      %944 = vmatpush1.bf16.msra.mxu0 0
      %945 = vmatprep.subr.bf16.mxu0 0
      %946 = vmatpush1.bf16.msra.mxu0 0
      %947 = vmatprep.subr.bf16.mxu0 0
      %948 = vmatpush1.bf16.msra.mxu0 0
      %949 = vmatprep.subr.bf16.mxu0 0
      %950 = vmatpush1.bf16.msra.mxu0 0
      %951 = vmatprep.subr.bf16.mxu0 0
      %952 = vmatpush1.bf16.msra.mxu0 0
      %953 = vmatprep.subr.bf16.mxu0 0
      %954 = vmatpush1.bf16.msra.mxu0 0
      %955 = vmatprep.subr.bf16.mxu0 0
      %956 = vmatpush1.bf16.msra.mxu0 0
      %957 = vmatprep.subr.bf16.mxu0 0
      %958 = vmatpush1.bf16.msra.mxu0 %v941
      %959 = vmatprep.subr.bf16.mxu0 0
      %960 = vmatpush2.bf16.msra.mxu0 0
      %961 = vmatprep.subr.bf16.mxu0 0
      %962 = vmatpush2.bf16.msra.mxu0 0
      %963 = vmatprep.subr.bf16.mxu0 0
      %964 = vmatpush2.bf16.msra.mxu0 0
      %965 = vmatprep.subr.bf16.mxu0 0
      %966 = vmatpush2.bf16.msra.mxu0 0
      %967 = vmatprep.subr.bf16.mxu0 0
      %968 = vmatpush2.bf16.msra.mxu0 0
      %969 = vmatprep.subr.bf16.mxu0 0
      %970 = vmatpush2.bf16.msra.mxu0 0
      %971 = vmatprep.subr.bf16.mxu0 0
      %972 = vmatpush2.bf16.msra.mxu0 0
      %973 = vmatprep.subr.bf16.mxu0 0
      %974 = vmatpush2.bf16.msra.mxu0 0
      %975 = vmatprep.mubr.bf16.mxu0 0
      %976 = vmatmul.mubr.bf16.gmra.mxu0 %v935
      %v977 = vpop.f32.mrf.mxu0
      %v978 = vadd.f32 %v921, %v977
      %v979 = vpop.f32.mrf.mxu0
      %v980 = vpop.f32.mrf.mxu0
      %v981 = vadd.f32 %v924, %v980
      %v982 = vpop.f32.mrf.mxu0
      %983 = vmatprep.mubr.bf16.mxu0 0
      %984 = vmatmul.mubr.bf16.gmra.mxu0 %v938
      %v985 = vpop.f32.mrf.mxu0
      %v986 = vadd.f32 %v929, %v985
      %v987 = vpop.f32.mrf.mxu0
      %v988 = vpop.f32.mrf.mxu0
      %v989 = vpop.f32.mrf.mxu0
      %990 = vdwg.mxu0
      %991 = vrot.lane.b32.xlu0 %v529, 112
      %v992 = vpop.permute.xlu0 %991
      %993 = vrot.lane.b32.xlu0 %v530, 112
      %v994 = vpop.permute.xlu0 %993
      %995 = vrot.lane.b32.xlu0 %v529, 80
      %v996 = vpop.permute.xlu0 %995
      %997 = vrot.lane.b32.xlu0 %v530, 80
      %v998 = vpop.permute.xlu0 %997
      %v1000 = vsel %vm537, %v992, 0
      %v1003 = vsel %vm537, %v994, 0
      %v1006 = vsel %vm537, %v996, 0
      %v1009 = vsel %vm537, %v998, 0
      %1011 = vmatprep.subr.bf16.mxu0 0
      %1012 = vmatpush1.bf16.xpose.msra.mxu0 0
      %1013 = vmatprep.subr.bf16.mxu0 0
      %1014 = vmatpush1.bf16.xpose.msra.mxu0 0
      %1015 = vmatprep.subr.bf16.mxu0 0
      %1016 = vmatpush1.bf16.xpose.msra.mxu0 0
      %1017 = vmatprep.subr.bf16.mxu0 0
      %1018 = vmatpush1.bf16.xpose.msra.mxu0 0
      %1019 = vmatprep.subr.bf16.mxu0 0
      %1020 = vmatpush1.bf16.xpose.msra.mxu0 0
      %1021 = vmatprep.subr.bf16.mxu0 0
      %1022 = vmatpush1.bf16.xpose.msra.mxu0 0
      %1023 = vmatprep.subr.bf16.mxu0 0
      %1024 = vmatpush1.bf16.xpose.msra.mxu0 %v1009
      %1025 = vmatprep.subr.bf16.mxu0 0
      %1026 = vmatpush1.bf16.xpose.msra.mxu0 %v1006
      %1027 = vmatprep.subr.bf16.mxu0 0
      %1028 = vmatpush2.bf16.xpose.msra.mxu0 0
      %1029 = vmatprep.subr.bf16.mxu0 0
      %1030 = vmatpush2.bf16.xpose.msra.mxu0 0
      %1031 = vmatprep.subr.bf16.mxu0 0
      %1032 = vmatpush2.bf16.xpose.msra.mxu0 0
      %1033 = vmatprep.subr.bf16.mxu0 0
      %1034 = vmatpush2.bf16.xpose.msra.mxu0 0
      %1035 = vmatprep.subr.bf16.mxu0 0
      %1036 = vmatpush2.bf16.xpose.msra.mxu0 0
      %1037 = vmatprep.subr.bf16.mxu0 0
      %1038 = vmatpush2.bf16.xpose.msra.mxu0 0
      %1039 = vmatprep.subr.bf16.mxu0 0
      %1040 = vmatpush2.bf16.xpose.msra.mxu0 0
      %1041 = vmatprep.subr.bf16.mxu0 0
      %1042 = vmatpush2.bf16.xpose.msra.mxu0 0
      %1043 = vmatprep.mubr.bf16.mxu0 0
      %1044 = vmatmul.mubr.bf16.gmra.mxu0 %v1000
      %v1045 = vpop.f32.mrf.mxu0
      %v1046 = vadd.f32 0.0, %v1045
      %v1047 = vpop.f32.mrf.mxu0
      %v1048 = vpop.f32.mrf.mxu0
      %v1049 = vadd.f32 0.0, %v1048
      %v1050 = vpop.f32.mrf.mxu0
      %1051 = vmatprep.mubr.bf16.mxu0 0
      %1052 = vmatmul.mubr.bf16.gmra.mxu0 %v1003
      %v1053 = vpop.f32.mrf.mxu0
      %v1054 = vadd.f32 0.0, %v1053
      %v1055 = vpop.f32.mrf.mxu0
      %v1056 = vpop.f32.mrf.mxu0
      %v1057 = vpop.f32.mrf.mxu0
      %1058 = vdwg.mxu0
      %v1059 = vmul.f32 %v1046, 0.35355338
      %v1060 = vmul.f32 %v1049, 0.35355338
      %v1061 = vmul.f32 %v1054, 0.35355338
      %v1062 = vsel %vm601, %v1059, -inf
      %1063 = vmax.xlane.f32.xlu0 %v1062
      %v1064 = vpop.xlane.xlu0 %1063
      %v1065 = vsel %vm601, %v1060, -inf
      %1066 = vmax.xlane.f32.xlu0 %v1065
      %v1067 = vpop.xlane.xlu0 %1066
      %v1068 = vsel %vm608, %v1061, -inf
      %1069 = vmax.xlane.f32.xlu0 %v1068
      %v1070 = vpop.xlane.xlu0 %1069
      %v1071 = vsub.f32 %v1059, %v1064
      %v1072 = vsub.f32 %v1060, %v1067
      %v1073 = vsub.f32 %v1061, %v1070
      %v1074 = vmul.f32 %v1071, 1.442695
      %v1075 = vpow.pop %v1074
      %v1076 = vmul.f32 %v1072, 1.442695
      %v1077 = vpow.pop %v1076
      %v1078 = vmul.f32 %v1073, 1.442695
      %v1079 = vpow.pop %v1078
      %v1080 = vsel %vm601, %v1075, 0.0
      %1081 = vadd.xlane.f32.xlu0 %v1080
      %v1082 = vpop.xlane.xlu0 %1081
      %v1083 = vsel %vm601, %v1077, 0.0
      %1084 = vadd.xlane.f32.xlu0 %v1083
      %v1085 = vpop.xlane.xlu0 %1084
      %v1086 = vsel %vm608, %v1079, 0.0
      %1087 = vadd.xlane.f32.xlu0 %v1086
      %v1088 = vpop.xlane.xlu0 %1087
      %v1089 = vrcp.pop %v1082
      %v1090 = vrcp.pop %v1085
      %v1091 = vrcp.pop %v1088
      %v1092 = vmul.f32 %v1075, %v1089
      %v1093 = vmul.f32 %v1077, %v1090
      %v1094 = vmul.f32 %v1079, %v1091
      %v1095 = vpack.c.bf16 %v1093, %v1092
      %v1096 = vpack.c.bf16 %v1094, %v1094
      %1097 = vrot.lane.b32.xlu0 %v529, 48
      %v1098 = vpop.permute.xlu0 %1097
      %1099 = vrot.lane.b32.xlu0 %v530, 48
      %v1100 = vpop.permute.xlu0 %1099
      %v1103 = vsel %vm601, %v1095, 0
      %v1106 = vsel %vm601, %v1096, 0
      %v1109 = vand.u32 %v1100, %v652
      %1111 = vmatprep.subr.bf16.mxu0 0
      %1112 = vmatpush1.bf16.msra.mxu0 0
      %1113 = vmatprep.subr.bf16.mxu0 0
      %1114 = vmatpush1.bf16.msra.mxu0 0
      %1115 = vmatprep.subr.bf16.mxu0 0
      %1116 = vmatpush1.bf16.msra.mxu0 0
      %1117 = vmatprep.subr.bf16.mxu0 0
      %1118 = vmatpush1.bf16.msra.mxu0 0
      %1119 = vmatprep.subr.bf16.mxu0 0
      %1120 = vmatpush1.bf16.msra.mxu0 0
      %1121 = vmatprep.subr.bf16.mxu0 0
      %1122 = vmatpush1.bf16.msra.mxu0 0
      %1123 = vmatprep.subr.bf16.mxu0 0
      %1124 = vmatpush1.bf16.msra.mxu0 %v1109
      %1125 = vmatprep.subr.bf16.mxu0 0
      %1126 = vmatpush1.bf16.msra.mxu0 %v1098
      %1127 = vmatprep.subr.bf16.mxu0 0
      %1128 = vmatpush2.bf16.msra.mxu0 0
      %1129 = vmatprep.subr.bf16.mxu0 0
      %1130 = vmatpush2.bf16.msra.mxu0 0
      %1131 = vmatprep.subr.bf16.mxu0 0
      %1132 = vmatpush2.bf16.msra.mxu0 0
      %1133 = vmatprep.subr.bf16.mxu0 0
      %1134 = vmatpush2.bf16.msra.mxu0 0
      %1135 = vmatprep.subr.bf16.mxu0 0
      %1136 = vmatpush2.bf16.msra.mxu0 0
      %1137 = vmatprep.subr.bf16.mxu0 0
      %1138 = vmatpush2.bf16.msra.mxu0 0
      %1139 = vmatprep.subr.bf16.mxu0 0
      %1140 = vmatpush2.bf16.msra.mxu0 0
      %1141 = vmatprep.subr.bf16.mxu0 0
      %1142 = vmatpush2.bf16.msra.mxu0 0
      %1143 = vmatprep.mubr.bf16.mxu0 0
      %1144 = vmatmul.mubr.bf16.gmra.mxu0 %v1103
      %v1145 = vpop.f32.mrf.mxu0
      %v1146 = vadd.f32 0.0, %v1145
      %v1147 = vpop.f32.mrf.mxu0
      %v1148 = vpop.f32.mrf.mxu0
      %v1149 = vadd.f32 0.0, %v1148
      %v1150 = vpop.f32.mrf.mxu0
      %1151 = vmatprep.mubr.bf16.mxu0 0
      %1152 = vmatmul.mubr.bf16.gmra.mxu0 %v1106
      %v1153 = vpop.f32.mrf.mxu0
      %v1154 = vadd.f32 0.0, %v1153
      %v1155 = vpop.f32.mrf.mxu0
      %v1156 = vpop.f32.mrf.mxu0
      %v1157 = vpop.f32.mrf.mxu0
      %1158 = vdwg.mxu0
      %v1159 = vpack.c.bf16 %v1149, %v1146
      %v1160 = vpack.c.bf16 %v1154, %v1154
      %v1162 = vsel %vm537, %v1159, 0
      %v1165 = vsel %vm537, %v1160, 0
      %v1168 = vsel %vm882, %v527, 0
      %1170 = vmatprep.subr.bf16.mxu0 0
      %1171 = vmatpush1.bf16.msra.mxu0 0
      %1172 = vmatprep.subr.bf16.mxu0 0
      %1173 = vmatpush1.bf16.msra.mxu0 0
      %1174 = vmatprep.subr.bf16.mxu0 0
      %1175 = vmatpush1.bf16.msra.mxu0 0
      %1176 = vmatprep.subr.bf16.mxu0 0
      %1177 = vmatpush1.bf16.msra.mxu0 0
      %1178 = vmatprep.subr.bf16.mxu0 0
      %1179 = vmatpush1.bf16.msra.mxu0 0
      %1180 = vmatprep.subr.bf16.mxu0 0
      %1181 = vmatpush1.bf16.msra.mxu0 0
      %1182 = vmatprep.subr.bf16.mxu0 0
      %1183 = vmatpush1.bf16.msra.mxu0 0
      %1184 = vmatprep.subr.bf16.mxu0 0
      %1185 = vmatpush1.bf16.msra.mxu0 %v1168
      %1186 = vmatprep.subr.bf16.mxu0 0
      %1187 = vmatpush2.bf16.msra.mxu0 0
      %1188 = vmatprep.subr.bf16.mxu0 0
      %1189 = vmatpush2.bf16.msra.mxu0 0
      %1190 = vmatprep.subr.bf16.mxu0 0
      %1191 = vmatpush2.bf16.msra.mxu0 0
      %1192 = vmatprep.subr.bf16.mxu0 0
      %1193 = vmatpush2.bf16.msra.mxu0 0
      %1194 = vmatprep.subr.bf16.mxu0 0
      %1195 = vmatpush2.bf16.msra.mxu0 0
      %1196 = vmatprep.subr.bf16.mxu0 0
      %1197 = vmatpush2.bf16.msra.mxu0 0
      %1198 = vmatprep.subr.bf16.mxu0 0
      %1199 = vmatpush2.bf16.msra.mxu0 0
      %1200 = vmatprep.subr.bf16.mxu0 0
      %1201 = vmatpush2.bf16.msra.mxu0 0
      %1202 = vmatprep.mubr.bf16.mxu0 0
      %1203 = vmatmul.mubr.bf16.gmra.mxu0 %v1162
      %v1204 = vpop.f32.mrf.mxu0
      %v1205 = vadd.f32 0.0, %v1204
      %v1206 = vpop.f32.mrf.mxu0
      %v1207 = vpop.f32.mrf.mxu0
      %v1208 = vadd.f32 0.0, %v1207
      %v1209 = vpop.f32.mrf.mxu0
      %1210 = vmatprep.mubr.bf16.mxu0 0
      %1211 = vmatmul.mubr.bf16.gmra.mxu0 %v1165
      %v1212 = vpop.f32.mrf.mxu0
      %v1213 = vadd.f32 0.0, %v1212
      %v1214 = vpop.f32.mrf.mxu0
      %v1215 = vpop.f32.mrf.mxu0
      %v1216 = vpop.f32.mrf.mxu0
      %1217 = vdwg.mxu0
      %v1218 = vadd.f32 %v978, %v1205
      %v1219 = vadd.f32 %v981, %v1208
      %v1220 = vadd.f32 %v986, %v1213
      %1221 = vrot.lane.b32.xlu0 %v529, 104
      %v1222 = vpop.permute.xlu0 %1221
      %1223 = vrot.lane.b32.xlu0 %v530, 104
      %v1224 = vpop.permute.xlu0 %1223
      %1225 = vrot.lane.b32.xlu0 %v529, 72
      %v1226 = vpop.permute.xlu0 %1225
      %1227 = vrot.lane.b32.xlu0 %v530, 72
      %v1228 = vpop.permute.xlu0 %1227
      %v1230 = vsel %vm537, %v1222, 0
      %v1233 = vsel %vm537, %v1224, 0
      %v1236 = vsel %vm537, %v1226, 0
      %v1239 = vsel %vm537, %v1228, 0
      %1241 = vmatprep.subr.bf16.mxu0 0
      %1242 = vmatpush1.bf16.xpose.msra.mxu0 0
      %1243 = vmatprep.subr.bf16.mxu0 0
      %1244 = vmatpush1.bf16.xpose.msra.mxu0 0
      %1245 = vmatprep.subr.bf16.mxu0 0
      %1246 = vmatpush1.bf16.xpose.msra.mxu0 0
      %1247 = vmatprep.subr.bf16.mxu0 0
      %1248 = vmatpush1.bf16.xpose.msra.mxu0 0
      %1249 = vmatprep.subr.bf16.mxu0 0
      %1250 = vmatpush1.bf16.xpose.msra.mxu0 0
      %1251 = vmatprep.subr.bf16.mxu0 0
      %1252 = vmatpush1.bf16.xpose.msra.mxu0 0
      %1253 = vmatprep.subr.bf16.mxu0 0
      %1254 = vmatpush1.bf16.xpose.msra.mxu0 %v1239
      %1255 = vmatprep.subr.bf16.mxu0 0
      %1256 = vmatpush1.bf16.xpose.msra.mxu0 %v1236
      %1257 = vmatprep.subr.bf16.mxu0 0
      %1258 = vmatpush2.bf16.xpose.msra.mxu0 0
      %1259 = vmatprep.subr.bf16.mxu0 0
      %1260 = vmatpush2.bf16.xpose.msra.mxu0 0
      %1261 = vmatprep.subr.bf16.mxu0 0
      %1262 = vmatpush2.bf16.xpose.msra.mxu0 0
      %1263 = vmatprep.subr.bf16.mxu0 0
      %1264 = vmatpush2.bf16.xpose.msra.mxu0 0
      %1265 = vmatprep.subr.bf16.mxu0 0
      %1266 = vmatpush2.bf16.xpose.msra.mxu0 0
      %1267 = vmatprep.subr.bf16.mxu0 0
      %1268 = vmatpush2.bf16.xpose.msra.mxu0 0
      %1269 = vmatprep.subr.bf16.mxu0 0
      %1270 = vmatpush2.bf16.xpose.msra.mxu0 0
      %1271 = vmatprep.subr.bf16.mxu0 0
      %1272 = vmatpush2.bf16.xpose.msra.mxu0 0
      %1273 = vmatprep.mubr.bf16.mxu0 0
      %1274 = vmatmul.mubr.bf16.gmra.mxu0 %v1230
      %v1275 = vpop.f32.mrf.mxu0
      %v1276 = vadd.f32 0.0, %v1275
      %v1277 = vpop.f32.mrf.mxu0
      %v1278 = vpop.f32.mrf.mxu0
      %v1279 = vadd.f32 0.0, %v1278
      %v1280 = vpop.f32.mrf.mxu0
      %1281 = vmatprep.mubr.bf16.mxu0 0
      %1282 = vmatmul.mubr.bf16.gmra.mxu0 %v1233
      %v1283 = vpop.f32.mrf.mxu0
      %v1284 = vadd.f32 0.0, %v1283
      %v1285 = vpop.f32.mrf.mxu0
      %v1286 = vpop.f32.mrf.mxu0
      %v1287 = vpop.f32.mrf.mxu0
      %1288 = vdwg.mxu0
      %v1289 = vmul.f32 %v1276, 0.35355338
      %v1290 = vmul.f32 %v1279, 0.35355338
      %v1291 = vmul.f32 %v1284, 0.35355338
      %v1292 = vsel %vm601, %v1289, -inf
      %1293 = vmax.xlane.f32.xlu0 %v1292
      %v1294 = vpop.xlane.xlu0 %1293
      %v1295 = vsel %vm601, %v1290, -inf
      %1296 = vmax.xlane.f32.xlu0 %v1295
      %v1297 = vpop.xlane.xlu0 %1296
      %v1298 = vsel %vm608, %v1291, -inf
      %1299 = vmax.xlane.f32.xlu0 %v1298
      %v1300 = vpop.xlane.xlu0 %1299
      %v1301 = vsub.f32 %v1289, %v1294
      %v1302 = vsub.f32 %v1290, %v1297
      %v1303 = vsub.f32 %v1291, %v1300
      %v1304 = vmul.f32 %v1301, 1.442695
      %v1305 = vpow.pop %v1304
      %v1306 = vmul.f32 %v1302, 1.442695
      %v1307 = vpow.pop %v1306
      %v1308 = vmul.f32 %v1303, 1.442695
      %v1309 = vpow.pop %v1308
      %v1310 = vsel %vm601, %v1305, 0.0
      %1311 = vadd.xlane.f32.xlu0 %v1310
      %v1312 = vpop.xlane.xlu0 %1311
      %v1313 = vsel %vm601, %v1307, 0.0
      %1314 = vadd.xlane.f32.xlu0 %v1313
      %v1315 = vpop.xlane.xlu0 %1314
      %v1316 = vsel %vm608, %v1309, 0.0
      %1317 = vadd.xlane.f32.xlu0 %v1316
      %v1318 = vpop.xlane.xlu0 %1317
      %v1319 = vrcp.pop %v1312
      %v1320 = vrcp.pop %v1315
      %v1321 = vrcp.pop %v1318
      %v1322 = vmul.f32 %v1305, %v1319
      %v1323 = vmul.f32 %v1307, %v1320
      %v1324 = vmul.f32 %v1309, %v1321
      %v1325 = vpack.c.bf16 %v1323, %v1322
      %v1326 = vpack.c.bf16 %v1324, %v1324
      %1327 = vrot.lane.b32.xlu0 %v529, 40
      %v1328 = vpop.permute.xlu0 %1327
      %1329 = vrot.lane.b32.xlu0 %v530, 40
      %v1330 = vpop.permute.xlu0 %1329
      %v1333 = vsel %vm601, %v1325, 0
      %v1336 = vsel %vm601, %v1326, 0
      %v1339 = vand.u32 %v1330, %v652
      %1341 = vmatprep.subr.bf16.mxu0 0
      %1342 = vmatpush1.bf16.msra.mxu0 0
      %1343 = vmatprep.subr.bf16.mxu0 0
      %1344 = vmatpush1.bf16.msra.mxu0 0
      %1345 = vmatprep.subr.bf16.mxu0 0
      %1346 = vmatpush1.bf16.msra.mxu0 0
      %1347 = vmatprep.subr.bf16.mxu0 0
      %1348 = vmatpush1.bf16.msra.mxu0 0
      %1349 = vmatprep.subr.bf16.mxu0 0
      %1350 = vmatpush1.bf16.msra.mxu0 0
      %1351 = vmatprep.subr.bf16.mxu0 0
      %1352 = vmatpush1.bf16.msra.mxu0 0
      %1353 = vmatprep.subr.bf16.mxu0 0
      %1354 = vmatpush1.bf16.msra.mxu0 %v1339
      %1355 = vmatprep.subr.bf16.mxu0 0
      %1356 = vmatpush1.bf16.msra.mxu0 %v1328
      %1357 = vmatprep.subr.bf16.mxu0 0
      %1358 = vmatpush2.bf16.msra.mxu0 0
      %1359 = vmatprep.subr.bf16.mxu0 0
      %1360 = vmatpush2.bf16.msra.mxu0 0
      %1361 = vmatprep.subr.bf16.mxu0 0
      %1362 = vmatpush2.bf16.msra.mxu0 0
      %1363 = vmatprep.subr.bf16.mxu0 0
      %1364 = vmatpush2.bf16.msra.mxu0 0
      %1365 = vmatprep.subr.bf16.mxu0 0
      %1366 = vmatpush2.bf16.msra.mxu0 0
      %1367 = vmatprep.subr.bf16.mxu0 0
      %1368 = vmatpush2.bf16.msra.mxu0 0
      %1369 = vmatprep.subr.bf16.mxu0 0
      %1370 = vmatpush2.bf16.msra.mxu0 0
      %1371 = vmatprep.subr.bf16.mxu0 0
      %1372 = vmatpush2.bf16.msra.mxu0 0
      %1373 = vmatprep.mubr.bf16.mxu0 0
      %1374 = vmatmul.mubr.bf16.gmra.mxu0 %v1333
      %v1375 = vpop.f32.mrf.mxu0
      %v1376 = vadd.f32 0.0, %v1375
      %v1377 = vpop.f32.mrf.mxu0
      %v1378 = vpop.f32.mrf.mxu0
      %v1379 = vadd.f32 0.0, %v1378
      %v1380 = vpop.f32.mrf.mxu0
      %1381 = vmatprep.mubr.bf16.mxu0 0
      %1382 = vmatmul.mubr.bf16.gmra.mxu0 %v1336
      %v1383 = vpop.f32.mrf.mxu0
      %v1384 = vadd.f32 0.0, %v1383
      %v1385 = vpop.f32.mrf.mxu0
      %v1386 = vpop.f32.mrf.mxu0
      %v1387 = vpop.f32.mrf.mxu0
      %1388 = vdwg.mxu0
      %v1389 = vpack.c.bf16 %v1379, %v1376
      %v1390 = vpack.c.bf16 %v1384, %v1384
      %v1392 = vsel %vm537, %v1389, 0
      %v1395 = vsel %vm537, %v1390, 0
      %v1398 = vsel %vm882, %v528, 0
      %1400 = vmatprep.subr.bf16.mxu0 0
      %1401 = vmatpush1.bf16.msra.mxu0 0
      %1402 = vmatprep.subr.bf16.mxu0 0
      %1403 = vmatpush1.bf16.msra.mxu0 0
      %1404 = vmatprep.subr.bf16.mxu0 0
      %1405 = vmatpush1.bf16.msra.mxu0 0
      %1406 = vmatprep.subr.bf16.mxu0 0
      %1407 = vmatpush1.bf16.msra.mxu0 0
      %1408 = vmatprep.subr.bf16.mxu0 0
      %1409 = vmatpush1.bf16.msra.mxu0 0
      %1410 = vmatprep.subr.bf16.mxu0 0
      %1411 = vmatpush1.bf16.msra.mxu0 0
      %1412 = vmatprep.subr.bf16.mxu0 0
      %1413 = vmatpush1.bf16.msra.mxu0 0
      %1414 = vmatprep.subr.bf16.mxu0 0
      %1415 = vmatpush1.bf16.msra.mxu0 %v1398
      %1416 = vmatprep.subr.bf16.mxu0 0
      %1417 = vmatpush2.bf16.msra.mxu0 0
      %1418 = vmatprep.subr.bf16.mxu0 0
      %1419 = vmatpush2.bf16.msra.mxu0 0
      %1420 = vmatprep.subr.bf16.mxu0 0
      %1421 = vmatpush2.bf16.msra.mxu0 0
      %1422 = vmatprep.subr.bf16.mxu0 0
      %1423 = vmatpush2.bf16.msra.mxu0 0
      %1424 = vmatprep.subr.bf16.mxu0 0
      %1425 = vmatpush2.bf16.msra.mxu0 0
      %1426 = vmatprep.subr.bf16.mxu0 0
      %1427 = vmatpush2.bf16.msra.mxu0 0
      %1428 = vmatprep.subr.bf16.mxu0 0
      %1429 = vmatpush2.bf16.msra.mxu0 0
      %1430 = vmatprep.subr.bf16.mxu0 0
      %1431 = vmatpush2.bf16.msra.mxu0 0
      %1432 = vmatprep.mubr.bf16.mxu0 0
      %1433 = vmatmul.mubr.bf16.gmra.mxu0 %v1392
      %v1434 = vpop.f32.mrf.mxu0
      %v1435 = vadd.f32 0.0, %v1434
      %v1436 = vpop.f32.mrf.mxu0
      %v1437 = vpop.f32.mrf.mxu0
      %v1438 = vadd.f32 0.0, %v1437
      %v1439 = vpop.f32.mrf.mxu0
      %1440 = vmatprep.mubr.bf16.mxu0 0
      %1441 = vmatmul.mubr.bf16.gmra.mxu0 %v1395
      %v1442 = vpop.f32.mrf.mxu0
      %v1443 = vadd.f32 0.0, %v1442
      %v1444 = vpop.f32.mrf.mxu0
      %v1445 = vpop.f32.mrf.mxu0
      %v1446 = vpop.f32.mrf.mxu0
      %1447 = vdwg.mxu0
      %v1448 = vadd.f32 %v1218, %v1435
      %v1449 = vadd.f32 %v1219, %v1438
      %v1450 = vadd.f32 %v1220, %v1443
      %v1451 = vld [vmem:[%s4] sm:$0x1]
      %v1453 = vlaneseq
      %v1454 = vshrl.u32 %v1453, 7
      %v1455 = vsub.s32 0, %v1454
      %v1456 = vrot.slane %v1451, %v1455
      %v1458 = vadd.f32 %v1448, %v1456
      %v1459 = vadd.f32 %v1449, %v1456
      %v1460 = vadd.f32 %v1450, %v1456
      %v1461 = vadd.f32 %v442, %v1458
      %v1462 = vadd.f32 %v443, %v1459
      %v1463 = vadd.f32 %v444, %v1460
      %v1464 = vld [vmem:[%s5] sm:$0x1]
      %v1465 = vld [vmem:[%s6] sm:$0x1]
      %v1466 = vsel %vm470, %v1461, 0.0
      %1467 = vadd.xlane.f32.xlu0 %v1466
      %v1468 = vpop.xlane.xlu0 %1467
      %v1469 = vsel %vm470, %v1462, 0.0
      %1470 = vadd.xlane.f32.xlu0 %v1469
      %v1471 = vpop.xlane.xlu0 %1470
      %vm1472 = vcmask 256000
      %v1473 = vsel %vm1472, %v1463, 0.0
      %1474 = vadd.xlane.f32.xlu0 %v1473
      %v1475 = vpop.xlane.xlu0 %1474
      %v1476 = vrcp.pop 32.0
      %v1477 = vmul.f32 %v1468, %v1476
      %v1478 = vmul.f32 %v1471, %v1476
      %v1479 = vmul.f32 %v1475, %v1476
      %v1480 = vsub.f32 %v1461, %v1477
      %v1481 = vsub.f32 %v1462, %v1478
      %v1482 = vsub.f32 %v1463, %v1479
      %v1483 = vmul.f32 %v1480, %v1480
      %v1484 = vmul.f32 %v1481, %v1481
      %v1485 = vmul.f32 %v1482, %v1482
      %v1486 = vsel %vm470, %v1483, 0.0
      %1487 = vadd.xlane.f32.xlu0 %v1486
      %v1488 = vpop.xlane.xlu0 %1487
      %v1489 = vsel %vm470, %v1484, 0.0
      %1490 = vadd.xlane.f32.xlu0 %v1489
      %v1491 = vpop.xlane.xlu0 %1490
      %v1492 = vsel %vm1472, %v1485, 0.0
      %1493 = vadd.xlane.f32.xlu0 %v1492
      %v1494 = vpop.xlane.xlu0 %1493
      %v1495 = vmul.f32 %v1488, %v1476
      %v1496 = vmul.f32 %v1491, %v1476
      %v1497 = vmul.f32 %v1494, %v1476
      %v1498 = vadd.f32 %v1495, 1e-05
      %v1499 = vadd.f32 %v1496, 1e-05
      %v1500 = vadd.f32 %v1497, 1e-05
      %v1501 = vrsqrt.pop %v1498
      %v1502 = vrsqrt.pop %v1499
      %v1503 = vrsqrt.pop %v1500
      %v1504 = vmul.f32 %v1480, %v1501
      %v1505 = vmul.f32 %v1481, %v1502
      %v1506 = vmul.f32 %v1482, %v1503
      %v1508 = vlaneseq
      %v1509 = vshrl.u32 %v1508, 7
      %v1510 = vsub.s32 0, %v1509
      %v1511 = vrot.slane %v1464, %v1510
      %v1513 = vmul.f32 %v1504, %v1511
      %v1514 = vmul.f32 %v1505, %v1511
      %v1515 = vmul.f32 %v1506, %v1511
      %v1517 = vlaneseq
      %v1518 = vshrl.u32 %v1517, 7
      %v1519 = vsub.s32 0, %v1518
      %v1520 = vrot.slane %v1465, %v1519
      %v1522 = vadd.f32 %v1513, %v1520
      %v1523 = vadd.f32 %v1514, %v1520
      %v1524 = vadd.f32 %v1515, %v1520
      %v1525 = vpack.c.bf16 %v1523, %v1522
      %v1526 = vpack.c.bf16 %v1524, %v1524
      %v1527 = vld [vmem:[%s7] sm:$0xf]
      %v1528 = vld [vmem:[%s7 + $0x4] sm:$0xf]
      %v1529 = vld [vmem:[%s7 + $0x8] sm:$0xf]
      %v1530 = vld [vmem:[%s7 + $0xc] sm:$0xf]
      %v1531 = vld [vmem:[%s8] sm:$0x1]
      %v1533 = vlaneseq
      %v1534 = vshrl.u32 %v1533, 7
      %v1535 = vsub.s32 0, %v1534
      %v1536 = vrot.slane %v1531, %v1535
      %v1542 = vunpack.c.l.b16 %v1527
      %v1543 = vunpack.c.l.b16 %v1528
      %v1544 = vunpack.c.l.b16 %v1529
      %v1545 = vunpack.c.l.b16 %v1530
      %v1546 = vpack.c.b16 %v1543, %v1542
      %v1547 = vpack.c.b16 %v1545, %v1544
      %v1551 = vsel %vm470, %v1525, 0
      %v1554 = vsel %vm470, %v1526, 0
      %1556 = vmatprep.subr.bf16.mxu0 0
      %1557 = vmatpush1.bf16.msra.mxu0 0
      %1558 = vmatprep.subr.bf16.mxu0 0
      %1559 = vmatpush1.bf16.msra.mxu0 0
      %1560 = vmatprep.subr.bf16.mxu0 0
      %1561 = vmatpush1.bf16.msra.mxu0 0
      %1562 = vmatprep.subr.bf16.mxu0 0
      %1563 = vmatpush1.bf16.msra.mxu0 0
      %1564 = vmatprep.subr.bf16.mxu0 0
      %1565 = vmatpush1.bf16.msra.mxu0 0
      %1566 = vmatprep.subr.bf16.mxu0 0
      %1567 = vmatpush1.bf16.msra.mxu0 0
      %1568 = vmatprep.subr.bf16.mxu0 0
      %1569 = vmatpush1.bf16.msra.mxu0 %v1547
      %1570 = vmatprep.subr.bf16.mxu0 0
      %1571 = vmatpush1.bf16.msra.mxu0 %v1546
      %1572 = vmatprep.subr.bf16.mxu0 0
      %1573 = vmatpush2.bf16.msra.mxu0 0
      %1574 = vmatprep.subr.bf16.mxu0 0
      %1575 = vmatpush2.bf16.msra.mxu0 0
      %1576 = vmatprep.subr.bf16.mxu0 0
      %1577 = vmatpush2.bf16.msra.mxu0 0
      %1578 = vmatprep.subr.bf16.mxu0 0
      %1579 = vmatpush2.bf16.msra.mxu0 0
      %1580 = vmatprep.subr.bf16.mxu0 0
      %1581 = vmatpush2.bf16.msra.mxu0 0
      %1582 = vmatprep.subr.bf16.mxu0 0
      %1583 = vmatpush2.bf16.msra.mxu0 0
      %1584 = vmatprep.subr.bf16.mxu0 0
      %1585 = vmatpush2.bf16.msra.mxu0 0
      %1586 = vmatprep.subr.bf16.mxu0 0
      %1587 = vmatpush2.bf16.msra.mxu0 0
      %1588 = vmatprep.mubr.bf16.mxu0 0
      %1589 = vmatmul.mubr.bf16.gmra.mxu0 %v1551
      %v1590 = vpop.f32.mrf.mxu0
      %v1591 = vadd.f32 %v1536, %v1590
      %v1592 = vpop.f32.mrf.mxu0
      %v1593 = vpop.f32.mrf.mxu0
      %v1594 = vadd.f32 %v1536, %v1593
      %v1595 = vpop.f32.mrf.mxu0
      %1596 = vmatprep.mubr.bf16.mxu0 0
      %1597 = vmatmul.mubr.bf16.gmra.mxu0 %v1554
      %v1598 = vpop.f32.mrf.mxu0
      %v1599 = vadd.f32 %v1536, %v1598
      %v1600 = vpop.f32.mrf.mxu0
      %v1601 = vpop.f32.mrf.mxu0
      %v1602 = vpop.f32.mrf.mxu0
      %1603 = vdwg.mxu0
      %v1604 = vmul.f32 %v1591, %v1591
      %v1605 = vmul.f32 %v1594, %v1594
      %v1606 = vmul.f32 %v1599, %v1599
      %v1607 = vmul.f32 %v1591, %v1604
      %v1608 = vmul.f32 %v1594, %v1605
      %v1609 = vmul.f32 %v1599, %v1606
      %v1610 = vmul.f32 %v1607, 0.044715
      %v1611 = vmul.f32 %v1608, 0.044715
      %v1612 = vmul.f32 %v1609, 0.044715
      %v1613 = vadd.f32 %v1591, %v1610
      %v1614 = vadd.f32 %v1594, %v1611
      %v1615 = vadd.f32 %v1599, %v1612
      %v1616 = vmul.f32 %v1613, 0.7978846
      %v1617 = vmul.f32 %v1614, 0.7978846
      %v1618 = vmul.f32 %v1615, 0.7978846
      %v1619 = vtanh.pop %v1616
      %v1620 = vtanh.pop %v1617
      %v1621 = vtanh.pop %v1618
      %v1622 = vadd.f32 %v1619, 1.0
      %v1623 = vadd.f32 %v1620, 1.0
      %v1624 = vadd.f32 %v1621, 1.0
      %v1625 = vmul.f32 %v1622, 0.5
      %v1626 = vmul.f32 %v1623, 0.5
      %v1627 = vmul.f32 %v1624, 0.5
      %v1628 = vmul.f32 %v1591, %v1625
      %v1629 = vmul.f32 %v1594, %v1626
      %v1630 = vmul.f32 %v1599, %v1627
      %v1631 = vpack.c.bf16 %v1629, %v1628
      %v1632 = vpack.c.bf16 %v1630, %v1630
      %v1633 = vld [vmem:[%s9] sm:$0xf]
      %v1634 = vld [vmem:[%s9 + $0x4] sm:$0xf]
      %v1635 = vld [vmem:[%s9 + $0x8] sm:$0xf]
      %v1636 = vld [vmem:[%s9 + $0xc] sm:$0xf]
      %v1637 = vld [vmem:[%s9 + $0x10] sm:$0xf]
      %v1638 = vld [vmem:[%s9 + $0x14] sm:$0xf]
      %v1639 = vld [vmem:[%s9 + $0x18] sm:$0xf]
      %v1640 = vld [vmem:[%s9 + $0x1c] sm:$0xf]
      %v1641 = vld [vmem:[%s10] sm:$0x1]
      %v1643 = vlaneseq
      %v1644 = vshrl.u32 %v1643, 7
      %v1645 = vsub.s32 0, %v1644
      %v1646 = vrot.slane %v1641, %v1645
      %v1656 = vunpack.c.l.b16 %v1633
      %v1657 = vunpack.c.l.b16 %v1634
      %v1658 = vunpack.c.l.b16 %v1635
      %v1659 = vunpack.c.l.b16 %v1636
      %v1660 = vunpack.c.l.b16 %v1637
      %v1661 = vunpack.c.l.b16 %v1638
      %v1662 = vunpack.c.l.b16 %v1639
      %v1663 = vunpack.c.l.b16 %v1640
      %v1664 = vpack.c.b16 %v1657, %v1656
      %v1665 = vpack.c.b16 %v1659, %v1658
      %v1666 = vpack.c.b16 %v1661, %v1660
      %v1667 = vpack.c.b16 %v1663, %v1662
      %vm1672 = vcmask 523264
      %v1674 = vsel %vm1672, %v1631, 0
      %v1677 = vsel %vm1672, %v1632, 0
      %1679 = vmatprep.subr.bf16.mxu0 0
      %1680 = vmatpush1.bf16.msra.mxu0 0
      %1681 = vmatprep.subr.bf16.mxu0 0
      %1682 = vmatpush1.bf16.msra.mxu0 0
      %1683 = vmatprep.subr.bf16.mxu0 0
      %1684 = vmatpush1.bf16.msra.mxu0 0
      %1685 = vmatprep.subr.bf16.mxu0 0
      %1686 = vmatpush1.bf16.msra.mxu0 0
      %1687 = vmatprep.subr.bf16.mxu0 0
      %1688 = vmatpush1.bf16.msra.mxu0 %v1667
      %1689 = vmatprep.subr.bf16.mxu0 0
      %1690 = vmatpush1.bf16.msra.mxu0 %v1666
      %1691 = vmatprep.subr.bf16.mxu0 0
      %1692 = vmatpush1.bf16.msra.mxu0 %v1665
      %1693 = vmatprep.subr.bf16.mxu0 0
      %1694 = vmatpush1.bf16.msra.mxu0 %v1664
      %1695 = vmatprep.subr.bf16.mxu0 0
      %1696 = vmatpush2.bf16.msra.mxu0 0
      %1697 = vmatprep.subr.bf16.mxu0 0
      %1698 = vmatpush2.bf16.msra.mxu0 0
      %1699 = vmatprep.subr.bf16.mxu0 0
      %1700 = vmatpush2.bf16.msra.mxu0 0
      %1701 = vmatprep.subr.bf16.mxu0 0
      %1702 = vmatpush2.bf16.msra.mxu0 0
      %1703 = vmatprep.subr.bf16.mxu0 0
      %1704 = vmatpush2.bf16.msra.mxu0 0
      %1705 = vmatprep.subr.bf16.mxu0 0
      %1706 = vmatpush2.bf16.msra.mxu0 0
      %1707 = vmatprep.subr.bf16.mxu0 0
      %1708 = vmatpush2.bf16.msra.mxu0 0
      %1709 = vmatprep.subr.bf16.mxu0 0
      %1710 = vmatpush2.bf16.msra.mxu0 0
      %1711 = vmatprep.mubr.bf16.mxu0 0
      %1712 = vmatmul.mubr.bf16.gmra.mxu0 %v1674
      %v1713 = vpop.f32.mrf.mxu0
      %v1714 = vadd.f32 %v1646, %v1713
      %v1715 = vpop.f32.mrf.mxu0
      %v1716 = vpop.f32.mrf.mxu0
      %v1717 = vadd.f32 %v1646, %v1716
      %v1718 = vpop.f32.mrf.mxu0
      %1719 = vmatprep.mubr.bf16.mxu0 0
      %1720 = vmatmul.mubr.bf16.gmra.mxu0 %v1677
      %v1721 = vpop.f32.mrf.mxu0
      %v1722 = vadd.f32 %v1646, %v1721
      %v1723 = vpop.f32.mrf.mxu0
      %v1724 = vpop.f32.mrf.mxu0
      %v1725 = vpop.f32.mrf.mxu0
      %1726 = vdwg.mxu0
      %v1727 = vadd.f32 %v1522, %v1714
      %v1728 = vadd.f32 %v1523, %v1717
      %v1729 = vadd.f32 %v1524, %v1722
      %v1730 = vld [vmem:[%s11] sm:$0x1]
      %v1731 = vld [vmem:[%s12] sm:$0x1]
      %v1732 = vsel %vm470, %v1727, 0.0
      %1733 = vadd.xlane.f32.xlu0 %v1732
      %v1734 = vpop.xlane.xlu0 %1733
      %v1735 = vsel %vm470, %v1728, 0.0
      %1736 = vadd.xlane.f32.xlu0 %v1735
      %v1737 = vpop.xlane.xlu0 %1736
      %v1738 = vsel %vm1472, %v1729, 0.0
      %1739 = vadd.xlane.f32.xlu0 %v1738
      %v1740 = vpop.xlane.xlu0 %1739
      %v1741 = vmul.f32 %v1734, %v1476
      %v1742 = vmul.f32 %v1737, %v1476
      %v1743 = vmul.f32 %v1740, %v1476
      %v1744 = vsub.f32 %v1727, %v1741
      %v1745 = vsub.f32 %v1728, %v1742
      %v1746 = vsub.f32 %v1729, %v1743
      %v1747 = vmul.f32 %v1744, %v1744
      %v1748 = vmul.f32 %v1745, %v1745
      %v1749 = vmul.f32 %v1746, %v1746
      %v1750 = vsel %vm470, %v1747, 0.0
      %1751 = vadd.xlane.f32.xlu0 %v1750
      %v1752 = vpop.xlane.xlu0 %1751
      %v1753 = vsel %vm470, %v1748, 0.0
      %1754 = vadd.xlane.f32.xlu0 %v1753
      %v1755 = vpop.xlane.xlu0 %1754
      %v1756 = vsel %vm1472, %v1749, 0.0
      %1757 = vadd.xlane.f32.xlu0 %v1756
      %v1758 = vpop.xlane.xlu0 %1757
      %v1759 = vmul.f32 %v1752, %v1476
      %v1760 = vmul.f32 %v1755, %v1476
      %v1761 = vmul.f32 %v1758, %v1476
      %v1762 = vadd.f32 %v1759, 1e-05
      %v1763 = vadd.f32 %v1760, 1e-05
      %v1764 = vadd.f32 %v1761, 1e-05
      %v1765 = vrsqrt.pop %v1762
      %v1766 = vrsqrt.pop %v1763
      %v1767 = vrsqrt.pop %v1764
      %v1768 = vmul.f32 %v1744, %v1765
      %v1769 = vmul.f32 %v1745, %v1766
      %v1770 = vmul.f32 %v1746, %v1767
      %v1772 = vlaneseq
      %v1773 = vshrl.u32 %v1772, 7
      %v1774 = vsub.s32 0, %v1773
      %v1775 = vrot.slane %v1730, %v1774
      %v1777 = vmul.f32 %v1768, %v1775
      %v1778 = vmul.f32 %v1769, %v1775
      %v1779 = vmul.f32 %v1770, %v1775
      %v1781 = vlaneseq
      %v1782 = vshrl.u32 %v1781, 7
      %v1783 = vsub.s32 0, %v1782
      %v1784 = vrot.slane %v1731, %v1783
      %v1786 = vadd.f32 %v1777, %v1784
      %v1787 = vadd.f32 %v1778, %v1784
      %v1788 = vadd.f32 %v1779, %v1784
      %v1789 = vmax.f32 %v1786, 0.0
      %v1790 = vmax.f32 %v1787, 0.0
      %v1791 = vmax.f32 %v1788, 0.0
      %1792 = vst.msk [vmem:[%s440] sm:$0xff] %vm470, %v1789
      %1793 = vst.msk [vmem:[%s440 + $0x8] sm:$0xff] %vm470, %v1790
      %1794 = vst.msk [vmem:[%s440 + $0x10] sm:$0x7] %vm1472, %v1791
      %p1795 = scmp.lt.s32.totalorder %s24, 1
      %s1796 = scalar_select %p1795, %s24, 1
      %s1797 = smul.addr %s1796, 3
      %s1798 = smul.addr %s1797, 8
      %s1799 = scalar_lea.vmem %s13, %s1798
      // Predicated region
      $region73: #{wavlm_wrapper_forward.13} parent=71 // pred_check
        %p1800 = pneg %p320
      $region74: #{wavlm_wrapper_forward.13} parent=71 // pred_check_branch
        %1802 = sbr.rel (%p1800) target = $region76
      $region75: #{wavlm_wrapper_forward.13} parent=71 // pred_region
        _
      $region76: #{wavlm_wrapper_forward.13} parent=71 // pred_fallthru
        _
    $region72: #{wavlm_wrapper_forward.13} parent=5 // pred_fallthru
      _
    %p1803 = scmp.le.s32.totalorder 2, %s19
    // Predicated region
    $region77: #{wavlm_wrapper_forward.13} parent=5 // pred_check
      %p1804 = pneg %p1803
    $region78: #{wavlm_wrapper_forward.13} parent=5 // pred_check_branch
      %1806 = sbr.rel (%p1804) target = $region80
    $region79: #{wavlm_wrapper_forward.13} parent=5 // pred_region
      %s1807 = ssub.s32 %s19, 2
      // Predicated region
      $region81: #{wavlm_wrapper_forward.13} parent=79 // pred_check
        %p1808 = pneg %p326
      $region82: #{wavlm_wrapper_forward.13} parent=79 // pred_check_branch
        %1810 = sbr.rel (%p1808) target = $region84
      $region83: #{wavlm_wrapper_forward.13} parent=79 // pred_region
        %p1811 = scmp.lt.s32.totalorder %s25, 1
        %s1812 = scalar_select %p1811, %s25, 1
        %s1813 = smul.addr %s1812, 3
        %s1814 = smul.addr %s1813, 8
        %s1815 = scalar_lea.vmem %s13, %s1814
      $region84: #{wavlm_wrapper_forward.13} parent=79 // pred_fallthru
        _
    $region80: #{wavlm_wrapper_forward.13} parent=5 // pred_fallthru
      _
  $region6: #{wavlm_wrapper_forward.13} parent=0 // loop_footer
    %s23 = sadd.s32 1, %s19
  $region7: #{wavlm_wrapper_forward.13} parent=0 // loop_footer_branch
    %18 = sbr.rel target = $region3
  $region8: #{wavlm_wrapper_forward.13} parent=0 // loop_exit
    _

</llo_original>
